<compile_context>
chip_gen: v7x
topology: tpu7x:2x2x1
jax: 0.10.0
libtpu: 0.0.40
codegen_flags: <defaults>
</compile_context>

<pallas_src>
import functools
import math

import jax
import jax.numpy as jnp
from jax import lax
from jax.experimental import pallas as pl
from jax.experimental.pallas import tpu as pltpu  # noqa: F401  (TPU backend)


# ----------------------- in-kernel helper functions -------------------------

def _mm(a, b):
    """MXU matmul: bf16 operands, f32 accumulate/output (weights already bf16)."""
    return jnp.dot(a.astype(jnp.bfloat16), b.astype(jnp.bfloat16),
                   preferred_element_type=jnp.float32)


def _add_ln(x, y, g, b, eps=1e-5):
    """LayerNorm(x + y) over the last dim (f32 math, rsqrt on the EUP)."""
    z = x + y
    mu = jnp.mean(z, axis=-1, keepdims=True)
    var = jnp.mean(jnp.square(z - mu), axis=-1, keepdims=True)
    return (z - mu) * lax.rsqrt(var + eps) * g + b


def _split_heads(x, num_heads, head_dim):
    """[T, E] -> head-major [H, T, D] via lane slices stacked on a new
    leading (major) axis — no sublane/lane transposes needed."""
    return jnp.stack(
        [x[:, h * head_dim:(h + 1) * head_dim] for h in range(num_heads)],
        axis=0)


def _mha(q, k, v, wo3, num_heads):
    """Multi-head attention, fused with the output projection.

    q: [T, E] (1/sqrt(D) already folded into the q weights), k/v: [S, E],
    wo3: [H, D, E] bf16 (out-proj weight reshaped head-major).
    Scores / attention / per-head out-proj are 3 batched MXU einsums; the
    head merge is a cheap leading-axis sum (no lane concatenates).
    No masks (matches the reference forward call). Returns [T, E] f32.
    """
    D = q.shape[-1] // num_heads
    qh = _split_heads(q.astype(jnp.bfloat16), num_heads, D)   # [H, T, D]
    kh = _split_heads(k.astype(jnp.bfloat16), num_heads, D)   # [H, S, D]
    vh = _split_heads(v.astype(jnp.bfloat16), num_heads, D)   # [H, S, D]
    s = jnp.einsum('htd,hsd->hts', qh, kh,
                   preferred_element_type=jnp.float32)         # [H, T, S]
    m = jnp.max(s, axis=-1, keepdims=True)
    p = jnp.exp(s - m)
    p = p * pl.reciprocal(jnp.sum(p, axis=-1, keepdims=True), approx=True)
    o = jnp.einsum('hts,hsd->htd', p.astype(jnp.bfloat16), vh,
                   preferred_element_type=jnp.float32)         # [H, T, D]
    per_head = jnp.einsum('htd,hde->hte', o.astype(jnp.bfloat16), wo3,
                          preferred_element_type=jnp.float32)  # [H, T, E]
    return jnp.sum(per_head, axis=0)                           # [T, E]


# ------------------------------ Pallas kernels -------------------------------

def _conv_kernel(p_ref, w_ref, b_ref, o_ref):
    """ReLU(patches @ w + b) — im2col-lowered conv, lane-dense (128) output."""
    o_ref[...] = jnp.maximum(_mm(p_ref[...], w_ref[...]) + b_ref[...], 0.0)


def _fused_kernel(p2_ref, cw_ref, cb_ref, pe_ref, tgt_ref,
                  e_wqkv, e_bqkv, e_wo3, e_bo,
                  e_ln1g, e_ln1b, e_w1, e_b1, e_w2, e_b2, e_ln2g, e_ln2b,
                  d_sa_wqkv, d_sa_bqkv, d_sa_wo3, d_sa_bo,
                  d_ln1g, d_ln1b,
                  d_ca_wq, d_ca_bq, d_ca_wkv, d_ca_bkv, d_ca_wo3, d_ca_bo,
                  d_ln2g, d_ln2b,
                  d_w1, d_b1, d_w2, d_b2, d_ln3g, d_ln3b,
                  head_w, head_b,
                  out_ref, *, num_heads, num_enc, num_dec):
    """Whole transformer in one call:
    conv2(+ReLU)+PE -> encoder x num_enc -> decoder x num_dec -> fused heads.
    Per-layer weights are stacked on a leading L axis; the layer loops are
    statically unrolled so the [S,E]/[T,E] activations stay in VMEM/vregs.
    Dropout = identity (eval semantics); post-norm layers as in PyTorch default.
    """
    E = pe_ref.shape[-1]

    # ---- conv2 (+ReLU) + 2D positional encoding -> feature sequence [S, E]
    x = (jnp.maximum(_mm(p2_ref[...], cw_ref[...]) + cb_ref[...], 0.0)
         + pe_ref[...])

    # ---- transformer encoder stack (statically unrolled)
    for l in range(num_enc):
        qkv = _mm(x, e_wqkv[l]) + e_bqkv[l]                    # [S, 3E]
        q, k, v = qkv[:, :E], qkv[:, E:2 * E], qkv[:, 2 * E:]
        attn = _mha(q, k, v, e_wo3[l], num_heads) + e_bo[l]
        x = _add_ln(x, attn, e_ln1g[l], e_ln1b[l])
        h = jnp.maximum(_mm(x, e_w1[l]) + e_b1[l], 0.0)
        ffn = _mm(h, e_w2[l]) + e_b2[l]
        x = _add_ln(x, ffn, e_ln2g[l], e_ln2b[l])
    mem = x                                                    # encoder memory

    # ---- transformer decoder stack (statically unrolled)
    # TODO(synk): reference forward passes no tgt_mask, so no causal mask here.
    y = tgt_ref[...]
    for l in range(num_dec):
        # self-attention
        qkv = _mm(y, d_sa_wqkv[l]) + d_sa_bqkv[l]
        q, k, v = qkv[:, :E], qkv[:, E:2 * E], qkv[:, 2 * E:]
        sa = _mha(q, k, v, d_sa_wo3[l], num_heads) + d_sa_bo[l]
        y = _add_ln(y, sa, d_ln1g[l], d_ln1b[l])
        # cross-attention over encoder memory
        q = _mm(y, d_ca_wq[l]) + d_ca_bq[l]
        kv = _mm(mem, d_ca_wkv[l]) + d_ca_bkv[l]
        k, v = kv[:, :E], kv[:, E:]
        ca = _mha(q, k, v, d_ca_wo3[l], num_heads) + d_ca_bo[l]
        y = _add_ln(y, ca, d_ln2g[l], d_ln2b[l])
        # feed-forward
        h = jnp.maximum(_mm(y, d_w1[l]) + d_b1[l], 0.0)
        ffn = _mm(h, d_w2[l]) + d_b2[l]
        y = _add_ln(y, ffn, d_ln3g[l], d_ln3b[l])

    # ---- fused, lane-padded (128) classifier + position heads
    out_ref[...] = _mm(y, head_w[...]) + head_b[...]


# ------------------------------ JAX glue -------------------------------------

def im2col_nhwc(x, kh, kw, stride, pad):
    """x: [B,H,W,C] (channels-last) -> patches [B*Ho*Wo, kh*kw*C] (K natural)."""
    x = jnp.pad(x, ((0, 0), (pad, pad), (pad, pad), (0, 0)))
    B, H, W, C = x.shape
    Ho = (H - kh) // stride + 1
    Wo = (W - kw) // stride + 1
    cols = []
    for i in range(kh):
        for j in range(kw):
            cols.append(x[:, i:i + stride * Ho:stride, j:j + stride * Wo:stride, :])
    p = jnp.concatenate(cols, axis=-1)                  # [B, Ho, Wo, kh*kw*C]
    return p.reshape(B * Ho * Wo, kh * kw * C), Ho, Wo


def flatten_conv_weight_nhwc(w):
    """torch-layout conv weight [C_out, C_in, kh, kw] -> [kh*kw*C_in, C_out]
    matching im2col_nhwc's (i, j, c) patch ordering."""
    C_out, C_in, kh, kw = w.shape
    return jnp.transpose(w, (2, 3, 1, 0)).reshape(kh * kw * C_in, C_out)


def positional_encoding_2d(embed_dim, H, W):
    """Deterministic sinusoidal 2D positional encoding, flattened to [H*W, E]."""
    quarter = embed_dim // 4
    div = jnp.exp(jnp.arange(quarter, dtype=jnp.float32)
                  * (-math.log(10000.0) / quarter))
    pos_y = jnp.arange(H, dtype=jnp.float32)[:, None] * div[None, :]
    pos_x = jnp.arange(W, dtype=jnp.float32)[:, None] * div[None, :]
    pe_y = jnp.concatenate([jnp.sin(pos_y), jnp.cos(pos_y)], axis=-1)   # [H, E/2]
    pe_x = jnp.concatenate([jnp.sin(pos_x), jnp.cos(pos_x)], axis=-1)   # [W, E/2]
    pe = jnp.concatenate(
        [jnp.broadcast_to(pe_y[:, None, :], (H, W, embed_dim // 2)),
         jnp.broadcast_to(pe_x[None, :, :], (H, W, embed_dim // 2))],
        axis=-1)                                                        # [H, W, E]
    return pe.reshape(H * W, embed_dim)


def i2c_forward(params, img, tgt, *, num_heads, num_classes, c_mid=16):
    # ---- conv1 (pallas_call #1): channels-last, lane-padded (128) output store
    x = jnp.transpose(img, (0, 2, 3, 1))                        # NCHW -> NHWC (glue)
    p1, Ho, Wo = im2col_nhwc(x, 3, 3, stride=2, pad=1)          # [B*Ho*Wo, 27]
    f1 = pl.pallas_call(
        _conv_kernel,
        out_shape=jax.ShapeDtypeStruct(
            (p1.shape[0], params["conv1_wf"].shape[1]), jnp.float32),
    )(p1, params["conv1_wf"], params["conv1_b"])
    # back to true channel count; stays channels-last for conv2's im2col
    f1 = f1.reshape(img.shape[0], Ho, Wo, -1)[..., :c_mid]      # [B, Ho, Wo, c_mid]

    # ---- conv2 patches + positional encoding (consumed by the fused kernel)
    p2, Ho2, Wo2 = im2col_nhwc(f1, 3, 3, stride=2, pad=1)       # [S, c_mid*9]
    E = tgt.shape[-1]
    pe = positional_encoding_2d(E, Ho2, Wo2)                    # [S, E]

    enc, dec = params["enc"], params["dec"]
    num_enc = enc["wqkv"].shape[0]
    num_dec = dec["sa_wqkv"].shape[0]
    T = tgt.shape[0]
    n_pad = params["head_w"].shape[1]

    # ---- pallas_call #2: conv2+PE + encoder stack + decoder stack + heads
    out = pl.pallas_call(
        functools.partial(_fused_kernel, num_heads=num_heads,
                          num_enc=num_enc, num_dec=num_dec),
        out_shape=jax.ShapeDtypeStruct((T, n_pad), jnp.float32),
    )(p2, params["conv2_wf"], params["conv2_b"], pe, tgt,
      enc["wqkv"], enc["bqkv"], enc["wo3"], enc["bo"],
      enc["ln1_g"], enc["ln1_b"], enc["w1"], enc["b1"], enc["w2"], enc["b2"],
      enc["ln2_g"], enc["ln2_b"],
      dec["sa_wqkv"], dec["sa_bqkv"], dec["sa_wo3"], dec["sa_bo"],
      dec["ln1_g"], dec["ln1_b"],
      dec["ca_wq"], dec["ca_bq"], dec["ca_wkv"], dec["ca_bkv"],
      dec["ca_wo3"], dec["ca_bo"],
      dec["ln2_g"], dec["ln2_b"],
      dec["w1"], dec["b1"], dec["w2"], dec["b2"],
      dec["ln3_g"], dec["ln3_b"],
      params["head_w"], params["head_b"])

    return out[:, :num_classes], out[:, num_classes:num_classes + 2]


# --------------------------- deterministic params ---------------------------

def make_params(key, embed_dim, ff_dim, num_heads, num_enc, num_dec, num_classes):
    keys = iter(jax.random.split(key, 512))
    D = embed_dim // num_heads
    scale = 1.0 / math.sqrt(D)
    bf16 = jnp.bfloat16

    def xavier(shape, fan_in, fan_out):
        bound = math.sqrt(6.0 / (fan_in + fan_out))
        return jax.random.uniform(next(keys), shape, jnp.float32, -bound, bound)

    def lin_w(din, dout):
        return xavier((din, dout), din, dout)

    def self_attn():
        wq = lin_w(embed_dim, embed_dim) * scale      # fold 1/sqrt(D) into q
        wk = lin_w(embed_dim, embed_dim)
        wv = lin_w(embed_dim, embed_dim)
        wqkv = jnp.concatenate([wq, wk, wv], axis=1).astype(bf16)
        bqkv = jnp.zeros((1, 3 * embed_dim), jnp.float32)
        wo3 = lin_w(embed_dim, embed_dim).reshape(num_heads, D, embed_dim).astype(bf16)
        bo = jnp.zeros((1, embed_dim), jnp.float32)
        return wqkv, bqkv, wo3, bo

    def cross_attn():
        wq = (lin_w(embed_dim, embed_dim) * scale).astype(bf16)
        bq = jnp.zeros((1, embed_dim), jnp.float32)
        wk = lin_w(embed_dim, embed_dim)
        wv = lin_w(embed_dim, embed_dim)
        wkv = jnp.concatenate([wk, wv], axis=1).astype(bf16)
        bkv = jnp.zeros((1, 2 * embed_dim), jnp.float32)
        wo3 = lin_w(embed_dim, embed_dim).reshape(num_heads, D, embed_dim).astype(bf16)
        bo = jnp.zeros((1, embed_dim), jnp.float32)
        return wq, bq, wkv, bkv, wo3, bo

    def ln():
        return (jnp.ones((1, embed_dim), jnp.float32),
                jnp.zeros((1, embed_dim), jnp.float32))

    def ffn():
        w1 = lin_w(embed_dim, ff_dim).astype(bf16)
        b1 = jnp.zeros((1, ff_dim), jnp.float32)
        w2 = lin_w(ff_dim, embed_dim).astype(bf16)
        b2 = jnp.zeros((1, embed_dim), jnp.float32)
        return w1, b1, w2, b2

    enc_layers = []
    for _ in range(num_enc):
        wqkv, bqkv, wo3, bo = self_attn()
        g1, be1 = ln(); g2, be2 = ln()
        w1, b1, w2, b2 = ffn()
        enc_layers.append(dict(wqkv=wqkv, bqkv=bqkv, wo3=wo3, bo=bo,
                               ln1_g=g1, ln1_b=be1,
                               w1=w1, b1=b1, w2=w2, b2=b2,
                               ln2_g=g2, ln2_b=be2))
    enc = {k: jnp.stack([lp[k] for lp in enc_layers]) for k in enc_layers[0]}

    dec_layers = []
    for _ in range(num_dec):
        sa_wqkv, sa_bqkv, sa_wo3, sa_bo = self_attn()
        ca_wq, ca_bq, ca_wkv, ca_bkv, ca_wo3, ca_bo = cross_attn()
        g1, be1 = ln(); g2, be2 = ln(); g3, be3 = ln()
        w1, b1, w2, b2 = ffn()
        dec_layers.append(dict(sa_wqkv=sa_wqkv, sa_bqkv=sa_bqkv,
                               sa_wo3=sa_wo3, sa_bo=sa_bo,
                               ln1_g=g1, ln1_b=be1,
                               ca_wq=ca_wq, ca_bq=ca_bq,
                               ca_wkv=ca_wkv, ca_bkv=ca_bkv,
                               ca_wo3=ca_wo3, ca_bo=ca_bo,
                               ln2_g=g2, ln2_b=be2,
                               w1=w1, b1=b1, w2=w2, b2=b2,
                               ln3_g=g3, ln3_b=be3))
    dec = {k: jnp.stack([lp[k] for lp in dec_layers]) for k in dec_layers[0]}

    # TODO(synk): ResNetBackbone / PositionalEncoding2D are undefined in the
    # reference; a deterministic 2-conv backbone + sinusoidal 2D PE stand in
    # with the same interface (features -> [S, embed_dim]).
    c_mid = 16
    conv1_w = xavier((c_mid, 3, 3, 3), 3 * 9, c_mid * 9)
    conv2_w = xavier((embed_dim, c_mid, 3, 3), c_mid * 9, embed_dim * 9)
    conv1_wf = flatten_conv_weight_nhwc(conv1_w)                 # [27, 16]
    conv1_wf = jnp.pad(conv1_wf, ((0, 0), (0, 128 - c_mid))).astype(bf16)  # lane-dense out
    conv1_b = jnp.zeros((1, 128), jnp.float32)
    conv2_wf = flatten_conv_weight_nhwc(conv2_w).astype(bf16)    # [144, 32]
    conv2_b = jnp.zeros((1, embed_dim), jnp.float32)

    # fused, lane-padded output heads: [cls | pos | zero pad] -> 128 lanes
    cls_w = lin_w(embed_dim, num_classes)
    pos_w = lin_w(embed_dim, 2)
    n_out = num_classes + 2
    n_pad = 128 * ((n_out + 127) // 128)
    head_w = jnp.zeros((embed_dim, n_pad), jnp.float32)
    head_w = head_w.at[:, :num_classes].set(cls_w)
    head_w = head_w.at[:, num_classes:n_out].set(pos_w)
    head_w = head_w.astype(bf16)
    head_b = jnp.zeros((1, n_pad), jnp.float32)

    return dict(conv1_wf=conv1_wf, conv1_b=conv1_b,
                conv2_wf=conv2_wf, conv2_b=conv2_b,
                enc=enc, dec=dec, head_w=head_w, head_b=head_b)


# ---------------------------------- main -------------------------------------

if __name__ == "__main__":
    # small, consistent shapes: img [1,3,16,16] -> feature seq [16, 32]; tgt [8, 32]
    EMBED, HEADS, FF, N_ENC, N_DEC, N_CLASSES = 32, 4, 64, 3, 1, 37
    TGT_LEN = 8

    root = jax.random.PRNGKey(0)
    k_params, k_img, k_tgt = jax.random.split(root, 3)
    params = make_params(k_params, EMBED, FF, HEADS, N_ENC, N_DEC, N_CLASSES)
    img = jax.random.normal(k_img, (1, 3, 16, 16), jnp.float32)
    tgt = jax.random.normal(k_tgt, (TGT_LEN, EMBED), jnp.float32)

    fwd = jax.jit(functools.partial(i2c_forward, num_heads=HEADS,
                                    num_classes=N_CLASSES, c_mid=16))
    char_class_pred, char_position_pred = fwd(params, img, tgt)
    jax.block_until_ready((char_class_pred, char_position_pred))

    assert char_class_pred.shape == (TGT_LEN, N_CLASSES)
    assert char_position_pred.shape == (TGT_LEN, 2)
    print("KERNEL_OK")
</pallas_src>

<mosaic_0001>
module attributes {stable_mosaic.version = 11 : i64} {
  func.func @_conv_kernel(%arg0: memref<64x27xf32, #tpu.memory_space<vmem>>, %arg1: memref<27x128xbf16, #tpu.memory_space<vmem>>, %arg2: memref<1x128xf32, #tpu.memory_space<vmem>>, %arg3: memref<64x128xf32, #tpu.memory_space<vmem>>) attributes {dimension_semantics = [], scalar_prefetch = 0 : i64, scratch_operands = 0 : i64, tpu.core_type = #tpu.core_type<tc>} {
    %c0 = arith.constant 0 : index
    %c0_0 = arith.constant 0 : index
    %0 = vector.load %arg0[%c0, %c0_0] : memref<64x27xf32, #tpu.memory_space<vmem>>, vector<64x27xf32>
    %c0_1 = arith.constant 0 : index
    %c0_2 = arith.constant 0 : index
    %1 = vector.load %arg1[%c0_1, %c0_2] : memref<27x128xbf16, #tpu.memory_space<vmem>>, vector<27x128xbf16>
    %2 = arith.truncf %0 : vector<64x27xf32> to vector<64x27xbf16>
    %cst = arith.constant dense<0.000000e+00> : vector<64x128xf32>
    %3 = tpu.matmul %2, %1, %cst {dimension_numbers = #tpu.dot_dimension_numbers<[1], [0], [0], [1], [0, 0, 1, 1], [], []>} : vector<64x27xbf16>, vector<27x128xbf16>, vector<64x128xf32> -> vector<64x128xf32>
    %c0_3 = arith.constant 0 : index
    %c0_4 = arith.constant 0 : index
    %4 = vector.load %arg2[%c0_3, %c0_4] : memref<1x128xf32, #tpu.memory_space<vmem>>, vector<1x128xf32>
    %5 = vector.broadcast %4 : vector<1x128xf32> to vector<64x128xf32>
    %6 = arith.addf %3, %5 : vector<64x128xf32>
    %cst_5 = arith.constant 0.000000e+00 : f32
    %7 = vector.broadcast %cst_5 : f32 to vector<64x128xf32>
    %8 = arith.maximumf %6, %7 : vector<64x128xf32>
    %c0_6 = arith.constant 0 : index
    %c0_7 = arith.constant 0 : index
    %9 = vector.load %arg3[%c0_6, %c0_7] : memref<64x128xf32, #tpu.memory_space<vmem>>, vector<64x128xf32>
    tpu.vector_store %arg3[%c0_6, %c0_7], %8 {strides = array<i32>} : memref<64x128xf32, #tpu.memory_space<vmem>>, vector<64x128xf32>,
    return
  }
}

module attributes {stable_mosaic.version = 11 : i64} {
  func.func @_fused_kernel(%arg0: memref<16x144xf32, #tpu.memory_space<vmem>>, %arg1: memref<144x32xbf16, #tpu.memory_space<vmem>>, %arg2: memref<1x32xf32, #tpu.memory_space<vmem>>, %arg3: memref<16x32xf32, #tpu.memory_space<vmem>>, %arg4: memref<8x32xf32, #tpu.memory_space<vmem>>, %arg5: memref<3x32x96xbf16, #tpu.memory_space<vmem>>, %arg6: memref<3x1x96xf32, #tpu.memory_space<vmem>>, %arg7: memref<3x4x8x32xbf16, #tpu.memory_space<vmem>>, %arg8: memref<3x1x32xf32, #tpu.memory_space<vmem>>, %arg9: memref<3x1x32xf32, #tpu.memory_space<vmem>>, %arg10: memref<3x1x32xf32, #tpu.memory_space<vmem>>, %arg11: memref<3x32x64xbf16, #tpu.memory_space<vmem>>, %arg12: memref<3x1x64xf32, #tpu.memory_space<vmem>>, %arg13: memref<3x64x32xbf16, #tpu.memory_space<vmem>>, %arg14: memref<3x1x32xf32, #tpu.memory_space<vmem>>, %arg15: memref<3x1x32xf32, #tpu.memory_space<vmem>>, %arg16: memref<3x1x32xf32, #tpu.memory_space<vmem>>, %arg17: memref<1x32x96xbf16, #tpu.memory_space<vmem>>, %arg18: memref<1x1x96xf32, #tpu.memory_space<vmem>>, %arg19: memref<1x4x8x32xbf16, #tpu.memory_space<vmem>>, %arg20: memref<1x1x32xf32, #tpu.memory_space<vmem>>, %arg21: memref<1x1x32xf32, #tpu.memory_space<vmem>>, %arg22: memref<1x1x32xf32, #tpu.memory_space<vmem>>, %arg23: memref<1x32x32xbf16, #tpu.memory_space<vmem>>, %arg24: memref<1x1x32xf32, #tpu.memory_space<vmem>>, %arg25: memref<1x32x64xbf16, #tpu.memory_space<vmem>>, %arg26: memref<1x1x64xf32, #tpu.memory_space<vmem>>, %arg27: memref<1x4x8x32xbf16, #tpu.memory_space<vmem>>, %arg28: memref<1x1x32xf32, #tpu.memory_space<vmem>>, %arg29: memref<1x1x32xf32, #tpu.memory_space<vmem>>, %arg30: memref<1x1x32xf32, #tpu.memory_space<vmem>>, %arg31: memref<1x32x64xbf16, #tpu.memory_space<vmem>>, %arg32: memref<1x1x64xf32, #tpu.memory_space<vmem>>, %arg33: memref<1x64x32xbf16, #tpu.memory_space<vmem>>, %arg34: memref<1x1x32xf32, #tpu.memory_space<vmem>>, %arg35: memref<1x1x32xf32, #tpu.memory_space<vmem>>, %arg36: memref<1x1x32xf32, #tpu.memory_space<vmem>>, %arg37: memref<32x128xbf16, #tpu.memory_space<vmem>>, %arg38: memref<1x128xf32, #tpu.memory_space<vmem>>, %arg39: memref<8x128xf32, #tpu.memory_space<vmem>>) attributes {dimension_semantics = [], scalar_prefetch = 0 : i64, scratch_operands = 0 : i64, tpu.core_type = #tpu.core_type<tc>} {
    %c0 = arith.constant 0 : index
    %c0_0 = arith.constant 0 : index
    %0 = vector.load %arg0[%c0, %c0_0] : memref<16x144xf32, #tpu.memory_space<vmem>>, vector<16x144xf32>
    %c0_1 = arith.constant 0 : index
    %c0_2 = arith.constant 0 : index
    %1 = vector.load %arg1[%c0_1, %c0_2] : memref<144x32xbf16, #tpu.memory_space<vmem>>, vector<144x32xbf16>
    %2 = arith.truncf %0 : vector<16x144xf32> to vector<16x144xbf16>
    %cst = arith.constant dense<0.000000e+00> : vector<16x32xf32>
    %3 = tpu.matmul %2, %1, %cst {dimension_numbers = #tpu.dot_dimension_numbers<[1], [0], [0], [1], [0, 0, 1, 1], [], []>} : vector<16x144xbf16>, vector<144x32xbf16>, vector<16x32xf32> -> vector<16x32xf32>
    %c0_3 = arith.constant 0 : index
    %c0_4 = arith.constant 0 : index
    %4 = vector.load %arg2[%c0_3, %c0_4] : memref<1x32xf32, #tpu.memory_space<vmem>>, vector<1x32xf32>
    %5 = vector.broadcast %4 : vector<1x32xf32> to vector<16x32xf32>
    %6 = arith.addf %3, %5 : vector<16x32xf32>
    %cst_5 = arith.constant 0.000000e+00 : f32
    %7 = vector.broadcast %cst_5 : f32 to vector<16x32xf32>
    %8 = arith.maximumf %6, %7 : vector<16x32xf32>
    %c0_6 = arith.constant 0 : index
    %c0_7 = arith.constant 0 : index
    %9 = vector.load %arg3[%c0_6, %c0_7] : memref<16x32xf32, #tpu.memory_space<vmem>>, vector<16x32xf32>
    %10 = arith.addf %8, %9 : vector<16x32xf32>
    %c0_8 = arith.constant 0 : index
    %c0_9 = arith.constant 0 : index
    %c0_10 = arith.constant 0 : index
    %11 = vector.load %arg5[%c0_8, %c0_9, %c0_10] : memref<3x32x96xbf16, #tpu.memory_space<vmem>>, vector<1x32x96xbf16>
    %12 = vector.shape_cast %11 : vector<1x32x96xbf16> to vector<32x96xbf16>
    %13 = arith.truncf %10 : vector<16x32xf32> to vector<16x32xbf16>
    %cst_11 = arith.constant dense<0.000000e+00> : vector<16x96xf32>
    %14 = tpu.matmul %13, %12, %cst_11 {dimension_numbers = #tpu.dot_dimension_numbers<[1], [0], [0], [1], [0, 0, 1, 1], [], []>} : vector<16x32xbf16>, vector<32x96xbf16>, vector<16x96xf32> -> vector<16x96xf32>
    %c0_12 = arith.constant 0 : index
    %c0_13 = arith.constant 0 : index
    %c0_14 = arith.constant 0 : index
    %15 = vector.load %arg6[%c0_12, %c0_13, %c0_14] : memref<3x1x96xf32, #tpu.memory_space<vmem>>, vector<1x1x96xf32>
    %16 = vector.shape_cast %15 : vector<1x1x96xf32> to vector<1x96xf32>
    %17 = vector.broadcast %16 : vector<1x96xf32> to vector<16x96xf32>
    %18 = arith.addf %14, %17 : vector<16x96xf32>
    %19 = vector.extract_strided_slice %18 {offsets = [0, 0], sizes = [16, 32], strides = [1, 1]} : vector<16x96xf32> to vector<16x32xf32>
    %20 = vector.extract_strided_slice %18 {offsets = [0, 32], sizes = [16, 32], strides = [1, 1]} : vector<16x96xf32> to vector<16x32xf32>
    %21 = vector.extract_strided_slice %18 {offsets = [0, 64], sizes = [16, 32], strides = [1, 1]} : vector<16x96xf32> to vector<16x32xf32>
    %c0_15 = arith.constant 0 : index
    %c0_16 = arith.constant 0 : index
    %c0_17 = arith.constant 0 : index
    %c0_18 = arith.constant 0 : index
    %22 = vector.load %arg7[%c0_15, %c0_16, %c0_17, %c0_18] : memref<3x4x8x32xbf16, #tpu.memory_space<vmem>>, vector<1x4x8x32xbf16>
    %23 = vector.shape_cast %22 : vector<1x4x8x32xbf16> to vector<4x8x32xbf16>
    %24 = arith.truncf %19 : vector<16x32xf32> to vector<16x32xbf16>
    %25 = vector.extract_strided_slice %24 {offsets = [0, 0], sizes = [16, 8], strides = [1, 1]} : vector<16x32xbf16> to vector<16x8xbf16>
    %26 = vector.extract_strided_slice %24 {offsets = [0, 8], sizes = [16, 8], strides = [1, 1]} : vector<16x32xbf16> to vector<16x8xbf16>
    %27 = vector.extract_strided_slice %24 {offsets = [0, 16], sizes = [16, 8], strides = [1, 1]} : vector<16x32xbf16> to vector<16x8xbf16>
    %28 = vector.extract_strided_slice %24 {offsets = [0, 24], sizes = [16, 8], strides = [1, 1]} : vector<16x32xbf16> to vector<16x8xbf16>
    %29 = vector.shape_cast %25 : vector<16x8xbf16> to vector<1x16x8xbf16>
    %30 = vector.shape_cast %26 : vector<16x8xbf16> to vector<1x16x8xbf16>
    %31 = vector.shape_cast %27 : vector<16x8xbf16> to vector<1x16x8xbf16>
    %32 = vector.shape_cast %28 : vector<16x8xbf16> to vector<1x16x8xbf16>
    %33 = tpu.concatenate %29, %30, %31, %32 in 0 : vector<1x16x8xbf16>, vector<1x16x8xbf16>, vector<1x16x8xbf16>, vector<1x16x8xbf16> -> vector<4x16x8xbf16>
    %34 = arith.truncf %20 : vector<16x32xf32> to vector<16x32xbf16>
    %35 = vector.extract_strided_slice %34 {offsets = [0, 0], sizes = [16, 8], strides = [1, 1]} : vector<16x32xbf16> to vector<16x8xbf16>
    %36 = vector.extract_strided_slice %34 {offsets = [0, 8], sizes = [16, 8], strides = [1, 1]} : vector<16x32xbf16> to vector<16x8xbf16>
    %37 = vector.extract_strided_slice %34 {offsets = [0, 16], sizes = [16, 8], strides = [1, 1]} : vector<16x32xbf16> to vector<16x8xbf16>
    %38 = vector.extract_strided_slice %34 {offsets = [0, 24], sizes = [16, 8], strides = [1, 1]} : vector<16x32xbf16> to vector<16x8xbf16>
    %39 = vector.shape_cast %35 : vector<16x8xbf16> to vector<1x16x8xbf16>
    %40 = vector.shape_cast %36 : vector<16x8xbf16> to vector<1x16x8xbf16>
    %41 = vector.shape_cast %37 : vector<16x8xbf16> to vector<1x16x8xbf16>
    %42 = vector.shape_cast %38 : vector<16x8xbf16> to vector<1x16x8xbf16>
    %43 = tpu.concatenate %39, %40, %41, %42 in 0 : vector<1x16x8xbf16>, vector<1x16x8xbf16>, vector<1x16x8xbf16>, vector<1x16x8xbf16> -> vector<4x16x8xbf16>
    %44 = arith.truncf %21 : vector<16x32xf32> to vector<16x32xbf16>
    %45 = vector.extract_strided_slice %44 {offsets = [0, 0], sizes = [16, 8], strides = [1, 1]} : vector<16x32xbf16> to vector<16x8xbf16>
    %46 = vector.extract_strided_slice %44 {offsets = [0, 8], sizes = [16, 8], strides = [1, 1]} : vector<16x32xbf16> to vector<16x8xbf16>
    %47 = vector.extract_strided_slice %44 {offsets = [0, 16], sizes = [16, 8], strides = [1, 1]} : vector<16x32xbf16> to vector<16x8xbf16>
    %48 = vector.extract_strided_slice %44 {offsets = [0, 24], sizes = [16, 8], strides = [1, 1]} : vector<16x32xbf16> to vector<16x8xbf16>
    %49 = vector.shape_cast %45 : vector<16x8xbf16> to vector<1x16x8xbf16>
    %50 = vector.shape_cast %46 : vector<16x8xbf16> to vector<1x16x8xbf16>
    %51 = vector.shape_cast %47 : vector<16x8xbf16> to vector<1x16x8xbf16>
    %52 = vector.shape_cast %48 : vector<16x8xbf16> to vector<1x16x8xbf16>
    %53 = tpu.concatenate %49, %50, %51, %52 in 0 : vector<1x16x8xbf16>, vector<1x16x8xbf16>, vector<1x16x8xbf16>, vector<1x16x8xbf16> -> vector<4x16x8xbf16>
    "tpu.trace_start"() <{level = 10 : i32, message = "htd,hsd->hts"}> : () -> ()
    %cst_19 = arith.constant dense<0.000000e+00> : vector<4x16x16xf32>
    %54 = tpu.matmul %33, %43, %cst_19 {dimension_numbers = #tpu.dot_dimension_numbers<[2], [2], [1], [1], [0, 0, 0, 1, 1, 1], [0], [0]>} : vector<4x16x8xbf16>, vector<4x16x8xbf16>, vector<4x16x16xf32> -> vector<4x16x16xf32>
    "tpu.trace_stop"() : () -> ()
    %cst_20 = arith.constant dense<0xFF800000> : vector<4x16xf32>
    %55 = vector.multi_reduction <maximumf>, %54, %cst_20 [2] : vector<4x16x16xf32> to vector<4x16xf32>
    %56 = vector.shape_cast %55 : vector<4x16xf32> to vector<4x16x1xf32>
    %57 = vector.broadcast %56 : vector<4x16x1xf32> to vector<4x16x16xf32>
    %58 = arith.subf %54, %57 : vector<4x16x16xf32>
    %59 = math.exp %58 : vector<4x16x16xf32>
    %cst_21 = arith.constant dense<0.000000e+00> : vector<4x16xf32>
    %60 = vector.multi_reduction <add>, %59, %cst_21 [2] : vector<4x16x16xf32> to vector<4x16xf32>
    %61 = vector.shape_cast %60 : vector<4x16xf32> to vector<4x16x1xf32>
    %62 = tpu.reciprocal %61 {approx = true} : vector<4x16x1xf32> -> vector<4x16x1xf32>
    %63 = vector.broadcast %62 : vector<4x16x1xf32> to vector<4x16x16xf32>
    %64 = arith.mulf %59, %63 : vector<4x16x16xf32>
    %65 = arith.truncf %64 : vector<4x16x16xf32> to vector<4x16x16xbf16>
    "tpu.trace_start"() <{level = 10 : i32, message = "hts,hsd->htd"}> : () -> ()
    %cst_22 = arith.constant dense<0.000000e+00> : vector<4x16x8xf32>
    %66 = tpu.matmul %65, %53, %cst_22 {dimension_numbers = #tpu.dot_dimension_numbers<[2], [1], [1], [2], [0, 0, 0, 1, 1, 2], [0], [0]>} : vector<4x16x16xbf16>, vector<4x16x8xbf16>, vector<4x16x8xf32> -> vector<4x16x8xf32>
    "tpu.trace_stop"() : () -> ()
    %67 = arith.truncf %66 : vector<4x16x8xf32> to vector<4x16x8xbf16>
    "tpu.trace_start"() <{level = 10 : i32, message = "htd,hde->hte"}> : () -> ()
    %cst_23 = arith.constant dense<0.000000e+00> : vector<4x16x32xf32>
    %68 = tpu.matmul %67, %23, %cst_23 {dimension_numbers = #tpu.dot_dimension_numbers<[2], [1], [1], [2], [0, 0, 0, 1, 1, 2], [0], [0]>} : vector<4x16x8xbf16>, vector<4x8x32xbf16>, vector<4x16x32xf32> -> vector<4x16x32xf32>
    "tpu.trace_stop"() : () -> ()
    %cst_24 = arith.constant dense<0.000000e+00> : vector<16x32xf32>
    %69 = vector.multi_reduction <add>, %68, %cst_24 [0] : vector<4x16x32xf32> to vector<16x32xf32>
    %c0_25 = arith.constant 0 : index
    %c0_26 = arith.constant 0 : index
    %c0_27 = arith.constant 0 : index
    %70 = vector.load %arg8[%c0_25, %c0_26, %c0_27] : memref<3x1x32xf32, #tpu.memory_space<vmem>>, vector<1x1x32xf32>
    %71 = vector.shape_cast %70 : vector<1x1x32xf32> to vector<1x32xf32>
    %72 = vector.broadcast %71 : vector<1x32xf32> to vector<16x32xf32>
    %73 = arith.addf %69, %72 : vector<16x32xf32>
    %c0_28 = arith.constant 0 : index
    %c0_29 = arith.constant 0 : index
    %c0_30 = arith.constant 0 : index
    %74 = vector.load %arg9[%c0_28, %c0_29, %c0_30] : memref<3x1x32xf32, #tpu.memory_space<vmem>>, vector<1x1x32xf32>
    %75 = vector.shape_cast %74 : vector<1x1x32xf32> to vector<1x32xf32>
    %c0_31 = arith.constant 0 : index
    %c0_32 = arith.constant 0 : index
    %c0_33 = arith.constant 0 : index
    %76 = vector.load %arg10[%c0_31, %c0_32, %c0_33] : memref<3x1x32xf32, #tpu.memory_space<vmem>>, vector<1x1x32xf32>
    %77 = vector.shape_cast %76 : vector<1x1x32xf32> to vector<1x32xf32>
    %78 = arith.addf %10, %73 : vector<16x32xf32>
    %cst_34 = arith.constant dense<0.000000e+00> : vector<16xf32>
    %79 = vector.multi_reduction <add>, %78, %cst_34 [1] : vector<16x32xf32> to vector<16xf32>
    %80 = vector.shape_cast %79 : vector<16xf32> to vector<16x1xf32>
    %cst_35 = arith.constant 3.200000e+01 : f32
    %81 = vector.broadcast %cst_35 : f32 to vector<16x1xf32>
    %82 = arith.divf %80, %81 : vector<16x1xf32>
    %83 = vector.broadcast %82 : vector<16x1xf32> to vector<16x32xf32>
    %84 = arith.subf %78, %83 : vector<16x32xf32>
    %85 = arith.mulf %84, %84 : vector<16x32xf32>
    %cst_36 = arith.constant dense<0.000000e+00> : vector<16xf32>
    %86 = vector.multi_reduction <add>, %85, %cst_36 [1] : vector<16x32xf32> to vector<16xf32>
    %87 = vector.shape_cast %86 : vector<16xf32> to vector<16x1xf32>
    %cst_37 = arith.constant 3.200000e+01 : f32
    %88 = vector.broadcast %cst_37 : f32 to vector<16x1xf32>
    %89 = arith.divf %87, %88 : vector<16x1xf32>
    %90 = vector.broadcast %82 : vector<16x1xf32> to vector<16x32xf32>
    %91 = arith.subf %78, %90 : vector<16x32xf32>
    %cst_38 = arith.constant 9.99999974E-6 : f32
    %92 = vector.broadcast %cst_38 : f32 to vector<16x1xf32>
    %93 = arith.addf %89, %92 : vector<16x1xf32>
    %94 = math.rsqrt %93 : vector<16x1xf32>
    %95 = vector.broadcast %94 : vector<16x1xf32> to vector<16x32xf32>
    %96 = arith.mulf %91, %95 : vector<16x32xf32>
    %97 = vector.broadcast %75 : vector<1x32xf32> to vector<16x32xf32>
    %98 = arith.mulf %96, %97 : vector<16x32xf32>
    %99 = vector.broadcast %77 : vector<1x32xf32> to vector<16x32xf32>
    %100 = arith.addf %98, %99 : vector<16x32xf32>
    %c0_39 = arith.constant 0 : index
    %c0_40 = arith.constant 0 : index
    %c0_41 = arith.constant 0 : index
    %101 = vector.load %arg11[%c0_39, %c0_40, %c0_41] : memref<3x32x64xbf16, #tpu.memory_space<vmem>>, vector<1x32x64xbf16>
    %102 = vector.shape_cast %101 : vector<1x32x64xbf16> to vector<32x64xbf16>
    %103 = arith.truncf %100 : vector<16x32xf32> to vector<16x32xbf16>
    %cst_42 = arith.constant dense<0.000000e+00> : vector<16x64xf32>
    %104 = tpu.matmul %103, %102, %cst_42 {dimension_numbers = #tpu.dot_dimension_numbers<[1], [0], [0], [1], [0, 0, 1, 1], [], []>} : vector<16x32xbf16>, vector<32x64xbf16>, vector<16x64xf32> -> vector<16x64xf32>
    %c0_43 = arith.constant 0 : index
    %c0_44 = arith.constant 0 : index
    %c0_45 = arith.constant 0 : index
    %105 = vector.load %arg12[%c0_43, %c0_44, %c0_45] : memref<3x1x64xf32, #tpu.memory_space<vmem>>, vector<1x1x64xf32>
    %106 = vector.shape_cast %105 : vector<1x1x64xf32> to vector<1x64xf32>
    %107 = vector.broadcast %106 : vector<1x64xf32> to vector<16x64xf32>
    %108 = arith.addf %104, %107 : vector<16x64xf32>
    %cst_46 = arith.constant 0.000000e+00 : f32
    %109 = vector.broadcast %cst_46 : f32 to vector<16x64xf32>
    %110 = arith.maximumf %108, %109 : vector<16x64xf32>
    %c0_47 = arith.constant 0 : index
    %c0_48 = arith.constant 0 : index
    %c0_49 = arith.constant 0 : index
    %111 = vector.load %arg13[%c0_47, %c0_48, %c0_49] : memref<3x64x32xbf16, #tpu.memory_space<vmem>>, vector<1x64x32xbf16>
    %112 = vector.shape_cast %111 : vector<1x64x32xbf16> to vector<64x32xbf16>
    %113 = arith.truncf %110 : vector<16x64xf32> to vector<16x64xbf16>
    %cst_50 = arith.constant dense<0.000000e+00> : vector<16x32xf32>
    %114 = tpu.matmul %113, %112, %cst_50 {dimension_numbers = #tpu.dot_dimension_numbers<[1], [0], [0], [1], [0, 0, 1, 1], [], []>} : vector<16x64xbf16>, vector<64x32xbf16>, vector<16x32xf32> -> vector<16x32xf32>
    %c0_51 = arith.constant 0 : index
    %c0_52 = arith.constant 0 : index
    %c0_53 = arith.constant 0 : index
    %115 = vector.load %arg14[%c0_51, %c0_52, %c0_53] : memref<3x1x32xf32, #tpu.memory_space<vmem>>, vector<1x1x32xf32>
    %116 = vector.shape_cast %115 : vector<1x1x32xf32> to vector<1x32xf32>
    %117 = vector.broadcast %116 : vector<1x32xf32> to vector<16x32xf32>
    %118 = arith.addf %114, %117 : vector<16x32xf32>
    %c0_54 = arith.constant 0 : index
    %c0_55 = arith.constant 0 : index
    %c0_56 = arith.constant 0 : index
    %119 = vector.load %arg15[%c0_54, %c0_55, %c0_56] : memref<3x1x32xf32, #tpu.memory_space<vmem>>, vector<1x1x32xf32>
    %120 = vector.shape_cast %119 : vector<1x1x32xf32> to vector<1x32xf32>
    %c0_57 = arith.constant 0 : index
    %c0_58 = arith.constant 0 : index
    %c0_59 = arith.constant 0 : index
    %121 = vector.load %arg16[%c0_57, %c0_58, %c0_59] : memref<3x1x32xf32, #tpu.memory_space<vmem>>, vector<1x1x32xf32>
    %122 = vector.shape_cast %121 : vector<1x1x32xf32> to vector<1x32xf32>
    %123 = arith.addf %100, %118 : vector<16x32xf32>
    %cst_60 = arith.constant dense<0.000000e+00> : vector<16xf32>
    %124 = vector.multi_reduction <add>, %123, %cst_60 [1] : vector<16x32xf32> to vector<16xf32>
    %125 = vector.shape_cast %124 : vector<16xf32> to vector<16x1xf32>
    %cst_61 = arith.constant 3.200000e+01 : f32
    %126 = vector.broadcast %cst_61 : f32 to vector<16x1xf32>
    %127 = arith.divf %125, %126 : vector<16x1xf32>
    %128 = vector.broadcast %127 : vector<16x1xf32> to vector<16x32xf32>
    %129 = arith.subf %123, %128 : vector<16x32xf32>
    %130 = arith.mulf %129, %129 : vector<16x32xf32>
    %cst_62 = arith.constant dense<0.000000e+00> : vector<16xf32>
    %131 = vector.multi_reduction <add>, %130, %cst_62 [1] : vector<16x32xf32> to vector<16xf32>
    %132 = vector.shape_cast %131 : vector<16xf32> to vector<16x1xf32>
    %cst_63 = arith.constant 3.200000e+01 : f32
    %133 = vector.broadcast %cst_63 : f32 to vector<16x1xf32>
    %134 = arith.divf %132, %133 : vector<16x1xf32>
    %135 = vector.broadcast %127 : vector<16x1xf32> to vector<16x32xf32>
    %136 = arith.subf %123, %135 : vector<16x32xf32>
    %cst_64 = arith.constant 9.99999974E-6 : f32
    %137 = vector.broadcast %cst_64 : f32 to vector<16x1xf32>
    %138 = arith.addf %134, %137 : vector<16x1xf32>
    %139 = math.rsqrt %138 : vector<16x1xf32>
    %140 = vector.broadcast %139 : vector<16x1xf32> to vector<16x32xf32>
    %141 = arith.mulf %136, %140 : vector<16x32xf32>
    %142 = vector.broadcast %120 : vector<1x32xf32> to vector<16x32xf32>
    %143 = arith.mulf %141, %142 : vector<16x32xf32>
    %144 = vector.broadcast %122 : vector<1x32xf32> to vector<16x32xf32>
    %145 = arith.addf %143, %144 : vector<16x32xf32>
    %c1 = arith.constant 1 : index
    %c0_65 = arith.constant 0 : index
    %c0_66 = arith.constant 0 : index
    %146 = vector.load %arg5[%c1, %c0_65, %c0_66] : memref<3x32x96xbf16, #tpu.memory_space<vmem>>, vector<1x32x96xbf16>
    %147 = vector.shape_cast %146 : vector<1x32x96xbf16> to vector<32x96xbf16>
    %148 = arith.truncf %145 : vector<16x32xf32> to vector<16x32xbf16>
    %cst_67 = arith.constant dense<0.000000e+00> : vector<16x96xf32>
    %149 = tpu.matmul %148, %147, %cst_67 {dimension_numbers = #tpu.dot_dimension_numbers<[1], [0], [0], [1], [0, 0, 1, 1], [], []>} : vector<16x32xbf16>, vector<32x96xbf16>, vector<16x96xf32> -> vector<16x96xf32>
    %c1_68 = arith.constant 1 : index
    %c0_69 = arith.constant 0 : index
    %c0_70 = arith.constant 0 : index
    %150 = vector.load %arg6[%c1_68, %c0_69, %c0_70] : memref<3x1x96xf32, #tpu.memory_space<vmem>>, vector<1x1x96xf32>
    %151 = vector.shape_cast %150 : vector<1x1x96xf32> to vector<1x96xf32>
    %152 = vector.broadcast %151 : vector<1x96xf32> to vector<16x96xf32>
    %153 = arith.addf %149, %152 : vector<16x96xf32>
    %154 = vector.extract_strided_slice %153 {offsets = [0, 0], sizes = [16, 32], strides = [1, 1]} : vector<16x96xf32> to vector<16x32xf32>
    %155 = vector.extract_strided_slice %153 {offsets = [0, 32], sizes = [16, 32], strides = [1, 1]} : vector<16x96xf32> to vector<16x32xf32>
    %156 = vector.extract_strided_slice %153 {offsets = [0, 64], sizes = [16, 32], strides = [1, 1]} : vector<16x96xf32> to vector<16x32xf32>
    %c1_71 = arith.constant 1 : index
    %c0_72 = arith.constant 0 : index
    %c0_73 = arith.constant 0 : index
    %c0_74 = arith.constant 0 : index
    %157 = vector.load %arg7[%c1_71, %c0_72, %c0_73, %c0_74] : memref<3x4x8x32xbf16, #tpu.memory_space<vmem>>, vector<1x4x8x32xbf16>
    %158 = vector.shape_cast %157 : vector<1x4x8x32xbf16> to vector<4x8x32xbf16>
    %159 = arith.truncf %154 : vector<16x32xf32> to vector<16x32xbf16>
    %160 = vector.extract_strided_slice %159 {offsets = [0, 0], sizes = [16, 8], strides = [1, 1]} : vector<16x32xbf16> to vector<16x8xbf16>
    %161 = vector.extract_strided_slice %159 {offsets = [0, 8], sizes = [16, 8], strides = [1, 1]} : vector<16x32xbf16> to vector<16x8xbf16>
    %162 = vector.extract_strided_slice %159 {offsets = [0, 16], sizes = [16, 8], strides = [1, 1]} : vector<16x32xbf16> to vector<16x8xbf16>
    %163 = vector.extract_strided_slice %159 {offsets = [0, 24], sizes = [16, 8], strides = [1, 1]} : vector<16x32xbf16> to vector<16x8xbf16>
    %164 = vector.shape_cast %160 : vector<16x8xbf16> to vector<1x16x8xbf16>
    %165 = vector.shape_cast %161 : vector<16x8xbf16> to vector<1x16x8xbf16>
    %166 = vector.shape_cast %162 : vector<16x8xbf16> to vector<1x16x8xbf16>
    %167 = vector.shape_cast %163 : vector<16x8xbf16> to vector<1x16x8xbf16>
    %168 = tpu.concatenate %164, %165, %166, %167 in 0 : vector<1x16x8xbf16>, vector<1x16x8xbf16>, vector<1x16x8xbf16>, vector<1x16x8xbf16> -> vector<4x16x8xbf16>
    %169 = arith.truncf %155 : vector<16x32xf32> to vector<16x32xbf16>
    %170 = vector.extract_strided_slice %169 {offsets = [0, 0], sizes = [16, 8], strides = [1, 1]} : vector<16x32xbf16> to vector<16x8xbf16>
    %171 = vector.extract_strided_slice %169 {offsets = [0, 8], sizes = [16, 8], strides = [1, 1]} : vector<16x32xbf16> to vector<16x8xbf16>
    %172 = vector.extract_strided_slice %169 {offsets = [0, 16], sizes = [16, 8], strides = [1, 1]} : vector<16x32xbf16> to vector<16x8xbf16>
    %173 = vector.extract_strided_slice %169 {offsets = [0, 24], sizes = [16, 8], strides = [1, 1]} : vector<16x32xbf16> to vector<16x8xbf16>
    %174 = vector.shape_cast %170 : vector<16x8xbf16> to vector<1x16x8xbf16>
    %175 = vector.shape_cast %171 : vector<16x8xbf16> to vector<1x16x8xbf16>
    %176 = vector.shape_cast %172 : vector<16x8xbf16> to vector<1x16x8xbf16>
    %177 = vector.shape_cast %173 : vector<16x8xbf16> to vector<1x16x8xbf16>
    %178 = tpu.concatenate %174, %175, %176, %177 in 0 : vector<1x16x8xbf16>, vector<1x16x8xbf16>, vector<1x16x8xbf16>, vector<1x16x8xbf16> -> vector<4x16x8xbf16>
    %179 = arith.truncf %156 : vector<16x32xf32> to vector<16x32xbf16>
    %180 = vector.extract_strided_slice %179 {offsets = [0, 0], sizes = [16, 8], strides = [1, 1]} : vector<16x32xbf16> to vector<16x8xbf16>
    %181 = vector.extract_strided_slice %179 {offsets = [0, 8], sizes = [16, 8], strides = [1, 1]} : vector<16x32xbf16> to vector<16x8xbf16>
    %182 = vector.extract_strided_slice %179 {offsets = [0, 16], sizes = [16, 8], strides = [1, 1]} : vector<16x32xbf16> to vector<16x8xbf16>
    %183 = vector.extract_strided_slice %179 {offsets = [0, 24], sizes = [16, 8], strides = [1, 1]} : vector<16x32xbf16> to vector<16x8xbf16>
    %184 = vector.shape_cast %180 : vector<16x8xbf16> to vector<1x16x8xbf16>
    %185 = vector.shape_cast %181 : vector<16x8xbf16> to vector<1x16x8xbf16>
    %186 = vector.shape_cast %182 : vector<16x8xbf16> to vector<1x16x8xbf16>
    %187 = vector.shape_cast %183 : vector<16x8xbf16> to vector<1x16x8xbf16>
    %188 = tpu.concatenate %184, %185, %186, %187 in 0 : vector<1x16x8xbf16>, vector<1x16x8xbf16>, vector<1x16x8xbf16>, vector<1x16x8xbf16> -> vector<4x16x8xbf16>
    "tpu.trace_start"() <{level = 10 : i32, message = "htd,hsd->hts"}> : () -> ()
    %cst_75 = arith.constant dense<0.000000e+00> : vector<4x16x16xf32>
    %189 = tpu.matmul %168, %178, %cst_75 {dimension_numbers = #tpu.dot_dimension_numbers<[2], [2], [1], [1], [0, 0, 0, 1, 1, 1], [0], [0]>} : vector<4x16x8xbf16>, vector<4x16x8xbf16>, vector<4x16x16xf32> -> vector<4x16x16xf32>
    "tpu.trace_stop"() : () -> ()
    %cst_76 = arith.constant dense<0xFF800000> : vector<4x16xf32>
    %190 = vector.multi_reduction <maximumf>, %189, %cst_76 [2] : vector<4x16x16xf32> to vector<4x16xf32>
    %191 = vector.shape_cast %190 : vector<4x16xf32> to vector<4x16x1xf32>
    %192 = vector.broadcast %191 : vector<4x16x1xf32> to vector<4x16x16xf32>
    %193 = arith.subf %189, %192 : vector<4x16x16xf32>
    %194 = math.exp %193 : vector<4x16x16xf32>
    %cst_77 = arith.constant dense<0.000000e+00> : vector<4x16xf32>
    %195 = vector.multi_reduction <add>, %194, %cst_77 [2] : vector<4x16x16xf32> to vector<4x16xf32>
    %196 = vector.shape_cast %195 : vector<4x16xf32> to vector<4x16x1xf32>
    %197 = tpu.reciprocal %196 {approx = true} : vector<4x16x1xf32> -> vector<4x16x1xf32>
    %198 = vector.broadcast %197 : vector<4x16x1xf32> to vector<4x16x16xf32>
    %199 = arith.mulf %194, %198 : vector<4x16x16xf32>
    %200 = arith.truncf %199 : vector<4x16x16xf32> to vector<4x16x16xbf16>
    "tpu.trace_start"() <{level = 10 : i32, message = "hts,hsd->htd"}> : () -> ()
    %cst_78 = arith.constant dense<0.000000e+00> : vector<4x16x8xf32>
    %201 = tpu.matmul %200, %188, %cst_78 {dimension_numbers = #tpu.dot_dimension_numbers<[2], [1], [1], [2], [0, 0, 0, 1, 1, 2], [0], [0]>} : vector<4x16x16xbf16>, vector<4x16x8xbf16>, vector<4x16x8xf32> -> vector<4x16x8xf32>
    "tpu.trace_stop"() : () -> ()
    %202 = arith.truncf %201 : vector<4x16x8xf32> to vector<4x16x8xbf16>
    "tpu.trace_start"() <{level = 10 : i32, message = "htd,hde->hte"}> : () -> ()
    %cst_79 = arith.constant dense<0.000000e+00> : vector<4x16x32xf32>
    %203 = tpu.matmul %202, %158, %cst_79 {dimension_numbers = #tpu.dot_dimension_numbers<[2], [1], [1], [2], [0, 0, 0, 1, 1, 2], [0], [0]>} : vector<4x16x8xbf16>, vector<4x8x32xbf16>, vector<4x16x32xf32> -> vector<4x16x32xf32>
    "tpu.trace_stop"() : () -> ()
    %cst_80 = arith.constant dense<0.000000e+00> : vector<16x32xf32>
    %204 = vector.multi_reduction <add>, %203, %cst_80 [0] : vector<4x16x32xf32> to vector<16x32xf32>
    %c1_81 = arith.constant 1 : index
    %c0_82 = arith.constant 0 : index
    %c0_83 = arith.constant 0 : index
    %205 = vector.load %arg8[%c1_81, %c0_82, %c0_83] : memref<3x1x32xf32, #tpu.memory_space<vmem>>, vector<1x1x32xf32>
    %206 = vector.shape_cast %205 : vector<1x1x32xf32> to vector<1x32xf32>
    %207 = vector.broadcast %206 : vector<1x32xf32> to vector<16x32xf32>
    %208 = arith.addf %204, %207 : vector<16x32xf32>
    %c1_84 = arith.constant 1 : index
    %c0_85 = arith.constant 0 : index
    %c0_86 = arith.constant 0 : index
    %209 = vector.load %arg9[%c1_84, %c0_85, %c0_86] : memref<3x1x32xf32, #tpu.memory_space<vmem>>, vector<1x1x32xf32>
    %210 = vector.shape_cast %209 : vector<1x1x32xf32> to vector<1x32xf32>
    %c1_87 = arith.constant 1 : index
    %c0_88 = arith.constant 0 : index
    %c0_89 = arith.constant 0 : index
    %211 = vector.load %arg10[%c1_87, %c0_88, %c0_89] : memref<3x1x32xf32, #tpu.memory_space<vmem>>, vector<1x1x32xf32>
    %212 = vector.shape_cast %211 : vector<1x1x32xf32> to vector<1x32xf32>
    %213 = arith.addf %145, %208 : vector<16x32xf32>
    %cst_90 = arith.constant dense<0.000000e+00> : vector<16xf32>
    %214 = vector.multi_reduction <add>, %213, %cst_90 [1] : vector<16x32xf32> to vector<16xf32>
    %215 = vector.shape_cast %214 : vector<16xf32> to vector<16x1xf32>
    %cst_91 = arith.constant 3.200000e+01 : f32
    %216 = vector.broadcast %cst_91 : f32 to vector<16x1xf32>
    %217 = arith.divf %215, %216 : vector<16x1xf32>
    %218 = vector.broadcast %217 : vector<16x1xf32> to vector<16x32xf32>
    %219 = arith.subf %213, %218 : vector<16x32xf32>
    %220 = arith.mulf %219, %219 : vector<16x32xf32>
    %cst_92 = arith.constant dense<0.000000e+00> : vector<16xf32>
    %221 = vector.multi_reduction <add>, %220, %cst_92 [1] : vector<16x32xf32> to vector<16xf32>
    %222 = vector.shape_cast %221 : vector<16xf32> to vector<16x1xf32>
    %cst_93 = arith.constant 3.200000e+01 : f32
    %223 = vector.broadcast %cst_93 : f32 to vector<16x1xf32>
    %224 = arith.divf %222, %223 : vector<16x1xf32>
    %225 = vector.broadcast %217 : vector<16x1xf32> to vector<16x32xf32>
    %226 = arith.subf %213, %225 : vector<16x32xf32>
    %cst_94 = arith.constant 9.99999974E-6 : f32
    %227 = vector.broadcast %cst_94 : f32 to vector<16x1xf32>
    %228 = arith.addf %224, %227 : vector<16x1xf32>
    %229 = math.rsqrt %228 : vector<16x1xf32>
    %230 = vector.broadcast %229 : vector<16x1xf32> to vector<16x32xf32>
    %231 = arith.mulf %226, %230 : vector<16x32xf32>
    %232 = vector.broadcast %210 : vector<1x32xf32> to vector<16x32xf32>
    %233 = arith.mulf %231, %232 : vector<16x32xf32>
    %234 = vector.broadcast %212 : vector<1x32xf32> to vector<16x32xf32>
    %235 = arith.addf %233, %234 : vector<16x32xf32>
    %c1_95 = arith.constant 1 : index
    %c0_96 = arith.constant 0 : index
    %c0_97 = arith.constant 0 : index
    %236 = vector.load %arg11[%c1_95, %c0_96, %c0_97] : memref<3x32x64xbf16, #tpu.memory_space<vmem>>, vector<1x32x64xbf16>
    %237 = vector.shape_cast %236 : vector<1x32x64xbf16> to vector<32x64xbf16>
    %238 = arith.truncf %235 : vector<16x32xf32> to vector<16x32xbf16>
    %cst_98 = arith.constant dense<0.000000e+00> : vector<16x64xf32>
    %239 = tpu.matmul %238, %237, %cst_98 {dimension_numbers = #tpu.dot_dimension_numbers<[1], [0], [0], [1], [0, 0, 1, 1], [], []>} : vector<16x32xbf16>, vector<32x64xbf16>, vector<16x64xf32> -> vector<16x64xf32>
    %c1_99 = arith.constant 1 : index
    %c0_100 = arith.constant 0 : index
    %c0_101 = arith.constant 0 : index
    %240 = vector.load %arg12[%c1_99, %c0_100, %c0_101] : memref<3x1x64xf32, #tpu.memory_space<vmem>>, vector<1x1x64xf32>
    %241 = vector.shape_cast %240 : vector<1x1x64xf32> to vector<1x64xf32>
    %242 = vector.broadcast %241 : vector<1x64xf32> to vector<16x64xf32>
    %243 = arith.addf %239, %242 : vector<16x64xf32>
    %cst_102 = arith.constant 0.000000e+00 : f32
    %244 = vector.broadcast %cst_102 : f32 to vector<16x64xf32>
    %245 = arith.maximumf %243, %244 : vector<16x64xf32>
    %c1_103 = arith.constant 1 : index
    %c0_104 = arith.constant 0 : index
    %c0_105 = arith.constant 0 : index
    %246 = vector.load %arg13[%c1_103, %c0_104, %c0_105] : memref<3x64x32xbf16, #tpu.memory_space<vmem>>, vector<1x64x32xbf16>
    %247 = vector.shape_cast %246 : vector<1x64x32xbf16> to vector<64x32xbf16>
    %248 = arith.truncf %245 : vector<16x64xf32> to vector<16x64xbf16>
    %cst_106 = arith.constant dense<0.000000e+00> : vector<16x32xf32>
    %249 = tpu.matmul %248, %247, %cst_106 {dimension_numbers = #tpu.dot_dimension_numbers<[1], [0], [0], [1], [0, 0, 1, 1], [], []>} : vector<16x64xbf16>, vector<64x32xbf16>, vector<16x32xf32> -> vector<16x32xf32>
    %c1_107 = arith.constant 1 : index
    %c0_108 = arith.constant 0 : index
    %c0_109 = arith.constant 0 : index
    %250 = vector.load %arg14[%c1_107, %c0_108, %c0_109] : memref<3x1x32xf32, #tpu.memory_space<vmem>>, vector<1x1x32xf32>
    %251 = vector.shape_cast %250 : vector<1x1x32xf32> to vector<1x32xf32>
    %252 = vector.broadcast %251 : vector<1x32xf32> to vector<16x32xf32>
    %253 = arith.addf %249, %252 : vector<16x32xf32>
    %c1_110 = arith.constant 1 : index
    %c0_111 = arith.constant 0 : index
    %c0_112 = arith.constant 0 : index
    %254 = vector.load %arg15[%c1_110, %c0_111, %c0_112] : memref<3x1x32xf32, #tpu.memory_space<vmem>>, vector<1x1x32xf32>
    %255 = vector.shape_cast %254 : vector<1x1x32xf32> to vector<1x32xf32>
    %c1_113 = arith.constant 1 : index
    %c0_114 = arith.constant 0 : index
    %c0_115 = arith.constant 0 : index
    %256 = vector.load %arg16[%c1_113, %c0_114, %c0_115] : memref<3x1x32xf32, #tpu.memory_space<vmem>>, vector<1x1x32xf32>
    %257 = vector.shape_cast %256 : vector<1x1x32xf32> to vector<1x32xf32>
    %258 = arith.addf %235, %253 : vector<16x32xf32>
    %cst_116 = arith.constant dense<0.000000e+00> : vector<16xf32>
    %259 = vector.multi_reduction <add>, %258, %cst_116 [1] : vector<16x32xf32> to vector<16xf32>
    %260 = vector.shape_cast %259 : vector<16xf32> to vector<16x1xf32>
    %cst_117 = arith.constant 3.200000e+01 : f32
    %261 = vector.broadcast %cst_117 : f32 to vector<16x1xf32>
    %262 = arith.divf %260, %261 : vector<16x1xf32>
    %263 = vector.broadcast %262 : vector<16x1xf32> to vector<16x32xf32>
    %264 = arith.subf %258, %263 : vector<16x32xf32>
    %265 = arith.mulf %264, %264 : vector<16x32xf32>
    %cst_118 = arith.constant dense<0.000000e+00> : vector<16xf32>
    %266 = vector.multi_reduction <add>, %265, %cst_118 [1] : vector<16x32xf32> to vector<16xf32>
    %267 = vector.shape_cast %266 : vector<16xf32> to vector<16x1xf32>
    %cst_119 = arith.constant 3.200000e+01 : f32
    %268 = vector.broadcast %cst_119 : f32 to vector<16x1xf32>
    %269 = arith.divf %267, %268 : vector<16x1xf32>
    %270 = vector.broadcast %262 : vector<16x1xf32> to vector<16x32xf32>
    %271 = arith.subf %258, %270 : vector<16x32xf32>
    %cst_120 = arith.constant 9.99999974E-6 : f32
    %272 = vector.broadcast %cst_120 : f32 to vector<16x1xf32>
    %273 = arith.addf %269, %272 : vector<16x1xf32>
    %274 = math.rsqrt %273 : vector<16x1xf32>
    %275 = vector.broadcast %274 : vector<16x1xf32> to vector<16x32xf32>
    %276 = arith.mulf %271, %275 : vector<16x32xf32>
    %277 = vector.broadcast %255 : vector<1x32xf32> to vector<16x32xf32>
    %278 = arith.mulf %276, %277 : vector<16x32xf32>
    %279 = vector.broadcast %257 : vector<1x32xf32> to vector<16x32xf32>
    %280 = arith.addf %278, %279 : vector<16x32xf32>
    %c2 = arith.constant 2 : index
    %c0_121 = arith.constant 0 : index
    %c0_122 = arith.constant 0 : index
    %281 = vector.load %arg5[%c2, %c0_121, %c0_122] : memref<3x32x96xbf16, #tpu.memory_space<vmem>>, vector<1x32x96xbf16>
    %282 = vector.shape_cast %281 : vector<1x32x96xbf16> to vector<32x96xbf16>
    %283 = arith.truncf %280 : vector<16x32xf32> to vector<16x32xbf16>
    %cst_123 = arith.constant dense<0.000000e+00> : vector<16x96xf32>
    %284 = tpu.matmul %283, %282, %cst_123 {dimension_numbers = #tpu.dot_dimension_numbers<[1], [0], [0], [1], [0, 0, 1, 1], [], []>} : vector<16x32xbf16>, vector<32x96xbf16>, vector<16x96xf32> -> vector<16x96xf32>
    %c2_124 = arith.constant 2 : index
    %c0_125 = arith.constant 0 : index
    %c0_126 = arith.constant 0 : index
    %285 = vector.load %arg6[%c2_124, %c0_125, %c0_126] : memref<3x1x96xf32, #tpu.memory_space<vmem>>, vector<1x1x96xf32>
    %286 = vector.shape_cast %285 : vector<1x1x96xf32> to vector<1x96xf32>
    %287 = vector.broadcast %286 : vector<1x96xf32> to vector<16x96xf32>
    %288 = arith.addf %284, %287 : vector<16x96xf32>
    %289 = vector.extract_strided_slice %288 {offsets = [0, 0], sizes = [16, 32], strides = [1, 1]} : vector<16x96xf32> to vector<16x32xf32>
    %290 = vector.extract_strided_slice %288 {offsets = [0, 32], sizes = [16, 32], strides = [1, 1]} : vector<16x96xf32> to vector<16x32xf32>
    %291 = vector.extract_strided_slice %288 {offsets = [0, 64], sizes = [16, 32], strides = [1, 1]} : vector<16x96xf32> to vector<16x32xf32>
    %c2_127 = arith.constant 2 : index
    %c0_128 = arith.constant 0 : index
    %c0_129 = arith.constant 0 : index
    %c0_130 = arith.constant 0 : index
    %292 = vector.load %arg7[%c2_127, %c0_128, %c0_129, %c0_130] : memref<3x4x8x32xbf16, #tpu.memory_space<vmem>>, vector<1x4x8x32xbf16>
    %293 = vector.shape_cast %292 : vector<1x4x8x32xbf16> to vector<4x8x32xbf16>
    %294 = arith.truncf %289 : vector<16x32xf32> to vector<16x32xbf16>
    %295 = vector.extract_strided_slice %294 {offsets = [0, 0], sizes = [16, 8], strides = [1, 1]} : vector<16x32xbf16> to vector<16x8xbf16>
    %296 = vector.extract_strided_slice %294 {offsets = [0, 8], sizes = [16, 8], strides = [1, 1]} : vector<16x32xbf16> to vector<16x8xbf16>
    %297 = vector.extract_strided_slice %294 {offsets = [0, 16], sizes = [16, 8], strides = [1, 1]} : vector<16x32xbf16> to vector<16x8xbf16>
    %298 = vector.extract_strided_slice %294 {offsets = [0, 24], sizes = [16, 8], strides = [1, 1]} : vector<16x32xbf16> to vector<16x8xbf16>
    %299 = vector.shape_cast %295 : vector<16x8xbf16> to vector<1x16x8xbf16>
    %300 = vector.shape_cast %296 : vector<16x8xbf16> to vector<1x16x8xbf16>
    %301 = vector.shape_cast %297 : vector<16x8xbf16> to vector<1x16x8xbf16>
    %302 = vector.shape_cast %298 : vector<16x8xbf16> to vector<1x16x8xbf16>
    %303 = tpu.concatenate %299, %300, %301, %302 in 0 : vector<1x16x8xbf16>, vector<1x16x8xbf16>, vector<1x16x8xbf16>, vector<1x16x8xbf16> -> vector<4x16x8xbf16>
    %304 = arith.truncf %290 : vector<16x32xf32> to vector<16x32xbf16>
    %305 = vector.extract_strided_slice %304 {offsets = [0, 0], sizes = [16, 8], strides = [1, 1]} : vector<16x32xbf16> to vector<16x8xbf16>
    %306 = vector.extract_strided_slice %304 {offsets = [0, 8], sizes = [16, 8], strides = [1, 1]} : vector<16x32xbf16> to vector<16x8xbf16>
    %307 = vector.extract_strided_slice %304 {offsets = [0, 16], sizes = [16, 8], strides = [1, 1]} : vector<16x32xbf16> to vector<16x8xbf16>
    %308 = vector.extract_strided_slice %304 {offsets = [0, 24], sizes = [16, 8], strides = [1, 1]} : vector<16x32xbf16> to vector<16x8xbf16>
    %309 = vector.shape_cast %305 : vector<16x8xbf16> to vector<1x16x8xbf16>
    %310 = vector.shape_cast %306 : vector<16x8xbf16> to vector<1x16x8xbf16>
    %311 = vector.shape_cast %307 : vector<16x8xbf16> to vector<1x16x8xbf16>
    %312 = vector.shape_cast %308 : vector<16x8xbf16> to vector<1x16x8xbf16>
    %313 = tpu.concatenate %309, %310, %311, %312 in 0 : vector<1x16x8xbf16>, vector<1x16x8xbf16>, vector<1x16x8xbf16>, vector<1x16x8xbf16> -> vector<4x16x8xbf16>
    %314 = arith.truncf %291 : vector<16x32xf32> to vector<16x32xbf16>
    %315 = vector.extract_strided_slice %314 {offsets = [0, 0], sizes = [16, 8], strides = [1, 1]} : vector<16x32xbf16> to vector<16x8xbf16>
    %316 = vector.extract_strided_slice %314 {offsets = [0, 8], sizes = [16, 8], strides = [1, 1]} : vector<16x32xbf16> to vector<16x8xbf16>
    %317 = vector.extract_strided_slice %314 {offsets = [0, 16], sizes = [16, 8], strides = [1, 1]} : vector<16x32xbf16> to vector<16x8xbf16>
    %318 = vector.extract_strided_slice %314 {offsets = [0, 24], sizes = [16, 8], strides = [1, 1]} : vector<16x32xbf16> to vector<16x8xbf16>
    %319 = vector.shape_cast %315 : vector<16x8xbf16> to vector<1x16x8xbf16>
    %320 = vector.shape_cast %316 : vector<16x8xbf16> to vector<1x16x8xbf16>
    %321 = vector.shape_cast %317 : vector<16x8xbf16> to vector<1x16x8xbf16>
    %322 = vector.shape_cast %318 : vector<16x8xbf16> to vector<1x16x8xbf16>
    %323 = tpu.concatenate %319, %320, %321, %322 in 0 : vector<1x16x8xbf16>, vector<1x16x8xbf16>, vector<1x16x8xbf16>, vector<1x16x8xbf16> -> vector<4x16x8xbf16>
    "tpu.trace_start"() <{level = 10 : i32, message = "htd,hsd->hts"}> : () -> ()
    %cst_131 = arith.constant dense<0.000000e+00> : vector<4x16x16xf32>
    %324 = tpu.matmul %303, %313, %cst_131 {dimension_numbers = #tpu.dot_dimension_numbers<[2], [2], [1], [1], [0, 0, 0, 1, 1, 1], [0], [0]>} : vector<4x16x8xbf16>, vector<4x16x8xbf16>, vector<4x16x16xf32> -> vector<4x16x16xf32>
    "tpu.trace_stop"() : () -> ()
    %cst_132 = arith.constant dense<0xFF800000> : vector<4x16xf32>
    %325 = vector.multi_reduction <maximumf>, %324, %cst_132 [2] : vector<4x16x16xf32> to vector<4x16xf32>
    %326 = vector.shape_cast %325 : vector<4x16xf32> to vector<4x16x1xf32>
    %327 = vector.broadcast %326 : vector<4x16x1xf32> to vector<4x16x16xf32>
    %328 = arith.subf %324, %327 : vector<4x16x16xf32>
    %329 = math.exp %328 : vector<4x16x16xf32>
    %cst_133 = arith.constant dense<0.000000e+00> : vector<4x16xf32>
    %330 = vector.multi_reduction <add>, %329, %cst_133 [2] : vector<4x16x16xf32> to vector<4x16xf32>
    %331 = vector.shape_cast %330 : vector<4x16xf32> to vector<4x16x1xf32>
    %332 = tpu.reciprocal %331 {approx = true} : vector<4x16x1xf32> -> vector<4x16x1xf32>
    %333 = vector.broadcast %332 : vector<4x16x1xf32> to vector<4x16x16xf32>
    %334 = arith.mulf %329, %333 : vector<4x16x16xf32>
    %335 = arith.truncf %334 : vector<4x16x16xf32> to vector<4x16x16xbf16>
    "tpu.trace_start"() <{level = 10 : i32, message = "hts,hsd->htd"}> : () -> ()
    %cst_134 = arith.constant dense<0.000000e+00> : vector<4x16x8xf32>
    %336 = tpu.matmul %335, %323, %cst_134 {dimension_numbers = #tpu.dot_dimension_numbers<[2], [1], [1], [2], [0, 0, 0, 1, 1, 2], [0], [0]>} : vector<4x16x16xbf16>, vector<4x16x8xbf16>, vector<4x16x8xf32> -> vector<4x16x8xf32>
    "tpu.trace_stop"() : () -> ()
    %337 = arith.truncf %336 : vector<4x16x8xf32> to vector<4x16x8xbf16>
    "tpu.trace_start"() <{level = 10 : i32, message = "htd,hde->hte"}> : () -> ()
    %cst_135 = arith.constant dense<0.000000e+00> : vector<4x16x32xf32>
    %338 = tpu.matmul %337, %293, %cst_135 {dimension_numbers = #tpu.dot_dimension_numbers<[2], [1], [1], [2], [0, 0, 0, 1, 1, 2], [0], [0]>} : vector<4x16x8xbf16>, vector<4x8x32xbf16>, vector<4x16x32xf32> -> vector<4x16x32xf32>
    "tpu.trace_stop"() : () -> ()
    %cst_136 = arith.constant dense<0.000000e+00> : vector<16x32xf32>
    %339 = vector.multi_reduction <add>, %338, %cst_136 [0] : vector<4x16x32xf32> to vector<16x32xf32>
    %c2_137 = arith.constant 2 : index
    %c0_138 = arith.constant 0 : index
    %c0_139 = arith.constant 0 : index
    %340 = vector.load %arg8[%c2_137, %c0_138, %c0_139] : memref<3x1x32xf32, #tpu.memory_space<vmem>>, vector<1x1x32xf32>
    %341 = vector.shape_cast %340 : vector<1x1x32xf32> to vector<1x32xf32>
    %342 = vector.broadcast %341 : vector<1x32xf32> to vector<16x32xf32>
    %343 = arith.addf %339, %342 : vector<16x32xf32>
    %c2_140 = arith.constant 2 : index
    %c0_141 = arith.constant 0 : index
    %c0_142 = arith.constant 0 : index
    %344 = vector.load %arg9[%c2_140, %c0_141, %c0_142] : memref<3x1x32xf32, #tpu.memory_space<vmem>>, vector<1x1x32xf32>
    %345 = vector.shape_cast %344 : vector<1x1x32xf32> to vector<1x32xf32>
    %c2_143 = arith.constant 2 : index
    %c0_144 = arith.constant 0 : index
    %c0_145 = arith.constant 0 : index
    %346 = vector.load %arg10[%c2_143, %c0_144, %c0_145] : memref<3x1x32xf32, #tpu.memory_space<vmem>>, vector<1x1x32xf32>
    %347 = vector.shape_cast %346 : vector<1x1x32xf32> to vector<1x32xf32>
    %348 = arith.addf %280, %343 : vector<16x32xf32>
    %cst_146 = arith.constant dense<0.000000e+00> : vector<16xf32>
    %349 = vector.multi_reduction <add>, %348, %cst_146 [1] : vector<16x32xf32> to vector<16xf32>
    %350 = vector.shape_cast %349 : vector<16xf32> to vector<16x1xf32>
    %cst_147 = arith.constant 3.200000e+01 : f32
    %351 = vector.broadcast %cst_147 : f32 to vector<16x1xf32>
    %352 = arith.divf %350, %351 : vector<16x1xf32>
    %353 = vector.broadcast %352 : vector<16x1xf32> to vector<16x32xf32>
    %354 = arith.subf %348, %353 : vector<16x32xf32>
    %355 = arith.mulf %354, %354 : vector<16x32xf32>
    %cst_148 = arith.constant dense<0.000000e+00> : vector<16xf32>
    %356 = vector.multi_reduction <add>, %355, %cst_148 [1] : vector<16x32xf32> to vector<16xf32>
    %357 = vector.shape_cast %356 : vector<16xf32> to vector<16x1xf32>
    %cst_149 = arith.constant 3.200000e+01 : f32
    %358 = vector.broadcast %cst_149 : f32 to vector<16x1xf32>
    %359 = arith.divf %357, %358 : vector<16x1xf32>
    %360 = vector.broadcast %352 : vector<16x1xf32> to vector<16x32xf32>
    %361 = arith.subf %348, %360 : vector<16x32xf32>
    %cst_150 = arith.constant 9.99999974E-6 : f32
    %362 = vector.broadcast %cst_150 : f32 to vector<16x1xf32>
    %363 = arith.addf %359, %362 : vector<16x1xf32>
    %364 = math.rsqrt %363 : vector<16x1xf32>
    %365 = vector.broadcast %364 : vector<16x1xf32> to vector<16x32xf32>
    %366 = arith.mulf %361, %365 : vector<16x32xf32>
    %367 = vector.broadcast %345 : vector<1x32xf32> to vector<16x32xf32>
    %368 = arith.mulf %366, %367 : vector<16x32xf32>
    %369 = vector.broadcast %347 : vector<1x32xf32> to vector<16x32xf32>
    %370 = arith.addf %368, %369 : vector<16x32xf32>
    %c2_151 = arith.constant 2 : index
    %c0_152 = arith.constant 0 : index
    %c0_153 = arith.constant 0 : index
    %371 = vector.load %arg11[%c2_151, %c0_152, %c0_153] : memref<3x32x64xbf16, #tpu.memory_space<vmem>>, vector<1x32x64xbf16>
    %372 = vector.shape_cast %371 : vector<1x32x64xbf16> to vector<32x64xbf16>
    %373 = arith.truncf %370 : vector<16x32xf32> to vector<16x32xbf16>
    %cst_154 = arith.constant dense<0.000000e+00> : vector<16x64xf32>
    %374 = tpu.matmul %373, %372, %cst_154 {dimension_numbers = #tpu.dot_dimension_numbers<[1], [0], [0], [1], [0, 0, 1, 1], [], []>} : vector<16x32xbf16>, vector<32x64xbf16>, vector<16x64xf32> -> vector<16x64xf32>
    %c2_155 = arith.constant 2 : index
    %c0_156 = arith.constant 0 : index
    %c0_157 = arith.constant 0 : index
    %375 = vector.load %arg12[%c2_155, %c0_156, %c0_157] : memref<3x1x64xf32, #tpu.memory_space<vmem>>, vector<1x1x64xf32>
    %376 = vector.shape_cast %375 : vector<1x1x64xf32> to vector<1x64xf32>
    %377 = vector.broadcast %376 : vector<1x64xf32> to vector<16x64xf32>
    %378 = arith.addf %374, %377 : vector<16x64xf32>
    %cst_158 = arith.constant 0.000000e+00 : f32
    %379 = vector.broadcast %cst_158 : f32 to vector<16x64xf32>
    %380 = arith.maximumf %378, %379 : vector<16x64xf32>
    %c2_159 = arith.constant 2 : index
    %c0_160 = arith.constant 0 : index
    %c0_161 = arith.constant 0 : index
    %381 = vector.load %arg13[%c2_159, %c0_160, %c0_161] : memref<3x64x32xbf16, #tpu.memory_space<vmem>>, vector<1x64x32xbf16>
    %382 = vector.shape_cast %381 : vector<1x64x32xbf16> to vector<64x32xbf16>
    %383 = arith.truncf %380 : vector<16x64xf32> to vector<16x64xbf16>
    %cst_162 = arith.constant dense<0.000000e+00> : vector<16x32xf32>
    %384 = tpu.matmul %383, %382, %cst_162 {dimension_numbers = #tpu.dot_dimension_numbers<[1], [0], [0], [1], [0, 0, 1, 1], [], []>} : vector<16x64xbf16>, vector<64x32xbf16>, vector<16x32xf32> -> vector<16x32xf32>
    %c2_163 = arith.constant 2 : index
    %c0_164 = arith.constant 0 : index
    %c0_165 = arith.constant 0 : index
    %385 = vector.load %arg14[%c2_163, %c0_164, %c0_165] : memref<3x1x32xf32, #tpu.memory_space<vmem>>, vector<1x1x32xf32>
    %386 = vector.shape_cast %385 : vector<1x1x32xf32> to vector<1x32xf32>
    %387 = vector.broadcast %386 : vector<1x32xf32> to vector<16x32xf32>
    %388 = arith.addf %384, %387 : vector<16x32xf32>
    %c2_166 = arith.constant 2 : index
    %c0_167 = arith.constant 0 : index
    %c0_168 = arith.constant 0 : index
    %389 = vector.load %arg15[%c2_166, %c0_167, %c0_168] : memref<3x1x32xf32, #tpu.memory_space<vmem>>, vector<1x1x32xf32>
    %390 = vector.shape_cast %389 : vector<1x1x32xf32> to vector<1x32xf32>
    %c2_169 = arith.constant 2 : index
    %c0_170 = arith.constant 0 : index
    %c0_171 = arith.constant 0 : index
    %391 = vector.load %arg16[%c2_169, %c0_170, %c0_171] : memref<3x1x32xf32, #tpu.memory_space<vmem>>, vector<1x1x32xf32>
    %392 = vector.shape_cast %391 : vector<1x1x32xf32> to vector<1x32xf32>
    %393 = arith.addf %370, %388 : vector<16x32xf32>
    %cst_172 = arith.constant dense<0.000000e+00> : vector<16xf32>
    %394 = vector.multi_reduction <add>, %393, %cst_172 [1] : vector<16x32xf32> to vector<16xf32>
    %395 = vector.shape_cast %394 : vector<16xf32> to vector<16x1xf32>
    %cst_173 = arith.constant 3.200000e+01 : f32
    %396 = vector.broadcast %cst_173 : f32 to vector<16x1xf32>
    %397 = arith.divf %395, %396 : vector<16x1xf32>
    %398 = vector.broadcast %397 : vector<16x1xf32> to vector<16x32xf32>
    %399 = arith.subf %393, %398 : vector<16x32xf32>
    %400 = arith.mulf %399, %399 : vector<16x32xf32>
    %cst_174 = arith.constant dense<0.000000e+00> : vector<16xf32>
    %401 = vector.multi_reduction <add>, %400, %cst_174 [1] : vector<16x32xf32> to vector<16xf32>
    %402 = vector.shape_cast %401 : vector<16xf32> to vector<16x1xf32>
    %cst_175 = arith.constant 3.200000e+01 : f32
    %403 = vector.broadcast %cst_175 : f32 to vector<16x1xf32>
    %404 = arith.divf %402, %403 : vector<16x1xf32>
    %405 = vector.broadcast %397 : vector<16x1xf32> to vector<16x32xf32>
    %406 = arith.subf %393, %405 : vector<16x32xf32>
    %cst_176 = arith.constant 9.99999974E-6 : f32
    %407 = vector.broadcast %cst_176 : f32 to vector<16x1xf32>
    %408 = arith.addf %404, %407 : vector<16x1xf32>
    %409 = math.rsqrt %408 : vector<16x1xf32>
    %410 = vector.broadcast %409 : vector<16x1xf32> to vector<16x32xf32>
    %411 = arith.mulf %406, %410 : vector<16x32xf32>
    %412 = vector.broadcast %390 : vector<1x32xf32> to vector<16x32xf32>
    %413 = arith.mulf %411, %412 : vector<16x32xf32>
    %414 = vector.broadcast %392 : vector<1x32xf32> to vector<16x32xf32>
    %415 = arith.addf %413, %414 : vector<16x32xf32>
    %c0_177 = arith.constant 0 : index
    %c0_178 = arith.constant 0 : index
    %416 = vector.load %arg4[%c0_177, %c0_178] : memref<8x32xf32, #tpu.memory_space<vmem>>, vector<8x32xf32>
    %c0_179 = arith.constant 0 : index
    %c0_180 = arith.constant 0 : index
    %c0_181 = arith.constant 0 : index
    %417 = vector.load %arg17[%c0_179, %c0_180, %c0_181] : memref<1x32x96xbf16, #tpu.memory_space<vmem>>, vector<1x32x96xbf16>
    %418 = vector.shape_cast %417 : vector<1x32x96xbf16> to vector<32x96xbf16>
    %419 = arith.truncf %416 : vector<8x32xf32> to vector<8x32xbf16>
    %cst_182 = arith.constant dense<0.000000e+00> : vector<8x96xf32>
    %420 = tpu.matmul %419, %418, %cst_182 {dimension_numbers = #tpu.dot_dimension_numbers<[1], [0], [0], [1], [0, 0, 1, 1], [], []>} : vector<8x32xbf16>, vector<32x96xbf16>, vector<8x96xf32> -> vector<8x96xf32>
    %c0_183 = arith.constant 0 : index
    %c0_184 = arith.constant 0 : index
    %c0_185 = arith.constant 0 : index
    %421 = vector.load %arg18[%c0_183, %c0_184, %c0_185] : memref<1x1x96xf32, #tpu.memory_space<vmem>>, vector<1x1x96xf32>
    %422 = vector.shape_cast %421 : vector<1x1x96xf32> to vector<1x96xf32>
    %423 = vector.broadcast %422 : vector<1x96xf32> to vector<8x96xf32>
    %424 = arith.addf %420, %423 : vector<8x96xf32>
    %425 = vector.extract_strided_slice %424 {offsets = [0, 0], sizes = [8, 32], strides = [1, 1]} : vector<8x96xf32> to vector<8x32xf32>
    %426 = vector.extract_strided_slice %424 {offsets = [0, 32], sizes = [8, 32], strides = [1, 1]} : vector<8x96xf32> to vector<8x32xf32>
    %427 = vector.extract_strided_slice %424 {offsets = [0, 64], sizes = [8, 32], strides = [1, 1]} : vector<8x96xf32> to vector<8x32xf32>
    %c0_186 = arith.constant 0 : index
    %c0_187 = arith.constant 0 : index
    %c0_188 = arith.constant 0 : index
    %c0_189 = arith.constant 0 : index
    %428 = vector.load %arg19[%c0_186, %c0_187, %c0_188, %c0_189] : memref<1x4x8x32xbf16, #tpu.memory_space<vmem>>, vector<1x4x8x32xbf16>
    %429 = vector.shape_cast %428 : vector<1x4x8x32xbf16> to vector<4x8x32xbf16>
    %430 = arith.truncf %425 : vector<8x32xf32> to vector<8x32xbf16>
    %431 = vector.extract_strided_slice %430 {offsets = [0, 0], sizes = [8, 8], strides = [1, 1]} : vector<8x32xbf16> to vector<8x8xbf16>
    %432 = vector.extract_strided_slice %430 {offsets = [0, 8], sizes = [8, 8], strides = [1, 1]} : vector<8x32xbf16> to vector<8x8xbf16>
    %433 = vector.extract_strided_slice %430 {offsets = [0, 16], sizes = [8, 8], strides = [1, 1]} : vector<8x32xbf16> to vector<8x8xbf16>
    %434 = vector.extract_strided_slice %430 {offsets = [0, 24], sizes = [8, 8], strides = [1, 1]} : vector<8x32xbf16> to vector<8x8xbf16>
    %435 = vector.shape_cast %431 : vector<8x8xbf16> to vector<1x8x8xbf16>
    %436 = vector.shape_cast %432 : vector<8x8xbf16> to vector<1x8x8xbf16>
    %437 = vector.shape_cast %433 : vector<8x8xbf16> to vector<1x8x8xbf16>
    %438 = vector.shape_cast %434 : vector<8x8xbf16> to vector<1x8x8xbf16>
    %439 = tpu.concatenate %435, %436, %437, %438 in 0 : vector<1x8x8xbf16>, vector<1x8x8xbf16>, vector<1x8x8xbf16>, vector<1x8x8xbf16> -> vector<4x8x8xbf16>
    %440 = arith.truncf %426 : vector<8x32xf32> to vector<8x32xbf16>
    %441 = vector.extract_strided_slice %440 {offsets = [0, 0], sizes = [8, 8], strides = [1, 1]} : vector<8x32xbf16> to vector<8x8xbf16>
    %442 = vector.extract_strided_slice %440 {offsets = [0, 8], sizes = [8, 8], strides = [1, 1]} : vector<8x32xbf16> to vector<8x8xbf16>
    %443 = vector.extract_strided_slice %440 {offsets = [0, 16], sizes = [8, 8], strides = [1, 1]} : vector<8x32xbf16> to vector<8x8xbf16>
    %444 = vector.extract_strided_slice %440 {offsets = [0, 24], sizes = [8, 8], strides = [1, 1]} : vector<8x32xbf16> to vector<8x8xbf16>
    %445 = vector.shape_cast %441 : vector<8x8xbf16> to vector<1x8x8xbf16>
    %446 = vector.shape_cast %442 : vector<8x8xbf16> to vector<1x8x8xbf16>
    %447 = vector.shape_cast %443 : vector<8x8xbf16> to vector<1x8x8xbf16>
    %448 = vector.shape_cast %444 : vector<8x8xbf16> to vector<1x8x8xbf16>
    %449 = tpu.concatenate %445, %446, %447, %448 in 0 : vector<1x8x8xbf16>, vector<1x8x8xbf16>, vector<1x8x8xbf16>, vector<1x8x8xbf16> -> vector<4x8x8xbf16>
    %450 = arith.truncf %427 : vector<8x32xf32> to vector<8x32xbf16>
    %451 = vector.extract_strided_slice %450 {offsets = [0, 0], sizes = [8, 8], strides = [1, 1]} : vector<8x32xbf16> to vector<8x8xbf16>
    %452 = vector.extract_strided_slice %450 {offsets = [0, 8], sizes = [8, 8], strides = [1, 1]} : vector<8x32xbf16> to vector<8x8xbf16>
    %453 = vector.extract_strided_slice %450 {offsets = [0, 16], sizes = [8, 8], strides = [1, 1]} : vector<8x32xbf16> to vector<8x8xbf16>
    %454 = vector.extract_strided_slice %450 {offsets = [0, 24], sizes = [8, 8], strides = [1, 1]} : vector<8x32xbf16> to vector<8x8xbf16>
    %455 = vector.shape_cast %451 : vector<8x8xbf16> to vector<1x8x8xbf16>
    %456 = vector.shape_cast %452 : vector<8x8xbf16> to vector<1x8x8xbf16>
    %457 = vector.shape_cast %453 : vector<8x8xbf16> to vector<1x8x8xbf16>
    %458 = vector.shape_cast %454 : vector<8x8xbf16> to vector<1x8x8xbf16>
    %459 = tpu.concatenate %455, %456, %457, %458 in 0 : vector<1x8x8xbf16>, vector<1x8x8xbf16>, vector<1x8x8xbf16>, vector<1x8x8xbf16> -> vector<4x8x8xbf16>
    "tpu.trace_start"() <{level = 10 : i32, message = "htd,hsd->hts"}> : () -> ()
    %cst_190 = arith.constant dense<0.000000e+00> : vector<4x8x8xf32>
    %460 = tpu.matmul %439, %449, %cst_190 {dimension_numbers = #tpu.dot_dimension_numbers<[2], [2], [1], [1], [0, 0, 0, 1, 1, 1], [0], [0]>} : vector<4x8x8xbf16>, vector<4x8x8xbf16>, vector<4x8x8xf32> -> vector<4x8x8xf32>
    "tpu.trace_stop"() : () -> ()
    %cst_191 = arith.constant dense<0xFF800000> : vector<4x8xf32>
    %461 = vector.multi_reduction <maximumf>, %460, %cst_191 [2] : vector<4x8x8xf32> to vector<4x8xf32>
    %462 = vector.shape_cast %461 : vector<4x8xf32> to vector<4x8x1xf32>
    %463 = vector.broadcast %462 : vector<4x8x1xf32> to vector<4x8x8xf32>
    %464 = arith.subf %460, %463 : vector<4x8x8xf32>
    %465 = math.exp %464 : vector<4x8x8xf32>
    %cst_192 = arith.constant dense<0.000000e+00> : vector<4x8xf32>
    %466 = vector.multi_reduction <add>, %465, %cst_192 [2] : vector<4x8x8xf32> to vector<4x8xf32>
    %467 = vector.shape_cast %466 : vector<4x8xf32> to vector<4x8x1xf32>
    %468 = tpu.reciprocal %467 {approx = true} : vector<4x8x1xf32> -> vector<4x8x1xf32>
    %469 = vector.broadcast %468 : vector<4x8x1xf32> to vector<4x8x8xf32>
    %470 = arith.mulf %465, %469 : vector<4x8x8xf32>
    %471 = arith.truncf %470 : vector<4x8x8xf32> to vector<4x8x8xbf16>
    "tpu.trace_start"() <{level = 10 : i32, message = "hts,hsd->htd"}> : () -> ()
    %cst_193 = arith.constant dense<0.000000e+00> : vector<4x8x8xf32>
    %472 = tpu.matmul %471, %459, %cst_193 {dimension_numbers = #tpu.dot_dimension_numbers<[2], [1], [1], [2], [0, 0, 0, 1, 1, 2], [0], [0]>} : vector<4x8x8xbf16>, vector<4x8x8xbf16>, vector<4x8x8xf32> -> vector<4x8x8xf32>
    "tpu.trace_stop"() : () -> ()
    %473 = arith.truncf %472 : vector<4x8x8xf32> to vector<4x8x8xbf16>
    "tpu.trace_start"() <{level = 10 : i32, message = "htd,hde->hte"}> : () -> ()
    %cst_194 = arith.constant dense<0.000000e+00> : vector<4x8x32xf32>
    %474 = tpu.matmul %473, %429, %cst_194 {dimension_numbers = #tpu.dot_dimension_numbers<[2], [1], [1], [2], [0, 0, 0, 1, 1, 2], [0], [0]>} : vector<4x8x8xbf16>, vector<4x8x32xbf16>, vector<4x8x32xf32> -> vector<4x8x32xf32>
    "tpu.trace_stop"() : () -> ()
    %cst_195 = arith.constant dense<0.000000e+00> : vector<8x32xf32>
    %475 = vector.multi_reduction <add>, %474, %cst_195 [0] : vector<4x8x32xf32> to vector<8x32xf32>
    %c0_196 = arith.constant 0 : index
    %c0_197 = arith.constant 0 : index
    %c0_198 = arith.constant 0 : index
    %476 = vector.load %arg20[%c0_196, %c0_197, %c0_198] : memref<1x1x32xf32, #tpu.memory_space<vmem>>, vector<1x1x32xf32>
    %477 = vector.shape_cast %476 : vector<1x1x32xf32> to vector<1x32xf32>
    %478 = vector.broadcast %477 : vector<1x32xf32> to vector<8x32xf32>
    %479 = arith.addf %475, %478 : vector<8x32xf32>
    %c0_199 = arith.constant 0 : index
    %c0_200 = arith.constant 0 : index
    %c0_201 = arith.constant 0 : index
    %480 = vector.load %arg21[%c0_199, %c0_200, %c0_201] : memref<1x1x32xf32, #tpu.memory_space<vmem>>, vector<1x1x32xf32>
    %481 = vector.shape_cast %480 : vector<1x1x32xf32> to vector<1x32xf32>
    %c0_202 = arith.constant 0 : index
    %c0_203 = arith.constant 0 : index
    %c0_204 = arith.constant 0 : index
    %482 = vector.load %arg22[%c0_202, %c0_203, %c0_204] : memref<1x1x32xf32, #tpu.memory_space<vmem>>, vector<1x1x32xf32>
    %483 = vector.shape_cast %482 : vector<1x1x32xf32> to vector<1x32xf32>
    %484 = arith.addf %416, %479 : vector<8x32xf32>
    %cst_205 = arith.constant dense<0.000000e+00> : vector<8xf32>
    %485 = vector.multi_reduction <add>, %484, %cst_205 [1] : vector<8x32xf32> to vector<8xf32>
    %486 = vector.shape_cast %485 : vector<8xf32> to vector<8x1xf32>
    %cst_206 = arith.constant 3.200000e+01 : f32
    %487 = vector.broadcast %cst_206 : f32 to vector<8x1xf32>
    %488 = arith.divf %486, %487 : vector<8x1xf32>
    %489 = vector.broadcast %488 : vector<8x1xf32> to vector<8x32xf32>
    %490 = arith.subf %484, %489 : vector<8x32xf32>
    %491 = arith.mulf %490, %490 : vector<8x32xf32>
    %cst_207 = arith.constant dense<0.000000e+00> : vector<8xf32>
    %492 = vector.multi_reduction <add>, %491, %cst_207 [1] : vector<8x32xf32> to vector<8xf32>
    %493 = vector.shape_cast %492 : vector<8xf32> to vector<8x1xf32>
    %cst_208 = arith.constant 3.200000e+01 : f32
    %494 = vector.broadcast %cst_208 : f32 to vector<8x1xf32>
    %495 = arith.divf %493, %494 : vector<8x1xf32>
    %496 = vector.broadcast %488 : vector<8x1xf32> to vector<8x32xf32>
    %497 = arith.subf %484, %496 : vector<8x32xf32>
    %cst_209 = arith.constant 9.99999974E-6 : f32
    %498 = vector.broadcast %cst_209 : f32 to vector<8x1xf32>
    %499 = arith.addf %495, %498 : vector<8x1xf32>
    %500 = math.rsqrt %499 : vector<8x1xf32>
    %501 = vector.broadcast %500 : vector<8x1xf32> to vector<8x32xf32>
    %502 = arith.mulf %497, %501 : vector<8x32xf32>
    %503 = vector.broadcast %481 : vector<1x32xf32> to vector<8x32xf32>
    %504 = arith.mulf %502, %503 : vector<8x32xf32>
    %505 = vector.broadcast %483 : vector<1x32xf32> to vector<8x32xf32>
    %506 = arith.addf %504, %505 : vector<8x32xf32>
    %c0_210 = arith.constant 0 : index
    %c0_211 = arith.constant 0 : index
    %c0_212 = arith.constant 0 : index
    %507 = vector.load %arg23[%c0_210, %c0_211, %c0_212] : memref<1x32x32xbf16, #tpu.memory_space<vmem>>, vector<1x32x32xbf16>
    %508 = vector.shape_cast %507 : vector<1x32x32xbf16> to vector<32x32xbf16>
    %509 = arith.truncf %506 : vector<8x32xf32> to vector<8x32xbf16>
    %cst_213 = arith.constant dense<0.000000e+00> : vector<8x32xf32>
    %510 = tpu.matmul %509, %508, %cst_213 {dimension_numbers = #tpu.dot_dimension_numbers<[1], [0], [0], [1], [0, 0, 1, 1], [], []>} : vector<8x32xbf16>, vector<32x32xbf16>, vector<8x32xf32> -> vector<8x32xf32>
    %c0_214 = arith.constant 0 : index
    %c0_215 = arith.constant 0 : index
    %c0_216 = arith.constant 0 : index
    %511 = vector.load %arg24[%c0_214, %c0_215, %c0_216] : memref<1x1x32xf32, #tpu.memory_space<vmem>>, vector<1x1x32xf32>
    %512 = vector.shape_cast %511 : vector<1x1x32xf32> to vector<1x32xf32>
    %513 = vector.broadcast %512 : vector<1x32xf32> to vector<8x32xf32>
    %514 = arith.addf %510, %513 : vector<8x32xf32>
    %c0_217 = arith.constant 0 : index
    %c0_218 = arith.constant 0 : index
    %c0_219 = arith.constant 0 : index
    %515 = vector.load %arg25[%c0_217, %c0_218, %c0_219] : memref<1x32x64xbf16, #tpu.memory_space<vmem>>, vector<1x32x64xbf16>
    %516 = vector.shape_cast %515 : vector<1x32x64xbf16> to vector<32x64xbf16>
    %517 = arith.truncf %415 : vector<16x32xf32> to vector<16x32xbf16>
    %cst_220 = arith.constant dense<0.000000e+00> : vector<16x64xf32>
    %518 = tpu.matmul %517, %516, %cst_220 {dimension_numbers = #tpu.dot_dimension_numbers<[1], [0], [0], [1], [0, 0, 1, 1], [], []>} : vector<16x32xbf16>, vector<32x64xbf16>, vector<16x64xf32> -> vector<16x64xf32>
    %c0_221 = arith.constant 0 : index
    %c0_222 = arith.constant 0 : index
    %c0_223 = arith.constant 0 : index
    %519 = vector.load %arg26[%c0_221, %c0_222, %c0_223] : memref<1x1x64xf32, #tpu.memory_space<vmem>>, vector<1x1x64xf32>
    %520 = vector.shape_cast %519 : vector<1x1x64xf32> to vector<1x64xf32>
    %521 = vector.broadcast %520 : vector<1x64xf32> to vector<16x64xf32>
    %522 = arith.addf %518, %521 : vector<16x64xf32>
    %523 = vector.extract_strided_slice %522 {offsets = [0, 0], sizes = [16, 32], strides = [1, 1]} : vector<16x64xf32> to vector<16x32xf32>
    %524 = vector.extract_strided_slice %522 {offsets = [0, 32], sizes = [16, 32], strides = [1, 1]} : vector<16x64xf32> to vector<16x32xf32>
    %c0_224 = arith.constant 0 : index
    %c0_225 = arith.constant 0 : index
    %c0_226 = arith.constant 0 : index
    %c0_227 = arith.constant 0 : index
    %525 = vector.load %arg27[%c0_224, %c0_225, %c0_226, %c0_227] : memref<1x4x8x32xbf16, #tpu.memory_space<vmem>>, vector<1x4x8x32xbf16>
    %526 = vector.shape_cast %525 : vector<1x4x8x32xbf16> to vector<4x8x32xbf16>
    %527 = arith.truncf %514 : vector<8x32xf32> to vector<8x32xbf16>
    %528 = vector.extract_strided_slice %527 {offsets = [0, 0], sizes = [8, 8], strides = [1, 1]} : vector<8x32xbf16> to vector<8x8xbf16>
    %529 = vector.extract_strided_slice %527 {offsets = [0, 8], sizes = [8, 8], strides = [1, 1]} : vector<8x32xbf16> to vector<8x8xbf16>
    %530 = vector.extract_strided_slice %527 {offsets = [0, 16], sizes = [8, 8], strides = [1, 1]} : vector<8x32xbf16> to vector<8x8xbf16>
    %531 = vector.extract_strided_slice %527 {offsets = [0, 24], sizes = [8, 8], strides = [1, 1]} : vector<8x32xbf16> to vector<8x8xbf16>
    %532 = vector.shape_cast %528 : vector<8x8xbf16> to vector<1x8x8xbf16>
    %533 = vector.shape_cast %529 : vector<8x8xbf16> to vector<1x8x8xbf16>
    %534 = vector.shape_cast %530 : vector<8x8xbf16> to vector<1x8x8xbf16>
    %535 = vector.shape_cast %531 : vector<8x8xbf16> to vector<1x8x8xbf16>
    %536 = tpu.concatenate %532, %533, %534, %535 in 0 : vector<1x8x8xbf16>, vector<1x8x8xbf16>, vector<1x8x8xbf16>, vector<1x8x8xbf16> -> vector<4x8x8xbf16>
    %537 = arith.truncf %523 : vector<16x32xf32> to vector<16x32xbf16>
    %538 = vector.extract_strided_slice %537 {offsets = [0, 0], sizes = [16, 8], strides = [1, 1]} : vector<16x32xbf16> to vector<16x8xbf16>
    %539 = vector.extract_strided_slice %537 {offsets = [0, 8], sizes = [16, 8], strides = [1, 1]} : vector<16x32xbf16> to vector<16x8xbf16>
    %540 = vector.extract_strided_slice %537 {offsets = [0, 16], sizes = [16, 8], strides = [1, 1]} : vector<16x32xbf16> to vector<16x8xbf16>
    %541 = vector.extract_strided_slice %537 {offsets = [0, 24], sizes = [16, 8], strides = [1, 1]} : vector<16x32xbf16> to vector<16x8xbf16>
    %542 = vector.shape_cast %538 : vector<16x8xbf16> to vector<1x16x8xbf16>
    %543 = vector.shape_cast %539 : vector<16x8xbf16> to vector<1x16x8xbf16>
    %544 = vector.shape_cast %540 : vector<16x8xbf16> to vector<1x16x8xbf16>
    %545 = vector.shape_cast %541 : vector<16x8xbf16> to vector<1x16x8xbf16>
    %546 = tpu.concatenate %542, %543, %544, %545 in 0 : vector<1x16x8xbf16>, vector<1x16x8xbf16>, vector<1x16x8xbf16>, vector<1x16x8xbf16> -> vector<4x16x8xbf16>
    %547 = arith.truncf %524 : vector<16x32xf32> to vector<16x32xbf16>
    %548 = vector.extract_strided_slice %547 {offsets = [0, 0], sizes = [16, 8], strides = [1, 1]} : vector<16x32xbf16> to vector<16x8xbf16>
    %549 = vector.extract_strided_slice %547 {offsets = [0, 8], sizes = [16, 8], strides = [1, 1]} : vector<16x32xbf16> to vector<16x8xbf16>
    %550 = vector.extract_strided_slice %547 {offsets = [0, 16], sizes = [16, 8], strides = [1, 1]} : vector<16x32xbf16> to vector<16x8xbf16>
    %551 = vector.extract_strided_slice %547 {offsets = [0, 24], sizes = [16, 8], strides = [1, 1]} : vector<16x32xbf16> to vector<16x8xbf16>
    %552 = vector.shape_cast %548 : vector<16x8xbf16> to vector<1x16x8xbf16>
    %553 = vector.shape_cast %549 : vector<16x8xbf16> to vector<1x16x8xbf16>
    %554 = vector.shape_cast %550 : vector<16x8xbf16> to vector<1x16x8xbf16>
    %555 = vector.shape_cast %551 : vector<16x8xbf16> to vector<1x16x8xbf16>
    %556 = tpu.concatenate %552, %553, %554, %555 in 0 : vector<1x16x8xbf16>, vector<1x16x8xbf16>, vector<1x16x8xbf16>, vector<1x16x8xbf16> -> vector<4x16x8xbf16>
    "tpu.trace_start"() <{level = 10 : i32, message = "htd,hsd->hts"}> : () -> ()
    %cst_228 = arith.constant dense<0.000000e+00> : vector<4x8x16xf32>
    %557 = tpu.matmul %536, %546, %cst_228 {dimension_numbers = #tpu.dot_dimension_numbers<[2], [2], [1], [1], [0, 0, 0, 1, 1, 1], [0], [0]>} : vector<4x8x8xbf16>, vector<4x16x8xbf16>, vector<4x8x16xf32> -> vector<4x8x16xf32>
    "tpu.trace_stop"() : () -> ()
    %cst_229 = arith.constant dense<0xFF800000> : vector<4x8xf32>
    %558 = vector.multi_reduction <maximumf>, %557, %cst_229 [2] : vector<4x8x16xf32> to vector<4x8xf32>
    %559 = vector.shape_cast %558 : vector<4x8xf32> to vector<4x8x1xf32>
    %560 = vector.broadcast %559 : vector<4x8x1xf32> to vector<4x8x16xf32>
    %561 = arith.subf %557, %560 : vector<4x8x16xf32>
    %562 = math.exp %561 : vector<4x8x16xf32>
    %cst_230 = arith.constant dense<0.000000e+00> : vector<4x8xf32>
    %563 = vector.multi_reduction <add>, %562, %cst_230 [2] : vector<4x8x16xf32> to vector<4x8xf32>
    %564 = vector.shape_cast %563 : vector<4x8xf32> to vector<4x8x1xf32>
    %565 = tpu.reciprocal %564 {approx = true} : vector<4x8x1xf32> -> vector<4x8x1xf32>
    %566 = vector.broadcast %565 : vector<4x8x1xf32> to vector<4x8x16xf32>
    %567 = arith.mulf %562, %566 : vector<4x8x16xf32>
    %568 = arith.truncf %567 : vector<4x8x16xf32> to vector<4x8x16xbf16>
    "tpu.trace_start"() <{level = 10 : i32, message = "hts,hsd->htd"}> : () -> ()
    %cst_231 = arith.constant dense<0.000000e+00> : vector<4x8x8xf32>
    %569 = tpu.matmul %568, %556, %cst_231 {dimension_numbers = #tpu.dot_dimension_numbers<[2], [1], [1], [2], [0, 0, 0, 1, 1, 2], [0], [0]>} : vector<4x8x16xbf16>, vector<4x16x8xbf16>, vector<4x8x8xf32> -> vector<4x8x8xf32>
    "tpu.trace_stop"() : () -> ()
    %570 = arith.truncf %569 : vector<4x8x8xf32> to vector<4x8x8xbf16>
    "tpu.trace_start"() <{level = 10 : i32, message = "htd,hde->hte"}> : () -> ()
    %cst_232 = arith.constant dense<0.000000e+00> : vector<4x8x32xf32>
    %571 = tpu.matmul %570, %526, %cst_232 {dimension_numbers = #tpu.dot_dimension_numbers<[2], [1], [1], [2], [0, 0, 0, 1, 1, 2], [0], [0]>} : vector<4x8x8xbf16>, vector<4x8x32xbf16>, vector<4x8x32xf32> -> vector<4x8x32xf32>
    "tpu.trace_stop"() : () -> ()
    %cst_233 = arith.constant dense<0.000000e+00> : vector<8x32xf32>
    %572 = vector.multi_reduction <add>, %571, %cst_233 [0] : vector<4x8x32xf32> to vector<8x32xf32>
    %c0_234 = arith.constant 0 : index
    %c0_235 = arith.constant 0 : index
    %c0_236 = arith.constant 0 : index
    %573 = vector.load %arg28[%c0_234, %c0_235, %c0_236] : memref<1x1x32xf32, #tpu.memory_space<vmem>>, vector<1x1x32xf32>
    %574 = vector.shape_cast %573 : vector<1x1x32xf32> to vector<1x32xf32>
    %575 = vector.broadcast %574 : vector<1x32xf32> to vector<8x32xf32>
    %576 = arith.addf %572, %575 : vector<8x32xf32>
    %c0_237 = arith.constant 0 : index
    %c0_238 = arith.constant 0 : index
    %c0_239 = arith.constant 0 : index
    %577 = vector.load %arg29[%c0_237, %c0_238, %c0_239] : memref<1x1x32xf32, #tpu.memory_space<vmem>>, vector<1x1x32xf32>
    %578 = vector.shape_cast %577 : vector<1x1x32xf32> to vector<1x32xf32>
    %c0_240 = arith.constant 0 : index
    %c0_241 = arith.constant 0 : index
    %c0_242 = arith.constant 0 : index
    %579 = vector.load %arg30[%c0_240, %c0_241, %c0_242] : memref<1x1x32xf32, #tpu.memory_space<vmem>>, vector<1x1x32xf32>
    %580 = vector.shape_cast %579 : vector<1x1x32xf32> to vector<1x32xf32>
    %581 = arith.addf %506, %576 : vector<8x32xf32>
    %cst_243 = arith.constant dense<0.000000e+00> : vector<8xf32>
    %582 = vector.multi_reduction <add>, %581, %cst_243 [1] : vector<8x32xf32> to vector<8xf32>
    %583 = vector.shape_cast %582 : vector<8xf32> to vector<8x1xf32>
    %cst_244 = arith.constant 3.200000e+01 : f32
    %584 = vector.broadcast %cst_244 : f32 to vector<8x1xf32>
    %585 = arith.divf %583, %584 : vector<8x1xf32>
    %586 = vector.broadcast %585 : vector<8x1xf32> to vector<8x32xf32>
    %587 = arith.subf %581, %586 : vector<8x32xf32>
    %588 = arith.mulf %587, %587 : vector<8x32xf32>
    %cst_245 = arith.constant dense<0.000000e+00> : vector<8xf32>
    %589 = vector.multi_reduction <add>, %588, %cst_245 [1] : vector<8x32xf32> to vector<8xf32>
    %590 = vector.shape_cast %589 : vector<8xf32> to vector<8x1xf32>
    %cst_246 = arith.constant 3.200000e+01 : f32
    %591 = vector.broadcast %cst_246 : f32 to vector<8x1xf32>
    %592 = arith.divf %590, %591 : vector<8x1xf32>
    %593 = vector.broadcast %585 : vector<8x1xf32> to vector<8x32xf32>
    %594 = arith.subf %581, %593 : vector<8x32xf32>
    %cst_247 = arith.constant 9.99999974E-6 : f32
    %595 = vector.broadcast %cst_247 : f32 to vector<8x1xf32>
    %596 = arith.addf %592, %595 : vector<8x1xf32>
    %597 = math.rsqrt %596 : vector<8x1xf32>
    %598 = vector.broadcast %597 : vector<8x1xf32> to vector<8x32xf32>
    %599 = arith.mulf %594, %598 : vector<8x32xf32>
    %600 = vector.broadcast %578 : vector<1x32xf32> to vector<8x32xf32>
    %601 = arith.mulf %599, %600 : vector<8x32xf32>
    %602 = vector.broadcast %580 : vector<1x32xf32> to vector<8x32xf32>
    %603 = arith.addf %601, %602 : vector<8x32xf32>
    %c0_248 = arith.constant 0 : index
    %c0_249 = arith.constant 0 : index
    %c0_250 = arith.constant 0 : index
    %604 = vector.load %arg31[%c0_248, %c0_249, %c0_250] : memref<1x32x64xbf16, #tpu.memory_space<vmem>>, vector<1x32x64xbf16>
    %605 = vector.shape_cast %604 : vector<1x32x64xbf16> to vector<32x64xbf16>
    %606 = arith.truncf %603 : vector<8x32xf32> to vector<8x32xbf16>
    %cst_251 = arith.constant dense<0.000000e+00> : vector<8x64xf32>
    %607 = tpu.matmul %606, %605, %cst_251 {dimension_numbers = #tpu.dot_dimension_numbers<[1], [0], [0], [1], [0, 0, 1, 1], [], []>} : vector<8x32xbf16>, vector<32x64xbf16>, vector<8x64xf32> -> vector<8x64xf32>
    %c0_252 = arith.constant 0 : index
    %c0_253 = arith.constant 0 : index
    %c0_254 = arith.constant 0 : index
    %608 = vector.load %arg32[%c0_252, %c0_253, %c0_254] : memref<1x1x64xf32, #tpu.memory_space<vmem>>, vector<1x1x64xf32>
    %609 = vector.shape_cast %608 : vector<1x1x64xf32> to vector<1x64xf32>
    %610 = vector.broadcast %609 : vector<1x64xf32> to vector<8x64xf32>
    %611 = arith.addf %607, %610 : vector<8x64xf32>
    %cst_255 = arith.constant 0.000000e+00 : f32
    %612 = vector.broadcast %cst_255 : f32 to vector<8x64xf32>
    %613 = arith.maximumf %611, %612 : vector<8x64xf32>
    %c0_256 = arith.constant 0 : index
    %c0_257 = arith.constant 0 : index
    %c0_258 = arith.constant 0 : index
    %614 = vector.load %arg33[%c0_256, %c0_257, %c0_258] : memref<1x64x32xbf16, #tpu.memory_space<vmem>>, vector<1x64x32xbf16>
    %615 = vector.shape_cast %614 : vector<1x64x32xbf16> to vector<64x32xbf16>
    %616 = arith.truncf %613 : vector<8x64xf32> to vector<8x64xbf16>
    %cst_259 = arith.constant dense<0.000000e+00> : vector<8x32xf32>
    %617 = tpu.matmul %616, %615, %cst_259 {dimension_numbers = #tpu.dot_dimension_numbers<[1], [0], [0], [1], [0, 0, 1, 1], [], []>} : vector<8x64xbf16>, vector<64x32xbf16>, vector<8x32xf32> -> vector<8x32xf32>
    %c0_260 = arith.constant 0 : index
    %c0_261 = arith.constant 0 : index
    %c0_262 = arith.constant 0 : index
    %618 = vector.load %arg34[%c0_260, %c0_261, %c0_262] : memref<1x1x32xf32, #tpu.memory_space<vmem>>, vector<1x1x32xf32>
    %619 = vector.shape_cast %618 : vector<1x1x32xf32> to vector<1x32xf32>
    %620 = vector.broadcast %619 : vector<1x32xf32> to vector<8x32xf32>
    %621 = arith.addf %617, %620 : vector<8x32xf32>
    %c0_263 = arith.constant 0 : index
    %c0_264 = arith.constant 0 : index
    %c0_265 = arith.constant 0 : index
    %622 = vector.load %arg35[%c0_263, %c0_264, %c0_265] : memref<1x1x32xf32, #tpu.memory_space<vmem>>, vector<1x1x32xf32>
    %623 = vector.shape_cast %622 : vector<1x1x32xf32> to vector<1x32xf32>
    %c0_266 = arith.constant 0 : index
    %c0_267 = arith.constant 0 : index
    %c0_268 = arith.constant 0 : index
    %624 = vector.load %arg36[%c0_266, %c0_267, %c0_268] : memref<1x1x32xf32, #tpu.memory_space<vmem>>, vector<1x1x32xf32>
    %625 = vector.shape_cast %624 : vector<1x1x32xf32> to vector<1x32xf32>
    %626 = arith.addf %603, %621 : vector<8x32xf32>
    %cst_269 = arith.constant dense<0.000000e+00> : vector<8xf32>
    %627 = vector.multi_reduction <add>, %626, %cst_269 [1] : vector<8x32xf32> to vector<8xf32>
    %628 = vector.shape_cast %627 : vector<8xf32> to vector<8x1xf32>
    %cst_270 = arith.constant 3.200000e+01 : f32
    %629 = vector.broadcast %cst_270 : f32 to vector<8x1xf32>
    %630 = arith.divf %628, %629 : vector<8x1xf32>
    %631 = vector.broadcast %630 : vector<8x1xf32> to vector<8x32xf32>
    %632 = arith.subf %626, %631 : vector<8x32xf32>
    %633 = arith.mulf %632, %632 : vector<8x32xf32>
    %cst_271 = arith.constant dense<0.000000e+00> : vector<8xf32>
    %634 = vector.multi_reduction <add>, %633, %cst_271 [1] : vector<8x32xf32> to vector<8xf32>
    %635 = vector.shape_cast %634 : vector<8xf32> to vector<8x1xf32>
    %cst_272 = arith.constant 3.200000e+01 : f32
    %636 = vector.broadcast %cst_272 : f32 to vector<8x1xf32>
    %637 = arith.divf %635, %636 : vector<8x1xf32>
    %638 = vector.broadcast %630 : vector<8x1xf32> to vector<8x32xf32>
    %639 = arith.subf %626, %638 : vector<8x32xf32>
    %cst_273 = arith.constant 9.99999974E-6 : f32
    %640 = vector.broadcast %cst_273 : f32 to vector<8x1xf32>
    %641 = arith.addf %637, %640 : vector<8x1xf32>
    %642 = math.rsqrt %641 : vector<8x1xf32>
    %643 = vector.broadcast %642 : vector<8x1xf32> to vector<8x32xf32>
    %644 = arith.mulf %639, %643 : vector<8x32xf32>
    %645 = vector.broadcast %623 : vector<1x32xf32> to vector<8x32xf32>
    %646 = arith.mulf %644, %645 : vector<8x32xf32>
    %647 = vector.broadcast %625 : vector<1x32xf32> to vector<8x32xf32>
    %648 = arith.addf %646, %647 : vector<8x32xf32>
    %c0_274 = arith.constant 0 : index
    %c0_275 = arith.constant 0 : index
    %649 = vector.load %arg37[%c0_274, %c0_275] : memref<32x128xbf16, #tpu.memory_space<vmem>>, vector<32x128xbf16>
    %650 = arith.truncf %648 : vector<8x32xf32> to vector<8x32xbf16>
    %cst_276 = arith.constant dense<0.000000e+00> : vector<8x128xf32>
    %651 = tpu.matmul %650, %649, %cst_276 {dimension_numbers = #tpu.dot_dimension_numbers<[1], [0], [0], [1], [0, 0, 1, 1], [], []>} : vector<8x32xbf16>, vector<32x128xbf16>, vector<8x128xf32> -> vector<8x128xf32>
    %c0_277 = arith.constant 0 : index
    %c0_278 = arith.constant 0 : index
    %652 = vector.load %arg38[%c0_277, %c0_278] : memref<1x128xf32, #tpu.memory_space<vmem>>, vector<1x128xf32>
    %653 = vector.broadcast %652 : vector<1x128xf32> to vector<8x128xf32>
    %654 = arith.addf %651, %653 : vector<8x128xf32>
    %c0_279 = arith.constant 0 : index
    %c0_280 = arith.constant 0 : index
    %655 = vector.load %arg39[%c0_279, %c0_280] : memref<8x128xf32, #tpu.memory_space<vmem>>, vector<8x128xf32>
    tpu.vector_store %arg39[%c0_279, %c0_280], %654 {strides = array<i32>} : memref<8x128xf32, #tpu.memory_space<vmem>>, vector<8x128xf32>,
    return
  }
}

</mosaic_0001>

<llo_original>
// kernel: i2c_forward.2
$region0: #{i2c_forward.2}
  #allocation0 [shape = 'u32[]', space=smem, size = 0x4, offset = 0x4, fixed_abs, tag = 'smem constant byte address 0x4 - core index']
  #allocation1 [shape = 'u32[144,128]{1,0:T(1,128)}', space=vmem, size = 0x12000, scoped, tag = 'internal scratch']
  %s0 = inlined_call_operand.vmem [shape: f32[64,27], index: 0, kind: input, shape index: {}]
  %s1 = inlined_call_operand.vmem [shape: bf16[27,128], index: 1, kind: input, shape index: {}]
  %s2 = inlined_call_operand.vmem [shape: f32[1,128], index: 2, kind: input, shape index: {}]
  %s3 = inlined_call_operand.vmem [shape: f32[64,128], index: 3, kind: output, shape index: {}]
  %s4 = sld [smem:[#allocation0]]
  $region22: #{i2c_forward.2} parent=0
    _
  %s6 = ssub.s32 1, %s4
  %s7 = scalar_select 0, %s6, %s4
  // Predicated region
  $region2: #{i2c_forward.2} parent=0 // pred_check
    _
  $region3: #{i2c_forward.2} parent=0 // pred_check_branch
    %9 = sbr.rel (0) target = $region5
  $region4: #{i2c_forward.2} parent=0 // pred_region
    _
  $region5: #{i2c_forward.2} parent=0 // pred_fallthru
    _
  // Predicated region
  $region6: #{i2c_forward.2} parent=0 // pred_check
    _
  $region7: #{i2c_forward.2} parent=0 // pred_check_branch
    %11 = sbr.rel (0) target = $region9
  $region8: #{i2c_forward.2} parent=0 // pred_region
    _
  $region9: #{i2c_forward.2} parent=0 // pred_fallthru
    _
  // Predicated region
  $region10: #{i2c_forward.2} parent=0 // pred_check
    _
  $region11: #{i2c_forward.2} parent=0 // pred_check_branch
    %13 = sbr.rel (0) target = $region13
  $region12: #{i2c_forward.2} parent=0 // pred_region
    _
  $region13: #{i2c_forward.2} parent=0 // pred_fallthru
    _
  %v15 = vld [vmem:[%s0] sm:$0xff]
  %v16 = vld [vmem:[%s0 + $0x8] sm:$0xff]
  %v17 = vld [vmem:[%s0 + $0x10] sm:$0xff]
  %v18 = vld [vmem:[%s0 + $0x18] sm:$0xff]
  %v19 = vld [vmem:[%s0 + $0x20] sm:$0xff]
  %v20 = vld [vmem:[%s0 + $0x28] sm:$0xff]
  %v21 = vld [vmem:[%s0 + $0x30] sm:$0xff]
  %v22 = vld [vmem:[%s0 + $0x38] sm:$0xff]
  %v23 = vld [vmem:[%s1] sm:$0xf]
  %v24 = vld [vmem:[%s1 + $0x4] sm:$0xf]
  %v25 = vld [vmem:[%s1 + $0x8] sm:$0xf]
  %v26 = vld [vmem:[%s1 + $0xc] sm:$0x3]
  %v27 = vpack.c.bf16 %v16, %v15
  %v28 = vpack.c.bf16 %v18, %v17
  %v29 = vpack.c.bf16 %v20, %v19
  %v30 = vpack.c.bf16 %v22, %v21
  %v31 = vld [vmem:[%s2] sm:$0x1]
  %v33 = vlaneseq
  %v34 = vshrl.u32 %v33, 7
  %v35 = vsub.s32 0, %v34
  %v36 = vrot.slane %v31, %v35
  %v42 = vunpack.c.l.b16 %v23
  %v43 = vunpack.c.l.b16 %v24
  %v44 = vunpack.c.l.b16 %v25
  %v45 = vunpack.c.l.b16 %v26
  %v46 = vpack.c.b16 %v43, %v42
  %v47 = vpack.c.b16 %v45, %v44
  %vm49 = vcmask 220160
  %v51 = vsel %vm49, %v27, 0
  %v54 = vsel %vm49, %v28, 0
  %v57 = vsel %vm49, %v29, 0
  %v60 = vsel %vm49, %v30, 0
  %vm62 = vcmask 1044480
  %vm63 = vcmask 1045504
  %v64 = vsel %vm62, 4294967295, 65535
  %v65 = vsel %vm63, %v64, 0
  %v67 = vand.u32 %v47, %v65
  %69 = vmatprep.subr.bf16.mxu0 0
  %70 = vmatpush1.bf16.msra.mxu0 %v46
  %71 = vmatprep.subr.bf16.mxu0 0
  %72 = vmatpush1.bf16.msra.mxu0 %v67
  %73 = vmatprep.subr.bf16.mxu0 0
  %74 = vmatpush1.bf16.msra.mxu0 0
  %75 = vmatprep.subr.bf16.mxu0 0
  %76 = vmatpush1.bf16.msra.mxu0 0
  %77 = vmatprep.subr.bf16.mxu0 0
  %78 = vmatpush1.bf16.msra.mxu0 0
  %79 = vmatprep.subr.bf16.mxu0 0
  %80 = vmatpush1.bf16.msra.mxu0 0
  %81 = vmatprep.subr.bf16.mxu0 0
  %82 = vmatpush1.bf16.msra.mxu0 0
  %83 = vmatprep.subr.bf16.mxu0 0
  %84 = vmatpush1.bf16.msra.mxu0 0
  %85 = vmatprep.subr.bf16.mxu0 0
  %86 = vmatpush1.bf16.msra.mxu0 0
  %87 = vmatprep.subr.bf16.mxu0 0
  %88 = vmatpush1.bf16.msra.mxu0 0
  %89 = vmatprep.subr.bf16.mxu0 0
  %90 = vmatpush1.bf16.msra.mxu0 0
  %91 = vmatprep.subr.bf16.mxu0 0
  %92 = vmatpush1.bf16.msra.mxu0 0
  %93 = vmatprep.subr.bf16.mxu0 0
  %94 = vmatpush1.bf16.msra.mxu0 0
  %95 = vmatprep.subr.bf16.mxu0 0
  %96 = vmatpush1.bf16.msra.mxu0 0
  %97 = vmatprep.subr.bf16.mxu0 0
  %98 = vmatpush1.bf16.msra.mxu0 0
  %99 = vmatprep.subr.bf16.mxu0 0
  %100 = vmatpush1.bf16.msra.mxu0 0
  %101 = vmatprep.mubr.bf16.mxu0 0
  %102 = vmatmul.mubr.bf16.gmra.mrb[0].mxu0 %v51
  %v103 = vpop.f32.mrb[0].mxu0
  %v104 = vadd.f32 %v36, %v103
  %v105 = vpop.f32.mrb[0].mxu0
  %v106 = vpop.f32.mrb[0].mxu0
  %v107 = vadd.f32 %v36, %v106
  %v108 = vpop.f32.mrb[0].mxu0
  %109 = vmatprep.mubr.bf16.mxu0 0
  %110 = vmatmul.mubr.bf16.gmra.mrb[0].mxu0 %v54
  %v111 = vpop.f32.mrb[0].mxu0
  %v112 = vadd.f32 %v36, %v111
  %v113 = vpop.f32.mrb[0].mxu0
  %v114 = vpop.f32.mrb[0].mxu0
  %v115 = vadd.f32 %v36, %v114
  %v116 = vpop.f32.mrb[0].mxu0
  %117 = vmatprep.mubr.bf16.mxu0 0
  %118 = vmatmul.mubr.bf16.gmra.mrb[0].mxu0 %v57
  %v119 = vpop.f32.mrb[0].mxu0
  %v120 = vadd.f32 %v36, %v119
  %v121 = vpop.f32.mrb[0].mxu0
  %v122 = vpop.f32.mrb[0].mxu0
  %v123 = vadd.f32 %v36, %v122
  %v124 = vpop.f32.mrb[0].mxu0
  %125 = vmatprep.mubr.bf16.mxu0 0
  %126 = vmatmul.mubr.bf16.gmra.mrb[0].mxu0 %v60
  %v127 = vpop.f32.mrb[0].mxu0
  %v128 = vadd.f32 %v36, %v127
  %v129 = vpop.f32.mrb[0].mxu0
  %v130 = vpop.f32.mrb[0].mxu0
  %v131 = vadd.f32 %v36, %v130
  %v132 = vpop.f32.mrb[0].mxu0
  %133 = vdwg.mxu0
  %v134 = vmax.f32 %v104, 0.0
  %v135 = vmax.f32 %v107, 0.0
  %v136 = vmax.f32 %v112, 0.0
  %v137 = vmax.f32 %v115, 0.0
  %v138 = vmax.f32 %v120, 0.0
  %v139 = vmax.f32 %v123, 0.0
  %v140 = vmax.f32 %v128, 0.0
  %v141 = vmax.f32 %v131, 0.0
  %142 = vst [vmem:[%s3] sm:$0xff] %v134
  %143 = vst [vmem:[%s3 + $0x8] sm:$0xff] %v135
  %144 = vst [vmem:[%s3 + $0x10] sm:$0xff] %v136
  %145 = vst [vmem:[%s3 + $0x18] sm:$0xff] %v137
  %146 = vst [vmem:[%s3 + $0x20] sm:$0xff] %v138
  %147 = vst [vmem:[%s3 + $0x28] sm:$0xff] %v139
  %148 = vst [vmem:[%s3 + $0x30] sm:$0xff] %v140
  %149 = vst [vmem:[%s3 + $0x38] sm:$0xff] %v141
  // Predicated region
  $region14: #{i2c_forward.2} parent=0 // pred_check
    _
  $region15: #{i2c_forward.2} parent=0 // pred_check_branch
    %151 = sbr.rel (0) target = $region17
  $region16: #{i2c_forward.2} parent=0 // pred_region
    _
  $region17: #{i2c_forward.2} parent=0 // pred_fallthru
    _
  // Predicated region
  $region18: #{i2c_forward.2} parent=0 // pred_check
    _
  $region19: #{i2c_forward.2} parent=0 // pred_check_branch
    %153 = sbr.rel (0) target = $region21
  $region20: #{i2c_forward.2} parent=0 // pred_region
    _
  $region21: #{i2c_forward.2} parent=0 // pred_fallthru
    _

// kernel: i2c_forward.3
$region0: #{i2c_forward.3}
  #allocation0 [shape = 'u32[]', space=smem, size = 0x4, offset = 0x4, fixed_abs, tag = 'smem constant byte address 0x4 - core index']
  #allocation1 [shape = 'u32[144,128]{1,0:T(1,128)}', space=vmem, size = 0x12000, scoped, tag = 'internal scratch']
  %s0 = inlined_call_operand.smem [shape: u32[40], index: -1, kind: input, shape index: {}]
  %s1 = sld [smem:[%s0]]
  %s2 = scalar_lea.smem %s0, 1
  %s3 = sld [smem:[%s2]]
  %s4 = scalar_lea.smem %s0, 2
  %s5 = sld [smem:[%s4]]
  %s6 = scalar_lea.smem %s0, 3
  %s7 = sld [smem:[%s6]]
  %s8 = scalar_lea.smem %s0, 4
  %s9 = sld [smem:[%s8]]
  %s10 = scalar_lea.smem %s0, 5
  %s11 = sld [smem:[%s10]]
  %s12 = scalar_lea.smem %s0, 6
  %s13 = sld [smem:[%s12]]
  %s14 = scalar_lea.smem %s0, 7
  %s15 = sld [smem:[%s14]]
  %s16 = scalar_lea.smem %s0, 8
  %s17 = sld [smem:[%s16]]
  %s18 = scalar_lea.smem %s0, 9
  %s19 = sld [smem:[%s18]]
  %s20 = scalar_lea.smem %s0, 10
  %s21 = sld [smem:[%s20]]
  %s22 = scalar_lea.smem %s0, 11
  %s23 = sld [smem:[%s22]]
  %s24 = scalar_lea.smem %s0, 12
  %s25 = sld [smem:[%s24]]
  %s26 = scalar_lea.smem %s0, 13
  %s27 = sld [smem:[%s26]]
  %s28 = scalar_lea.smem %s0, 14
  %s29 = sld [smem:[%s28]]
  %s30 = scalar_lea.smem %s0, 15
  %s31 = sld [smem:[%s30]]
  %s32 = scalar_lea.smem %s0, 16
  %s33 = sld [smem:[%s32]]
  %s34 = scalar_lea.smem %s0, 17
  %s35 = sld [smem:[%s34]]
  %s36 = scalar_lea.smem %s0, 18
  %s37 = sld [smem:[%s36]]
  %s38 = scalar_lea.smem %s0, 19
  %s39 = sld [smem:[%s38]]
  %s40 = scalar_lea.smem %s0, 20
  %s41 = sld [smem:[%s40]]
  %s42 = scalar_lea.smem %s0, 21
  %s43 = sld [smem:[%s42]]
  %s44 = scalar_lea.smem %s0, 22
  %s45 = sld [smem:[%s44]]
  %s46 = scalar_lea.smem %s0, 23
  %s47 = sld [smem:[%s46]]
  %s48 = scalar_lea.smem %s0, 24
  %s49 = sld [smem:[%s48]]
  %s50 = scalar_lea.smem %s0, 25
  %s51 = sld [smem:[%s50]]
  %s52 = scalar_lea.smem %s0, 26
  %s53 = sld [smem:[%s52]]
  %s54 = scalar_lea.smem %s0, 27
  %s55 = sld [smem:[%s54]]
  %s56 = scalar_lea.smem %s0, 28
  %s57 = sld [smem:[%s56]]
  %s58 = scalar_lea.smem %s0, 29
  %s59 = sld [smem:[%s58]]
  %s60 = scalar_lea.smem %s0, 30
  %s61 = sld [smem:[%s60]]
  %s62 = scalar_lea.smem %s0, 31
  %s63 = sld [smem:[%s62]]
  %s64 = scalar_lea.smem %s0, 32
  %s65 = sld [smem:[%s64]]
  %s66 = scalar_lea.smem %s0, 33
  %s67 = sld [smem:[%s66]]
  %s68 = scalar_lea.smem %s0, 34
  %s69 = sld [smem:[%s68]]
  %s70 = scalar_lea.smem %s0, 35
  %s71 = sld [smem:[%s70]]
  %s72 = scalar_lea.smem %s0, 36
  %s73 = sld [smem:[%s72]]
  %s74 = scalar_lea.smem %s0, 37
  %s75 = sld [smem:[%s74]]
  %s76 = scalar_lea.smem %s0, 38
  %s77 = sld [smem:[%s76]]
  %s78 = scalar_lea.smem %s0, 39
  %s79 = sld [smem:[%s78]]
  %s80 = sld [smem:[#allocation0]]
  $region166: #{i2c_forward.3} parent=0
    _
  %s82 = ssub.s32 1, %s80
  %s83 = scalar_select 0, %s82, %s80
  // Predicated region
  $region2: #{i2c_forward.3} parent=0 // pred_check
    _
  $region3: #{i2c_forward.3} parent=0 // pred_check_branch
    %85 = sbr.rel (0) target = $region5
  $region4: #{i2c_forward.3} parent=0 // pred_region
    _
  $region5: #{i2c_forward.3} parent=0 // pred_fallthru
    _
  // Predicated region
  $region6: #{i2c_forward.3} parent=0 // pred_check
    _
  $region7: #{i2c_forward.3} parent=0 // pred_check_branch
    %87 = sbr.rel (0) target = $region9
  $region8: #{i2c_forward.3} parent=0 // pred_region
    _
  $region9: #{i2c_forward.3} parent=0 // pred_fallthru
    _
  // Predicated region
  $region10: #{i2c_forward.3} parent=0 // pred_check
    _
  $region11: #{i2c_forward.3} parent=0 // pred_check_branch
    %89 = sbr.rel (0) target = $region13
  $region12: #{i2c_forward.3} parent=0 // pred_region
    _
  $region13: #{i2c_forward.3} parent=0 // pred_fallthru
    _
  // Predicated region
  $region14: #{i2c_forward.3} parent=0 // pred_check
    _
  $region15: #{i2c_forward.3} parent=0 // pred_check_branch
    %91 = sbr.rel (0) target = $region17
  $region16: #{i2c_forward.3} parent=0 // pred_region
    _
  $region17: #{i2c_forward.3} parent=0 // pred_fallthru
    _
  // Predicated region
  $region18: #{i2c_forward.3} parent=0 // pred_check
    _
  $region19: #{i2c_forward.3} parent=0 // pred_check_branch
    %93 = sbr.rel (0) target = $region21
  $region20: #{i2c_forward.3} parent=0 // pred_region
    _
  $region21: #{i2c_forward.3} parent=0 // pred_fallthru
    _
  // Predicated region
  $region22: #{i2c_forward.3} parent=0 // pred_check
    _
  $region23: #{i2c_forward.3} parent=0 // pred_check_branch
    %95 = sbr.rel (0) target = $region25
  $region24: #{i2c_forward.3} parent=0 // pred_region
    _
  $region25: #{i2c_forward.3} parent=0 // pred_fallthru
    _
  // Predicated region
  $region26: #{i2c_forward.3} parent=0 // pred_check
    _
  $region27: #{i2c_forward.3} parent=0 // pred_check_branch
    %97 = sbr.rel (0) target = $region29
  $region28: #{i2c_forward.3} parent=0 // pred_region
    _
  $region29: #{i2c_forward.3} parent=0 // pred_fallthru
    _
  // Predicated region
  $region30: #{i2c_forward.3} parent=0 // pred_check
    _
  $region31: #{i2c_forward.3} parent=0 // pred_check_branch
    %99 = sbr.rel (0) target = $region33
  $region32: #{i2c_forward.3} parent=0 // pred_region
    _
  $region33: #{i2c_forward.3} parent=0 // pred_fallthru
    _
  // Predicated region
  $region34: #{i2c_forward.3} parent=0 // pred_check
    _
  $region35: #{i2c_forward.3} parent=0 // pred_check_branch
    %101 = sbr.rel (0) target = $region37
  $region36: #{i2c_forward.3} parent=0 // pred_region
    _
  $region37: #{i2c_forward.3} parent=0 // pred_fallthru
    _
  // Predicated region
  $region38: #{i2c_forward.3} parent=0 // pred_check
    _
  $region39: #{i2c_forward.3} parent=0 // pred_check_branch
    %103 = sbr.rel (0) target = $region41
  $region40: #{i2c_forward.3} parent=0 // pred_region
    _
  $region41: #{i2c_forward.3} parent=0 // pred_fallthru
    _
  // Predicated region
  $region42: #{i2c_forward.3} parent=0 // pred_check
    _
  $region43: #{i2c_forward.3} parent=0 // pred_check_branch
    %105 = sbr.rel (0) target = $region45
  $region44: #{i2c_forward.3} parent=0 // pred_region
    _
  $region45: #{i2c_forward.3} parent=0 // pred_fallthru
    _
  // Predicated region
  $region46: #{i2c_forward.3} parent=0 // pred_check
    _
  $region47: #{i2c_forward.3} parent=0 // pred_check_branch
    %107 = sbr.rel (0) target = $region49
  $region48: #{i2c_forward.3} parent=0 // pred_region
    _
  $region49: #{i2c_forward.3} parent=0 // pred_fallthru
    _
  // Predicated region
  $region50: #{i2c_forward.3} parent=0 // pred_check
    _
  $region51: #{i2c_forward.3} parent=0 // pred_check_branch
    %109 = sbr.rel (0) target = $region53
  $region52: #{i2c_forward.3} parent=0 // pred_region
    _
  $region53: #{i2c_forward.3} parent=0 // pred_fallthru
    _
  // Predicated region
  $region54: #{i2c_forward.3} parent=0 // pred_check
    _
  $region55: #{i2c_forward.3} parent=0 // pred_check_branch
    %111 = sbr.rel (0) target = $region57
  $region56: #{i2c_forward.3} parent=0 // pred_region
    _
  $region57: #{i2c_forward.3} parent=0 // pred_fallthru
    _
  // Predicated region
  $region58: #{i2c_forward.3} parent=0 // pred_check
    _
  $region59: #{i2c_forward.3} parent=0 // pred_check_branch
    %113 = sbr.rel (0) target = $region61
  $region60: #{i2c_forward.3} parent=0 // pred_region
    _
  $region61: #{i2c_forward.3} parent=0 // pred_fallthru
    _
  // Predicated region
  $region62: #{i2c_forward.3} parent=0 // pred_check
    _
  $region63: #{i2c_forward.3} parent=0 // pred_check_branch
    %115 = sbr.rel (0) target = $region65
  $region64: #{i2c_forward.3} parent=0 // pred_region
    _
  $region65: #{i2c_forward.3} parent=0 // pred_fallthru
    _
  // Predicated region
  $region66: #{i2c_forward.3} parent=0 // pred_check
    _
  $region67: #{i2c_forward.3} parent=0 // pred_check_branch
    %117 = sbr.rel (0) target = $region69
  $region68: #{i2c_forward.3} parent=0 // pred_region
    _
  $region69: #{i2c_forward.3} parent=0 // pred_fallthru
    _
  // Predicated region
  $region70: #{i2c_forward.3} parent=0 // pred_check
    _
  $region71: #{i2c_forward.3} parent=0 // pred_check_branch
    %119 = sbr.rel (0) target = $region73
  $region72: #{i2c_forward.3} parent=0 // pred_region
    _
  $region73: #{i2c_forward.3} parent=0 // pred_fallthru
    _
  // Predicated region
  $region74: #{i2c_forward.3} parent=0 // pred_check
    _
  $region75: #{i2c_forward.3} parent=0 // pred_check_branch
    %121 = sbr.rel (0) target = $region77
  $region76: #{i2c_forward.3} parent=0 // pred_region
    _
  $region77: #{i2c_forward.3} parent=0 // pred_fallthru
    _
  // Predicated region
  $region78: #{i2c_forward.3} parent=0 // pred_check
    _
  $region79: #{i2c_forward.3} parent=0 // pred_check_branch
    %123 = sbr.rel (0) target = $region81
  $region80: #{i2c_forward.3} parent=0 // pred_region
    _
  $region81: #{i2c_forward.3} parent=0 // pred_fallthru
    _
  // Predicated region
  $region82: #{i2c_forward.3} parent=0 // pred_check
    _
  $region83: #{i2c_forward.3} parent=0 // pred_check_branch
    %125 = sbr.rel (0) target = $region85
  $region84: #{i2c_forward.3} parent=0 // pred_region
    _
  $region85: #{i2c_forward.3} parent=0 // pred_fallthru
    _
  // Predicated region
  $region86: #{i2c_forward.3} parent=0 // pred_check
    _
  $region87: #{i2c_forward.3} parent=0 // pred_check_branch
    %127 = sbr.rel (0) target = $region89
  $region88: #{i2c_forward.3} parent=0 // pred_region
    _
  $region89: #{i2c_forward.3} parent=0 // pred_fallthru
    _
  // Predicated region
  $region90: #{i2c_forward.3} parent=0 // pred_check
    _
  $region91: #{i2c_forward.3} parent=0 // pred_check_branch
    %129 = sbr.rel (0) target = $region93
  $region92: #{i2c_forward.3} parent=0 // pred_region
    _
  $region93: #{i2c_forward.3} parent=0 // pred_fallthru
    _
  // Predicated region
  $region94: #{i2c_forward.3} parent=0 // pred_check
    _
  $region95: #{i2c_forward.3} parent=0 // pred_check_branch
    %131 = sbr.rel (0) target = $region97
  $region96: #{i2c_forward.3} parent=0 // pred_region
    _
  $region97: #{i2c_forward.3} parent=0 // pred_fallthru
    _
  // Predicated region
  $region98: #{i2c_forward.3} parent=0 // pred_check
    _
  $region99: #{i2c_forward.3} parent=0 // pred_check_branch
    %133 = sbr.rel (0) target = $region101
  $region100: #{i2c_forward.3} parent=0 // pred_region
    _
  $region101: #{i2c_forward.3} parent=0 // pred_fallthru
    _
  // Predicated region
  $region102: #{i2c_forward.3} parent=0 // pred_check
    _
  $region103: #{i2c_forward.3} parent=0 // pred_check_branch
    %135 = sbr.rel (0) target = $region105
  $region104: #{i2c_forward.3} parent=0 // pred_region
    _
  $region105: #{i2c_forward.3} parent=0 // pred_fallthru
    _
  // Predicated region
  $region106: #{i2c_forward.3} parent=0 // pred_check
    _
  $region107: #{i2c_forward.3} parent=0 // pred_check_branch
    %137 = sbr.rel (0) target = $region109
  $region108: #{i2c_forward.3} parent=0 // pred_region
    _
  $region109: #{i2c_forward.3} parent=0 // pred_fallthru
    _
  // Predicated region
  $region110: #{i2c_forward.3} parent=0 // pred_check
    _
  $region111: #{i2c_forward.3} parent=0 // pred_check_branch
    %139 = sbr.rel (0) target = $region113
  $region112: #{i2c_forward.3} parent=0 // pred_region
    _
  $region113: #{i2c_forward.3} parent=0 // pred_fallthru
    _
  // Predicated region
  $region114: #{i2c_forward.3} parent=0 // pred_check
    _
  $region115: #{i2c_forward.3} parent=0 // pred_check_branch
    %141 = sbr.rel (0) target = $region117
  $region116: #{i2c_forward.3} parent=0 // pred_region
    _
  $region117: #{i2c_forward.3} parent=0 // pred_fallthru
    _
  // Predicated region
  $region118: #{i2c_forward.3} parent=0 // pred_check
    _
  $region119: #{i2c_forward.3} parent=0 // pred_check_branch
    %143 = sbr.rel (0) target = $region121
  $region120: #{i2c_forward.3} parent=0 // pred_region
    _
  $region121: #{i2c_forward.3} parent=0 // pred_fallthru
    _
  // Predicated region
  $region122: #{i2c_forward.3} parent=0 // pred_check
    _
  $region123: #{i2c_forward.3} parent=0 // pred_check_branch
    %145 = sbr.rel (0) target = $region125
  $region124: #{i2c_forward.3} parent=0 // pred_region
    _
  $region125: #{i2c_forward.3} parent=0 // pred_fallthru
    _
  // Predicated region
  $region126: #{i2c_forward.3} parent=0 // pred_check
    _
  $region127: #{i2c_forward.3} parent=0 // pred_check_branch
    %147 = sbr.rel (0) target = $region129
  $region128: #{i2c_forward.3} parent=0 // pred_region
    _
  $region129: #{i2c_forward.3} parent=0 // pred_fallthru
    _
  // Predicated region
  $region130: #{i2c_forward.3} parent=0 // pred_check
    _
  $region131: #{i2c_forward.3} parent=0 // pred_check_branch
    %149 = sbr.rel (0) target = $region133
  $region132: #{i2c_forward.3} parent=0 // pred_region
    _
  $region133: #{i2c_forward.3} parent=0 // pred_fallthru
    _
  // Predicated region
  $region134: #{i2c_forward.3} parent=0 // pred_check
    _
  $region135: #{i2c_forward.3} parent=0 // pred_check_branch
    %151 = sbr.rel (0) target = $region137
  $region136: #{i2c_forward.3} parent=0 // pred_region
    _
  $region137: #{i2c_forward.3} parent=0 // pred_fallthru
    _
  // Predicated region
  $region138: #{i2c_forward.3} parent=0 // pred_check
    _
  $region139: #{i2c_forward.3} parent=0 // pred_check_branch
    %153 = sbr.rel (0) target = $region141
  $region140: #{i2c_forward.3} parent=0 // pred_region
    _
  $region141: #{i2c_forward.3} parent=0 // pred_fallthru
    _
  // Predicated region
  $region142: #{i2c_forward.3} parent=0 // pred_check
    _
  $region143: #{i2c_forward.3} parent=0 // pred_check_branch
    %155 = sbr.rel (0) target = $region145
  $region144: #{i2c_forward.3} parent=0 // pred_region
    _
  $region145: #{i2c_forward.3} parent=0 // pred_fallthru
    _
  // Predicated region
  $region146: #{i2c_forward.3} parent=0 // pred_check
    _
  $region147: #{i2c_forward.3} parent=0 // pred_check_branch
    %157 = sbr.rel (0) target = $region149
  $region148: #{i2c_forward.3} parent=0 // pred_region
    _
  $region149: #{i2c_forward.3} parent=0 // pred_fallthru
    _
  // Predicated region
  $region150: #{i2c_forward.3} parent=0 // pred_check
    _
  $region151: #{i2c_forward.3} parent=0 // pred_check_branch
    %159 = sbr.rel (0) target = $region153
  $region152: #{i2c_forward.3} parent=0 // pred_region
    _
  $region153: #{i2c_forward.3} parent=0 // pred_fallthru
    _
  // Predicated region
  $region154: #{i2c_forward.3} parent=0 // pred_check
    _
  $region155: #{i2c_forward.3} parent=0 // pred_check_branch
    %161 = sbr.rel (0) target = $region157
  $region156: #{i2c_forward.3} parent=0 // pred_region
    _
  $region157: #{i2c_forward.3} parent=0 // pred_fallthru
    _
  %v163 = vld [vmem:[%s1] sm:$0xff]
  %v164 = vld [vmem:[%s1 + $0x8] sm:$0xff]
  %v165 = vld [vmem:[%s1 + $0x10] sm:$0xff]
  %v166 = vld [vmem:[%s1 + $0x18] sm:$0xff]
  %v167 = vld [vmem:[%s3] sm:$0xf]
  %v168 = vld [vmem:[%s3 + $0x4] sm:$0xf]
  %v169 = vld [vmem:[%s3 + $0x8] sm:$0xf]
  %v170 = vld [vmem:[%s3 + $0xc] sm:$0xf]
  %v171 = vld [vmem:[%s3 + $0x10] sm:$0xf]
  %v172 = vld [vmem:[%s3 + $0x14] sm:$0xf]
  %v173 = vld [vmem:[%s3 + $0x18] sm:$0xf]
  %v174 = vld [vmem:[%s3 + $0x1c] sm:$0xf]
  %v175 = vld [vmem:[%s3 + $0x20] sm:$0xf]
  %v176 = vld [vmem:[%s3 + $0x24] sm:$0xf]
  %v177 = vld [vmem:[%s3 + $0x28] sm:$0xf]
  %v178 = vld [vmem:[%s3 + $0x2c] sm:$0xf]
  %v179 = vld [vmem:[%s3 + $0x30] sm:$0xf]
  %v180 = vld [vmem:[%s3 + $0x34] sm:$0xf]
  %v181 = vld [vmem:[%s3 + $0x38] sm:$0xf]
  %v182 = vld [vmem:[%s3 + $0x3c] sm:$0xf]
  %v183 = vld [vmem:[%s3 + $0x40] sm:$0xf]
  %v184 = vld [vmem:[%s3 + $0x44] sm:$0xf]
  %v185 = vpack.c.bf16 %v165, %v163
  %v186 = vpack.c.bf16 %v166, %v164
  %v187 = vld [vmem:[%s5] sm:$0x1]
  %v189 = vlaneseq
  %v190 = vshrl.u32 %v189, 7
  %v191 = vsub.s32 0, %v190
  %v192 = vrot.slane %v187, %v191
  %v212 = vunpack.c.l.b16 %v167
  %v213 = vunpack.c.l.b16 %v168
  %v214 = vunpack.c.l.b16 %v169
  %v215 = vunpack.c.l.b16 %v170
  %v216 = vunpack.c.l.b16 %v171
  %v217 = vunpack.c.l.b16 %v172
  %v218 = vunpack.c.l.b16 %v173
  %v219 = vunpack.c.l.b16 %v174
  %v220 = vunpack.c.l.b16 %v175
  %v221 = vunpack.c.l.b16 %v176
  %v222 = vunpack.c.l.b16 %v177
  %v223 = vunpack.c.l.b16 %v178
  %v224 = vunpack.c.l.b16 %v179
  %v225 = vunpack.c.l.b16 %v180
  %v226 = vunpack.c.l.b16 %v181
  %v227 = vunpack.c.l.b16 %v182
  %v228 = vunpack.c.l.b16 %v183
  %v229 = vunpack.c.l.b16 %v184
  %v230 = vpack.c.b16 %v213, %v212
  %v231 = vpack.c.b16 %v215, %v214
  %v232 = vpack.c.b16 %v217, %v216
  %v233 = vpack.c.b16 %v219, %v218
  %v234 = vpack.c.b16 %v221, %v220
  %v235 = vpack.c.b16 %v223, %v222
  %v236 = vpack.c.b16 %v225, %v224
  %v237 = vpack.c.b16 %v227, %v226
  %v238 = vpack.c.b16 %v229, %v228
  %vm248 = vcmask 130048
  %v250 = vsel %vm248, %v186, 0
  %252 = vmatprep.subr.bf16.mxu0 0
  %253 = vmatpush1.bf16.msra.mxu0 %v230
  %254 = vmatprep.subr.bf16.mxu0 0
  %255 = vmatpush1.bf16.msra.mxu0 %v231
  %256 = vmatprep.subr.bf16.mxu0 0
  %257 = vmatpush1.bf16.msra.mxu0 %v232
  %258 = vmatprep.subr.bf16.mxu0 0
  %259 = vmatpush1.bf16.msra.mxu0 %v233
  %260 = vmatprep.subr.bf16.mxu0 0
  %261 = vmatpush1.bf16.msra.mxu0 %v234
  %262 = vmatprep.subr.bf16.mxu0 0
  %263 = vmatpush1.bf16.msra.mxu0 %v235
  %264 = vmatprep.subr.bf16.mxu0 0
  %265 = vmatpush1.bf16.msra.mxu0 %v236
  %266 = vmatprep.subr.bf16.mxu0 0
  %267 = vmatpush1.bf16.msra.mxu0 %v237
  %268 = vmatprep.subr.bf16.mxu0 0
  %269 = vmatpush1.bf16.msra.mxu0 %v238
  %270 = vmatprep.subr.bf16.mxu0 0
  %271 = vmatpush1.bf16.msra.mxu0 0
  %272 = vmatprep.subr.bf16.mxu0 0
  %273 = vmatpush1.bf16.msra.mxu0 0
  %274 = vmatprep.subr.bf16.mxu0 0
  %275 = vmatpush1.bf16.msra.mxu0 0
  %276 = vmatprep.subr.bf16.mxu0 0
  %277 = vmatpush1.bf16.msra.mxu0 0
  %278 = vmatprep.subr.bf16.mxu0 0
  %279 = vmatpush1.bf16.msra.mxu0 0
  %280 = vmatprep.subr.bf16.mxu0 0
  %281 = vmatpush1.bf16.msra.mxu0 0
  %282 = vmatprep.subr.bf16.mxu0 0
  %283 = vmatpush1.bf16.msra.mxu0 0
  %284 = vmatprep.mubr.bf16.mxu0 %v250
  %285 = vmatmul.mubr.bf16.gmra.mrb[0].mxu0 %v185
  %v286 = vpop.f32.mrb[0].mxu0
  %v287 = vadd.f32 %v192, %v286
  %v288 = vpop.f32.mrb[0].mxu0
  %v289 = vpop.f32.mrb[0].mxu0
  %v290 = vadd.f32 %v192, %v289
  %v291 = vpop.f32.mrb[0].mxu0
  %292 = vdwg.mxu0
  %v293 = vmax.f32 %v287, 0.0
  %v294 = vmax.f32 %v290, 0.0
  %v295 = vld [vmem:[%s7] sm:$0xff]
  %v296 = vld [vmem:[%s7 + $0x8] sm:$0xff]
  %v297 = vadd.f32 %v293, %v295
  %v298 = vadd.f32 %v294, %v296
  %v299 = vld [vmem:[%s11] sm:$0xf]
  %v300 = vld [vmem:[%s11 + $0x4] sm:$0xf]
  %v301 = vld [vmem:[%s11 + $0x8] sm:$0xf]
  %v302 = vld [vmem:[%s11 + $0xc] sm:$0xf]
  %v303 = vpack.c.bf16 %v298, %v297
  %v304 = vld [vmem:[%s13] sm:$0x1]
  %v306 = vlaneseq
  %v307 = vshrl.u32 %v306, 7
  %v308 = vsub.s32 0, %v307
  %v309 = vrot.slane %v304, %v308
  %v315 = vunpack.c.l.b16 %v299
  %v316 = vunpack.c.l.b16 %v300
  %v317 = vunpack.c.l.b16 %v301
  %v318 = vunpack.c.l.b16 %v302
  %v319 = vpack.c.b16 %v316, %v315
  %v320 = vpack.c.b16 %v318, %v317
  %vm323 = vcmask 261120
  %v325 = vsel %vm323, %v303, 0
  %327 = vmatprep.subr.bf16.mxu0 0
  %328 = vmatpush1.bf16.msra.mxu0 %v319
  %329 = vmatprep.subr.bf16.mxu0 0
  %330 = vmatpush1.bf16.msra.mxu0 %v320
  %331 = vmatprep.subr.bf16.mxu0 0
  %332 = vmatpush1.bf16.msra.mxu0 0
  %333 = vmatprep.subr.bf16.mxu0 0
  %334 = vmatpush1.bf16.msra.mxu0 0
  %335 = vmatprep.subr.bf16.mxu0 0
  %336 = vmatpush1.bf16.msra.mxu0 0
  %337 = vmatprep.subr.bf16.mxu0 0
  %338 = vmatpush1.bf16.msra.mxu0 0
  %339 = vmatprep.subr.bf16.mxu0 0
  %340 = vmatpush1.bf16.msra.mxu0 0
  %341 = vmatprep.subr.bf16.mxu0 0
  %342 = vmatpush1.bf16.msra.mxu0 0
  %343 = vmatprep.subr.bf16.mxu0 0
  %344 = vmatpush1.bf16.msra.mxu0 0
  %345 = vmatprep.subr.bf16.mxu0 0
  %346 = vmatpush1.bf16.msra.mxu0 0
  %347 = vmatprep.subr.bf16.mxu0 0
  %348 = vmatpush1.bf16.msra.mxu0 0
  %349 = vmatprep.subr.bf16.mxu0 0
  %350 = vmatpush1.bf16.msra.mxu0 0
  %351 = vmatprep.subr.bf16.mxu0 0
  %352 = vmatpush1.bf16.msra.mxu0 0
  %353 = vmatprep.subr.bf16.mxu0 0
  %354 = vmatpush1.bf16.msra.mxu0 0
  %355 = vmatprep.subr.bf16.mxu0 0
  %356 = vmatpush1.bf16.msra.mxu0 0
  %357 = vmatprep.subr.bf16.mxu0 0
  %358 = vmatpush1.bf16.msra.mxu0 0
  %359 = vmatprep.mubr.bf16.mxu0 0
  %360 = vmatmul.mubr.bf16.gmra.mrb[0].mxu0 %v325
  %v361 = vpop.f32.mrb[0].mxu0
  %v362 = vadd.f32 %v309, %v361
  %v363 = vpop.f32.mrb[0].mxu0
  %v364 = vpop.f32.mrb[0].mxu0
  %v365 = vadd.f32 %v309, %v364
  %v366 = vpop.f32.mrb[0].mxu0
  %367 = vdwg.mxu0
  %v368 = vld [vmem:[%s15] sm:$0xf]
  %v369 = vld [vmem:[%s15 + $0x4] sm:$0xf]
  %v370 = vld [vmem:[%s15 + $0x8] sm:$0xf]
  %v371 = vld [vmem:[%s15 + $0xc] sm:$0xf]
  %v372 = vpack.c.bf16 %v365, %v362
  %374 = vrot.lane.b32.xlu0 %v372, 120
  %v375 = vpop.permute.xlu0 %374
  %376 = vrot.lane.b32.xlu0 %v372, 112
  %v377 = vpop.permute.xlu0 %376
  %378 = vrot.lane.b32.xlu0 %v372, 104
  %v379 = vpop.permute.xlu0 %378
  %380 = vrot.lane.b32.xlu0 %v372, 96
  %v381 = vpop.permute.xlu0 %380
  %vm382 = vcmask 64512
  %v384 = vsel %vm382, %v372, 0
  %v387 = vsel %vm382, %v381, 0
  %389 = vmatprep.subr.bf16.mxu0 0
  %390 = vmatpush1.bf16.xpose.msra.mxu0 %v387
  %391 = vmatprep.subr.bf16.mxu0 0
  %392 = vmatpush1.bf16.xpose.msra.mxu0 0
  %393 = vmatprep.subr.bf16.mxu0 0
  %394 = vmatpush1.bf16.xpose.msra.mxu0 0
  %395 = vmatprep.subr.bf16.mxu0 0
  %396 = vmatpush1.bf16.xpose.msra.mxu0 0
  %397 = vmatprep.subr.bf16.mxu0 0
  %398 = vmatpush1.bf16.xpose.msra.mxu0 0
  %399 = vmatprep.subr.bf16.mxu0 0
  %400 = vmatpush1.bf16.xpose.msra.mxu0 0
  %401 = vmatprep.subr.bf16.mxu0 0
  %402 = vmatpush1.bf16.xpose.msra.mxu0 0
  %403 = vmatprep.subr.bf16.mxu0 0
  %404 = vmatpush1.bf16.xpose.msra.mxu0 0
  %405 = vmatprep.subr.bf16.mxu0 0
  %406 = vmatpush1.bf16.xpose.msra.mxu0 0
  %407 = vmatprep.subr.bf16.mxu0 0
  %408 = vmatpush1.bf16.xpose.msra.mxu0 0
  %409 = vmatprep.subr.bf16.mxu0 0
  %410 = vmatpush1.bf16.xpose.msra.mxu0 0
  %411 = vmatprep.subr.bf16.mxu0 0
  %412 = vmatpush1.bf16.xpose.msra.mxu0 0
  %413 = vmatprep.subr.bf16.mxu0 0
  %414 = vmatpush1.bf16.xpose.msra.mxu0 0
  %415 = vmatprep.subr.bf16.mxu0 0
  %416 = vmatpush1.bf16.xpose.msra.mxu0 0
  %417 = vmatprep.subr.bf16.mxu0 0
  %418 = vmatpush1.bf16.xpose.msra.mxu0 0
  %419 = vmatprep.subr.bf16.mxu0 0
  %420 = vmatpush1.bf16.xpose.msra.mxu0 0
  %421 = vmatprep.mubr.bf16.mxu0 0
  %422 = vmatmul.mubr.bf16.gmra.mrb[0].mxu0 %v384
  %v423 = vpop.f32.mrb[0].mxu0
  %v424 = vadd.f32 0.0, %v423
  %v425 = vpop.f32.mrb[0].mxu0
  %v426 = vpop.f32.mrb[0].mxu0
  %v427 = vadd.f32 0.0, %v426
  %v428 = vpop.f32.mrb[0].mxu0
  %429 = vdwg.mxu0
  %430 = vrot.lane.b32.xlu0 %v375, 96
  %v431 = vpop.permute.xlu0 %430
  %v433 = vsel %vm382, %v375, 0
  %v436 = vsel %vm382, %v431, 0
  %438 = vmatprep.subr.bf16.mxu0 0
  %439 = vmatpush1.bf16.xpose.msra.mxu0 %v436
  %440 = vmatprep.subr.bf16.mxu0 0
  %441 = vmatpush1.bf16.xpose.msra.mxu0 0
  %442 = vmatprep.subr.bf16.mxu0 0
  %443 = vmatpush1.bf16.xpose.msra.mxu0 0
  %444 = vmatprep.subr.bf16.mxu0 0
  %445 = vmatpush1.bf16.xpose.msra.mxu0 0
  %446 = vmatprep.subr.bf16.mxu0 0
  %447 = vmatpush1.bf16.xpose.msra.mxu0 0
  %448 = vmatprep.subr.bf16.mxu0 0
  %449 = vmatpush1.bf16.xpose.msra.mxu0 0
  %450 = vmatprep.subr.bf16.mxu0 0
  %451 = vmatpush1.bf16.xpose.msra.mxu0 0
  %452 = vmatprep.subr.bf16.mxu0 0
  %453 = vmatpush1.bf16.xpose.msra.mxu0 0
  %454 = vmatprep.subr.bf16.mxu0 0
  %455 = vmatpush1.bf16.xpose.msra.mxu0 0
  %456 = vmatprep.subr.bf16.mxu0 0
  %457 = vmatpush1.bf16.xpose.msra.mxu0 0
  %458 = vmatprep.subr.bf16.mxu0 0
  %459 = vmatpush1.bf16.xpose.msra.mxu0 0
  %460 = vmatprep.subr.bf16.mxu0 0
  %461 = vmatpush1.bf16.xpose.msra.mxu0 0
  %462 = vmatprep.subr.bf16.mxu0 0
  %463 = vmatpush1.bf16.xpose.msra.mxu0 0
  %464 = vmatprep.subr.bf16.mxu0 0
  %465 = vmatpush1.bf16.xpose.msra.mxu0 0
  %466 = vmatprep.subr.bf16.mxu0 0
  %467 = vmatpush1.bf16.xpose.msra.mxu0 0
  %468 = vmatprep.subr.bf16.mxu0 0
  %469 = vmatpush1.bf16.xpose.msra.mxu0 0
  %470 = vmatprep.mubr.bf16.mxu0 0
  %471 = vmatmul.mubr.bf16.gmra.mrb[0].mxu0 %v433
  %v472 = vpop.f32.mrb[0].mxu0
  %v473 = vadd.f32 0.0, %v472
  %v474 = vpop.f32.mrb[0].mxu0
  %v475 = vpop.f32.mrb[0].mxu0
  %v476 = vadd.f32 0.0, %v475
  %v477 = vpop.f32.mrb[0].mxu0
  %478 = vdwg.mxu0
  %479 = vrot.lane.b32.xlu0 %v377, 96
  %v480 = vpop.permute.xlu0 %479
  %v482 = vsel %vm382, %v377, 0
  %v485 = vsel %vm382, %v480, 0
  %487 = vmatprep.subr.bf16.mxu0 0
  %488 = vmatpush1.bf16.xpose.msra.mxu0 %v485
  %489 = vmatprep.subr.bf16.mxu0 0
  %490 = vmatpush1.bf16.xpose.msra.mxu0 0
  %491 = vmatprep.subr.bf16.mxu0 0
  %492 = vmatpush1.bf16.xpose.msra.mxu0 0
  %493 = vmatprep.subr.bf16.mxu0 0
  %494 = vmatpush1.bf16.xpose.msra.mxu0 0
  %495 = vmatprep.subr.bf16.mxu0 0
  %496 = vmatpush1.bf16.xpose.msra.mxu0 0
  %497 = vmatprep.subr.bf16.mxu0 0
  %498 = vmatpush1.bf16.xpose.msra.mxu0 0
  %499 = vmatprep.subr.bf16.mxu0 0
  %500 = vmatpush1.bf16.xpose.msra.mxu0 0
  %501 = vmatprep.subr.bf16.mxu0 0
  %502 = vmatpush1.bf16.xpose.msra.mxu0 0
  %503 = vmatprep.subr.bf16.mxu0 0
  %504 = vmatpush1.bf16.xpose.msra.mxu0 0
  %505 = vmatprep.subr.bf16.mxu0 0
  %506 = vmatpush1.bf16.xpose.msra.mxu0 0
  %507 = vmatprep.subr.bf16.mxu0 0
  %508 = vmatpush1.bf16.xpose.msra.mxu0 0
  %509 = vmatprep.subr.bf16.mxu0 0
  %510 = vmatpush1.bf16.xpose.msra.mxu0 0
  %511 = vmatprep.subr.bf16.mxu0 0
  %512 = vmatpush1.bf16.xpose.msra.mxu0 0
  %513 = vmatprep.subr.bf16.mxu0 0
  %514 = vmatpush1.bf16.xpose.msra.mxu0 0
  %515 = vmatprep.subr.bf16.mxu0 0
  %516 = vmatpush1.bf16.xpose.msra.mxu0 0
  %517 = vmatprep.subr.bf16.mxu0 0
  %518 = vmatpush1.bf16.xpose.msra.mxu0 0
  %519 = vmatprep.mubr.bf16.mxu0 0
  %520 = vmatmul.mubr.bf16.gmra.mrb[0].mxu0 %v482
  %v521 = vpop.f32.mrb[0].mxu0
  %v522 = vadd.f32 0.0, %v521
  %v523 = vpop.f32.mrb[0].mxu0
  %v524 = vpop.f32.mrb[0].mxu0
  %v525 = vadd.f32 0.0, %v524
  %v526 = vpop.f32.mrb[0].mxu0
  %527 = vdwg.mxu0
  %528 = vrot.lane.b32.xlu0 %v379, 96
  %v529 = vpop.permute.xlu0 %528
  %v531 = vsel %vm382, %v379, 0
  %v534 = vsel %vm382, %v529, 0
  %536 = vmatprep.subr.bf16.mxu0 0
  %537 = vmatpush1.bf16.xpose.msra.mxu0 %v534
  %538 = vmatprep.subr.bf16.mxu0 0
  %539 = vmatpush1.bf16.xpose.msra.mxu0 0
  %540 = vmatprep.subr.bf16.mxu0 0
  %541 = vmatpush1.bf16.xpose.msra.mxu0 0
  %542 = vmatprep.subr.bf16.mxu0 0
  %543 = vmatpush1.bf16.xpose.msra.mxu0 0
  %544 = vmatprep.subr.bf16.mxu0 0
  %545 = vmatpush1.bf16.xpose.msra.mxu0 0
  %546 = vmatprep.subr.bf16.mxu0 0
  %547 = vmatpush1.bf16.xpose.msra.mxu0 0
  %548 = vmatprep.subr.bf16.mxu0 0
  %549 = vmatpush1.bf16.xpose.msra.mxu0 0
  %550 = vmatprep.subr.bf16.mxu0 0
  %551 = vmatpush1.bf16.xpose.msra.mxu0 0
  %552 = vmatprep.subr.bf16.mxu0 0
  %553 = vmatpush1.bf16.xpose.msra.mxu0 0
  %554 = vmatprep.subr.bf16.mxu0 0
  %555 = vmatpush1.bf16.xpose.msra.mxu0 0
  %556 = vmatprep.subr.bf16.mxu0 0
  %557 = vmatpush1.bf16.xpose.msra.mxu0 0
  %558 = vmatprep.subr.bf16.mxu0 0
  %559 = vmatpush1.bf16.xpose.msra.mxu0 0
  %560 = vmatprep.subr.bf16.mxu0 0
  %561 = vmatpush1.bf16.xpose.msra.mxu0 0
  %562 = vmatprep.subr.bf16.mxu0 0
  %563 = vmatpush1.bf16.xpose.msra.mxu0 0
  %564 = vmatprep.subr.bf16.mxu0 0
  %565 = vmatpush1.bf16.xpose.msra.mxu0 0
  %566 = vmatprep.subr.bf16.mxu0 0
  %567 = vmatpush1.bf16.xpose.msra.mxu0 0
  %568 = vmatprep.mubr.bf16.mxu0 0
  %569 = vmatmul.mubr.bf16.gmra.mrb[0].mxu0 %v531
  %v570 = vpop.f32.mrb[0].mxu0
  %v571 = vadd.f32 0.0, %v570
  %v572 = vpop.f32.mrb[0].mxu0
  %v573 = vpop.f32.mrb[0].mxu0
  %v574 = vadd.f32 0.0, %v573
  %v575 = vpop.f32.mrb[0].mxu0
  %576 = vdwg.mxu0
  %v577 = vsel %vm248, %v424, -inf
  %578 = vmax.xlane.f32.xlu0 %v577
  %v579 = vpop.xlane.xlu0 %578
  %v580 = vsel %vm248, %v427, -inf
  %581 = vmax.xlane.f32.xlu0 %v580
  %v582 = vpop.xlane.xlu0 %581
  %v583 = vsel %vm248, %v473, -inf
  %584 = vmax.xlane.f32.xlu0 %v583
  %v585 = vpop.xlane.xlu0 %584
  %v586 = vsel %vm248, %v476, -inf
  %587 = vmax.xlane.f32.xlu0 %v586
  %v588 = vpop.xlane.xlu0 %587
  %v589 = vsel %vm248, %v522, -inf
  %590 = vmax.xlane.f32.xlu0 %v589
  %v591 = vpop.xlane.xlu0 %590
  %v592 = vsel %vm248, %v525, -inf
  %593 = vmax.xlane.f32.xlu0 %v592
  %v594 = vpop.xlane.xlu0 %593
  %v595 = vsel %vm248, %v571, -inf
  %596 = vmax.xlane.f32.xlu0 %v595
  %v597 = vpop.xlane.xlu0 %596
  %v598 = vsel %vm248, %v574, -inf
  %599 = vmax.xlane.f32.xlu0 %v598
  %v600 = vpop.xlane.xlu0 %599
  %v601 = vsub.f32 %v424, %v579
  %v602 = vsub.f32 %v427, %v582
  %v603 = vsub.f32 %v473, %v585
  %v604 = vsub.f32 %v476, %v588
  %v605 = vsub.f32 %v522, %v591
  %v606 = vsub.f32 %v525, %v594
  %v607 = vsub.f32 %v571, %v597
  %v608 = vsub.f32 %v574, %v600
  %v609 = vmul.f32 %v601, 1.442695
  %v610 = vpow.pop %v609
  %v611 = vmul.f32 %v602, 1.442695
  %v612 = vpow.pop %v611
  %v613 = vmul.f32 %v603, 1.442695
  %v614 = vpow.pop %v613
  %v615 = vmul.f32 %v604, 1.442695
  %v616 = vpow.pop %v615
  %v617 = vmul.f32 %v605, 1.442695
  %v618 = vpow.pop %v617
  %v619 = vmul.f32 %v606, 1.442695
  %v620 = vpow.pop %v619
  %v621 = vmul.f32 %v607, 1.442695
  %v622 = vpow.pop %v621
  %v623 = vmul.f32 %v608, 1.442695
  %v624 = vpow.pop %v623
  %v625 = vsel %vm248, %v610, 0.0
  %626 = vadd.xlane.f32.xlu0 %v625
  %v627 = vpop.xlane.xlu0 %626
  %v628 = vsel %vm248, %v612, 0.0
  %629 = vadd.xlane.f32.xlu0 %v628
  %v630 = vpop.xlane.xlu0 %629
  %v631 = vsel %vm248, %v614, 0.0
  %632 = vadd.xlane.f32.xlu0 %v631
  %v633 = vpop.xlane.xlu0 %632
  %v634 = vsel %vm248, %v616, 0.0
  %635 = vadd.xlane.f32.xlu0 %v634
  %v636 = vpop.xlane.xlu0 %635
  %v637 = vsel %vm248, %v618, 0.0
  %638 = vadd.xlane.f32.xlu0 %v637
  %v639 = vpop.xlane.xlu0 %638
  %v640 = vsel %vm248, %v620, 0.0
  %641 = vadd.xlane.f32.xlu0 %v640
  %v642 = vpop.xlane.xlu0 %641
  %v643 = vsel %vm248, %v622, 0.0
  %644 = vadd.xlane.f32.xlu0 %v643
  %v645 = vpop.xlane.xlu0 %644
  %v646 = vsel %vm248, %v624, 0.0
  %647 = vadd.xlane.f32.xlu0 %v646
  %v648 = vpop.xlane.xlu0 %647
  %v649 = vrcp.pop %v627
  %v650 = vrcp.pop %v630
  %v651 = vrcp.pop %v633
  %v652 = vrcp.pop %v636
  %v653 = vrcp.pop %v639
  %v654 = vrcp.pop %v642
  %v655 = vrcp.pop %v645
  %v656 = vrcp.pop %v648
  %v657 = vmul.f32 %v610, %v649
  %v658 = vmul.f32 %v612, %v650
  %v659 = vmul.f32 %v614, %v651
  %v660 = vmul.f32 %v616, %v652
  %v661 = vmul.f32 %v618, %v653
  %v662 = vmul.f32 %v620, %v654
  %v663 = vmul.f32 %v622, %v655
  %v664 = vmul.f32 %v624, %v656
  %v665 = vpack.c.bf16 %v658, %v657
  %v666 = vpack.c.bf16 %v660, %v659
  %v667 = vpack.c.bf16 %v662, %v661
  %v668 = vpack.c.bf16 %v664, %v663
  %669 = vrot.lane.b32.xlu0 %v372, 64
  %v670 = vpop.permute.xlu0 %669
  %v673 = vsel %vm248, %v665, 0
  %675 = vmatprep.subr.bf16.mxu0 0
  %676 = vmatpush1.bf16.msra.mxu0 %v670
  %677 = vmatprep.subr.bf16.mxu0 0
  %678 = vmatpush1.bf16.msra.mxu0 0
  %679 = vmatprep.subr.bf16.mxu0 0
  %680 = vmatpush1.bf16.msra.mxu0 0
  %681 = vmatprep.subr.bf16.mxu0 0
  %682 = vmatpush1.bf16.msra.mxu0 0
  %683 = vmatprep.subr.bf16.mxu0 0
  %684 = vmatpush1.bf16.msra.mxu0 0
  %685 = vmatprep.subr.bf16.mxu0 0
  %686 = vmatpush1.bf16.msra.mxu0 0
  %687 = vmatprep.subr.bf16.mxu0 0
  %688 = vmatpush1.bf16.msra.mxu0 0
  %689 = vmatprep.subr.bf16.mxu0 0
  %690 = vmatpush1.bf16.msra.mxu0 0
  %691 = vmatprep.subr.bf16.mxu0 0
  %692 = vmatpush1.bf16.msra.mxu0 0
  %693 = vmatprep.subr.bf16.mxu0 0
  %694 = vmatpush1.bf16.msra.mxu0 0
  %695 = vmatprep.subr.bf16.mxu0 0
  %696 = vmatpush1.bf16.msra.mxu0 0
  %697 = vmatprep.subr.bf16.mxu0 0
  %698 = vmatpush1.bf16.msra.mxu0 0
  %699 = vmatprep.subr.bf16.mxu0 0
  %700 = vmatpush1.bf16.msra.mxu0 0
  %701 = vmatprep.subr.bf16.mxu0 0
  %702 = vmatpush1.bf16.msra.mxu0 0
  %703 = vmatprep.subr.bf16.mxu0 0
  %704 = vmatpush1.bf16.msra.mxu0 0
  %705 = vmatprep.subr.bf16.mxu0 0
  %706 = vmatpush1.bf16.msra.mxu0 0
  %707 = vmatprep.mubr.bf16.mxu0 0
  %708 = vmatmul.mubr.bf16.gmra.mrb[0].mxu0 %v673
  %v709 = vpop.f32.mrb[0].mxu0
  %v710 = vadd.f32 0.0, %v709
  %v711 = vpop.f32.mrb[0].mxu0
  %v712 = vpop.f32.mrb[0].mxu0
  %v713 = vadd.f32 0.0, %v712
  %v714 = vpop.f32.mrb[0].mxu0
  %715 = vdwg.mxu0
  %716 = vrot.lane.b32.xlu0 %v375, 64
  %v717 = vpop.permute.xlu0 %716
  %v720 = vsel %vm248, %v666, 0
  %722 = vmatprep.subr.bf16.mxu0 0
  %723 = vmatpush1.bf16.msra.mxu0 %v717
  %724 = vmatprep.subr.bf16.mxu0 0
  %725 = vmatpush1.bf16.msra.mxu0 0
  %726 = vmatprep.subr.bf16.mxu0 0
  %727 = vmatpush1.bf16.msra.mxu0 0
  %728 = vmatprep.subr.bf16.mxu0 0
  %729 = vmatpush1.bf16.msra.mxu0 0
  %730 = vmatprep.subr.bf16.mxu0 0
  %731 = vmatpush1.bf16.msra.mxu0 0
  %732 = vmatprep.subr.bf16.mxu0 0
  %733 = vmatpush1.bf16.msra.mxu0 0
  %734 = vmatprep.subr.bf16.mxu0 0
  %735 = vmatpush1.bf16.msra.mxu0 0
  %736 = vmatprep.subr.bf16.mxu0 0
  %737 = vmatpush1.bf16.msra.mxu0 0
  %738 = vmatprep.subr.bf16.mxu0 0
  %739 = vmatpush1.bf16.msra.mxu0 0
  %740 = vmatprep.subr.bf16.mxu0 0
  %741 = vmatpush1.bf16.msra.mxu0 0
  %742 = vmatprep.subr.bf16.mxu0 0
  %743 = vmatpush1.bf16.msra.mxu0 0
  %744 = vmatprep.subr.bf16.mxu0 0
  %745 = vmatpush1.bf16.msra.mxu0 0
  %746 = vmatprep.subr.bf16.mxu0 0
  %747 = vmatpush1.bf16.msra.mxu0 0
  %748 = vmatprep.subr.bf16.mxu0 0
  %749 = vmatpush1.bf16.msra.mxu0 0
  %750 = vmatprep.subr.bf16.mxu0 0
  %751 = vmatpush1.bf16.msra.mxu0 0
  %752 = vmatprep.subr.bf16.mxu0 0
  %753 = vmatpush1.bf16.msra.mxu0 0
  %754 = vmatprep.mubr.bf16.mxu0 0
  %755 = vmatmul.mubr.bf16.gmra.mrb[0].mxu0 %v720
  %v756 = vpop.f32.mrb[0].mxu0
  %v757 = vadd.f32 0.0, %v756
  %v758 = vpop.f32.mrb[0].mxu0
  %v759 = vpop.f32.mrb[0].mxu0
  %v760 = vadd.f32 0.0, %v759
  %v761 = vpop.f32.mrb[0].mxu0
  %762 = vdwg.mxu0
  %763 = vrot.lane.b32.xlu0 %v377, 64
  %v764 = vpop.permute.xlu0 %763
  %v767 = vsel %vm248, %v667, 0
  %769 = vmatprep.subr.bf16.mxu0 0
  %770 = vmatpush1.bf16.msra.mxu0 %v764
  %771 = vmatprep.subr.bf16.mxu0 0
  %772 = vmatpush1.bf16.msra.mxu0 0
  %773 = vmatprep.subr.bf16.mxu0 0
  %774 = vmatpush1.bf16.msra.mxu0 0
  %775 = vmatprep.subr.bf16.mxu0 0
  %776 = vmatpush1.bf16.msra.mxu0 0
  %777 = vmatprep.subr.bf16.mxu0 0
  %778 = vmatpush1.bf16.msra.mxu0 0
  %779 = vmatprep.subr.bf16.mxu0 0
  %780 = vmatpush1.bf16.msra.mxu0 0
  %781 = vmatprep.subr.bf16.mxu0 0
  %782 = vmatpush1.bf16.msra.mxu0 0
  %783 = vmatprep.subr.bf16.mxu0 0
  %784 = vmatpush1.bf16.msra.mxu0 0
  %785 = vmatprep.subr.bf16.mxu0 0
  %786 = vmatpush1.bf16.msra.mxu0 0
  %787 = vmatprep.subr.bf16.mxu0 0
  %788 = vmatpush1.bf16.msra.mxu0 0
  %789 = vmatprep.subr.bf16.mxu0 0
  %790 = vmatpush1.bf16.msra.mxu0 0
  %791 = vmatprep.subr.bf16.mxu0 0
  %792 = vmatpush1.bf16.msra.mxu0 0
  %793 = vmatprep.subr.bf16.mxu0 0
  %794 = vmatpush1.bf16.msra.mxu0 0
  %795 = vmatprep.subr.bf16.mxu0 0
  %796 = vmatpush1.bf16.msra.mxu0 0
  %797 = vmatprep.subr.bf16.mxu0 0
  %798 = vmatpush1.bf16.msra.mxu0 0
  %799 = vmatprep.subr.bf16.mxu0 0
  %800 = vmatpush1.bf16.msra.mxu0 0
  %801 = vmatprep.mubr.bf16.mxu0 0
  %802 = vmatmul.mubr.bf16.gmra.mrb[0].mxu0 %v767
  %v803 = vpop.f32.mrb[0].mxu0
  %v804 = vadd.f32 0.0, %v803
  %v805 = vpop.f32.mrb[0].mxu0
  %v806 = vpop.f32.mrb[0].mxu0
  %v807 = vadd.f32 0.0, %v806
  %v808 = vpop.f32.mrb[0].mxu0
  %809 = vdwg.mxu0
  %810 = vrot.lane.b32.xlu0 %v379, 64
  %v811 = vpop.permute.xlu0 %810
  %v814 = vsel %vm248, %v668, 0
  %816 = vmatprep.subr.bf16.mxu0 0
  %817 = vmatpush1.bf16.msra.mxu0 %v811
  %818 = vmatprep.subr.bf16.mxu0 0
  %819 = vmatpush1.bf16.msra.mxu0 0
  %820 = vmatprep.subr.bf16.mxu0 0
  %821 = vmatpush1.bf16.msra.mxu0 0
  %822 = vmatprep.subr.bf16.mxu0 0
  %823 = vmatpush1.bf16.msra.mxu0 0
  %824 = vmatprep.subr.bf16.mxu0 0
  %825 = vmatpush1.bf16.msra.mxu0 0
  %826 = vmatprep.subr.bf16.mxu0 0
  %827 = vmatpush1.bf16.msra.mxu0 0
  %828 = vmatprep.subr.bf16.mxu0 0
  %829 = vmatpush1.bf16.msra.mxu0 0
  %830 = vmatprep.subr.bf16.mxu0 0
  %831 = vmatpush1.bf16.msra.mxu0 0
  %832 = vmatprep.subr.bf16.mxu0 0
  %833 = vmatpush1.bf16.msra.mxu0 0
  %834 = vmatprep.subr.bf16.mxu0 0
  %835 = vmatpush1.bf16.msra.mxu0 0
  %836 = vmatprep.subr.bf16.mxu0 0
  %837 = vmatpush1.bf16.msra.mxu0 0
  %838 = vmatprep.subr.bf16.mxu0 0
  %839 = vmatpush1.bf16.msra.mxu0 0
  %840 = vmatprep.subr.bf16.mxu0 0
  %841 = vmatpush1.bf16.msra.mxu0 0
  %842 = vmatprep.subr.bf16.mxu0 0
  %843 = vmatpush1.bf16.msra.mxu0 0
  %844 = vmatprep.subr.bf16.mxu0 0
  %845 = vmatpush1.bf16.msra.mxu0 0
  %846 = vmatprep.subr.bf16.mxu0 0
  %847 = vmatpush1.bf16.msra.mxu0 0
  %848 = vmatprep.mubr.bf16.mxu0 0
  %849 = vmatmul.mubr.bf16.gmra.mrb[0].mxu0 %v814
  %v850 = vpop.f32.mrb[0].mxu0
  %v851 = vadd.f32 0.0, %v850
  %v852 = vpop.f32.mrb[0].mxu0
  %v853 = vpop.f32.mrb[0].mxu0
  %v854 = vadd.f32 0.0, %v853
  %v855 = vpop.f32.mrb[0].mxu0
  %856 = vdwg.mxu0
  %v857 = vpack.c.bf16 %v713, %v710
  %v858 = vpack.c.bf16 %v760, %v757
  %v859 = vpack.c.bf16 %v807, %v804
  %v860 = vpack.c.bf16 %v854, %v851
  %v862 = vsel %vm382, %v857, 0
  %vm864 = vcmask 1043456
  %v866 = vsel %vm864, %v368, 0
  %868 = vmatprep.subr.bf16.mxu0 0
  %869 = vmatpush1.bf16.msra.mxu0 %v866
  %870 = vmatprep.subr.bf16.mxu0 0
  %871 = vmatpush1.bf16.msra.mxu0 0
  %872 = vmatprep.subr.bf16.mxu0 0
  %873 = vmatpush1.bf16.msra.mxu0 0
  %874 = vmatprep.subr.bf16.mxu0 0
  %875 = vmatpush1.bf16.msra.mxu0 0
  %876 = vmatprep.subr.bf16.mxu0 0
  %877 = vmatpush1.bf16.msra.mxu0 0
  %878 = vmatprep.subr.bf16.mxu0 0
  %879 = vmatpush1.bf16.msra.mxu0 0
  %880 = vmatprep.subr.bf16.mxu0 0
  %881 = vmatpush1.bf16.msra.mxu0 0
  %882 = vmatprep.subr.bf16.mxu0 0
  %883 = vmatpush1.bf16.msra.mxu0 0
  %884 = vmatprep.subr.bf16.mxu0 0
  %885 = vmatpush1.bf16.msra.mxu0 0
  %886 = vmatprep.subr.bf16.mxu0 0
  %887 = vmatpush1.bf16.msra.mxu0 0
  %888 = vmatprep.subr.bf16.mxu0 0
  %889 = vmatpush1.bf16.msra.mxu0 0
  %890 = vmatprep.subr.bf16.mxu0 0
  %891 = vmatpush1.bf16.msra.mxu0 0
  %892 = vmatprep.subr.bf16.mxu0 0
  %893 = vmatpush1.bf16.msra.mxu0 0
  %894 = vmatprep.subr.bf16.mxu0 0
  %895 = vmatpush1.bf16.msra.mxu0 0
  %896 = vmatprep.subr.bf16.mxu0 0
  %897 = vmatpush1.bf16.msra.mxu0 0
  %898 = vmatprep.subr.bf16.mxu0 0
  %899 = vmatpush1.bf16.msra.mxu0 0
  %900 = vmatprep.mubr.bf16.mxu0 0
  %901 = vmatmul.mubr.bf16.gmra.mrb[0].mxu0 %v862
  %v902 = vpop.f32.mrb[0].mxu0
  %v903 = vadd.f32 0.0, %v902
  %v904 = vpop.f32.mrb[0].mxu0
  %v905 = vpop.f32.mrb[0].mxu0
  %v906 = vadd.f32 0.0, %v905
  %v907 = vpop.f32.mrb[0].mxu0
  %908 = vdwg.mxu0
  %v910 = vsel %vm382, %v858, 0
  %v913 = vsel %vm864, %v369, 0
  %915 = vmatprep.subr.bf16.mxu0 0
  %916 = vmatpush1.bf16.msra.mxu0 %v913
  %917 = vmatprep.subr.bf16.mxu0 0
  %918 = vmatpush1.bf16.msra.mxu0 0
  %919 = vmatprep.subr.bf16.mxu0 0
  %920 = vmatpush1.bf16.msra.mxu0 0
  %921 = vmatprep.subr.bf16.mxu0 0
  %922 = vmatpush1.bf16.msra.mxu0 0
  %923 = vmatprep.subr.bf16.mxu0 0
  %924 = vmatpush1.bf16.msra.mxu0 0
  %925 = vmatprep.subr.bf16.mxu0 0
  %926 = vmatpush1.bf16.msra.mxu0 0
  %927 = vmatprep.subr.bf16.mxu0 0
  %928 = vmatpush1.bf16.msra.mxu0 0
  %929 = vmatprep.subr.bf16.mxu0 0
  %930 = vmatpush1.bf16.msra.mxu0 0
  %931 = vmatprep.subr.bf16.mxu0 0
  %932 = vmatpush1.bf16.msra.mxu0 0
  %933 = vmatprep.subr.bf16.mxu0 0
  %934 = vmatpush1.bf16.msra.mxu0 0
  %935 = vmatprep.subr.bf16.mxu0 0
  %936 = vmatpush1.bf16.msra.mxu0 0
  %937 = vmatprep.subr.bf16.mxu0 0
  %938 = vmatpush1.bf16.msra.mxu0 0
  %939 = vmatprep.subr.bf16.mxu0 0
  %940 = vmatpush1.bf16.msra.mxu0 0
  %941 = vmatprep.subr.bf16.mxu0 0
  %942 = vmatpush1.bf16.msra.mxu0 0
  %943 = vmatprep.subr.bf16.mxu0 0
  %944 = vmatpush1.bf16.msra.mxu0 0
  %945 = vmatprep.subr.bf16.mxu0 0
  %946 = vmatpush1.bf16.msra.mxu0 0
  %947 = vmatprep.mubr.bf16.mxu0 0
  %948 = vmatmul.mubr.bf16.gmra.mrb[0].mxu0 %v910
  %v949 = vpop.f32.mrb[0].mxu0
  %v950 = vadd.f32 0.0, %v949
  %v951 = vpop.f32.mrb[0].mxu0
  %v952 = vpop.f32.mrb[0].mxu0
  %v953 = vadd.f32 0.0, %v952
  %v954 = vpop.f32.mrb[0].mxu0
  %955 = vdwg.mxu0
  %v957 = vsel %vm382, %v859, 0
  %v960 = vsel %vm864, %v370, 0
  %962 = vmatprep.subr.bf16.mxu0 0
  %963 = vmatpush1.bf16.msra.mxu0 %v960
  %964 = vmatprep.subr.bf16.mxu0 0
  %965 = vmatpush1.bf16.msra.mxu0 0
  %966 = vmatprep.subr.bf16.mxu0 0
  %967 = vmatpush1.bf16.msra.mxu0 0
  %968 = vmatprep.subr.bf16.mxu0 0
  %969 = vmatpush1.bf16.msra.mxu0 0
  %970 = vmatprep.subr.bf16.mxu0 0
  %971 = vmatpush1.bf16.msra.mxu0 0
  %972 = vmatprep.subr.bf16.mxu0 0
  %973 = vmatpush1.bf16.msra.mxu0 0
  %974 = vmatprep.subr.bf16.mxu0 0
  %975 = vmatpush1.bf16.msra.mxu0 0
  %976 = vmatprep.subr.bf16.mxu0 0
  %977 = vmatpush1.bf16.msra.mxu0 0
  %978 = vmatprep.subr.bf16.mxu0 0
  %979 = vmatpush1.bf16.msra.mxu0 0
  %980 = vmatprep.subr.bf16.mxu0 0
  %981 = vmatpush1.bf16.msra.mxu0 0
  %982 = vmatprep.subr.bf16.mxu0 0
  %983 = vmatpush1.bf16.msra.mxu0 0
  %984 = vmatprep.subr.bf16.mxu0 0
  %985 = vmatpush1.bf16.msra.mxu0 0
  %986 = vmatprep.subr.bf16.mxu0 0
  %987 = vmatpush1.bf16.msra.mxu0 0
  %988 = vmatprep.subr.bf16.mxu0 0
  %989 = vmatpush1.bf16.msra.mxu0 0
  %990 = vmatprep.subr.bf16.mxu0 0
  %991 = vmatpush1.bf16.msra.mxu0 0
  %992 = vmatprep.subr.bf16.mxu0 0
  %993 = vmatpush1.bf16.msra.mxu0 0
  %994 = vmatprep.mubr.bf16.mxu0 0
  %995 = vmatmul.mubr.bf16.gmra.mrb[0].mxu0 %v957
  %v996 = vpop.f32.mrb[0].mxu0
  %v997 = vadd.f32 0.0, %v996
  %v998 = vpop.f32.mrb[0].mxu0
  %v999 = vpop.f32.mrb[0].mxu0
  %v1000 = vadd.f32 0.0, %v999
  %v1001 = vpop.f32.mrb[0].mxu0
  %1002 = vdwg.mxu0
  %v1004 = vsel %vm382, %v860, 0
  %v1007 = vsel %vm864, %v371, 0
  %1009 = vmatprep.subr.bf16.mxu0 0
  %1010 = vmatpush1.bf16.msra.mxu0 %v1007
  %1011 = vmatprep.subr.bf16.mxu0 0
  %1012 = vmatpush1.bf16.msra.mxu0 0
  %1013 = vmatprep.subr.bf16.mxu0 0
  %1014 = vmatpush1.bf16.msra.mxu0 0
  %1015 = vmatprep.subr.bf16.mxu0 0
  %1016 = vmatpush1.bf16.msra.mxu0 0
  %1017 = vmatprep.subr.bf16.mxu0 0
  %1018 = vmatpush1.bf16.msra.mxu0 0
  %1019 = vmatprep.subr.bf16.mxu0 0
  %1020 = vmatpush1.bf16.msra.mxu0 0
  %1021 = vmatprep.subr.bf16.mxu0 0
  %1022 = vmatpush1.bf16.msra.mxu0 0
  %1023 = vmatprep.subr.bf16.mxu0 0
  %1024 = vmatpush1.bf16.msra.mxu0 0
  %1025 = vmatprep.subr.bf16.mxu0 0
  %1026 = vmatpush1.bf16.msra.mxu0 0
  %1027 = vmatprep.subr.bf16.mxu0 0
  %1028 = vmatpush1.bf16.msra.mxu0 0
  %1029 = vmatprep.subr.bf16.mxu0 0
  %1030 = vmatpush1.bf16.msra.mxu0 0
  %1031 = vmatprep.subr.bf16.mxu0 0
  %1032 = vmatpush1.bf16.msra.mxu0 0
  %1033 = vmatprep.subr.bf16.mxu0 0
  %1034 = vmatpush1.bf16.msra.mxu0 0
  %1035 = vmatprep.subr.bf16.mxu0 0
  %1036 = vmatpush1.bf16.msra.mxu0 0
  %1037 = vmatprep.subr.bf16.mxu0 0
  %1038 = vmatpush1.bf16.msra.mxu0 0
  %1039 = vmatprep.subr.bf16.mxu0 0
  %1040 = vmatpush1.bf16.msra.mxu0 0
  %1041 = vmatprep.mubr.bf16.mxu0 0
  %1042 = vmatmul.mubr.bf16.gmra.mrb[0].mxu0 %v1004
  %v1043 = vpop.f32.mrb[0].mxu0
  %v1044 = vadd.f32 0.0, %v1043
  %v1045 = vpop.f32.mrb[0].mxu0
  %v1046 = vpop.f32.mrb[0].mxu0
  %v1047 = vadd.f32 0.0, %v1046
  %v1048 = vpop.f32.mrb[0].mxu0
  %1049 = vdwg.mxu0
  %v1050 = vsel %vm323, %v903, 0.0
  %v1051 = vsel %vm323, %v950, 0.0
  %v1052 = vadd.f32 %v1050, %v1051
  %v1053 = vsel %vm323, %v997, 0.0
  %v1054 = vadd.f32 %v1052, %v1053
  %v1055 = vsel %vm323, %v1044, 0.0
  %v1056 = vadd.f32 %v1054, %v1055
  %v1057 = vsel %vm323, %v906, 0.0
  %v1058 = vsel %vm323, %v953, 0.0
  %v1059 = vadd.f32 %v1057, %v1058
  %v1060 = vsel %vm323, %v1000, 0.0
  %v1061 = vadd.f32 %v1059, %v1060
  %v1062 = vsel %vm323, %v1047, 0.0
  %v1063 = vadd.f32 %v1061, %v1062
  %v1064 = vld [vmem:[%s17] sm:$0x1]
  %v1066 = vlaneseq
  %v1067 = vshrl.u32 %v1066, 7
  %v1068 = vsub.s32 0, %v1067
  %v1069 = vrot.slane %v1064, %v1068
  %v1071 = vadd.f32 %v1056, %v1069
  %v1072 = vadd.f32 %v1063, %v1069
  %v1073 = vld [vmem:[%s19] sm:$0x1]
  %v1074 = vld [vmem:[%s21] sm:$0x1]
  %v1075 = vadd.f32 %v297, %v1071
  %v1076 = vadd.f32 %v298, %v1072
  %v1077 = vsel %vm323, %v1075, 0.0
  %1078 = vadd.xlane.f32.xlu0 %v1077
  %v1079 = vpop.xlane.xlu0 %1078
  %v1080 = vsel %vm323, %v1076, 0.0
  %1081 = vadd.xlane.f32.xlu0 %v1080
  %v1082 = vpop.xlane.xlu0 %1081
  %v1083 = vrcp.pop 32.0
  %v1084 = vmul.f32 %v1079, %v1083
  %v1085 = vmul.f32 %v1082, %v1083
  %v1086 = vsub.f32 %v1075, %v1084
  %v1087 = vsub.f32 %v1076, %v1085
  %v1088 = vmul.f32 %v1086, %v1086
  %v1089 = vmul.f32 %v1087, %v1087
  %v1090 = vsel %vm323, %v1088, 0.0
  %1091 = vadd.xlane.f32.xlu0 %v1090
  %v1092 = vpop.xlane.xlu0 %1091
  %v1093 = vsel %vm323, %v1089, 0.0
  %1094 = vadd.xlane.f32.xlu0 %v1093
  %v1095 = vpop.xlane.xlu0 %1094
  %v1096 = vmul.f32 %v1092, %v1083
  %v1097 = vmul.f32 %v1095, %v1083
  %v1098 = vadd.f32 %v1096, 1e-05
  %v1099 = vadd.f32 %v1097, 1e-05
  %v1100 = vrsqrt.pop %v1098
  %v1101 = vrsqrt.pop %v1099
  %v1102 = vmul.f32 %v1086, %v1100
  %v1103 = vmul.f32 %v1087, %v1101
  %v1105 = vlaneseq
  %v1106 = vshrl.u32 %v1105, 7
  %v1107 = vsub.s32 0, %v1106
  %v1108 = vrot.slane %v1073, %v1107
  %v1110 = vmul.f32 %v1102, %v1108
  %v1111 = vmul.f32 %v1103, %v1108
  %v1113 = vlaneseq
  %v1114 = vshrl.u32 %v1113, 7
  %v1115 = vsub.s32 0, %v1114
  %v1116 = vrot.slane %v1074, %v1115
  %v1118 = vadd.f32 %v1110, %v1116
  %v1119 = vadd.f32 %v1111, %v1116
  %v1120 = vld [vmem:[%s23] sm:$0xf]
  %v1121 = vld [vmem:[%s23 + $0x4] sm:$0xf]
  %v1122 = vld [vmem:[%s23 + $0x8] sm:$0xf]
  %v1123 = vld [vmem:[%s23 + $0xc] sm:$0xf]
  %v1124 = vpack.c.bf16 %v1119, %v1118
  %v1125 = vld [vmem:[%s25] sm:$0x1]
  %v1127 = vlaneseq
  %v1128 = vshrl.u32 %v1127, 7
  %v1129 = vsub.s32 0, %v1128
  %v1130 = vrot.slane %v1125, %v1129
  %v1136 = vunpack.c.l.b16 %v1120
  %v1137 = vunpack.c.l.b16 %v1121
  %v1138 = vunpack.c.l.b16 %v1122
  %v1139 = vunpack.c.l.b16 %v1123
  %v1140 = vpack.c.b16 %v1137, %v1136
  %v1141 = vpack.c.b16 %v1139, %v1138
  %v1145 = vsel %vm323, %v1124, 0
  %1147 = vmatprep.subr.bf16.mxu0 0
  %1148 = vmatpush1.bf16.msra.mxu0 %v1140
  %1149 = vmatprep.subr.bf16.mxu0 0
  %1150 = vmatpush1.bf16.msra.mxu0 %v1141
  %1151 = vmatprep.subr.bf16.mxu0 0
  %1152 = vmatpush1.bf16.msra.mxu0 0
  %1153 = vmatprep.subr.bf16.mxu0 0
  %1154 = vmatpush1.bf16.msra.mxu0 0
  %1155 = vmatprep.subr.bf16.mxu0 0
  %1156 = vmatpush1.bf16.msra.mxu0 0
  %1157 = vmatprep.subr.bf16.mxu0 0
  %1158 = vmatpush1.bf16.msra.mxu0 0
  %1159 = vmatprep.subr.bf16.mxu0 0
  %1160 = vmatpush1.bf16.msra.mxu0 0
  %1161 = vmatprep.subr.bf16.mxu0 0
  %1162 = vmatpush1.bf16.msra.mxu0 0
  %1163 = vmatprep.subr.bf16.mxu0 0
  %1164 = vmatpush1.bf16.msra.mxu0 0
  %1165 = vmatprep.subr.bf16.mxu0 0
  %1166 = vmatpush1.bf16.msra.mxu0 0
  %1167 = vmatprep.subr.bf16.mxu0 0
  %1168 = vmatpush1.bf16.msra.mxu0 0
  %1169 = vmatprep.subr.bf16.mxu0 0
  %1170 = vmatpush1.bf16.msra.mxu0 0
  %1171 = vmatprep.subr.bf16.mxu0 0
  %1172 = vmatpush1.bf16.msra.mxu0 0
  %1173 = vmatprep.subr.bf16.mxu0 0
  %1174 = vmatpush1.bf16.msra.mxu0 0
  %1175 = vmatprep.subr.bf16.mxu0 0
  %1176 = vmatpush1.bf16.msra.mxu0 0
  %1177 = vmatprep.subr.bf16.mxu0 0
  %1178 = vmatpush1.bf16.msra.mxu0 0
  %1179 = vmatprep.mubr.bf16.mxu0 0
  %1180 = vmatmul.mubr.bf16.gmra.mrb[0].mxu0 %v1145
  %v1181 = vpop.f32.mrb[0].mxu0
  %v1182 = vadd.f32 %v1130, %v1181
  %v1183 = vpop.f32.mrb[0].mxu0
  %v1184 = vpop.f32.mrb[0].mxu0
  %v1185 = vadd.f32 %v1130, %v1184
  %v1186 = vpop.f32.mrb[0].mxu0
  %1187 = vdwg.mxu0
  %v1188 = vmax.f32 %v1182, 0.0
  %v1189 = vmax.f32 %v1185, 0.0
  %v1190 = vld [vmem:[%s27] sm:$0xf]
  %v1191 = vld [vmem:[%s27 + $0x4] sm:$0xf]
  %v1192 = vld [vmem:[%s27 + $0x8] sm:$0xf]
  %v1193 = vld [vmem:[%s27 + $0xc] sm:$0xf]
  %v1194 = vld [vmem:[%s27 + $0x10] sm:$0xf]
  %v1195 = vld [vmem:[%s27 + $0x14] sm:$0xf]
  %v1196 = vld [vmem:[%s27 + $0x18] sm:$0xf]
  %v1197 = vld [vmem:[%s27 + $0x1c] sm:$0xf]
  %v1198 = vpack.c.bf16 %v1189, %v1188
  %v1199 = vld [vmem:[%s29] sm:$0x1]
  %v1201 = vlaneseq
  %v1202 = vshrl.u32 %v1201, 7
  %v1203 = vsub.s32 0, %v1202
  %v1204 = vrot.slane %v1199, %v1203
  %v1214 = vunpack.c.l.b16 %v1190
  %v1215 = vunpack.c.l.b16 %v1191
  %v1216 = vunpack.c.l.b16 %v1192
  %v1217 = vunpack.c.l.b16 %v1193
  %v1218 = vunpack.c.l.b16 %v1194
  %v1219 = vunpack.c.l.b16 %v1195
  %v1220 = vunpack.c.l.b16 %v1196
  %v1221 = vunpack.c.l.b16 %v1197
  %v1222 = vpack.c.b16 %v1215, %v1214
  %v1223 = vpack.c.b16 %v1217, %v1216
  %v1224 = vpack.c.b16 %v1219, %v1218
  %v1225 = vpack.c.b16 %v1221, %v1220
  %vm1230 = vcmask 523264
  %v1232 = vsel %vm1230, %v1198, 0
  %1234 = vmatprep.subr.bf16.mxu0 0
  %1235 = vmatpush1.bf16.msra.mxu0 %v1222
  %1236 = vmatprep.subr.bf16.mxu0 0
  %1237 = vmatpush1.bf16.msra.mxu0 %v1223
  %1238 = vmatprep.subr.bf16.mxu0 0
  %1239 = vmatpush1.bf16.msra.mxu0 %v1224
  %1240 = vmatprep.subr.bf16.mxu0 0
  %1241 = vmatpush1.bf16.msra.mxu0 %v1225
  %1242 = vmatprep.subr.bf16.mxu0 0
  %1243 = vmatpush1.bf16.msra.mxu0 0
  %1244 = vmatprep.subr.bf16.mxu0 0
  %1245 = vmatpush1.bf16.msra.mxu0 0
  %1246 = vmatprep.subr.bf16.mxu0 0
  %1247 = vmatpush1.bf16.msra.mxu0 0
  %1248 = vmatprep.subr.bf16.mxu0 0
  %1249 = vmatpush1.bf16.msra.mxu0 0
  %1250 = vmatprep.subr.bf16.mxu0 0
  %1251 = vmatpush1.bf16.msra.mxu0 0
  %1252 = vmatprep.subr.bf16.mxu0 0
  %1253 = vmatpush1.bf16.msra.mxu0 0
  %1254 = vmatprep.subr.bf16.mxu0 0
  %1255 = vmatpush1.bf16.msra.mxu0 0
  %1256 = vmatprep.subr.bf16.mxu0 0
  %1257 = vmatpush1.bf16.msra.mxu0 0
  %1258 = vmatprep.subr.bf16.mxu0 0
  %1259 = vmatpush1.bf16.msra.mxu0 0
  %1260 = vmatprep.subr.bf16.mxu0 0
  %1261 = vmatpush1.bf16.msra.mxu0 0
  %1262 = vmatprep.subr.bf16.mxu0 0
  %1263 = vmatpush1.bf16.msra.mxu0 0
  %1264 = vmatprep.subr.bf16.mxu0 0
  %1265 = vmatpush1.bf16.msra.mxu0 0
  %1266 = vmatprep.mubr.bf16.mxu0 0
  %1267 = vmatmul.mubr.bf16.gmra.mrb[0].mxu0 %v1232
  %v1268 = vpop.f32.mrb[0].mxu0
  %v1269 = vadd.f32 %v1204, %v1268
  %v1270 = vpop.f32.mrb[0].mxu0
  %v1271 = vpop.f32.mrb[0].mxu0
  %v1272 = vadd.f32 %v1204, %v1271
  %v1273 = vpop.f32.mrb[0].mxu0
  %1274 = vdwg.mxu0
  %v1275 = vld [vmem:[%s31] sm:$0x1]
  %v1276 = vld [vmem:[%s33] sm:$0x1]
  %v1277 = vadd.f32 %v1118, %v1269
  %v1278 = vadd.f32 %v1119, %v1272
  %v1279 = vsel %vm323, %v1277, 0.0
  %1280 = vadd.xlane.f32.xlu0 %v1279
  %v1281 = vpop.xlane.xlu0 %1280
  %v1282 = vsel %vm323, %v1278, 0.0
  %1283 = vadd.xlane.f32.xlu0 %v1282
  %v1284 = vpop.xlane.xlu0 %1283
  %v1285 = vmul.f32 %v1281, %v1083
  %v1286 = vmul.f32 %v1284, %v1083
  %v1287 = vsub.f32 %v1277, %v1285
  %v1288 = vsub.f32 %v1278, %v1286
  %v1289 = vmul.f32 %v1287, %v1287
  %v1290 = vmul.f32 %v1288, %v1288
  %v1291 = vsel %vm323, %v1289, 0.0
  %1292 = vadd.xlane.f32.xlu0 %v1291
  %v1293 = vpop.xlane.xlu0 %1292
  %v1294 = vsel %vm323, %v1290, 0.0
  %1295 = vadd.xlane.f32.xlu0 %v1294
  %v1296 = vpop.xlane.xlu0 %1295
  %v1297 = vmul.f32 %v1293, %v1083
  %v1298 = vmul.f32 %v1296, %v1083
  %v1299 = vadd.f32 %v1297, 1e-05
  %v1300 = vadd.f32 %v1298, 1e-05
  %v1301 = vrsqrt.pop %v1299
  %v1302 = vrsqrt.pop %v1300
  %v1303 = vmul.f32 %v1287, %v1301
  %v1304 = vmul.f32 %v1288, %v1302
  %v1306 = vlaneseq
  %v1307 = vshrl.u32 %v1306, 7
  %v1308 = vsub.s32 0, %v1307
  %v1309 = vrot.slane %v1275, %v1308
  %v1311 = vmul.f32 %v1303, %v1309
  %v1312 = vmul.f32 %v1304, %v1309
  %v1314 = vlaneseq
  %v1315 = vshrl.u32 %v1314, 7
  %v1316 = vsub.s32 0, %v1315
  %v1317 = vrot.slane %v1276, %v1316
  %v1319 = vadd.f32 %v1311, %v1317
  %v1320 = vadd.f32 %v1312, %v1317
  %s1321 = scalar_lea.vmem %s11, 16
  %v1322 = vld [vmem:[%s1321] sm:$0xf]
  %v1323 = vld [vmem:[%s1321 + $0x4] sm:$0xf]
  %v1324 = vld [vmem:[%s1321 + $0x8] sm:$0xf]
  %v1325 = vld [vmem:[%s1321 + $0xc] sm:$0xf]
  %v1326 = vpack.c.bf16 %v1320, %v1319
  %s1327 = scalar_lea.vmem %s13, 1
  %v1328 = vld [vmem:[%s1327] sm:$0x1]
  %v1330 = vlaneseq
  %v1331 = vshrl.u32 %v1330, 7
  %v1332 = vsub.s32 0, %v1331
  %v1333 = vrot.slane %v1328, %v1332
  %v1339 = vunpack.c.l.b16 %v1322
  %v1340 = vunpack.c.l.b16 %v1323
  %v1341 = vunpack.c.l.b16 %v1324
  %v1342 = vunpack.c.l.b16 %v1325
  %v1343 = vpack.c.b16 %v1340, %v1339
  %v1344 = vpack.c.b16 %v1342, %v1341
  %v1348 = vsel %vm323, %v1326, 0
  %1350 = vmatprep.subr.bf16.mxu0 0
  %1351 = vmatpush1.bf16.msra.mxu0 %v1343
  %1352 = vmatprep.subr.bf16.mxu0 0
  %1353 = vmatpush1.bf16.msra.mxu0 %v1344
  %1354 = vmatprep.subr.bf16.mxu0 0
  %1355 = vmatpush1.bf16.msra.mxu0 0
  %1356 = vmatprep.subr.bf16.mxu0 0
  %1357 = vmatpush1.bf16.msra.mxu0 0
  %1358 = vmatprep.subr.bf16.mxu0 0
  %1359 = vmatpush1.bf16.msra.mxu0 0
  %1360 = vmatprep.subr.bf16.mxu0 0
  %1361 = vmatpush1.bf16.msra.mxu0 0
  %1362 = vmatprep.subr.bf16.mxu0 0
  %1363 = vmatpush1.bf16.msra.mxu0 0
  %1364 = vmatprep.subr.bf16.mxu0 0
  %1365 = vmatpush1.bf16.msra.mxu0 0
  %1366 = vmatprep.subr.bf16.mxu0 0
  %1367 = vmatpush1.bf16.msra.mxu0 0
  %1368 = vmatprep.subr.bf16.mxu0 0
  %1369 = vmatpush1.bf16.msra.mxu0 0
  %1370 = vmatprep.subr.bf16.mxu0 0
  %1371 = vmatpush1.bf16.msra.mxu0 0
  %1372 = vmatprep.subr.bf16.mxu0 0
  %1373 = vmatpush1.bf16.msra.mxu0 0
  %1374 = vmatprep.subr.bf16.mxu0 0
  %1375 = vmatpush1.bf16.msra.mxu0 0
  %1376 = vmatprep.subr.bf16.mxu0 0
  %1377 = vmatpush1.bf16.msra.mxu0 0
  %1378 = vmatprep.subr.bf16.mxu0 0
  %1379 = vmatpush1.bf16.msra.mxu0 0
  %1380 = vmatprep.subr.bf16.mxu0 0
  %1381 = vmatpush1.bf16.msra.mxu0 0
  %1382 = vmatprep.mubr.bf16.mxu0 0
  %1383 = vmatmul.mubr.bf16.gmra.mrb[0].mxu0 %v1348
  %v1384 = vpop.f32.mrb[0].mxu0
  %v1385 = vadd.f32 %v1333, %v1384
  %v1386 = vpop.f32.mrb[0].mxu0
  %v1387 = vpop.f32.mrb[0].mxu0
  %v1388 = vadd.f32 %v1333, %v1387
  %v1389 = vpop.f32.mrb[0].mxu0
  %1390 = vdwg.mxu0
  %s1391 = scalar_lea.vmem %s15, 16
  %v1392 = vld [vmem:[%s1391] sm:$0xf]
  %v1393 = vld [vmem:[%s1391 + $0x4] sm:$0xf]
  %v1394 = vld [vmem:[%s1391 + $0x8] sm:$0xf]
  %v1395 = vld [vmem:[%s1391 + $0xc] sm:$0xf]
  %v1396 = vpack.c.bf16 %v1388, %v1385
  %1398 = vrot.lane.b32.xlu0 %v1396, 120
  %v1399 = vpop.permute.xlu0 %1398
  %1400 = vrot.lane.b32.xlu0 %v1396, 112
  %v1401 = vpop.permute.xlu0 %1400
  %1402 = vrot.lane.b32.xlu0 %v1396, 104
  %v1403 = vpop.permute.xlu0 %1402
  %1404 = vrot.lane.b32.xlu0 %v1396, 96
  %v1405 = vpop.permute.xlu0 %1404
  %v1407 = vsel %vm382, %v1396, 0
  %v1410 = vsel %vm382, %v1405, 0
  %1412 = vmatprep.subr.bf16.mxu0 0
  %1413 = vmatpush1.bf16.xpose.msra.mxu0 %v1410
  %1414 = vmatprep.subr.bf16.mxu0 0
  %1415 = vmatpush1.bf16.xpose.msra.mxu0 0
  %1416 = vmatprep.subr.bf16.mxu0 0
  %1417 = vmatpush1.bf16.xpose.msra.mxu0 0
  %1418 = vmatprep.subr.bf16.mxu0 0
  %1419 = vmatpush1.bf16.xpose.msra.mxu0 0
  %1420 = vmatprep.subr.bf16.mxu0 0
  %1421 = vmatpush1.bf16.xpose.msra.mxu0 0
  %1422 = vmatprep.subr.bf16.mxu0 0
  %1423 = vmatpush1.bf16.xpose.msra.mxu0 0
  %1424 = vmatprep.subr.bf16.mxu0 0
  %1425 = vmatpush1.bf16.xpose.msra.mxu0 0
  %1426 = vmatprep.subr.bf16.mxu0 0
  %1427 = vmatpush1.bf16.xpose.msra.mxu0 0
  %1428 = vmatprep.subr.bf16.mxu0 0
  %1429 = vmatpush1.bf16.xpose.msra.mxu0 0
  %1430 = vmatprep.subr.bf16.mxu0 0
  %1431 = vmatpush1.bf16.xpose.msra.mxu0 0
  %1432 = vmatprep.subr.bf16.mxu0 0
  %1433 = vmatpush1.bf16.xpose.msra.mxu0 0
  %1434 = vmatprep.subr.bf16.mxu0 0
  %1435 = vmatpush1.bf16.xpose.msra.mxu0 0
  %1436 = vmatprep.subr.bf16.mxu0 0
  %1437 = vmatpush1.bf16.xpose.msra.mxu0 0
  %1438 = vmatprep.subr.bf16.mxu0 0
  %1439 = vmatpush1.bf16.xpose.msra.mxu0 0
  %1440 = vmatprep.subr.bf16.mxu0 0
  %1441 = vmatpush1.bf16.xpose.msra.mxu0 0
  %1442 = vmatprep.subr.bf16.mxu0 0
  %1443 = vmatpush1.bf16.xpose.msra.mxu0 0
  %1444 = vmatprep.mubr.bf16.mxu0 0
  %1445 = vmatmul.mubr.bf16.gmra.mrb[0].mxu0 %v1407
  %v1446 = vpop.f32.mrb[0].mxu0
  %v1447 = vadd.f32 0.0, %v1446
  %v1448 = vpop.f32.mrb[0].mxu0
  %v1449 = vpop.f32.mrb[0].mxu0
  %v1450 = vadd.f32 0.0, %v1449
  %v1451 = vpop.f32.mrb[0].mxu0
  %1452 = vdwg.mxu0
  %1453 = vrot.lane.b32.xlu0 %v1399, 96
  %v1454 = vpop.permute.xlu0 %1453
  %v1456 = vsel %vm382, %v1399, 0
  %v1459 = vsel %vm382, %v1454, 0
  %1461 = vmatprep.subr.bf16.mxu0 0
  %1462 = vmatpush1.bf16.xpose.msra.mxu0 %v1459
  %1463 = vmatprep.subr.bf16.mxu0 0
  %1464 = vmatpush1.bf16.xpose.msra.mxu0 0
  %1465 = vmatprep.subr.bf16.mxu0 0
  %1466 = vmatpush1.bf16.xpose.msra.mxu0 0
  %1467 = vmatprep.subr.bf16.mxu0 0
  %1468 = vmatpush1.bf16.xpose.msra.mxu0 0
  %1469 = vmatprep.subr.bf16.mxu0 0
  %1470 = vmatpush1.bf16.xpose.msra.mxu0 0
  %1471 = vmatprep.subr.bf16.mxu0 0
  %1472 = vmatpush1.bf16.xpose.msra.mxu0 0
  %1473 = vmatprep.subr.bf16.mxu0 0
  %1474 = vmatpush1.bf16.xpose.msra.mxu0 0
  %1475 = vmatprep.subr.bf16.mxu0 0
  %1476 = vmatpush1.bf16.xpose.msra.mxu0 0
  %1477 = vmatprep.subr.bf16.mxu0 0
  %1478 = vmatpush1.bf16.xpose.msra.mxu0 0
  %1479 = vmatprep.subr.bf16.mxu0 0
  %1480 = vmatpush1.bf16.xpose.msra.mxu0 0
  %1481 = vmatprep.subr.bf16.mxu0 0
  %1482 = vmatpush1.bf16.xpose.msra.mxu0 0
  %1483 = vmatprep.subr.bf16.mxu0 0
  %1484 = vmatpush1.bf16.xpose.msra.mxu0 0
  %1485 = vmatprep.subr.bf16.mxu0 0
  %1486 = vmatpush1.bf16.xpose.msra.mxu0 0
  %1487 = vmatprep.subr.bf16.mxu0 0
  %1488 = vmatpush1.bf16.xpose.msra.mxu0 0
  %1489 = vmatprep.subr.bf16.mxu0 0
  %1490 = vmatpush1.bf16.xpose.msra.mxu0 0
  %1491 = vmatprep.subr.bf16.mxu0 0
  %1492 = vmatpush1.bf16.xpose.msra.mxu0 0
  %1493 = vmatprep.mubr.bf16.mxu0 0
  %1494 = vmatmul.mubr.bf16.gmra.mrb[0].mxu0 %v1456
  %v1495 = vpop.f32.mrb[0].mxu0
  %v1496 = vadd.f32 0.0, %v1495
  %v1497 = vpop.f32.mrb[0].mxu0
  %v1498 = vpop.f32.mrb[0].mxu0
  %v1499 = vadd.f32 0.0, %v1498
  %v1500 = vpop.f32.mrb[0].mxu0
  %1501 = vdwg.mxu0
  %1502 = vrot.lane.b32.xlu0 %v1401, 96
  %v1503 = vpop.permute.xlu0 %1502
  %v1505 = vsel %vm382, %v1401, 0
  %v1508 = vsel %vm382, %v1503, 0
  %1510 = vmatprep.subr.bf16.mxu0 0
  %1511 = vmatpush1.bf16.xpose.msra.mxu0 %v1508
  %1512 = vmatprep.subr.bf16.mxu0 0
  %1513 = vmatpush1.bf16.xpose.msra.mxu0 0
  %1514 = vmatprep.subr.bf16.mxu0 0
  %1515 = vmatpush1.bf16.xpose.msra.mxu0 0
  %1516 = vmatprep.subr.bf16.mxu0 0
  %1517 = vmatpush1.bf16.xpose.msra.mxu0 0
  %1518 = vmatprep.subr.bf16.mxu0 0
  %1519 = vmatpush1.bf16.xpose.msra.mxu0 0
  %1520 = vmatprep.subr.bf16.mxu0 0
  %1521 = vmatpush1.bf16.xpose.msra.mxu0 0
  %1522 = vmatprep.subr.bf16.mxu0 0
  %1523 = vmatpush1.bf16.xpose.msra.mxu0 0
  %1524 = vmatprep.subr.bf16.mxu0 0
  %1525 = vmatpush1.bf16.xpose.msra.mxu0 0
  %1526 = vmatprep.subr.bf16.mxu0 0
  %1527 = vmatpush1.bf16.xpose.msra.mxu0 0
  %1528 = vmatprep.subr.bf16.mxu0 0
  %1529 = vmatpush1.bf16.xpose.msra.mxu0 0
  %1530 = vmatprep.subr.bf16.mxu0 0
  %1531 = vmatpush1.bf16.xpose.msra.mxu0 0
  %1532 = vmatprep.subr.bf16.mxu0 0
  %1533 = vmatpush1.bf16.xpose.msra.mxu0 0
  %1534 = vmatprep.subr.bf16.mxu0 0
  %1535 = vmatpush1.bf16.xpose.msra.mxu0 0
  %1536 = vmatprep.subr.bf16.mxu0 0
  %1537 = vmatpush1.bf16.xpose.msra.mxu0 0
  %1538 = vmatprep.subr.bf16.mxu0 0
  %1539 = vmatpush1.bf16.xpose.msra.mxu0 0
  %1540 = vmatprep.subr.bf16.mxu0 0
  %1541 = vmatpush1.bf16.xpose.msra.mxu0 0
  %1542 = vmatprep.mubr.bf16.mxu0 0
  %1543 = vmatmul.mubr.bf16.gmra.mrb[0].mxu0 %v1505
  %v1544 = vpop.f32.mrb[0].mxu0
  %v1545 = vadd.f32 0.0, %v1544
  %v1546 = vpop.f32.mrb[0].mxu0
  %v1547 = vpop.f32.mrb[0].mxu0
  %v1548 = vadd.f32 0.0, %v1547
  %v1549 = vpop.f32.mrb[0].mxu0
  %1550 = vdwg.mxu0
  %1551 = vrot.lane.b32.xlu0 %v1403, 96
  %v1552 = vpop.permute.xlu0 %1551
  %v1554 = vsel %vm382, %v1403, 0
  %v1557 = vsel %vm382, %v1552, 0
  %1559 = vmatprep.subr.bf16.mxu0 0
  %1560 = vmatpush1.bf16.xpose.msra.mxu0 %v1557
  %1561 = vmatprep.subr.bf16.mxu0 0
  %1562 = vmatpush1.bf16.xpose.msra.mxu0 0
  %1563 = vmatprep.subr.bf16.mxu0 0
  %1564 = vmatpush1.bf16.xpose.msra.mxu0 0
  %1565 = vmatprep.subr.bf16.mxu0 0
  %1566 = vmatpush1.bf16.xpose.msra.mxu0 0
  %1567 = vmatprep.subr.bf16.mxu0 0
  %1568 = vmatpush1.bf16.xpose.msra.mxu0 0
  %1569 = vmatprep.subr.bf16.mxu0 0
  %1570 = vmatpush1.bf16.xpose.msra.mxu0 0
  %1571 = vmatprep.subr.bf16.mxu0 0
  %1572 = vmatpush1.bf16.xpose.msra.mxu0 0
  %1573 = vmatprep.subr.bf16.mxu0 0
  %1574 = vmatpush1.bf16.xpose.msra.mxu0 0
  %1575 = vmatprep.subr.bf16.mxu0 0
  %1576 = vmatpush1.bf16.xpose.msra.mxu0 0
  %1577 = vmatprep.subr.bf16.mxu0 0
  %1578 = vmatpush1.bf16.xpose.msra.mxu0 0
  %1579 = vmatprep.subr.bf16.mxu0 0
  %1580 = vmatpush1.bf16.xpose.msra.mxu0 0
  %1581 = vmatprep.subr.bf16.mxu0 0
  %1582 = vmatpush1.bf16.xpose.msra.mxu0 0
  %1583 = vmatprep.subr.bf16.mxu0 0
  %1584 = vmatpush1.bf16.xpose.msra.mxu0 0
  %1585 = vmatprep.subr.bf16.mxu0 0
  %1586 = vmatpush1.bf16.xpose.msra.mxu0 0
  %1587 = vmatprep.subr.bf16.mxu0 0
  %1588 = vmatpush1.bf16.xpose.msra.mxu0 0
  %1589 = vmatprep.subr.bf16.mxu0 0
  %1590 = vmatpush1.bf16.xpose.msra.mxu0 0
  %1591 = vmatprep.mubr.bf16.mxu0 0
  %1592 = vmatmul.mubr.bf16.gmra.mrb[0].mxu0 %v1554
  %v1593 = vpop.f32.mrb[0].mxu0
  %v1594 = vadd.f32 0.0, %v1593
  %v1595 = vpop.f32.mrb[0].mxu0
  %v1596 = vpop.f32.mrb[0].mxu0
  %v1597 = vadd.f32 0.0, %v1596
  %v1598 = vpop.f32.mrb[0].mxu0
  %1599 = vdwg.mxu0
  %v1600 = vsel %vm248, %v1447, -inf
  %1601 = vmax.xlane.f32.xlu0 %v1600
  %v1602 = vpop.xlane.xlu0 %1601
  %v1603 = vsel %vm248, %v1450, -inf
  %1604 = vmax.xlane.f32.xlu0 %v1603
  %v1605 = vpop.xlane.xlu0 %1604
  %v1606 = vsel %vm248, %v1496, -inf
  %1607 = vmax.xlane.f32.xlu0 %v1606
  %v1608 = vpop.xlane.xlu0 %1607
  %v1609 = vsel %vm248, %v1499, -inf
  %1610 = vmax.xlane.f32.xlu0 %v1609
  %v1611 = vpop.xlane.xlu0 %1610
  %v1612 = vsel %vm248, %v1545, -inf
  %1613 = vmax.xlane.f32.xlu0 %v1612
  %v1614 = vpop.xlane.xlu0 %1613
  %v1615 = vsel %vm248, %v1548, -inf
  %1616 = vmax.xlane.f32.xlu0 %v1615
  %v1617 = vpop.xlane.xlu0 %1616
  %v1618 = vsel %vm248, %v1594, -inf
  %1619 = vmax.xlane.f32.xlu0 %v1618
  %v1620 = vpop.xlane.xlu0 %1619
  %v1621 = vsel %vm248, %v1597, -inf
  %1622 = vmax.xlane.f32.xlu0 %v1621
  %v1623 = vpop.xlane.xlu0 %1622
  %v1624 = vsub.f32 %v1447, %v1602
  %v1625 = vsub.f32 %v1450, %v1605
  %v1626 = vsub.f32 %v1496, %v1608
  %v1627 = vsub.f32 %v1499, %v1611
  %v1628 = vsub.f32 %v1545, %v1614
  %v1629 = vsub.f32 %v1548, %v1617
  %v1630 = vsub.f32 %v1594, %v1620
  %v1631 = vsub.f32 %v1597, %v1623
  %v1632 = vmul.f32 %v1624, 1.442695
  %v1633 = vpow.pop %v1632
  %v1634 = vmul.f32 %v1625, 1.442695
  %v1635 = vpow.pop %v1634
  %v1636 = vmul.f32 %v1626, 1.442695
  %v1637 = vpow.pop %v1636
  %v1638 = vmul.f32 %v1627, 1.442695
  %v1639 = vpow.pop %v1638
  %v1640 = vmul.f32 %v1628, 1.442695
  %v1641 = vpow.pop %v1640
  %v1642 = vmul.f32 %v1629, 1.442695
  %v1643 = vpow.pop %v1642
  %v1644 = vmul.f32 %v1630, 1.442695
  %v1645 = vpow.pop %v1644
  %v1646 = vmul.f32 %v1631, 1.442695
  %v1647 = vpow.pop %v1646
  %v1648 = vsel %vm248, %v1633, 0.0
  %1649 = vadd.xlane.f32.xlu0 %v1648
  %v1650 = vpop.xlane.xlu0 %1649
  %v1651 = vsel %vm248, %v1635, 0.0
  %1652 = vadd.xlane.f32.xlu0 %v1651
  %v1653 = vpop.xlane.xlu0 %1652
  %v1654 = vsel %vm248, %v1637, 0.0
  %1655 = vadd.xlane.f32.xlu0 %v1654
  %v1656 = vpop.xlane.xlu0 %1655
  %v1657 = vsel %vm248, %v1639, 0.0
  %1658 = vadd.xlane.f32.xlu0 %v1657
  %v1659 = vpop.xlane.xlu0 %1658
  %v1660 = vsel %vm248, %v1641, 0.0
  %1661 = vadd.xlane.f32.xlu0 %v1660
  %v1662 = vpop.xlane.xlu0 %1661
  %v1663 = vsel %vm248, %v1643, 0.0
  %1664 = vadd.xlane.f32.xlu0 %v1663
  %v1665 = vpop.xlane.xlu0 %1664
  %v1666 = vsel %vm248, %v1645, 0.0
  %1667 = vadd.xlane.f32.xlu0 %v1666
  %v1668 = vpop.xlane.xlu0 %1667
  %v1669 = vsel %vm248, %v1647, 0.0
  %1670 = vadd.xlane.f32.xlu0 %v1669
  %v1671 = vpop.xlane.xlu0 %1670
  %v1672 = vrcp.pop %v1650
  %v1673 = vrcp.pop %v1653
  %v1674 = vrcp.pop %v1656
  %v1675 = vrcp.pop %v1659
  %v1676 = vrcp.pop %v1662
  %v1677 = vrcp.pop %v1665
  %v1678 = vrcp.pop %v1668
  %v1679 = vrcp.pop %v1671
  %v1680 = vmul.f32 %v1633, %v1672
  %v1681 = vmul.f32 %v1635, %v1673
  %v1682 = vmul.f32 %v1637, %v1674
  %v1683 = vmul.f32 %v1639, %v1675
  %v1684 = vmul.f32 %v1641, %v1676
  %v1685 = vmul.f32 %v1643, %v1677
  %v1686 = vmul.f32 %v1645, %v1678
  %v1687 = vmul.f32 %v1647, %v1679
  %v1688 = vpack.c.bf16 %v1681, %v1680
  %v1689 = vpack.c.bf16 %v1683, %v1682
  %v1690 = vpack.c.bf16 %v1685, %v1684
  %v1691 = vpack.c.bf16 %v1687, %v1686
  %1692 = vrot.lane.b32.xlu0 %v1396, 64
  %v1693 = vpop.permute.xlu0 %1692
  %v1696 = vsel %vm248, %v1688, 0
  %1698 = vmatprep.subr.bf16.mxu0 0
  %1699 = vmatpush1.bf16.msra.mxu0 %v1693
  %1700 = vmatprep.subr.bf16.mxu0 0
  %1701 = vmatpush1.bf16.msra.mxu0 0
  %1702 = vmatprep.subr.bf16.mxu0 0
  %1703 = vmatpush1.bf16.msra.mxu0 0
  %1704 = vmatprep.subr.bf16.mxu0 0
  %1705 = vmatpush1.bf16.msra.mxu0 0
  %1706 = vmatprep.subr.bf16.mxu0 0
  %1707 = vmatpush1.bf16.msra.mxu0 0
  %1708 = vmatprep.subr.bf16.mxu0 0
  %1709 = vmatpush1.bf16.msra.mxu0 0
  %1710 = vmatprep.subr.bf16.mxu0 0
  %1711 = vmatpush1.bf16.msra.mxu0 0
  %1712 = vmatprep.subr.bf16.mxu0 0
  %1713 = vmatpush1.bf16.msra.mxu0 0
  %1714 = vmatprep.subr.bf16.mxu0 0
  %1715 = vmatpush1.bf16.msra.mxu0 0
  %1716 = vmatprep.subr.bf16.mxu0 0
  %1717 = vmatpush1.bf16.msra.mxu0 0
  %1718 = vmatprep.subr.bf16.mxu0 0
  %1719 = vmatpush1.bf16.msra.mxu0 0
  %1720 = vmatprep.subr.bf16.mxu0 0
  %1721 = vmatpush1.bf16.msra.mxu0 0
  %1722 = vmatprep.subr.bf16.mxu0 0
  %1723 = vmatpush1.bf16.msra.mxu0 0
  %1724 = vmatprep.subr.bf16.mxu0 0
  %1725 = vmatpush1.bf16.msra.mxu0 0
  %1726 = vmatprep.subr.bf16.mxu0 0
  %1727 = vmatpush1.bf16.msra.mxu0 0
  %1728 = vmatprep.subr.bf16.mxu0 0
  %1729 = vmatpush1.bf16.msra.mxu0 0
  %1730 = vmatprep.mubr.bf16.mxu0 0
  %1731 = vmatmul.mubr.bf16.gmra.mrb[0].mxu0 %v1696
  %v1732 = vpop.f32.mrb[0].mxu0
  %v1733 = vadd.f32 0.0, %v1732
  %v1734 = vpop.f32.mrb[0].mxu0
  %v1735 = vpop.f32.mrb[0].mxu0
  %v1736 = vadd.f32 0.0, %v1735
  %v1737 = vpop.f32.mrb[0].mxu0
  %1738 = vdwg.mxu0
  %1739 = vrot.lane.b32.xlu0 %v1399, 64
  %v1740 = vpop.permute.xlu0 %1739
  %v1743 = vsel %vm248, %v1689, 0
  %1745 = vmatprep.subr.bf16.mxu0 0
  %1746 = vmatpush1.bf16.msra.mxu0 %v1740
  %1747 = vmatprep.subr.bf16.mxu0 0
  %1748 = vmatpush1.bf16.msra.mxu0 0
  %1749 = vmatprep.subr.bf16.mxu0 0
  %1750 = vmatpush1.bf16.msra.mxu0 0
  %1751 = vmatprep.subr.bf16.mxu0 0
  %1752 = vmatpush1.bf16.msra.mxu0 0
  %1753 = vmatprep.subr.bf16.mxu0 0
  %1754 = vmatpush1.bf16.msra.mxu0 0
  %1755 = vmatprep.subr.bf16.mxu0 0
  %1756 = vmatpush1.bf16.msra.mxu0 0
  %1757 = vmatprep.subr.bf16.mxu0 0
  %1758 = vmatpush1.bf16.msra.mxu0 0
  %1759 = vmatprep.subr.bf16.mxu0 0
  %1760 = vmatpush1.bf16.msra.mxu0 0
  %1761 = vmatprep.subr.bf16.mxu0 0
  %1762 = vmatpush1.bf16.msra.mxu0 0
  %1763 = vmatprep.subr.bf16.mxu0 0
  %1764 = vmatpush1.bf16.msra.mxu0 0
  %1765 = vmatprep.subr.bf16.mxu0 0
  %1766 = vmatpush1.bf16.msra.mxu0 0
  %1767 = vmatprep.subr.bf16.mxu0 0
  %1768 = vmatpush1.bf16.msra.mxu0 0
  %1769 = vmatprep.subr.bf16.mxu0 0
  %1770 = vmatpush1.bf16.msra.mxu0 0
  %1771 = vmatprep.subr.bf16.mxu0 0
  %1772 = vmatpush1.bf16.msra.mxu0 0
  %1773 = vmatprep.subr.bf16.mxu0 0
  %1774 = vmatpush1.bf16.msra.mxu0 0
  %1775 = vmatprep.subr.bf16.mxu0 0
  %1776 = vmatpush1.bf16.msra.mxu0 0
  %1777 = vmatprep.mubr.bf16.mxu0 0
  %1778 = vmatmul.mubr.bf16.gmra.mrb[0].mxu0 %v1743
  %v1779 = vpop.f32.mrb[0].mxu0
  %v1780 = vadd.f32 0.0, %v1779
  %v1781 = vpop.f32.mrb[0].mxu0
  %v1782 = vpop.f32.mrb[0].mxu0
  %v1783 = vadd.f32 0.0, %v1782
  %v1784 = vpop.f32.mrb[0].mxu0
  %1785 = vdwg.mxu0
  %1786 = vrot.lane.b32.xlu0 %v1401, 64
  %v1787 = vpop.permute.xlu0 %1786
  %v1790 = vsel %vm248, %v1690, 0
  %1792 = vmatprep.subr.bf16.mxu0 0
  %1793 = vmatpush1.bf16.msra.mxu0 %v1787
  %1794 = vmatprep.subr.bf16.mxu0 0
  %1795 = vmatpush1.bf16.msra.mxu0 0
  %1796 = vmatprep.subr.bf16.mxu0 0
  %1797 = vmatpush1.bf16.msra.mxu0 0
  %1798 = vmatprep.subr.bf16.mxu0 0
  %1799 = vmatpush1.bf16.msra.mxu0 0
  %1800 = vmatprep.subr.bf16.mxu0 0
  %1801 = vmatpush1.bf16.msra.mxu0 0
  %1802 = vmatprep.subr.bf16.mxu0 0
  %1803 = vmatpush1.bf16.msra.mxu0 0
  %1804 = vmatprep.subr.bf16.mxu0 0
  %1805 = vmatpush1.bf16.msra.mxu0 0
  %1806 = vmatprep.subr.bf16.mxu0 0
  %1807 = vmatpush1.bf16.msra.mxu0 0
  %1808 = vmatprep.subr.bf16.mxu0 0
  %1809 = vmatpush1.bf16.msra.mxu0 0
  %1810 = vmatprep.subr.bf16.mxu0 0
  %1811 = vmatpush1.bf16.msra.mxu0 0
  %1812 = vmatprep.subr.bf16.mxu0 0
  %1813 = vmatpush1.bf16.msra.mxu0 0
  %1814 = vmatprep.subr.bf16.mxu0 0
  %1815 = vmatpush1.bf16.msra.mxu0 0
  %1816 = vmatprep.subr.bf16.mxu0 0
  %1817 = vmatpush1.bf16.msra.mxu0 0
  %1818 = vmatprep.subr.bf16.mxu0 0
  %1819 = vmatpush1.bf16.msra.mxu0 0
  %1820 = vmatprep.subr.bf16.mxu0 0
  %1821 = vmatpush1.bf16.msra.mxu0 0
  %1822 = vmatprep.subr.bf16.mxu0 0
  %1823 = vmatpush1.bf16.msra.mxu0 0
  %1824 = vmatprep.mubr.bf16.mxu0 0
  %1825 = vmatmul.mubr.bf16.gmra.mrb[0].mxu0 %v1790
  %v1826 = vpop.f32.mrb[0].mxu0
  %v1827 = vadd.f32 0.0, %v1826
  %v1828 = vpop.f32.mrb[0].mxu0
  %v1829 = vpop.f32.mrb[0].mxu0
  %v1830 = vadd.f32 0.0, %v1829
  %v1831 = vpop.f32.mrb[0].mxu0
  %1832 = vdwg.mxu0
  %1833 = vrot.lane.b32.xlu0 %v1403, 64
  %v1834 = vpop.permute.xlu0 %1833
  %v1837 = vsel %vm248, %v1691, 0
  %1839 = vmatprep.subr.bf16.mxu0 0
  %1840 = vmatpush1.bf16.msra.mxu0 %v1834
  %1841 = vmatprep.subr.bf16.mxu0 0
  %1842 = vmatpush1.bf16.msra.mxu0 0
  %1843 = vmatprep.subr.bf16.mxu0 0
  %1844 = vmatpush1.bf16.msra.mxu0 0
  %1845 = vmatprep.subr.bf16.mxu0 0
  %1846 = vmatpush1.bf16.msra.mxu0 0
  %1847 = vmatprep.subr.bf16.mxu0 0
  %1848 = vmatpush1.bf16.msra.mxu0 0
  %1849 = vmatprep.subr.bf16.mxu0 0
  %1850 = vmatpush1.bf16.msra.mxu0 0
  %1851 = vmatprep.subr.bf16.mxu0 0
  %1852 = vmatpush1.bf16.msra.mxu0 0
  %1853 = vmatprep.subr.bf16.mxu0 0
  %1854 = vmatpush1.bf16.msra.mxu0 0
  %1855 = vmatprep.subr.bf16.mxu0 0
  %1856 = vmatpush1.bf16.msra.mxu0 0
  %1857 = vmatprep.subr.bf16.mxu0 0
  %1858 = vmatpush1.bf16.msra.mxu0 0
  %1859 = vmatprep.subr.bf16.mxu0 0
  %1860 = vmatpush1.bf16.msra.mxu0 0
  %1861 = vmatprep.subr.bf16.mxu0 0
  %1862 = vmatpush1.bf16.msra.mxu0 0
  %1863 = vmatprep.subr.bf16.mxu0 0
  %1864 = vmatpush1.bf16.msra.mxu0 0
  %1865 = vmatprep.subr.bf16.mxu0 0
  %1866 = vmatpush1.bf16.msra.mxu0 0
  %1867 = vmatprep.subr.bf16.mxu0 0
  %1868 = vmatpush1.bf16.msra.mxu0 0
  %1869 = vmatprep.subr.bf16.mxu0 0
  %1870 = vmatpush1.bf16.msra.mxu0 0
  %1871 = vmatprep.mubr.bf16.mxu0 0
  %1872 = vmatmul.mubr.bf16.gmra.mrb[0].mxu0 %v1837
  %v1873 = vpop.f32.mrb[0].mxu0
  %v1874 = vadd.f32 0.0, %v1873
  %v1875 = vpop.f32.mrb[0].mxu0
  %v1876 = vpop.f32.mrb[0].mxu0
  %v1877 = vadd.f32 0.0, %v1876
  %v1878 = vpop.f32.mrb[0].mxu0
  %1879 = vdwg.mxu0
  %v1880 = vpack.c.bf16 %v1736, %v1733
  %v1881 = vpack.c.bf16 %v1783, %v1780
  %v1882 = vpack.c.bf16 %v1830, %v1827
  %v1883 = vpack.c.bf16 %v1877, %v1874
  %v1885 = vsel %vm382, %v1880, 0
  %v1888 = vsel %vm864, %v1392, 0
  %1890 = vmatprep.subr.bf16.mxu0 0
  %1891 = vmatpush1.bf16.msra.mxu0 %v1888
  %1892 = vmatprep.subr.bf16.mxu0 0
  %1893 = vmatpush1.bf16.msra.mxu0 0
  %1894 = vmatprep.subr.bf16.mxu0 0
  %1895 = vmatpush1.bf16.msra.mxu0 0
  %1896 = vmatprep.subr.bf16.mxu0 0
  %1897 = vmatpush1.bf16.msra.mxu0 0
  %1898 = vmatprep.subr.bf16.mxu0 0
  %1899 = vmatpush1.bf16.msra.mxu0 0
  %1900 = vmatprep.subr.bf16.mxu0 0
  %1901 = vmatpush1.bf16.msra.mxu0 0
  %1902 = vmatprep.subr.bf16.mxu0 0
  %1903 = vmatpush1.bf16.msra.mxu0 0
  %1904 = vmatprep.subr.bf16.mxu0 0
  %1905 = vmatpush1.bf16.msra.mxu0 0
  %1906 = vmatprep.subr.bf16.mxu0 0
  %1907 = vmatpush1.bf16.msra.mxu0 0
  %1908 = vmatprep.subr.bf16.mxu0 0
  %1909 = vmatpush1.bf16.msra.mxu0 0
  %1910 = vmatprep.subr.bf16.mxu0 0
  %1911 = vmatpush1.bf16.msra.mxu0 0
  %1912 = vmatprep.subr.bf16.mxu0 0
  %1913 = vmatpush1.bf16.msra.mxu0 0
  %1914 = vmatprep.subr.bf16.mxu0 0
  %1915 = vmatpush1.bf16.msra.mxu0 0
  %1916 = vmatprep.subr.bf16.mxu0 0
  %1917 = vmatpush1.bf16.msra.mxu0 0
  %1918 = vmatprep.subr.bf16.mxu0 0
  %1919 = vmatpush1.bf16.msra.mxu0 0
  %1920 = vmatprep.subr.bf16.mxu0 0
  %1921 = vmatpush1.bf16.msra.mxu0 0
  %1922 = vmatprep.mubr.bf16.mxu0 0
  %1923 = vmatmul.mubr.bf16.gmra.mrb[0].mxu0 %v1885
  %v1924 = vpop.f32.mrb[0].mxu0
  %v1925 = vadd.f32 0.0, %v1924
  %v1926 = vpop.f32.mrb[0].mxu0
  %v1927 = vpop.f32.mrb[0].mxu0
  %v1928 = vadd.f32 0.0, %v1927
  %v1929 = vpop.f32.mrb[0].mxu0
  %1930 = vdwg.mxu0
  %v1932 = vsel %vm382, %v1881, 0
  %v1935 = vsel %vm864, %v1393, 0
  %1937 = vmatprep.subr.bf16.mxu0 0
  %1938 = vmatpush1.bf16.msra.mxu0 %v1935
  %1939 = vmatprep.subr.bf16.mxu0 0
  %1940 = vmatpush1.bf16.msra.mxu0 0
  %1941 = vmatprep.subr.bf16.mxu0 0
  %1942 = vmatpush1.bf16.msra.mxu0 0
  %1943 = vmatprep.subr.bf16.mxu0 0
  %1944 = vmatpush1.bf16.msra.mxu0 0
  %1945 = vmatprep.subr.bf16.mxu0 0
  %1946 = vmatpush1.bf16.msra.mxu0 0
  %1947 = vmatprep.subr.bf16.mxu0 0
  %1948 = vmatpush1.bf16.msra.mxu0 0
  %1949 = vmatprep.subr.bf16.mxu0 0
  %1950 = vmatpush1.bf16.msra.mxu0 0
  %1951 = vmatprep.subr.bf16.mxu0 0
  %1952 = vmatpush1.bf16.msra.mxu0 0
  %1953 = vmatprep.subr.bf16.mxu0 0
  %1954 = vmatpush1.bf16.msra.mxu0 0
  %1955 = vmatprep.subr.bf16.mxu0 0
  %1956 = vmatpush1.bf16.msra.mxu0 0
  %1957 = vmatprep.subr.bf16.mxu0 0
  %1958 = vmatpush1.bf16.msra.mxu0 0
  %1959 = vmatprep.subr.bf16.mxu0 0
  %1960 = vmatpush1.bf16.msra.mxu0 0
  %1961 = vmatprep.subr.bf16.mxu0 0
  %1962 = vmatpush1.bf16.msra.mxu0 0
  %1963 = vmatprep.subr.bf16.mxu0 0
  %1964 = vmatpush1.bf16.msra.mxu0 0
  %1965 = vmatprep.subr.bf16.mxu0 0
  %1966 = vmatpush1.bf16.msra.mxu0 0
  %1967 = vmatprep.subr.bf16.mxu0 0
  %1968 = vmatpush1.bf16.msra.mxu0 0
  %1969 = vmatprep.mubr.bf16.mxu0 0
  %1970 = vmatmul.mubr.bf16.gmra.mrb[0].mxu0 %v1932
  %v1971 = vpop.f32.mrb[0].mxu0
  %v1972 = vadd.f32 0.0, %v1971
  %v1973 = vpop.f32.mrb[0].mxu0
  %v1974 = vpop.f32.mrb[0].mxu0
  %v1975 = vadd.f32 0.0, %v1974
  %v1976 = vpop.f32.mrb[0].mxu0
  %1977 = vdwg.mxu0
  %v1979 = vsel %vm382, %v1882, 0
  %v1982 = vsel %vm864, %v1394, 0
  %1984 = vmatprep.subr.bf16.mxu0 0
  %1985 = vmatpush1.bf16.msra.mxu0 %v1982
  %1986 = vmatprep.subr.bf16.mxu0 0
  %1987 = vmatpush1.bf16.msra.mxu0 0
  %1988 = vmatprep.subr.bf16.mxu0 0
  %1989 = vmatpush1.bf16.msra.mxu0 0
  %1990 = vmatprep.subr.bf16.mxu0 0
  %1991 = vmatpush1.bf16.msra.mxu0 0
  %1992 = vmatprep.subr.bf16.mxu0 0
  %1993 = vmatpush1.bf16.msra.mxu0 0
  %1994 = vmatprep.subr.bf16.mxu0 0
  %1995 = vmatpush1.bf16.msra.mxu0 0
  %1996 = vmatprep.subr.bf16.mxu0 0
  %1997 = vmatpush1.bf16.msra.mxu0 0
  %1998 = vmatprep.subr.bf16.mxu0 0
  %1999 = vmatpush1.bf16.msra.mxu0 0
  %2000 = vmatprep.subr.bf16.mxu0 0
  %2001 = vmatpush1.bf16.msra.mxu0 0
  %2002 = vmatprep.subr.bf16.mxu0 0
  %2003 = vmatpush1.bf16.msra.mxu0 0
  %2004 = vmatprep.subr.bf16.mxu0 0
  %2005 = vmatpush1.bf16.msra.mxu0 0
  %2006 = vmatprep.subr.bf16.mxu0 0
  %2007 = vmatpush1.bf16.msra.mxu0 0
  %2008 = vmatprep.subr.bf16.mxu0 0
  %2009 = vmatpush1.bf16.msra.mxu0 0
  %2010 = vmatprep.subr.bf16.mxu0 0
  %2011 = vmatpush1.bf16.msra.mxu0 0
  %2012 = vmatprep.subr.bf16.mxu0 0
  %2013 = vmatpush1.bf16.msra.mxu0 0
  %2014 = vmatprep.subr.bf16.mxu0 0
  %2015 = vmatpush1.bf16.msra.mxu0 0
  %2016 = vmatprep.mubr.bf16.mxu0 0
  %2017 = vmatmul.mubr.bf16.gmra.mrb[0].mxu0 %v1979
  %v2018 = vpop.f32.mrb[0].mxu0
  %v2019 = vadd.f32 0.0, %v2018
  %v2020 = vpop.f32.mrb[0].mxu0
  %v2021 = vpop.f32.mrb[0].mxu0
  %v2022 = vadd.f32 0.0, %v2021
  %v2023 = vpop.f32.mrb[0].mxu0
  %2024 = vdwg.mxu0
  %v2026 = vsel %vm382, %v1883, 0
  %v2029 = vsel %vm864, %v1395, 0
  %2031 = vmatprep.subr.bf16.mxu0 0
  %2032 = vmatpush1.bf16.msra.mxu0 %v2029
  %2033 = vmatprep.subr.bf16.mxu0 0
  %2034 = vmatpush1.bf16.msra.mxu0 0
  %2035 = vmatprep.subr.bf16.mxu0 0
  %2036 = vmatpush1.bf16.msra.mxu0 0
  %2037 = vmatprep.subr.bf16.mxu0 0
  %2038 = vmatpush1.bf16.msra.mxu0 0
  %2039 = vmatprep.subr.bf16.mxu0 0
  %2040 = vmatpush1.bf16.msra.mxu0 0
  %2041 = vmatprep.subr.bf16.mxu0 0
  %2042 = vmatpush1.bf16.msra.mxu0 0
  %2043 = vmatprep.subr.bf16.mxu0 0
  %2044 = vmatpush1.bf16.msra.mxu0 0
  %2045 = vmatprep.subr.bf16.mxu0 0
  %2046 = vmatpush1.bf16.msra.mxu0 0
  %2047 = vmatprep.subr.bf16.mxu0 0
  %2048 = vmatpush1.bf16.msra.mxu0 0
  %2049 = vmatprep.subr.bf16.mxu0 0
  %2050 = vmatpush1.bf16.msra.mxu0 0
  %2051 = vmatprep.subr.bf16.mxu0 0
  %2052 = vmatpush1.bf16.msra.mxu0 0
  %2053 = vmatprep.subr.bf16.mxu0 0
  %2054 = vmatpush1.bf16.msra.mxu0 0
  %2055 = vmatprep.subr.bf16.mxu0 0
  %2056 = vmatpush1.bf16.msra.mxu0 0
  %2057 = vmatprep.subr.bf16.mxu0 0
  %2058 = vmatpush1.bf16.msra.mxu0 0
  %2059 = vmatprep.subr.bf16.mxu0 0
  %2060 = vmatpush1.bf16.msra.mxu0 0
  %2061 = vmatprep.subr.bf16.mxu0 0
  %2062 = vmatpush1.bf16.msra.mxu0 0
  %2063 = vmatprep.mubr.bf16.mxu0 0
  %2064 = vmatmul.mubr.bf16.gmra.mrb[0].mxu0 %v2026
  %v2065 = vpop.f32.mrb[0].mxu0
  %v2066 = vadd.f32 0.0, %v2065
  %v2067 = vpop.f32.mrb[0].mxu0
  %v2068 = vpop.f32.mrb[0].mxu0
  %v2069 = vadd.f32 0.0, %v2068
  %v2070 = vpop.f32.mrb[0].mxu0
  %2071 = vdwg.mxu0
  %v2072 = vsel %vm323, %v1925, 0.0
  %v2073 = vsel %vm323, %v1972, 0.0
  %v2074 = vadd.f32 %v2072, %v2073
  %v2075 = vsel %vm323, %v2019, 0.0
  %v2076 = vadd.f32 %v2074, %v2075
  %v2077 = vsel %vm323, %v2066, 0.0
  %v2078 = vadd.f32 %v2076, %v2077
  %v2079 = vsel %vm323, %v1928, 0.0
  %v2080 = vsel %vm323, %v1975, 0.0
  %v2081 = vadd.f32 %v2079, %v2080
  %v2082 = vsel %vm323, %v2022, 0.0
  %v2083 = vadd.f32 %v2081, %v2082
  %v2084 = vsel %vm323, %v2069, 0.0
  %v2085 = vadd.f32 %v2083, %v2084
  %s2086 = scalar_lea.vmem %s17, 1
  %v2087 = vld [vmem:[%s2086] sm:$0x1]
  %v2089 = vlaneseq
  %v2090 = vshrl.u32 %v2089, 7
  %v2091 = vsub.s32 0, %v2090
  %v2092 = vrot.slane %v2087, %v2091
  %v2094 = vadd.f32 %v2078, %v2092
  %v2095 = vadd.f32 %v2085, %v2092
  %s2096 = scalar_lea.vmem %s19, 1
  %v2097 = vld [vmem:[%s2096] sm:$0x1]
  %s2098 = scalar_lea.vmem %s21, 1
  %v2099 = vld [vmem:[%s2098] sm:$0x1]
  %v2100 = vadd.f32 %v1319, %v2094
  %v2101 = vadd.f32 %v1320, %v2095
  %v2102 = vsel %vm323, %v2100, 0.0
  %2103 = vadd.xlane.f32.xlu0 %v2102
  %v2104 = vpop.xlane.xlu0 %2103
  %v2105 = vsel %vm323, %v2101, 0.0
  %2106 = vadd.xlane.f32.xlu0 %v2105
  %v2107 = vpop.xlane.xlu0 %2106
  %v2108 = vmul.f32 %v2104, %v1083
  %v2109 = vmul.f32 %v2107, %v1083
  %v2110 = vsub.f32 %v2100, %v2108
  %v2111 = vsub.f32 %v2101, %v2109
  %v2112 = vmul.f32 %v2110, %v2110
  %v2113 = vmul.f32 %v2111, %v2111
  %v2114 = vsel %vm323, %v2112, 0.0
  %2115 = vadd.xlane.f32.xlu0 %v2114
  %v2116 = vpop.xlane.xlu0 %2115
  %v2117 = vsel %vm323, %v2113, 0.0
  %2118 = vadd.xlane.f32.xlu0 %v2117
  %v2119 = vpop.xlane.xlu0 %2118
  %v2120 = vmul.f32 %v2116, %v1083
  %v2121 = vmul.f32 %v2119, %v1083
  %v2122 = vadd.f32 %v2120, 1e-05
  %v2123 = vadd.f32 %v2121, 1e-05
  %v2124 = vrsqrt.pop %v2122
  %v2125 = vrsqrt.pop %v2123
  %v2126 = vmul.f32 %v2110, %v2124
  %v2127 = vmul.f32 %v2111, %v2125
  %v2129 = vlaneseq
  %v2130 = vshrl.u32 %v2129, 7
  %v2131 = vsub.s32 0, %v2130
  %v2132 = vrot.slane %v2097, %v2131
  %v2134 = vmul.f32 %v2126, %v2132
  %v2135 = vmul.f32 %v2127, %v2132
  %v2137 = vlaneseq
  %v2138 = vshrl.u32 %v2137, 7
  %v2139 = vsub.s32 0, %v2138
  %v2140 = vrot.slane %v2099, %v2139
  %v2142 = vadd.f32 %v2134, %v2140
  %v2143 = vadd.f32 %v2135, %v2140
  %s2144 = scalar_lea.vmem %s23, 16
  %v2145 = vld [vmem:[%s2144] sm:$0xf]
  %v2146 = vld [vmem:[%s2144 + $0x4] sm:$0xf]
  %v2147 = vld [vmem:[%s2144 + $0x8] sm:$0xf]
  %v2148 = vld [vmem:[%s2144 + $0xc] sm:$0xf]
  %v2149 = vpack.c.bf16 %v2143, %v2142
  %s2150 = scalar_lea.vmem %s25, 1
  %v2151 = vld [vmem:[%s2150] sm:$0x1]
  %v2153 = vlaneseq
  %v2154 = vshrl.u32 %v2153, 7
  %v2155 = vsub.s32 0, %v2154
  %v2156 = vrot.slane %v2151, %v2155
  %v2162 = vunpack.c.l.b16 %v2145
  %v2163 = vunpack.c.l.b16 %v2146
  %v2164 = vunpack.c.l.b16 %v2147
  %v2165 = vunpack.c.l.b16 %v2148
  %v2166 = vpack.c.b16 %v2163, %v2162
  %v2167 = vpack.c.b16 %v2165, %v2164
  %v2171 = vsel %vm323, %v2149, 0
  %2173 = vmatprep.subr.bf16.mxu0 0
  %2174 = vmatpush1.bf16.msra.mxu0 %v2166
  %2175 = vmatprep.subr.bf16.mxu0 0
  %2176 = vmatpush1.bf16.msra.mxu0 %v2167
  %2177 = vmatprep.subr.bf16.mxu0 0
  %2178 = vmatpush1.bf16.msra.mxu0 0
  %2179 = vmatprep.subr.bf16.mxu0 0
  %2180 = vmatpush1.bf16.msra.mxu0 0
  %2181 = vmatprep.subr.bf16.mxu0 0
  %2182 = vmatpush1.bf16.msra.mxu0 0
  %2183 = vmatprep.subr.bf16.mxu0 0
  %2184 = vmatpush1.bf16.msra.mxu0 0
  %2185 = vmatprep.subr.bf16.mxu0 0
  %2186 = vmatpush1.bf16.msra.mxu0 0
  %2187 = vmatprep.subr.bf16.mxu0 0
  %2188 = vmatpush1.bf16.msra.mxu0 0
  %2189 = vmatprep.subr.bf16.mxu0 0
  %2190 = vmatpush1.bf16.msra.mxu0 0
  %2191 = vmatprep.subr.bf16.mxu0 0
  %2192 = vmatpush1.bf16.msra.mxu0 0
  %2193 = vmatprep.subr.bf16.mxu0 0
  %2194 = vmatpush1.bf16.msra.mxu0 0
  %2195 = vmatprep.subr.bf16.mxu0 0
  %2196 = vmatpush1.bf16.msra.mxu0 0
  %2197 = vmatprep.subr.bf16.mxu0 0
  %2198 = vmatpush1.bf16.msra.mxu0 0
  %2199 = vmatprep.subr.bf16.mxu0 0
  %2200 = vmatpush1.bf16.msra.mxu0 0
  %2201 = vmatprep.subr.bf16.mxu0 0
  %2202 = vmatpush1.bf16.msra.mxu0 0
  %2203 = vmatprep.subr.bf16.mxu0 0
  %2204 = vmatpush1.bf16.msra.mxu0 0
  %2205 = vmatprep.mubr.bf16.mxu0 0
  %2206 = vmatmul.mubr.bf16.gmra.mrb[0].mxu0 %v2171
  %v2207 = vpop.f32.mrb[0].mxu0
  %v2208 = vadd.f32 %v2156, %v2207
  %v2209 = vpop.f32.mrb[0].mxu0
  %v2210 = vpop.f32.mrb[0].mxu0
  %v2211 = vadd.f32 %v2156, %v2210
  %v2212 = vpop.f32.mrb[0].mxu0
  %2213 = vdwg.mxu0
  %v2214 = vmax.f32 %v2208, 0.0
  %v2215 = vmax.f32 %v2211, 0.0
  %s2216 = scalar_lea.vmem %s27, 32
  %v2217 = vld [vmem:[%s2216] sm:$0xf]
  %v2218 = vld [vmem:[%s2216 + $0x4] sm:$0xf]
  %v2219 = vld [vmem:[%s2216 + $0x8] sm:$0xf]
  %v2220 = vld [vmem:[%s2216 + $0xc] sm:$0xf]
  %v2221 = vld [vmem:[%s2216 + $0x10] sm:$0xf]
  %v2222 = vld [vmem:[%s2216 + $0x14] sm:$0xf]
  %v2223 = vld [vmem:[%s2216 + $0x18] sm:$0xf]
  %v2224 = vld [vmem:[%s2216 + $0x1c] sm:$0xf]
  %v2225 = vpack.c.bf16 %v2215, %v2214
  %s2226 = scalar_lea.vmem %s29, 1
  %v2227 = vld [vmem:[%s2226] sm:$0x1]
  %v2229 = vlaneseq
  %v2230 = vshrl.u32 %v2229, 7
  %v2231 = vsub.s32 0, %v2230
  %v2232 = vrot.slane %v2227, %v2231
  %v2242 = vunpack.c.l.b16 %v2217
  %v2243 = vunpack.c.l.b16 %v2218
  %v2244 = vunpack.c.l.b16 %v2219
  %v2245 = vunpack.c.l.b16 %v2220
  %v2246 = vunpack.c.l.b16 %v2221
  %v2247 = vunpack.c.l.b16 %v2222
  %v2248 = vunpack.c.l.b16 %v2223
  %v2249 = vunpack.c.l.b16 %v2224
  %v2250 = vpack.c.b16 %v2243, %v2242
  %v2251 = vpack.c.b16 %v2245, %v2244
  %v2252 = vpack.c.b16 %v2247, %v2246
  %v2253 = vpack.c.b16 %v2249, %v2248
  %v2259 = vsel %vm1230, %v2225, 0
  %2261 = vmatprep.subr.bf16.mxu0 0
  %2262 = vmatpush1.bf16.msra.mxu0 %v2250
  %2263 = vmatprep.subr.bf16.mxu0 0
  %2264 = vmatpush1.bf16.msra.mxu0 %v2251
  %2265 = vmatprep.subr.bf16.mxu0 0
  %2266 = vmatpush1.bf16.msra.mxu0 %v2252
  %2267 = vmatprep.subr.bf16.mxu0 0
  %2268 = vmatpush1.bf16.msra.mxu0 %v2253
  %2269 = vmatprep.subr.bf16.mxu0 0
  %2270 = vmatpush1.bf16.msra.mxu0 0
  %2271 = vmatprep.subr.bf16.mxu0 0
  %2272 = vmatpush1.bf16.msra.mxu0 0
  %2273 = vmatprep.subr.bf16.mxu0 0
  %2274 = vmatpush1.bf16.msra.mxu0 0
  %2275 = vmatprep.subr.bf16.mxu0 0
  %2276 = vmatpush1.bf16.msra.mxu0 0
  %2277 = vmatprep.subr.bf16.mxu0 0
  %2278 = vmatpush1.bf16.msra.mxu0 0
  %2279 = vmatprep.subr.bf16.mxu0 0
  %2280 = vmatpush1.bf16.msra.mxu0 0
  %2281 = vmatprep.subr.bf16.mxu0 0
  %2282 = vmatpush1.bf16.msra.mxu0 0
  %2283 = vmatprep.subr.bf16.mxu0 0
  %2284 = vmatpush1.bf16.msra.mxu0 0
  %2285 = vmatprep.subr.bf16.mxu0 0
  %2286 = vmatpush1.bf16.msra.mxu0 0
  %2287 = vmatprep.subr.bf16.mxu0 0
  %2288 = vmatpush1.bf16.msra.mxu0 0
  %2289 = vmatprep.subr.bf16.mxu0 0
  %2290 = vmatpush1.bf16.msra.mxu0 0
  %2291 = vmatprep.subr.bf16.mxu0 0
  %2292 = vmatpush1.bf16.msra.mxu0 0
  %2293 = vmatprep.mubr.bf16.mxu0 0
  %2294 = vmatmul.mubr.bf16.gmra.mrb[0].mxu0 %v2259
  %v2295 = vpop.f32.mrb[0].mxu0
  %v2296 = vadd.f32 %v2232, %v2295
  %v2297 = vpop.f32.mrb[0].mxu0
  %v2298 = vpop.f32.mrb[0].mxu0
  %v2299 = vadd.f32 %v2232, %v2298
  %v2300 = vpop.f32.mrb[0].mxu0
  %2301 = vdwg.mxu0
  %s2302 = scalar_lea.vmem %s31, 1
  %v2303 = vld [vmem:[%s2302] sm:$0x1]
  %s2304 = scalar_lea.vmem %s33, 1
  %v2305 = vld [vmem:[%s2304] sm:$0x1]
  %v2306 = vadd.f32 %v2142, %v2296
  %v2307 = vadd.f32 %v2143, %v2299
  %v2308 = vsel %vm323, %v2306, 0.0
  %2309 = vadd.xlane.f32.xlu0 %v2308
  %v2310 = vpop.xlane.xlu0 %2309
  %v2311 = vsel %vm323, %v2307, 0.0
  %2312 = vadd.xlane.f32.xlu0 %v2311
  %v2313 = vpop.xlane.xlu0 %2312
  %v2314 = vmul.f32 %v2310, %v1083
  %v2315 = vmul.f32 %v2313, %v1083
  %v2316 = vsub.f32 %v2306, %v2314
  %v2317 = vsub.f32 %v2307, %v2315
  %v2318 = vmul.f32 %v2316, %v2316
  %v2319 = vmul.f32 %v2317, %v2317
  %v2320 = vsel %vm323, %v2318, 0.0
  %2321 = vadd.xlane.f32.xlu0 %v2320
  %v2322 = vpop.xlane.xlu0 %2321
  %v2323 = vsel %vm323, %v2319, 0.0
  %2324 = vadd.xlane.f32.xlu0 %v2323
  %v2325 = vpop.xlane.xlu0 %2324
  %v2326 = vmul.f32 %v2322, %v1083
  %v2327 = vmul.f32 %v2325, %v1083
  %v2328 = vadd.f32 %v2326, 1e-05
  %v2329 = vadd.f32 %v2327, 1e-05
  %v2330 = vrsqrt.pop %v2328
  %v2331 = vrsqrt.pop %v2329
  %v2332 = vmul.f32 %v2316, %v2330
  %v2333 = vmul.f32 %v2317, %v2331
  %v2335 = vlaneseq
  %v2336 = vshrl.u32 %v2335, 7
  %v2337 = vsub.s32 0, %v2336
  %v2338 = vrot.slane %v2303, %v2337
  %v2340 = vmul.f32 %v2332, %v2338
  %v2341 = vmul.f32 %v2333, %v2338
  %v2343 = vlaneseq
  %v2344 = vshrl.u32 %v2343, 7
  %v2345 = vsub.s32 0, %v2344
  %v2346 = vrot.slane %v2305, %v2345
  %v2348 = vadd.f32 %v2340, %v2346
  %v2349 = vadd.f32 %v2341, %v2346
  %s2350 = scalar_lea.vmem %s11, 32
  %v2351 = vld [vmem:[%s2350] sm:$0xf]
  %v2352 = vld [vmem:[%s2350 + $0x4] sm:$0xf]
  %v2353 = vld [vmem:[%s2350 + $0x8] sm:$0xf]
  %v2354 = vld [vmem:[%s2350 + $0xc] sm:$0xf]
  %v2355 = vpack.c.bf16 %v2349, %v2348
  %s2356 = scalar_lea.vmem %s13, 2
  %v2357 = vld [vmem:[%s2356] sm:$0x1]
  %v2359 = vlaneseq
  %v2360 = vshrl.u32 %v2359, 7
  %v2361 = vsub.s32 0, %v2360
  %v2362 = vrot.slane %v2357, %v2361
  %v2368 = vunpack.c.l.b16 %v2351
  %v2369 = vunpack.c.l.b16 %v2352
  %v2370 = vunpack.c.l.b16 %v2353
  %v2371 = vunpack.c.l.b16 %v2354
  %v2372 = vpack.c.b16 %v2369, %v2368
  %v2373 = vpack.c.b16 %v2371, %v2370
  %v2377 = vsel %vm323, %v2355, 0
  %2379 = vmatprep.subr.bf16.mxu0 0
  %2380 = vmatpush1.bf16.msra.mxu0 %v2372
  %2381 = vmatprep.subr.bf16.mxu0 0
  %2382 = vmatpush1.bf16.msra.mxu0 %v2373
  %2383 = vmatprep.subr.bf16.mxu0 0
  %2384 = vmatpush1.bf16.msra.mxu0 0
  %2385 = vmatprep.subr.bf16.mxu0 0
  %2386 = vmatpush1.bf16.msra.mxu0 0
  %2387 = vmatprep.subr.bf16.mxu0 0
  %2388 = vmatpush1.bf16.msra.mxu0 0
  %2389 = vmatprep.subr.bf16.mxu0 0
  %2390 = vmatpush1.bf16.msra.mxu0 0
  %2391 = vmatprep.subr.bf16.mxu0 0
  %2392 = vmatpush1.bf16.msra.mxu0 0
  %2393 = vmatprep.subr.bf16.mxu0 0
  %2394 = vmatpush1.bf16.msra.mxu0 0
  %2395 = vmatprep.subr.bf16.mxu0 0
  %2396 = vmatpush1.bf16.msra.mxu0 0
  %2397 = vmatprep.subr.bf16.mxu0 0
  %2398 = vmatpush1.bf16.msra.mxu0 0
  %2399 = vmatprep.subr.bf16.mxu0 0
  %2400 = vmatpush1.bf16.msra.mxu0 0
  %2401 = vmatprep.subr.bf16.mxu0 0
  %2402 = vmatpush1.bf16.msra.mxu0 0
  %2403 = vmatprep.subr.bf16.mxu0 0
  %2404 = vmatpush1.bf16.msra.mxu0 0
  %2405 = vmatprep.subr.bf16.mxu0 0
  %2406 = vmatpush1.bf16.msra.mxu0 0
  %2407 = vmatprep.subr.bf16.mxu0 0
  %2408 = vmatpush1.bf16.msra.mxu0 0
  %2409 = vmatprep.subr.bf16.mxu0 0
  %2410 = vmatpush1.bf16.msra.mxu0 0
  %2411 = vmatprep.mubr.bf16.mxu0 0
  %2412 = vmatmul.mubr.bf16.gmra.mrb[0].mxu0 %v2377
  %v2413 = vpop.f32.mrb[0].mxu0
  %v2414 = vadd.f32 %v2362, %v2413
  %v2415 = vpop.f32.mrb[0].mxu0
  %v2416 = vpop.f32.mrb[0].mxu0
  %v2417 = vadd.f32 %v2362, %v2416
  %v2418 = vpop.f32.mrb[0].mxu0
  %2419 = vdwg.mxu0
  %s2420 = scalar_lea.vmem %s15, 32
  %v2421 = vld [vmem:[%s2420] sm:$0xf]
  %v2422 = vld [vmem:[%s2420 + $0x4] sm:$0xf]
  %v2423 = vld [vmem:[%s2420 + $0x8] sm:$0xf]
  %v2424 = vld [vmem:[%s2420 + $0xc] sm:$0xf]
  %v2425 = vpack.c.bf16 %v2417, %v2414
  %2427 = vrot.lane.b32.xlu0 %v2425, 120
  %v2428 = vpop.permute.xlu0 %2427
  %2429 = vrot.lane.b32.xlu0 %v2425, 112
  %v2430 = vpop.permute.xlu0 %2429
  %2431 = vrot.lane.b32.xlu0 %v2425, 104
  %v2432 = vpop.permute.xlu0 %2431
  %2433 = vrot.lane.b32.xlu0 %v2425, 96
  %v2434 = vpop.permute.xlu0 %2433
  %v2436 = vsel %vm382, %v2425, 0
  %v2439 = vsel %vm382, %v2434, 0
  %2441 = vmatprep.subr.bf16.mxu0 0
  %2442 = vmatpush1.bf16.xpose.msra.mxu0 %v2439
  %2443 = vmatprep.subr.bf16.mxu0 0
  %2444 = vmatpush1.bf16.xpose.msra.mxu0 0
  %2445 = vmatprep.subr.bf16.mxu0 0
  %2446 = vmatpush1.bf16.xpose.msra.mxu0 0
  %2447 = vmatprep.subr.bf16.mxu0 0
  %2448 = vmatpush1.bf16.xpose.msra.mxu0 0
  %2449 = vmatprep.subr.bf16.mxu0 0
  %2450 = vmatpush1.bf16.xpose.msra.mxu0 0
  %2451 = vmatprep.subr.bf16.mxu0 0
  %2452 = vmatpush1.bf16.xpose.msra.mxu0 0
  %2453 = vmatprep.subr.bf16.mxu0 0
  %2454 = vmatpush1.bf16.xpose.msra.mxu0 0
  %2455 = vmatprep.subr.bf16.mxu0 0
  %2456 = vmatpush1.bf16.xpose.msra.mxu0 0
  %2457 = vmatprep.subr.bf16.mxu0 0
  %2458 = vmatpush1.bf16.xpose.msra.mxu0 0
  %2459 = vmatprep.subr.bf16.mxu0 0
  %2460 = vmatpush1.bf16.xpose.msra.mxu0 0
  %2461 = vmatprep.subr.bf16.mxu0 0
  %2462 = vmatpush1.bf16.xpose.msra.mxu0 0
  %2463 = vmatprep.subr.bf16.mxu0 0
  %2464 = vmatpush1.bf16.xpose.msra.mxu0 0
  %2465 = vmatprep.subr.bf16.mxu0 0
  %2466 = vmatpush1.bf16.xpose.msra.mxu0 0
  %2467 = vmatprep.subr.bf16.mxu0 0
  %2468 = vmatpush1.bf16.xpose.msra.mxu0 0
  %2469 = vmatprep.subr.bf16.mxu0 0
  %2470 = vmatpush1.bf16.xpose.msra.mxu0 0
  %2471 = vmatprep.subr.bf16.mxu0 0
  %2472 = vmatpush1.bf16.xpose.msra.mxu0 0
  %2473 = vmatprep.mubr.bf16.mxu0 0
  %2474 = vmatmul.mubr.bf16.gmra.mrb[0].mxu0 %v2436
  %v2475 = vpop.f32.mrb[0].mxu0
  %v2476 = vadd.f32 0.0, %v2475
  %v2477 = vpop.f32.mrb[0].mxu0
  %v2478 = vpop.f32.mrb[0].mxu0
  %v2479 = vadd.f32 0.0, %v2478
  %v2480 = vpop.f32.mrb[0].mxu0
  %2481 = vdwg.mxu0
  %2482 = vrot.lane.b32.xlu0 %v2428, 96
  %v2483 = vpop.permute.xlu0 %2482
  %v2485 = vsel %vm382, %v2428, 0
  %v2488 = vsel %vm382, %v2483, 0
  %2490 = vmatprep.subr.bf16.mxu0 0
  %2491 = vmatpush1.bf16.xpose.msra.mxu0 %v2488
  %2492 = vmatprep.subr.bf16.mxu0 0
  %2493 = vmatpush1.bf16.xpose.msra.mxu0 0
  %2494 = vmatprep.subr.bf16.mxu0 0
  %2495 = vmatpush1.bf16.xpose.msra.mxu0 0
  %2496 = vmatprep.subr.bf16.mxu0 0
  %2497 = vmatpush1.bf16.xpose.msra.mxu0 0
  %2498 = vmatprep.subr.bf16.mxu0 0
  %2499 = vmatpush1.bf16.xpose.msra.mxu0 0
  %2500 = vmatprep.subr.bf16.mxu0 0
  %2501 = vmatpush1.bf16.xpose.msra.mxu0 0
  %2502 = vmatprep.subr.bf16.mxu0 0
  %2503 = vmatpush1.bf16.xpose.msra.mxu0 0
  %2504 = vmatprep.subr.bf16.mxu0 0
  %2505 = vmatpush1.bf16.xpose.msra.mxu0 0
  %2506 = vmatprep.subr.bf16.mxu0 0
  %2507 = vmatpush1.bf16.xpose.msra.mxu0 0
  %2508 = vmatprep.subr.bf16.mxu0 0
  %2509 = vmatpush1.bf16.xpose.msra.mxu0 0
  %2510 = vmatprep.subr.bf16.mxu0 0
  %2511 = vmatpush1.bf16.xpose.msra.mxu0 0
  %2512 = vmatprep.subr.bf16.mxu0 0
  %2513 = vmatpush1.bf16.xpose.msra.mxu0 0
  %2514 = vmatprep.subr.bf16.mxu0 0
  %2515 = vmatpush1.bf16.xpose.msra.mxu0 0
  %2516 = vmatprep.subr.bf16.mxu0 0
  %2517 = vmatpush1.bf16.xpose.msra.mxu0 0
  %2518 = vmatprep.subr.bf16.mxu0 0
  %2519 = vmatpush1.bf16.xpose.msra.mxu0 0
  %2520 = vmatprep.subr.bf16.mxu0 0
  %2521 = vmatpush1.bf16.xpose.msra.mxu0 0
  %2522 = vmatprep.mubr.bf16.mxu0 0
  %2523 = vmatmul.mubr.bf16.gmra.mrb[0].mxu0 %v2485
  %v2524 = vpop.f32.mrb[0].mxu0
  %v2525 = vadd.f32 0.0, %v2524
  %v2526 = vpop.f32.mrb[0].mxu0
  %v2527 = vpop.f32.mrb[0].mxu0
  %v2528 = vadd.f32 0.0, %v2527
  %v2529 = vpop.f32.mrb[0].mxu0
  %2530 = vdwg.mxu0
  %2531 = vrot.lane.b32.xlu0 %v2430, 96
  %v2532 = vpop.permute.xlu0 %2531
  %v2534 = vsel %vm382, %v2430, 0
  %v2537 = vsel %vm382, %v2532, 0
  %2539 = vmatprep.subr.bf16.mxu0 0
  %2540 = vmatpush1.bf16.xpose.msra.mxu0 %v2537
  %2541 = vmatprep.subr.bf16.mxu0 0
  %2542 = vmatpush1.bf16.xpose.msra.mxu0 0
  %2543 = vmatprep.subr.bf16.mxu0 0
  %2544 = vmatpush1.bf16.xpose.msra.mxu0 0
  %2545 = vmatprep.subr.bf16.mxu0 0
  %2546 = vmatpush1.bf16.xpose.msra.mxu0 0
  %2547 = vmatprep.subr.bf16.mxu0 0
  %2548 = vmatpush1.bf16.xpose.msra.mxu0 0
  %2549 = vmatprep.subr.bf16.mxu0 0
  %2550 = vmatpush1.bf16.xpose.msra.mxu0 0
  %2551 = vmatprep.subr.bf16.mxu0 0
  %2552 = vmatpush1.bf16.xpose.msra.mxu0 0
  %2553 = vmatprep.subr.bf16.mxu0 0
  %2554 = vmatpush1.bf16.xpose.msra.mxu0 0
  %2555 = vmatprep.subr.bf16.mxu0 0
  %2556 = vmatpush1.bf16.xpose.msra.mxu0 0
  %2557 = vmatprep.subr.bf16.mxu0 0
  %2558 = vmatpush1.bf16.xpose.msra.mxu0 0
  %2559 = vmatprep.subr.bf16.mxu0 0
  %2560 = vmatpush1.bf16.xpose.msra.mxu0 0
  %2561 = vmatprep.subr.bf16.mxu0 0
  %2562 = vmatpush1.bf16.xpose.msra.mxu0 0
  %2563 = vmatprep.subr.bf16.mxu0 0
  %2564 = vmatpush1.bf16.xpose.msra.mxu0 0
  %2565 = vmatprep.subr.bf16.mxu0 0
  %2566 = vmatpush1.bf16.xpose.msra.mxu0 0
  %2567 = vmatprep.subr.bf16.mxu0 0
  %2568 = vmatpush1.bf16.xpose.msra.mxu0 0
  %2569 = vmatprep.subr.bf16.mxu0 0
  %2570 = vmatpush1.bf16.xpose.msra.mxu0 0
  %2571 = vmatprep.mubr.bf16.mxu0 0
  %2572 = vmatmul.mubr.bf16.gmra.mrb[0].mxu0 %v2534
  %v2573 = vpop.f32.mrb[0].mxu0
  %v2574 = vadd.f32 0.0, %v2573
  %v2575 = vpop.f32.mrb[0].mxu0
  %v2576 = vpop.f32.mrb[0].mxu0
  %v2577 = vadd.f32 0.0, %v2576
  %v2578 = vpop.f32.mrb[0].mxu0
  %2579 = vdwg.mxu0
  %2580 = vrot.lane.b32.xlu0 %v2432, 96
  %v2581 = vpop.permute.xlu0 %2580
  %v2583 = vsel %vm382, %v2432, 0
  %v2586 = vsel %vm382, %v2581, 0
  %2588 = vmatprep.subr.bf16.mxu0 0
  %2589 = vmatpush1.bf16.xpose.msra.mxu0 %v2586
  %2590 = vmatprep.subr.bf16.mxu0 0
  %2591 = vmatpush1.bf16.xpose.msra.mxu0 0
  %2592 = vmatprep.subr.bf16.mxu0 0
  %2593 = vmatpush1.bf16.xpose.msra.mxu0 0
  %2594 = vmatprep.subr.bf16.mxu0 0
  %2595 = vmatpush1.bf16.xpose.msra.mxu0 0
  %2596 = vmatprep.subr.bf16.mxu0 0
  %2597 = vmatpush1.bf16.xpose.msra.mxu0 0
  %2598 = vmatprep.subr.bf16.mxu0 0
  %2599 = vmatpush1.bf16.xpose.msra.mxu0 0
  %2600 = vmatprep.subr.bf16.mxu0 0
  %2601 = vmatpush1.bf16.xpose.msra.mxu0 0
  %2602 = vmatprep.subr.bf16.mxu0 0
  %2603 = vmatpush1.bf16.xpose.msra.mxu0 0
  %2604 = vmatprep.subr.bf16.mxu0 0
  %2605 = vmatpush1.bf16.xpose.msra.mxu0 0
  %2606 = vmatprep.subr.bf16.mxu0 0
  %2607 = vmatpush1.bf16.xpose.msra.mxu0 0
  %2608 = vmatprep.subr.bf16.mxu0 0
  %2609 = vmatpush1.bf16.xpose.msra.mxu0 0
  %2610 = vmatprep.subr.bf16.mxu0 0
  %2611 = vmatpush1.bf16.xpose.msra.mxu0 0
  %2612 = vmatprep.subr.bf16.mxu0 0
  %2613 = vmatpush1.bf16.xpose.msra.mxu0 0
  %2614 = vmatprep.subr.bf16.mxu0 0
  %2615 = vmatpush1.bf16.xpose.msra.mxu0 0
  %2616 = vmatprep.subr.bf16.mxu0 0
  %2617 = vmatpush1.bf16.xpose.msra.mxu0 0
  %2618 = vmatprep.subr.bf16.mxu0 0
  %2619 = vmatpush1.bf16.xpose.msra.mxu0 0
  %2620 = vmatprep.mubr.bf16.mxu0 0
  %2621 = vmatmul.mubr.bf16.gmra.mrb[0].mxu0 %v2583
  %v2622 = vpop.f32.mrb[0].mxu0
  %v2623 = vadd.f32 0.0, %v2622
  %v2624 = vpop.f32.mrb[0].mxu0
  %v2625 = vpop.f32.mrb[0].mxu0
  %v2626 = vadd.f32 0.0, %v2625
  %v2627 = vpop.f32.mrb[0].mxu0
  %2628 = vdwg.mxu0
  %v2629 = vsel %vm248, %v2476, -inf
  %2630 = vmax.xlane.f32.xlu0 %v2629
  %v2631 = vpop.xlane.xlu0 %2630
  %v2632 = vsel %vm248, %v2479, -inf
  %2633 = vmax.xlane.f32.xlu0 %v2632
  %v2634 = vpop.xlane.xlu0 %2633
  %v2635 = vsel %vm248, %v2525, -inf
  %2636 = vmax.xlane.f32.xlu0 %v2635
  %v2637 = vpop.xlane.xlu0 %2636
  %v2638 = vsel %vm248, %v2528, -inf
  %2639 = vmax.xlane.f32.xlu0 %v2638
  %v2640 = vpop.xlane.xlu0 %2639
  %v2641 = vsel %vm248, %v2574, -inf
  %2642 = vmax.xlane.f32.xlu0 %v2641
  %v2643 = vpop.xlane.xlu0 %2642
  %v2644 = vsel %vm248, %v2577, -inf
  %2645 = vmax.xlane.f32.xlu0 %v2644
  %v2646 = vpop.xlane.xlu0 %2645
  %v2647 = vsel %vm248, %v2623, -inf
  %2648 = vmax.xlane.f32.xlu0 %v2647
  %v2649 = vpop.xlane.xlu0 %2648
  %v2650 = vsel %vm248, %v2626, -inf
  %2651 = vmax.xlane.f32.xlu0 %v2650
  %v2652 = vpop.xlane.xlu0 %2651
  %v2653 = vsub.f32 %v2476, %v2631
  %v2654 = vsub.f32 %v2479, %v2634
  %v2655 = vsub.f32 %v2525, %v2637
  %v2656 = vsub.f32 %v2528, %v2640
  %v2657 = vsub.f32 %v2574, %v2643
  %v2658 = vsub.f32 %v2577, %v2646
  %v2659 = vsub.f32 %v2623, %v2649
  %v2660 = vsub.f32 %v2626, %v2652
  %v2661 = vmul.f32 %v2653, 1.442695
  %v2662 = vpow.pop %v2661
  %v2663 = vmul.f32 %v2654, 1.442695
  %v2664 = vpow.pop %v2663
  %v2665 = vmul.f32 %v2655, 1.442695
  %v2666 = vpow.pop %v2665
  %v2667 = vmul.f32 %v2656, 1.442695
  %v2668 = vpow.pop %v2667
  %v2669 = vmul.f32 %v2657, 1.442695
  %v2670 = vpow.pop %v2669
  %v2671 = vmul.f32 %v2658, 1.442695
  %v2672 = vpow.pop %v2671
  %v2673 = vmul.f32 %v2659, 1.442695
  %v2674 = vpow.pop %v2673
  %v2675 = vmul.f32 %v2660, 1.442695
  %v2676 = vpow.pop %v2675
  %v2677 = vsel %vm248, %v2662, 0.0
  %2678 = vadd.xlane.f32.xlu0 %v2677
  %v2679 = vpop.xlane.xlu0 %2678
  %v2680 = vsel %vm248, %v2664, 0.0
  %2681 = vadd.xlane.f32.xlu0 %v2680
  %v2682 = vpop.xlane.xlu0 %2681
  %v2683 = vsel %vm248, %v2666, 0.0
  %2684 = vadd.xlane.f32.xlu0 %v2683
  %v2685 = vpop.xlane.xlu0 %2684
  %v2686 = vsel %vm248, %v2668, 0.0
  %2687 = vadd.xlane.f32.xlu0 %v2686
  %v2688 = vpop.xlane.xlu0 %2687
  %v2689 = vsel %vm248, %v2670, 0.0
  %2690 = vadd.xlane.f32.xlu0 %v2689
  %v2691 = vpop.xlane.xlu0 %2690
  %v2692 = vsel %vm248, %v2672, 0.0
  %2693 = vadd.xlane.f32.xlu0 %v2692
  %v2694 = vpop.xlane.xlu0 %2693
  %v2695 = vsel %vm248, %v2674, 0.0
  %2696 = vadd.xlane.f32.xlu0 %v2695
  %v2697 = vpop.xlane.xlu0 %2696
  %v2698 = vsel %vm248, %v2676, 0.0
  %2699 = vadd.xlane.f32.xlu0 %v2698
  %v2700 = vpop.xlane.xlu0 %2699
  %v2701 = vrcp.pop %v2679
  %v2702 = vrcp.pop %v2682
  %v2703 = vrcp.pop %v2685
  %v2704 = vrcp.pop %v2688
  %v2705 = vrcp.pop %v2691
  %v2706 = vrcp.pop %v2694
  %v2707 = vrcp.pop %v2697
  %v2708 = vrcp.pop %v2700
  %v2709 = vmul.f32 %v2662, %v2701
  %v2710 = vmul.f32 %v2664, %v2702
  %v2711 = vmul.f32 %v2666, %v2703
  %v2712 = vmul.f32 %v2668, %v2704
  %v2713 = vmul.f32 %v2670, %v2705
  %v2714 = vmul.f32 %v2672, %v2706
  %v2715 = vmul.f32 %v2674, %v2707
  %v2716 = vmul.f32 %v2676, %v2708
  %v2717 = vpack.c.bf16 %v2710, %v2709
  %v2718 = vpack.c.bf16 %v2712, %v2711
  %v2719 = vpack.c.bf16 %v2714, %v2713
  %v2720 = vpack.c.bf16 %v2716, %v2715
  %2721 = vrot.lane.b32.xlu0 %v2425, 64
  %v2722 = vpop.permute.xlu0 %2721
  %v2725 = vsel %vm248, %v2717, 0
  %2727 = vmatprep.subr.bf16.mxu0 0
  %2728 = vmatpush1.bf16.msra.mxu0 %v2722
  %2729 = vmatprep.subr.bf16.mxu0 0
  %2730 = vmatpush1.bf16.msra.mxu0 0
  %2731 = vmatprep.subr.bf16.mxu0 0
  %2732 = vmatpush1.bf16.msra.mxu0 0
  %2733 = vmatprep.subr.bf16.mxu0 0
  %2734 = vmatpush1.bf16.msra.mxu0 0
  %2735 = vmatprep.subr.bf16.mxu0 0
  %2736 = vmatpush1.bf16.msra.mxu0 0
  %2737 = vmatprep.subr.bf16.mxu0 0
  %2738 = vmatpush1.bf16.msra.mxu0 0
  %2739 = vmatprep.subr.bf16.mxu0 0
  %2740 = vmatpush1.bf16.msra.mxu0 0
  %2741 = vmatprep.subr.bf16.mxu0 0
  %2742 = vmatpush1.bf16.msra.mxu0 0
  %2743 = vmatprep.subr.bf16.mxu0 0
  %2744 = vmatpush1.bf16.msra.mxu0 0
  %2745 = vmatprep.subr.bf16.mxu0 0
  %2746 = vmatpush1.bf16.msra.mxu0 0
  %2747 = vmatprep.subr.bf16.mxu0 0
  %2748 = vmatpush1.bf16.msra.mxu0 0
  %2749 = vmatprep.subr.bf16.mxu0 0
  %2750 = vmatpush1.bf16.msra.mxu0 0
  %2751 = vmatprep.subr.bf16.mxu0 0
  %2752 = vmatpush1.bf16.msra.mxu0 0
  %2753 = vmatprep.subr.bf16.mxu0 0
  %2754 = vmatpush1.bf16.msra.mxu0 0
  %2755 = vmatprep.subr.bf16.mxu0 0
  %2756 = vmatpush1.bf16.msra.mxu0 0
  %2757 = vmatprep.subr.bf16.mxu0 0
  %2758 = vmatpush1.bf16.msra.mxu0 0
  %2759 = vmatprep.mubr.bf16.mxu0 0
  %2760 = vmatmul.mubr.bf16.gmra.mrb[0].mxu0 %v2725
  %v2761 = vpop.f32.mrb[0].mxu0
  %v2762 = vadd.f32 0.0, %v2761
  %v2763 = vpop.f32.mrb[0].mxu0
  %v2764 = vpop.f32.mrb[0].mxu0
  %v2765 = vadd.f32 0.0, %v2764
  %v2766 = vpop.f32.mrb[0].mxu0
  %2767 = vdwg.mxu0
  %2768 = vrot.lane.b32.xlu0 %v2428, 64
  %v2769 = vpop.permute.xlu0 %2768
  %v2772 = vsel %vm248, %v2718, 0
  %2774 = vmatprep.subr.bf16.mxu0 0
  %2775 = vmatpush1.bf16.msra.mxu0 %v2769
  %2776 = vmatprep.subr.bf16.mxu0 0
  %2777 = vmatpush1.bf16.msra.mxu0 0
  %2778 = vmatprep.subr.bf16.mxu0 0
  %2779 = vmatpush1.bf16.msra.mxu0 0
  %2780 = vmatprep.subr.bf16.mxu0 0
  %2781 = vmatpush1.bf16.msra.mxu0 0
  %2782 = vmatprep.subr.bf16.mxu0 0
  %2783 = vmatpush1.bf16.msra.mxu0 0
  %2784 = vmatprep.subr.bf16.mxu0 0
  %2785 = vmatpush1.bf16.msra.mxu0 0
  %2786 = vmatprep.subr.bf16.mxu0 0
  %2787 = vmatpush1.bf16.msra.mxu0 0
  %2788 = vmatprep.subr.bf16.mxu0 0
  %2789 = vmatpush1.bf16.msra.mxu0 0
  %2790 = vmatprep.subr.bf16.mxu0 0
  %2791 = vmatpush1.bf16.msra.mxu0 0
  %2792 = vmatprep.subr.bf16.mxu0 0
  %2793 = vmatpush1.bf16.msra.mxu0 0
  %2794 = vmatprep.subr.bf16.mxu0 0
  %2795 = vmatpush1.bf16.msra.mxu0 0
  %2796 = vmatprep.subr.bf16.mxu0 0
  %2797 = vmatpush1.bf16.msra.mxu0 0
  %2798 = vmatprep.subr.bf16.mxu0 0
  %2799 = vmatpush1.bf16.msra.mxu0 0
  %2800 = vmatprep.subr.bf16.mxu0 0
  %2801 = vmatpush1.bf16.msra.mxu0 0
  %2802 = vmatprep.subr.bf16.mxu0 0
  %2803 = vmatpush1.bf16.msra.mxu0 0
  %2804 = vmatprep.subr.bf16.mxu0 0
  %2805 = vmatpush1.bf16.msra.mxu0 0
  %2806 = vmatprep.mubr.bf16.mxu0 0
  %2807 = vmatmul.mubr.bf16.gmra.mrb[0].mxu0 %v2772
  %v2808 = vpop.f32.mrb[0].mxu0
  %v2809 = vadd.f32 0.0, %v2808
  %v2810 = vpop.f32.mrb[0].mxu0
  %v2811 = vpop.f32.mrb[0].mxu0
  %v2812 = vadd.f32 0.0, %v2811
  %v2813 = vpop.f32.mrb[0].mxu0
  %2814 = vdwg.mxu0
  %2815 = vrot.lane.b32.xlu0 %v2430, 64
  %v2816 = vpop.permute.xlu0 %2815
  %v2819 = vsel %vm248, %v2719, 0
  %2821 = vmatprep.subr.bf16.mxu0 0
  %2822 = vmatpush1.bf16.msra.mxu0 %v2816
  %2823 = vmatprep.subr.bf16.mxu0 0
  %2824 = vmatpush1.bf16.msra.mxu0 0
  %2825 = vmatprep.subr.bf16.mxu0 0
  %2826 = vmatpush1.bf16.msra.mxu0 0
  %2827 = vmatprep.subr.bf16.mxu0 0
  %2828 = vmatpush1.bf16.msra.mxu0 0
  %2829 = vmatprep.subr.bf16.mxu0 0
  %2830 = vmatpush1.bf16.msra.mxu0 0
  %2831 = vmatprep.subr.bf16.mxu0 0
  %2832 = vmatpush1.bf16.msra.mxu0 0
  %2833 = vmatprep.subr.bf16.mxu0 0
  %2834 = vmatpush1.bf16.msra.mxu0 0
  %2835 = vmatprep.subr.bf16.mxu0 0
  %2836 = vmatpush1.bf16.msra.mxu0 0
  %2837 = vmatprep.subr.bf16.mxu0 0
  %2838 = vmatpush1.bf16.msra.mxu0 0
  %2839 = vmatprep.subr.bf16.mxu0 0
  %2840 = vmatpush1.bf16.msra.mxu0 0
  %2841 = vmatprep.subr.bf16.mxu0 0
  %2842 = vmatpush1.bf16.msra.mxu0 0
  %2843 = vmatprep.subr.bf16.mxu0 0
  %2844 = vmatpush1.bf16.msra.mxu0 0
  %2845 = vmatprep.subr.bf16.mxu0 0
  %2846 = vmatpush1.bf16.msra.mxu0 0
  %2847 = vmatprep.subr.bf16.mxu0 0
  %2848 = vmatpush1.bf16.msra.mxu0 0
  %2849 = vmatprep.subr.bf16.mxu0 0
  %2850 = vmatpush1.bf16.msra.mxu0 0
  %2851 = vmatprep.subr.bf16.mxu0 0
  %2852 = vmatpush1.bf16.msra.mxu0 0
  %2853 = vmatprep.mubr.bf16.mxu0 0
  %2854 = vmatmul.mubr.bf16.gmra.mrb[0].mxu0 %v2819
  %v2855 = vpop.f32.mrb[0].mxu0
  %v2856 = vadd.f32 0.0, %v2855
  %v2857 = vpop.f32.mrb[0].mxu0
  %v2858 = vpop.f32.mrb[0].mxu0
  %v2859 = vadd.f32 0.0, %v2858
  %v2860 = vpop.f32.mrb[0].mxu0
  %2861 = vdwg.mxu0
  %2862 = vrot.lane.b32.xlu0 %v2432, 64
  %v2863 = vpop.permute.xlu0 %2862
  %v2866 = vsel %vm248, %v2720, 0
  %2868 = vmatprep.subr.bf16.mxu0 0
  %2869 = vmatpush1.bf16.msra.mxu0 %v2863
  %2870 = vmatprep.subr.bf16.mxu0 0
  %2871 = vmatpush1.bf16.msra.mxu0 0
  %2872 = vmatprep.subr.bf16.mxu0 0
  %2873 = vmatpush1.bf16.msra.mxu0 0
  %2874 = vmatprep.subr.bf16.mxu0 0
  %2875 = vmatpush1.bf16.msra.mxu0 0
  %2876 = vmatprep.subr.bf16.mxu0 0
  %2877 = vmatpush1.bf16.msra.mxu0 0
  %2878 = vmatprep.subr.bf16.mxu0 0
  %2879 = vmatpush1.bf16.msra.mxu0 0
  %2880 = vmatprep.subr.bf16.mxu0 0
  %2881 = vmatpush1.bf16.msra.mxu0 0
  %2882 = vmatprep.subr.bf16.mxu0 0
  %2883 = vmatpush1.bf16.msra.mxu0 0
  %2884 = vmatprep.subr.bf16.mxu0 0
  %2885 = vmatpush1.bf16.msra.mxu0 0
  %2886 = vmatprep.subr.bf16.mxu0 0
  %2887 = vmatpush1.bf16.msra.mxu0 0
  %2888 = vmatprep.subr.bf16.mxu0 0
  %2889 = vmatpush1.bf16.msra.mxu0 0
  %2890 = vmatprep.subr.bf16.mxu0 0
  %2891 = vmatpush1.bf16.msra.mxu0 0
  %2892 = vmatprep.subr.bf16.mxu0 0
  %2893 = vmatpush1.bf16.msra.mxu0 0
  %2894 = vmatprep.subr.bf16.mxu0 0
  %2895 = vmatpush1.bf16.msra.mxu0 0
  %2896 = vmatprep.subr.bf16.mxu0 0
  %2897 = vmatpush1.bf16.msra.mxu0 0
  %2898 = vmatprep.subr.bf16.mxu0 0
  %2899 = vmatpush1.bf16.msra.mxu0 0
  %2900 = vmatprep.mubr.bf16.mxu0 0
  %2901 = vmatmul.mubr.bf16.gmra.mrb[0].mxu0 %v2866
  %v2902 = vpop.f32.mrb[0].mxu0
  %v2903 = vadd.f32 0.0, %v2902
  %v2904 = vpop.f32.mrb[0].mxu0
  %v2905 = vpop.f32.mrb[0].mxu0
  %v2906 = vadd.f32 0.0, %v2905
  %v2907 = vpop.f32.mrb[0].mxu0
  %2908 = vdwg.mxu0
  %v2909 = vpack.c.bf16 %v2765, %v2762
  %v2910 = vpack.c.bf16 %v2812, %v2809
  %v2911 = vpack.c.bf16 %v2859, %v2856
  %v2912 = vpack.c.bf16 %v2906, %v2903
  %v2914 = vsel %vm382, %v2909, 0
  %v2917 = vsel %vm864, %v2421, 0
  %2919 = vmatprep.subr.bf16.mxu0 0
  %2920 = vmatpush1.bf16.msra.mxu0 %v2917
  %2921 = vmatprep.subr.bf16.mxu0 0
  %2922 = vmatpush1.bf16.msra.mxu0 0
  %2923 = vmatprep.subr.bf16.mxu0 0
  %2924 = vmatpush1.bf16.msra.mxu0 0
  %2925 = vmatprep.subr.bf16.mxu0 0
  %2926 = vmatpush1.bf16.msra.mxu0 0
  %2927 = vmatprep.subr.bf16.mxu0 0
  %2928 = vmatpush1.bf16.msra.mxu0 0
  %2929 = vmatprep.subr.bf16.mxu0 0
  %2930 = vmatpush1.bf16.msra.mxu0 0
  %2931 = vmatprep.subr.bf16.mxu0 0
  %2932 = vmatpush1.bf16.msra.mxu0 0
  %2933 = vmatprep.subr.bf16.mxu0 0
  %2934 = vmatpush1.bf16.msra.mxu0 0
  %2935 = vmatprep.subr.bf16.mxu0 0
  %2936 = vmatpush1.bf16.msra.mxu0 0
  %2937 = vmatprep.subr.bf16.mxu0 0
  %2938 = vmatpush1.bf16.msra.mxu0 0
  %2939 = vmatprep.subr.bf16.mxu0 0
  %2940 = vmatpush1.bf16.msra.mxu0 0
  %2941 = vmatprep.subr.bf16.mxu0 0
  %2942 = vmatpush1.bf16.msra.mxu0 0
  %2943 = vmatprep.subr.bf16.mxu0 0
  %2944 = vmatpush1.bf16.msra.mxu0 0
  %2945 = vmatprep.subr.bf16.mxu0 0
  %2946 = vmatpush1.bf16.msra.mxu0 0
  %2947 = vmatprep.subr.bf16.mxu0 0
  %2948 = vmatpush1.bf16.msra.mxu0 0
  %2949 = vmatprep.subr.bf16.mxu0 0
  %2950 = vmatpush1.bf16.msra.mxu0 0
  %2951 = vmatprep.mubr.bf16.mxu0 0
  %2952 = vmatmul.mubr.bf16.gmra.mrb[0].mxu0 %v2914
  %v2953 = vpop.f32.mrb[0].mxu0
  %v2954 = vadd.f32 0.0, %v2953
  %v2955 = vpop.f32.mrb[0].mxu0
  %v2956 = vpop.f32.mrb[0].mxu0
  %v2957 = vadd.f32 0.0, %v2956
  %v2958 = vpop.f32.mrb[0].mxu0
  %2959 = vdwg.mxu0
  %v2961 = vsel %vm382, %v2910, 0
  %v2964 = vsel %vm864, %v2422, 0
  %2966 = vmatprep.subr.bf16.mxu0 0
  %2967 = vmatpush1.bf16.msra.mxu0 %v2964
  %2968 = vmatprep.subr.bf16.mxu0 0
  %2969 = vmatpush1.bf16.msra.mxu0 0
  %2970 = vmatprep.subr.bf16.mxu0 0
  %2971 = vmatpush1.bf16.msra.mxu0 0
  %2972 = vmatprep.subr.bf16.mxu0 0
  %2973 = vmatpush1.bf16.msra.mxu0 0
  %2974 = vmatprep.subr.bf16.mxu0 0
  %2975 = vmatpush1.bf16.msra.mxu0 0
  %2976 = vmatprep.subr.bf16.mxu0 0
  %2977 = vmatpush1.bf16.msra.mxu0 0
  %2978 = vmatprep.subr.bf16.mxu0 0
  %2979 = vmatpush1.bf16.msra.mxu0 0
  %2980 = vmatprep.subr.bf16.mxu0 0
  %2981 = vmatpush1.bf16.msra.mxu0 0
  %2982 = vmatprep.subr.bf16.mxu0 0
  %2983 = vmatpush1.bf16.msra.mxu0 0
  %2984 = vmatprep.subr.bf16.mxu0 0
  %2985 = vmatpush1.bf16.msra.mxu0 0
  %2986 = vmatprep.subr.bf16.mxu0 0
  %2987 = vmatpush1.bf16.msra.mxu0 0
  %2988 = vmatprep.subr.bf16.mxu0 0
  %2989 = vmatpush1.bf16.msra.mxu0 0
  %2990 = vmatprep.subr.bf16.mxu0 0
  %2991 = vmatpush1.bf16.msra.mxu0 0
  %2992 = vmatprep.subr.bf16.mxu0 0
  %2993 = vmatpush1.bf16.msra.mxu0 0
  %2994 = vmatprep.subr.bf16.mxu0 0
  %2995 = vmatpush1.bf16.msra.mxu0 0
  %2996 = vmatprep.subr.bf16.mxu0 0
  %2997 = vmatpush1.bf16.msra.mxu0 0
  %2998 = vmatprep.mubr.bf16.mxu0 0
  %2999 = vmatmul.mubr.bf16.gmra.mrb[0].mxu0 %v2961
  %v3000 = vpop.f32.mrb[0].mxu0
  %v3001 = vadd.f32 0.0, %v3000
  %v3002 = vpop.f32.mrb[0].mxu0
  %v3003 = vpop.f32.mrb[0].mxu0
  %v3004 = vadd.f32 0.0, %v3003
  %v3005 = vpop.f32.mrb[0].mxu0
  %3006 = vdwg.mxu0
  %v3008 = vsel %vm382, %v2911, 0
  %v3011 = vsel %vm864, %v2423, 0
  %3013 = vmatprep.subr.bf16.mxu0 0
  %3014 = vmatpush1.bf16.msra.mxu0 %v3011
  %3015 = vmatprep.subr.bf16.mxu0 0
  %3016 = vmatpush1.bf16.msra.mxu0 0
  %3017 = vmatprep.subr.bf16.mxu0 0
  %3018 = vmatpush1.bf16.msra.mxu0 0
  %3019 = vmatprep.subr.bf16.mxu0 0
  %3020 = vmatpush1.bf16.msra.mxu0 0
  %3021 = vmatprep.subr.bf16.mxu0 0
  %3022 = vmatpush1.bf16.msra.mxu0 0
  %3023 = vmatprep.subr.bf16.mxu0 0
  %3024 = vmatpush1.bf16.msra.mxu0 0
  %3025 = vmatprep.subr.bf16.mxu0 0
  %3026 = vmatpush1.bf16.msra.mxu0 0
  %3027 = vmatprep.subr.bf16.mxu0 0
  %3028 = vmatpush1.bf16.msra.mxu0 0
  %3029 = vmatprep.subr.bf16.mxu0 0
  %3030 = vmatpush1.bf16.msra.mxu0 0
  %3031 = vmatprep.subr.bf16.mxu0 0
  %3032 = vmatpush1.bf16.msra.mxu0 0
  %3033 = vmatprep.subr.bf16.mxu0 0
  %3034 = vmatpush1.bf16.msra.mxu0 0
  %3035 = vmatprep.subr.bf16.mxu0 0
  %3036 = vmatpush1.bf16.msra.mxu0 0
  %3037 = vmatprep.subr.bf16.mxu0 0
  %3038 = vmatpush1.bf16.msra.mxu0 0
  %3039 = vmatprep.subr.bf16.mxu0 0
  %3040 = vmatpush1.bf16.msra.mxu0 0
  %3041 = vmatprep.subr.bf16.mxu0 0
  %3042 = vmatpush1.bf16.msra.mxu0 0
  %3043 = vmatprep.subr.bf16.mxu0 0
  %3044 = vmatpush1.bf16.msra.mxu0 0
  %3045 = vmatprep.mubr.bf16.mxu0 0
  %3046 = vmatmul.mubr.bf16.gmra.mrb[0].mxu0 %v3008
  %v3047 = vpop.f32.mrb[0].mxu0
  %v3048 = vadd.f32 0.0, %v3047
  %v3049 = vpop.f32.mrb[0].mxu0
  %v3050 = vpop.f32.mrb[0].mxu0
  %v3051 = vadd.f32 0.0, %v3050
  %v3052 = vpop.f32.mrb[0].mxu0
  %3053 = vdwg.mxu0
  %v3055 = vsel %vm382, %v2912, 0
  %v3058 = vsel %vm864, %v2424, 0
  %3060 = vmatprep.subr.bf16.mxu0 0
  %3061 = vmatpush1.bf16.msra.mxu0 %v3058
  %3062 = vmatprep.subr.bf16.mxu0 0
  %3063 = vmatpush1.bf16.msra.mxu0 0
  %3064 = vmatprep.subr.bf16.mxu0 0
  %3065 = vmatpush1.bf16.msra.mxu0 0
  %3066 = vmatprep.subr.bf16.mxu0 0
  %3067 = vmatpush1.bf16.msra.mxu0 0
  %3068 = vmatprep.subr.bf16.mxu0 0
  %3069 = vmatpush1.bf16.msra.mxu0 0
  %3070 = vmatprep.subr.bf16.mxu0 0
  %3071 = vmatpush1.bf16.msra.mxu0 0
  %3072 = vmatprep.subr.bf16.mxu0 0
  %3073 = vmatpush1.bf16.msra.mxu0 0
  %3074 = vmatprep.subr.bf16.mxu0 0
  %3075 = vmatpush1.bf16.msra.mxu0 0
  %3076 = vmatprep.subr.bf16.mxu0 0
  %3077 = vmatpush1.bf16.msra.mxu0 0
  %3078 = vmatprep.subr.bf16.mxu0 0
  %3079 = vmatpush1.bf16.msra.mxu0 0
  %3080 = vmatprep.subr.bf16.mxu0 0
  %3081 = vmatpush1.bf16.msra.mxu0 0
  %3082 = vmatprep.subr.bf16.mxu0 0
  %3083 = vmatpush1.bf16.msra.mxu0 0
  %3084 = vmatprep.subr.bf16.mxu0 0
  %3085 = vmatpush1.bf16.msra.mxu0 0
  %3086 = vmatprep.subr.bf16.mxu0 0
  %3087 = vmatpush1.bf16.msra.mxu0 0
  %3088 = vmatprep.subr.bf16.mxu0 0
  %3089 = vmatpush1.bf16.msra.mxu0 0
  %3090 = vmatprep.subr.bf16.mxu0 0
  %3091 = vmatpush1.bf16.msra.mxu0 0
  %3092 = vmatprep.mubr.bf16.mxu0 0
  %3093 = vmatmul.mubr.bf16.gmra.mrb[0].mxu0 %v3055
  %v3094 = vpop.f32.mrb[0].mxu0
  %v3095 = vadd.f32 0.0, %v3094
  %v3096 = vpop.f32.mrb[0].mxu0
  %v3097 = vpop.f32.mrb[0].mxu0
  %v3098 = vadd.f32 0.0, %v3097
  %v3099 = vpop.f32.mrb[0].mxu0
  %3100 = vdwg.mxu0
  %v3101 = vsel %vm323, %v2954, 0.0
  %v3102 = vsel %vm323, %v3001, 0.0
  %v3103 = vadd.f32 %v3101, %v3102
  %v3104 = vsel %vm323, %v3048, 0.0
  %v3105 = vadd.f32 %v3103, %v3104
  %v3106 = vsel %vm323, %v3095, 0.0
  %v3107 = vadd.f32 %v3105, %v3106
  %v3108 = vsel %vm323, %v2957, 0.0
  %v3109 = vsel %vm323, %v3004, 0.0
  %v3110 = vadd.f32 %v3108, %v3109
  %v3111 = vsel %vm323, %v3051, 0.0
  %v3112 = vadd.f32 %v3110, %v3111
  %v3113 = vsel %vm323, %v3098, 0.0
  %v3114 = vadd.f32 %v3112, %v3113
  %s3115 = scalar_lea.vmem %s17, 2
  %v3116 = vld [vmem:[%s3115] sm:$0x1]
  %v3118 = vlaneseq
  %v3119 = vshrl.u32 %v3118, 7
  %v3120 = vsub.s32 0, %v3119
  %v3121 = vrot.slane %v3116, %v3120
  %v3123 = vadd.f32 %v3107, %v3121
  %v3124 = vadd.f32 %v3114, %v3121
  %s3125 = scalar_lea.vmem %s19, 2
  %v3126 = vld [vmem:[%s3125] sm:$0x1]
  %s3127 = scalar_lea.vmem %s21, 2
  %v3128 = vld [vmem:[%s3127] sm:$0x1]
  %v3129 = vadd.f32 %v2348, %v3123
  %v3130 = vadd.f32 %v2349, %v3124
  %v3131 = vsel %vm323, %v3129, 0.0
  %3132 = vadd.xlane.f32.xlu0 %v3131
  %v3133 = vpop.xlane.xlu0 %3132
  %v3134 = vsel %vm323, %v3130, 0.0
  %3135 = vadd.xlane.f32.xlu0 %v3134
  %v3136 = vpop.xlane.xlu0 %3135
  %v3137 = vmul.f32 %v3133, %v1083
  %v3138 = vmul.f32 %v3136, %v1083
  %v3139 = vsub.f32 %v3129, %v3137
  %v3140 = vsub.f32 %v3130, %v3138
  %v3141 = vmul.f32 %v3139, %v3139
  %v3142 = vmul.f32 %v3140, %v3140
  %v3143 = vsel %vm323, %v3141, 0.0
  %3144 = vadd.xlane.f32.xlu0 %v3143
  %v3145 = vpop.xlane.xlu0 %3144
  %v3146 = vsel %vm323, %v3142, 0.0
  %3147 = vadd.xlane.f32.xlu0 %v3146
  %v3148 = vpop.xlane.xlu0 %3147
  %v3149 = vmul.f32 %v3145, %v1083
  %v3150 = vmul.f32 %v3148, %v1083
  %v3151 = vadd.f32 %v3149, 1e-05
  %v3152 = vadd.f32 %v3150, 1e-05
  %v3153 = vrsqrt.pop %v3151
  %v3154 = vrsqrt.pop %v3152
  %v3155 = vmul.f32 %v3139, %v3153
  %v3156 = vmul.f32 %v3140, %v3154
  %v3158 = vlaneseq
  %v3159 = vshrl.u32 %v3158, 7
  %v3160 = vsub.s32 0, %v3159
  %v3161 = vrot.slane %v3126, %v3160
  %v3163 = vmul.f32 %v3155, %v3161
  %v3164 = vmul.f32 %v3156, %v3161
  %v3166 = vlaneseq
  %v3167 = vshrl.u32 %v3166, 7
  %v3168 = vsub.s32 0, %v3167
  %v3169 = vrot.slane %v3128, %v3168
  %v3171 = vadd.f32 %v3163, %v3169
  %v3172 = vadd.f32 %v3164, %v3169
  %s3173 = scalar_lea.vmem %s23, 32
  %v3174 = vld [vmem:[%s3173] sm:$0xf]
  %v3175 = vld [vmem:[%s3173 + $0x4] sm:$0xf]
  %v3176 = vld [vmem:[%s3173 + $0x8] sm:$0xf]
  %v3177 = vld [vmem:[%s3173 + $0xc] sm:$0xf]
  %v3178 = vpack.c.bf16 %v3172, %v3171
  %s3179 = scalar_lea.vmem %s25, 2
  %v3180 = vld [vmem:[%s3179] sm:$0x1]
  %v3182 = vlaneseq
  %v3183 = vshrl.u32 %v3182, 7
  %v3184 = vsub.s32 0, %v3183
  %v3185 = vrot.slane %v3180, %v3184
  %v3191 = vunpack.c.l.b16 %v3174
  %v3192 = vunpack.c.l.b16 %v3175
  %v3193 = vunpack.c.l.b16 %v3176
  %v3194 = vunpack.c.l.b16 %v3177
  %v3195 = vpack.c.b16 %v3192, %v3191
  %v3196 = vpack.c.b16 %v3194, %v3193
  %v3200 = vsel %vm323, %v3178, 0
  %3202 = vmatprep.subr.bf16.mxu0 0
  %3203 = vmatpush1.bf16.msra.mxu0 %v3195
  %3204 = vmatprep.subr.bf16.mxu0 0
  %3205 = vmatpush1.bf16.msra.mxu0 %v3196
  %3206 = vmatprep.subr.bf16.mxu0 0
  %3207 = vmatpush1.bf16.msra.mxu0 0
  %3208 = vmatprep.subr.bf16.mxu0 0
  %3209 = vmatpush1.bf16.msra.mxu0 0
  %3210 = vmatprep.subr.bf16.mxu0 0
  %3211 = vmatpush1.bf16.msra.mxu0 0
  %3212 = vmatprep.subr.bf16.mxu0 0
  %3213 = vmatpush1.bf16.msra.mxu0 0
  %3214 = vmatprep.subr.bf16.mxu0 0
  %3215 = vmatpush1.bf16.msra.mxu0 0
  %3216 = vmatprep.subr.bf16.mxu0 0
  %3217 = vmatpush1.bf16.msra.mxu0 0
  %3218 = vmatprep.subr.bf16.mxu0 0
  %3219 = vmatpush1.bf16.msra.mxu0 0
  %3220 = vmatprep.subr.bf16.mxu0 0
  %3221 = vmatpush1.bf16.msra.mxu0 0
  %3222 = vmatprep.subr.bf16.mxu0 0
  %3223 = vmatpush1.bf16.msra.mxu0 0
  %3224 = vmatprep.subr.bf16.mxu0 0
  %3225 = vmatpush1.bf16.msra.mxu0 0
  %3226 = vmatprep.subr.bf16.mxu0 0
  %3227 = vmatpush1.bf16.msra.mxu0 0
  %3228 = vmatprep.subr.bf16.mxu0 0
  %3229 = vmatpush1.bf16.msra.mxu0 0
  %3230 = vmatprep.subr.bf16.mxu0 0
  %3231 = vmatpush1.bf16.msra.mxu0 0
  %3232 = vmatprep.subr.bf16.mxu0 0
  %3233 = vmatpush1.bf16.msra.mxu0 0
  %3234 = vmatprep.mubr.bf16.mxu0 0
  %3235 = vmatmul.mubr.bf16.gmra.mrb[0].mxu0 %v3200
  %v3236 = vpop.f32.mrb[0].mxu0
  %v3237 = vadd.f32 %v3185, %v3236
  %v3238 = vpop.f32.mrb[0].mxu0
  %v3239 = vpop.f32.mrb[0].mxu0
  %v3240 = vadd.f32 %v3185, %v3239
  %v3241 = vpop.f32.mrb[0].mxu0
  %3242 = vdwg.mxu0
  %v3243 = vmax.f32 %v3237, 0.0
  %v3244 = vmax.f32 %v3240, 0.0
  %s3245 = scalar_lea.vmem %s27, 64
  %v3246 = vld [vmem:[%s3245] sm:$0xf]
  %v3247 = vld [vmem:[%s3245 + $0x4] sm:$0xf]
  %v3248 = vld [vmem:[%s3245 + $0x8] sm:$0xf]
  %v3249 = vld [vmem:[%s3245 + $0xc] sm:$0xf]
  %v3250 = vld [vmem:[%s3245 + $0x10] sm:$0xf]
  %v3251 = vld [vmem:[%s3245 + $0x14] sm:$0xf]
  %v3252 = vld [vmem:[%s3245 + $0x18] sm:$0xf]
  %v3253 = vld [vmem:[%s3245 + $0x1c] sm:$0xf]
  %v3254 = vpack.c.bf16 %v3244, %v3243
  %s3255 = scalar_lea.vmem %s29, 2
  %v3256 = vld [vmem:[%s3255] sm:$0x1]
  %v3258 = vlaneseq
  %v3259 = vshrl.u32 %v3258, 7
  %v3260 = vsub.s32 0, %v3259
  %v3261 = vrot.slane %v3256, %v3260
  %v3271 = vunpack.c.l.b16 %v3246
  %v3272 = vunpack.c.l.b16 %v3247
  %v3273 = vunpack.c.l.b16 %v3248
  %v3274 = vunpack.c.l.b16 %v3249
  %v3275 = vunpack.c.l.b16 %v3250
  %v3276 = vunpack.c.l.b16 %v3251
  %v3277 = vunpack.c.l.b16 %v3252
  %v3278 = vunpack.c.l.b16 %v3253
  %v3279 = vpack.c.b16 %v3272, %v3271
  %v3280 = vpack.c.b16 %v3274, %v3273
  %v3281 = vpack.c.b16 %v3276, %v3275
  %v3282 = vpack.c.b16 %v3278, %v3277
  %v3288 = vsel %vm1230, %v3254, 0
  %3290 = vmatprep.subr.bf16.mxu0 0
  %3291 = vmatpush1.bf16.msra.mxu0 %v3279
  %3292 = vmatprep.subr.bf16.mxu0 0
  %3293 = vmatpush1.bf16.msra.mxu0 %v3280
  %3294 = vmatprep.subr.bf16.mxu0 0
  %3295 = vmatpush1.bf16.msra.mxu0 %v3281
  %3296 = vmatprep.subr.bf16.mxu0 0
  %3297 = vmatpush1.bf16.msra.mxu0 %v3282
  %3298 = vmatprep.subr.bf16.mxu0 0
  %3299 = vmatpush1.bf16.msra.mxu0 0
  %3300 = vmatprep.subr.bf16.mxu0 0
  %3301 = vmatpush1.bf16.msra.mxu0 0
  %3302 = vmatprep.subr.bf16.mxu0 0
  %3303 = vmatpush1.bf16.msra.mxu0 0
  %3304 = vmatprep.subr.bf16.mxu0 0
  %3305 = vmatpush1.bf16.msra.mxu0 0
  %3306 = vmatprep.subr.bf16.mxu0 0
  %3307 = vmatpush1.bf16.msra.mxu0 0
  %3308 = vmatprep.subr.bf16.mxu0 0
  %3309 = vmatpush1.bf16.msra.mxu0 0
  %3310 = vmatprep.subr.bf16.mxu0 0
  %3311 = vmatpush1.bf16.msra.mxu0 0
  %3312 = vmatprep.subr.bf16.mxu0 0
  %3313 = vmatpush1.bf16.msra.mxu0 0
  %3314 = vmatprep.subr.bf16.mxu0 0
  %3315 = vmatpush1.bf16.msra.mxu0 0
  %3316 = vmatprep.subr.bf16.mxu0 0
  %3317 = vmatpush1.bf16.msra.mxu0 0
  %3318 = vmatprep.subr.bf16.mxu0 0
  %3319 = vmatpush1.bf16.msra.mxu0 0
  %3320 = vmatprep.subr.bf16.mxu0 0
  %3321 = vmatpush1.bf16.msra.mxu0 0
  %3322 = vmatprep.mubr.bf16.mxu0 0
  %3323 = vmatmul.mubr.bf16.gmra.mrb[0].mxu0 %v3288
  %v3324 = vpop.f32.mrb[0].mxu0
  %v3325 = vadd.f32 %v3261, %v3324
  %v3326 = vpop.f32.mrb[0].mxu0
  %v3327 = vpop.f32.mrb[0].mxu0
  %v3328 = vadd.f32 %v3261, %v3327
  %v3329 = vpop.f32.mrb[0].mxu0
  %3330 = vdwg.mxu0
  %s3331 = scalar_lea.vmem %s31, 2
  %v3332 = vld [vmem:[%s3331] sm:$0x1]
  %s3333 = scalar_lea.vmem %s33, 2
  %v3334 = vld [vmem:[%s3333] sm:$0x1]
  %v3335 = vadd.f32 %v3171, %v3325
  %v3336 = vadd.f32 %v3172, %v3328
  %v3337 = vsel %vm323, %v3335, 0.0
  %3338 = vadd.xlane.f32.xlu0 %v3337
  %v3339 = vpop.xlane.xlu0 %3338
  %v3340 = vsel %vm323, %v3336, 0.0
  %3341 = vadd.xlane.f32.xlu0 %v3340
  %v3342 = vpop.xlane.xlu0 %3341
  %v3343 = vmul.f32 %v3339, %v1083
  %v3344 = vmul.f32 %v3342, %v1083
  %v3345 = vsub.f32 %v3335, %v3343
  %v3346 = vsub.f32 %v3336, %v3344
  %v3347 = vmul.f32 %v3345, %v3345
  %v3348 = vmul.f32 %v3346, %v3346
  %v3349 = vsel %vm323, %v3347, 0.0
  %3350 = vadd.xlane.f32.xlu0 %v3349
  %v3351 = vpop.xlane.xlu0 %3350
  %v3352 = vsel %vm323, %v3348, 0.0
  %3353 = vadd.xlane.f32.xlu0 %v3352
  %v3354 = vpop.xlane.xlu0 %3353
  %v3355 = vmul.f32 %v3351, %v1083
  %v3356 = vmul.f32 %v3354, %v1083
  %v3357 = vadd.f32 %v3355, 1e-05
  %v3358 = vadd.f32 %v3356, 1e-05
  %v3359 = vrsqrt.pop %v3357
  %v3360 = vrsqrt.pop %v3358
  %v3361 = vmul.f32 %v3345, %v3359
  %v3362 = vmul.f32 %v3346, %v3360
  %v3364 = vlaneseq
  %v3365 = vshrl.u32 %v3364, 7
  %v3366 = vsub.s32 0, %v3365
  %v3367 = vrot.slane %v3332, %v3366
  %v3369 = vmul.f32 %v3361, %v3367
  %v3370 = vmul.f32 %v3362, %v3367
  %v3372 = vlaneseq
  %v3373 = vshrl.u32 %v3372, 7
  %v3374 = vsub.s32 0, %v3373
  %v3375 = vrot.slane %v3334, %v3374
  %v3377 = vadd.f32 %v3369, %v3375
  %v3378 = vadd.f32 %v3370, %v3375
  %v3379 = vld [vmem:[%s9] sm:$0xff]
  %v3380 = vld [vmem:[%s35] sm:$0xf]
  %v3381 = vld [vmem:[%s35 + $0x4] sm:$0xf]
  %v3382 = vld [vmem:[%s35 + $0x8] sm:$0xf]
  %v3383 = vld [vmem:[%s35 + $0xc] sm:$0xf]
  %v3384 = vpack.c.bf16 %v3379, %v3379
  %v3385 = vld [vmem:[%s37] sm:$0x1]
  %v3387 = vlaneseq
  %v3388 = vshrl.u32 %v3387, 7
  %v3389 = vsub.s32 0, %v3388
  %v3390 = vrot.slane %v3385, %v3389
  %v3396 = vunpack.c.l.b16 %v3380
  %v3397 = vunpack.c.l.b16 %v3381
  %v3398 = vunpack.c.l.b16 %v3382
  %v3399 = vunpack.c.l.b16 %v3383
  %v3400 = vpack.c.b16 %v3397, %v3396
  %v3401 = vpack.c.b16 %v3399, %v3398
  %v3405 = vsel %vm323, %v3384, 0
  %3407 = vmatprep.subr.bf16.mxu0 0
  %3408 = vmatpush1.bf16.msra.mxu0 %v3400
  %3409 = vmatprep.subr.bf16.mxu0 0
  %3410 = vmatpush1.bf16.msra.mxu0 %v3401
  %3411 = vmatprep.subr.bf16.mxu0 0
  %3412 = vmatpush1.bf16.msra.mxu0 0
  %3413 = vmatprep.subr.bf16.mxu0 0
  %3414 = vmatpush1.bf16.msra.mxu0 0
  %3415 = vmatprep.subr.bf16.mxu0 0
  %3416 = vmatpush1.bf16.msra.mxu0 0
  %3417 = vmatprep.subr.bf16.mxu0 0
  %3418 = vmatpush1.bf16.msra.mxu0 0
  %3419 = vmatprep.subr.bf16.mxu0 0
  %3420 = vmatpush1.bf16.msra.mxu0 0
  %3421 = vmatprep.subr.bf16.mxu0 0
  %3422 = vmatpush1.bf16.msra.mxu0 0
  %3423 = vmatprep.subr.bf16.mxu0 0
  %3424 = vmatpush1.bf16.msra.mxu0 0
  %3425 = vmatprep.subr.bf16.mxu0 0
  %3426 = vmatpush1.bf16.msra.mxu0 0
  %3427 = vmatprep.subr.bf16.mxu0 0
  %3428 = vmatpush1.bf16.msra.mxu0 0
  %3429 = vmatprep.subr.bf16.mxu0 0
  %3430 = vmatpush1.bf16.msra.mxu0 0
  %3431 = vmatprep.subr.bf16.mxu0 0
  %3432 = vmatpush1.bf16.msra.mxu0 0
  %3433 = vmatprep.subr.bf16.mxu0 0
  %3434 = vmatpush1.bf16.msra.mxu0 0
  %3435 = vmatprep.subr.bf16.mxu0 0
  %3436 = vmatpush1.bf16.msra.mxu0 0
  %3437 = vmatprep.subr.bf16.mxu0 0
  %3438 = vmatpush1.bf16.msra.mxu0 0
  %3439 = vmatprep.mubr.bf16.mxu0 0
  %3440 = vmatmul.mubr.bf16.gmra.mrb[0].mxu0 %v3405
  %v3441 = vpop.f32.mrb[0].mxu0
  %v3442 = vadd.f32 %v3390, %v3441
  %v3443 = vpop.f32.mrb[0].mxu0
  %v3444 = vpop.f32.mrb[0].mxu0
  %v3445 = vpop.f32.mrb[0].mxu0
  %3446 = vdwg.mxu0
  %v3447 = vld [vmem:[%s39] sm:$0xf]
  %v3448 = vld [vmem:[%s39 + $0x4] sm:$0xf]
  %v3449 = vld [vmem:[%s39 + $0x8] sm:$0xf]
  %v3450 = vld [vmem:[%s39 + $0xc] sm:$0xf]
  %v3451 = vpack.c.bf16 %v3442, %v3442
  %3453 = vrot.lane.b32.xlu0 %v3451, 120
  %v3454 = vpop.permute.xlu0 %3453
  %3455 = vrot.lane.b32.xlu0 %v3451, 112
  %v3456 = vpop.permute.xlu0 %3455
  %3457 = vrot.lane.b32.xlu0 %v3451, 104
  %v3458 = vpop.permute.xlu0 %3457
  %3459 = vrot.lane.b32.xlu0 %v3451, 96
  %v3460 = vpop.permute.xlu0 %3459
  %v3462 = vsel %vm382, %v3451, 0
  %v3465 = vsel %vm382, %v3460, 0
  %3467 = vmatprep.subr.bf16.mxu0 0
  %3468 = vmatpush1.bf16.xpose.msra.mxu0 %v3465
  %3469 = vmatprep.subr.bf16.mxu0 0
  %3470 = vmatpush1.bf16.xpose.msra.mxu0 0
  %3471 = vmatprep.subr.bf16.mxu0 0
  %3472 = vmatpush1.bf16.xpose.msra.mxu0 0
  %3473 = vmatprep.subr.bf16.mxu0 0
  %3474 = vmatpush1.bf16.xpose.msra.mxu0 0
  %3475 = vmatprep.subr.bf16.mxu0 0
  %3476 = vmatpush1.bf16.xpose.msra.mxu0 0
  %3477 = vmatprep.subr.bf16.mxu0 0
  %3478 = vmatpush1.bf16.xpose.msra.mxu0 0
  %3479 = vmatprep.subr.bf16.mxu0 0
  %3480 = vmatpush1.bf16.xpose.msra.mxu0 0
  %3481 = vmatprep.subr.bf16.mxu0 0
  %3482 = vmatpush1.bf16.xpose.msra.mxu0 0
  %3483 = vmatprep.subr.bf16.mxu0 0
  %3484 = vmatpush1.bf16.xpose.msra.mxu0 0
  %3485 = vmatprep.subr.bf16.mxu0 0
  %3486 = vmatpush1.bf16.xpose.msra.mxu0 0
  %3487 = vmatprep.subr.bf16.mxu0 0
  %3488 = vmatpush1.bf16.xpose.msra.mxu0 0
  %3489 = vmatprep.subr.bf16.mxu0 0
  %3490 = vmatpush1.bf16.xpose.msra.mxu0 0
  %3491 = vmatprep.subr.bf16.mxu0 0
  %3492 = vmatpush1.bf16.xpose.msra.mxu0 0
  %3493 = vmatprep.subr.bf16.mxu0 0
  %3494 = vmatpush1.bf16.xpose.msra.mxu0 0
  %3495 = vmatprep.subr.bf16.mxu0 0
  %3496 = vmatpush1.bf16.xpose.msra.mxu0 0
  %3497 = vmatprep.subr.bf16.mxu0 0
  %3498 = vmatpush1.bf16.xpose.msra.mxu0 0
  %3499 = vmatprep.mubr.bf16.mxu0 0
  %3500 = vmatmul.mubr.bf16.gmra.mrb[0].mxu0 %v3462
  %v3501 = vpop.f32.mrb[0].mxu0
  %v3502 = vadd.f32 0.0, %v3501
  %v3503 = vpop.f32.mrb[0].mxu0
  %v3504 = vpop.f32.mrb[0].mxu0
  %v3505 = vpop.f32.mrb[0].mxu0
  %3506 = vdwg.mxu0
  %3507 = vrot.lane.b32.xlu0 %v3454, 96
  %v3508 = vpop.permute.xlu0 %3507
  %v3510 = vsel %vm382, %v3454, 0
  %v3513 = vsel %vm382, %v3508, 0
  %3515 = vmatprep.subr.bf16.mxu0 0
  %3516 = vmatpush1.bf16.xpose.msra.mxu0 %v3513
  %3517 = vmatprep.subr.bf16.mxu0 0
  %3518 = vmatpush1.bf16.xpose.msra.mxu0 0
  %3519 = vmatprep.subr.bf16.mxu0 0
  %3520 = vmatpush1.bf16.xpose.msra.mxu0 0
  %3521 = vmatprep.subr.bf16.mxu0 0
  %3522 = vmatpush1.bf16.xpose.msra.mxu0 0
  %3523 = vmatprep.subr.bf16.mxu0 0
  %3524 = vmatpush1.bf16.xpose.msra.mxu0 0
  %3525 = vmatprep.subr.bf16.mxu0 0
  %3526 = vmatpush1.bf16.xpose.msra.mxu0 0
  %3527 = vmatprep.subr.bf16.mxu0 0
  %3528 = vmatpush1.bf16.xpose.msra.mxu0 0
  %3529 = vmatprep.subr.bf16.mxu0 0
  %3530 = vmatpush1.bf16.xpose.msra.mxu0 0
  %3531 = vmatprep.subr.bf16.mxu0 0
  %3532 = vmatpush1.bf16.xpose.msra.mxu0 0
  %3533 = vmatprep.subr.bf16.mxu0 0
  %3534 = vmatpush1.bf16.xpose.msra.mxu0 0
  %3535 = vmatprep.subr.bf16.mxu0 0
  %3536 = vmatpush1.bf16.xpose.msra.mxu0 0
  %3537 = vmatprep.subr.bf16.mxu0 0
  %3538 = vmatpush1.bf16.xpose.msra.mxu0 0
  %3539 = vmatprep.subr.bf16.mxu0 0
  %3540 = vmatpush1.bf16.xpose.msra.mxu0 0
  %3541 = vmatprep.subr.bf16.mxu0 0
  %3542 = vmatpush1.bf16.xpose.msra.mxu0 0
  %3543 = vmatprep.subr.bf16.mxu0 0
  %3544 = vmatpush1.bf16.xpose.msra.mxu0 0
  %3545 = vmatprep.subr.bf16.mxu0 0
  %3546 = vmatpush1.bf16.xpose.msra.mxu0 0
  %3547 = vmatprep.mubr.bf16.mxu0 0
  %3548 = vmatmul.mubr.bf16.gmra.mrb[0].mxu0 %v3510
  %v3549 = vpop.f32.mrb[0].mxu0
  %v3550 = vadd.f32 0.0, %v3549
  %v3551 = vpop.f32.mrb[0].mxu0
  %v3552 = vpop.f32.mrb[0].mxu0
  %v3553 = vpop.f32.mrb[0].mxu0
  %3554 = vdwg.mxu0
  %3555 = vrot.lane.b32.xlu0 %v3456, 96
  %v3556 = vpop.permute.xlu0 %3555
  %v3558 = vsel %vm382, %v3456, 0
  %v3561 = vsel %vm382, %v3556, 0
  %3563 = vmatprep.subr.bf16.mxu0 0
  %3564 = vmatpush1.bf16.xpose.msra.mxu0 %v3561
  %3565 = vmatprep.subr.bf16.mxu0 0
  %3566 = vmatpush1.bf16.xpose.msra.mxu0 0
  %3567 = vmatprep.subr.bf16.mxu0 0
  %3568 = vmatpush1.bf16.xpose.msra.mxu0 0
  %3569 = vmatprep.subr.bf16.mxu0 0
  %3570 = vmatpush1.bf16.xpose.msra.mxu0 0
  %3571 = vmatprep.subr.bf16.mxu0 0
  %3572 = vmatpush1.bf16.xpose.msra.mxu0 0
  %3573 = vmatprep.subr.bf16.mxu0 0
  %3574 = vmatpush1.bf16.xpose.msra.mxu0 0
  %3575 = vmatprep.subr.bf16.mxu0 0
  %3576 = vmatpush1.bf16.xpose.msra.mxu0 0
  %3577 = vmatprep.subr.bf16.mxu0 0
  %3578 = vmatpush1.bf16.xpose.msra.mxu0 0
  %3579 = vmatprep.subr.bf16.mxu0 0
  %3580 = vmatpush1.bf16.xpose.msra.mxu0 0
  %3581 = vmatprep.subr.bf16.mxu0 0
  %3582 = vmatpush1.bf16.xpose.msra.mxu0 0
  %3583 = vmatprep.subr.bf16.mxu0 0
  %3584 = vmatpush1.bf16.xpose.msra.mxu0 0
  %3585 = vmatprep.subr.bf16.mxu0 0
  %3586 = vmatpush1.bf16.xpose.msra.mxu0 0
  %3587 = vmatprep.subr.bf16.mxu0 0
  %3588 = vmatpush1.bf16.xpose.msra.mxu0 0
  %3589 = vmatprep.subr.bf16.mxu0 0
  %3590 = vmatpush1.bf16.xpose.msra.mxu0 0
  %3591 = vmatprep.subr.bf16.mxu0 0
  %3592 = vmatpush1.bf16.xpose.msra.mxu0 0
  %3593 = vmatprep.subr.bf16.mxu0 0
  %3594 = vmatpush1.bf16.xpose.msra.mxu0 0
  %3595 = vmatprep.mubr.bf16.mxu0 0
  %3596 = vmatmul.mubr.bf16.gmra.mrb[0].mxu0 %v3558
  %v3597 = vpop.f32.mrb[0].mxu0
  %v3598 = vadd.f32 0.0, %v3597
  %v3599 = vpop.f32.mrb[0].mxu0
  %v3600 = vpop.f32.mrb[0].mxu0
  %v3601 = vpop.f32.mrb[0].mxu0
  %3602 = vdwg.mxu0
  %3603 = vrot.lane.b32.xlu0 %v3458, 96
  %v3604 = vpop.permute.xlu0 %3603
  %v3606 = vsel %vm382, %v3458, 0
  %v3609 = vsel %vm382, %v3604, 0
  %3611 = vmatprep.subr.bf16.mxu0 0
  %3612 = vmatpush1.bf16.xpose.msra.mxu0 %v3609
  %3613 = vmatprep.subr.bf16.mxu0 0
  %3614 = vmatpush1.bf16.xpose.msra.mxu0 0
  %3615 = vmatprep.subr.bf16.mxu0 0
  %3616 = vmatpush1.bf16.xpose.msra.mxu0 0
  %3617 = vmatprep.subr.bf16.mxu0 0
  %3618 = vmatpush1.bf16.xpose.msra.mxu0 0
  %3619 = vmatprep.subr.bf16.mxu0 0
  %3620 = vmatpush1.bf16.xpose.msra.mxu0 0
  %3621 = vmatprep.subr.bf16.mxu0 0
  %3622 = vmatpush1.bf16.xpose.msra.mxu0 0
  %3623 = vmatprep.subr.bf16.mxu0 0
  %3624 = vmatpush1.bf16.xpose.msra.mxu0 0
  %3625 = vmatprep.subr.bf16.mxu0 0
  %3626 = vmatpush1.bf16.xpose.msra.mxu0 0
  %3627 = vmatprep.subr.bf16.mxu0 0
  %3628 = vmatpush1.bf16.xpose.msra.mxu0 0
  %3629 = vmatprep.subr.bf16.mxu0 0
  %3630 = vmatpush1.bf16.xpose.msra.mxu0 0
  %3631 = vmatprep.subr.bf16.mxu0 0
  %3632 = vmatpush1.bf16.xpose.msra.mxu0 0
  %3633 = vmatprep.subr.bf16.mxu0 0
  %3634 = vmatpush1.bf16.xpose.msra.mxu0 0
  %3635 = vmatprep.subr.bf16.mxu0 0
  %3636 = vmatpush1.bf16.xpose.msra.mxu0 0
  %3637 = vmatprep.subr.bf16.mxu0 0
  %3638 = vmatpush1.bf16.xpose.msra.mxu0 0
  %3639 = vmatprep.subr.bf16.mxu0 0
  %3640 = vmatpush1.bf16.xpose.msra.mxu0 0
  %3641 = vmatprep.subr.bf16.mxu0 0
  %3642 = vmatpush1.bf16.xpose.msra.mxu0 0
  %3643 = vmatprep.mubr.bf16.mxu0 0
  %3644 = vmatmul.mubr.bf16.gmra.mrb[0].mxu0 %v3606
  %v3645 = vpop.f32.mrb[0].mxu0
  %v3646 = vadd.f32 0.0, %v3645
  %v3647 = vpop.f32.mrb[0].mxu0
  %v3648 = vpop.f32.mrb[0].mxu0
  %v3649 = vpop.f32.mrb[0].mxu0
  %3650 = vdwg.mxu0
  %v3651 = vsel %vm382, %v3502, -inf
  %3652 = vmax.xlane.f32.xlu0 %v3651
  %v3653 = vpop.xlane.xlu0 %3652
  %v3654 = vsel %vm382, %v3550, -inf
  %3655 = vmax.xlane.f32.xlu0 %v3654
  %v3656 = vpop.xlane.xlu0 %3655
  %v3657 = vsel %vm382, %v3598, -inf
  %3658 = vmax.xlane.f32.xlu0 %v3657
  %v3659 = vpop.xlane.xlu0 %3658
  %v3660 = vsel %vm382, %v3646, -inf
  %3661 = vmax.xlane.f32.xlu0 %v3660
  %v3662 = vpop.xlane.xlu0 %3661
  %v3663 = vsub.f32 %v3502, %v3653
  %v3664 = vsub.f32 %v3550, %v3656
  %v3665 = vsub.f32 %v3598, %v3659
  %v3666 = vsub.f32 %v3646, %v3662
  %v3667 = vmul.f32 %v3663, 1.442695
  %v3668 = vpow.pop %v3667
  %v3669 = vmul.f32 %v3664, 1.442695
  %v3670 = vpow.pop %v3669
  %v3671 = vmul.f32 %v3665, 1.442695
  %v3672 = vpow.pop %v3671
  %v3673 = vmul.f32 %v3666, 1.442695
  %v3674 = vpow.pop %v3673
  %v3675 = vsel %vm382, %v3668, 0.0
  %3676 = vadd.xlane.f32.xlu0 %v3675
  %v3677 = vpop.xlane.xlu0 %3676
  %v3678 = vsel %vm382, %v3670, 0.0
  %3679 = vadd.xlane.f32.xlu0 %v3678
  %v3680 = vpop.xlane.xlu0 %3679
  %v3681 = vsel %vm382, %v3672, 0.0
  %3682 = vadd.xlane.f32.xlu0 %v3681
  %v3683 = vpop.xlane.xlu0 %3682
  %v3684 = vsel %vm382, %v3674, 0.0
  %3685 = vadd.xlane.f32.xlu0 %v3684
  %v3686 = vpop.xlane.xlu0 %3685
  %v3687 = vrcp.pop %v3677
  %v3688 = vrcp.pop %v3680
  %v3689 = vrcp.pop %v3683
  %v3690 = vrcp.pop %v3686
  %v3691 = vmul.f32 %v3668, %v3687
  %v3692 = vmul.f32 %v3670, %v3688
  %v3693 = vmul.f32 %v3672, %v3689
  %v3694 = vmul.f32 %v3674, %v3690
  %v3695 = vpack.c.bf16 %v3691, %v3691
  %v3696 = vpack.c.bf16 %v3692, %v3692
  %v3697 = vpack.c.bf16 %v3693, %v3693
  %v3698 = vpack.c.bf16 %v3694, %v3694
  %3699 = vrot.lane.b32.xlu0 %v3451, 64
  %v3700 = vpop.permute.xlu0 %3699
  %v3702 = vsel %vm382, %v3695, 0
  %v3705 = vsel %vm864, %v3700, 0
  %3707 = vmatprep.subr.bf16.mxu0 0
  %3708 = vmatpush1.bf16.msra.mxu0 %v3705
  %3709 = vmatprep.subr.bf16.mxu0 0
  %3710 = vmatpush1.bf16.msra.mxu0 0
  %3711 = vmatprep.subr.bf16.mxu0 0
  %3712 = vmatpush1.bf16.msra.mxu0 0
  %3713 = vmatprep.subr.bf16.mxu0 0
  %3714 = vmatpush1.bf16.msra.mxu0 0
  %3715 = vmatprep.subr.bf16.mxu0 0
  %3716 = vmatpush1.bf16.msra.mxu0 0
  %3717 = vmatprep.subr.bf16.mxu0 0
  %3718 = vmatpush1.bf16.msra.mxu0 0
  %3719 = vmatprep.subr.bf16.mxu0 0
  %3720 = vmatpush1.bf16.msra.mxu0 0
  %3721 = vmatprep.subr.bf16.mxu0 0
  %3722 = vmatpush1.bf16.msra.mxu0 0
  %3723 = vmatprep.subr.bf16.mxu0 0
  %3724 = vmatpush1.bf16.msra.mxu0 0
  %3725 = vmatprep.subr.bf16.mxu0 0
  %3726 = vmatpush1.bf16.msra.mxu0 0
  %3727 = vmatprep.subr.bf16.mxu0 0
  %3728 = vmatpush1.bf16.msra.mxu0 0
  %3729 = vmatprep.subr.bf16.mxu0 0
  %3730 = vmatpush1.bf16.msra.mxu0 0
  %3731 = vmatprep.subr.bf16.mxu0 0
  %3732 = vmatpush1.bf16.msra.mxu0 0
  %3733 = vmatprep.subr.bf16.mxu0 0
  %3734 = vmatpush1.bf16.msra.mxu0 0
  %3735 = vmatprep.subr.bf16.mxu0 0
  %3736 = vmatpush1.bf16.msra.mxu0 0
  %3737 = vmatprep.subr.bf16.mxu0 0
  %3738 = vmatpush1.bf16.msra.mxu0 0
  %3739 = vmatprep.mubr.bf16.mxu0 0
  %3740 = vmatmul.mubr.bf16.gmra.mrb[0].mxu0 %v3702
  %v3741 = vpop.f32.mrb[0].mxu0
  %v3742 = vadd.f32 0.0, %v3741
  %v3743 = vpop.f32.mrb[0].mxu0
  %v3744 = vpop.f32.mrb[0].mxu0
  %v3745 = vpop.f32.mrb[0].mxu0
  %3746 = vdwg.mxu0
  %3747 = vrot.lane.b32.xlu0 %v3454, 64
  %v3748 = vpop.permute.xlu0 %3747
  %v3750 = vsel %vm382, %v3696, 0
  %v3753 = vsel %vm864, %v3748, 0
  %3755 = vmatprep.subr.bf16.mxu0 0
  %3756 = vmatpush1.bf16.msra.mxu0 %v3753
  %3757 = vmatprep.subr.bf16.mxu0 0
  %3758 = vmatpush1.bf16.msra.mxu0 0
  %3759 = vmatprep.subr.bf16.mxu0 0
  %3760 = vmatpush1.bf16.msra.mxu0 0
  %3761 = vmatprep.subr.bf16.mxu0 0
  %3762 = vmatpush1.bf16.msra.mxu0 0
  %3763 = vmatprep.subr.bf16.mxu0 0
  %3764 = vmatpush1.bf16.msra.mxu0 0
  %3765 = vmatprep.subr.bf16.mxu0 0
  %3766 = vmatpush1.bf16.msra.mxu0 0
  %3767 = vmatprep.subr.bf16.mxu0 0
  %3768 = vmatpush1.bf16.msra.mxu0 0
  %3769 = vmatprep.subr.bf16.mxu0 0
  %3770 = vmatpush1.bf16.msra.mxu0 0
  %3771 = vmatprep.subr.bf16.mxu0 0
  %3772 = vmatpush1.bf16.msra.mxu0 0
  %3773 = vmatprep.subr.bf16.mxu0 0
  %3774 = vmatpush1.bf16.msra.mxu0 0
  %3775 = vmatprep.subr.bf16.mxu0 0
  %3776 = vmatpush1.bf16.msra.mxu0 0
  %3777 = vmatprep.subr.bf16.mxu0 0
  %3778 = vmatpush1.bf16.msra.mxu0 0
  %3779 = vmatprep.subr.bf16.mxu0 0
  %3780 = vmatpush1.bf16.msra.mxu0 0
  %3781 = vmatprep.subr.bf16.mxu0 0
  %3782 = vmatpush1.bf16.msra.mxu0 0
  %3783 = vmatprep.subr.bf16.mxu0 0
  %3784 = vmatpush1.bf16.msra.mxu0 0
  %3785 = vmatprep.subr.bf16.mxu0 0
  %3786 = vmatpush1.bf16.msra.mxu0 0
  %3787 = vmatprep.mubr.bf16.mxu0 0
  %3788 = vmatmul.mubr.bf16.gmra.mrb[0].mxu0 %v3750
  %v3789 = vpop.f32.mrb[0].mxu0
  %v3790 = vadd.f32 0.0, %v3789
  %v3791 = vpop.f32.mrb[0].mxu0
  %v3792 = vpop.f32.mrb[0].mxu0
  %v3793 = vpop.f32.mrb[0].mxu0
  %3794 = vdwg.mxu0
  %3795 = vrot.lane.b32.xlu0 %v3456, 64
  %v3796 = vpop.permute.xlu0 %3795
  %v3798 = vsel %vm382, %v3697, 0
  %v3801 = vsel %vm864, %v3796, 0
  %3803 = vmatprep.subr.bf16.mxu0 0
  %3804 = vmatpush1.bf16.msra.mxu0 %v3801
  %3805 = vmatprep.subr.bf16.mxu0 0
  %3806 = vmatpush1.bf16.msra.mxu0 0
  %3807 = vmatprep.subr.bf16.mxu0 0
  %3808 = vmatpush1.bf16.msra.mxu0 0
  %3809 = vmatprep.subr.bf16.mxu0 0
  %3810 = vmatpush1.bf16.msra.mxu0 0
  %3811 = vmatprep.subr.bf16.mxu0 0
  %3812 = vmatpush1.bf16.msra.mxu0 0
  %3813 = vmatprep.subr.bf16.mxu0 0
  %3814 = vmatpush1.bf16.msra.mxu0 0
  %3815 = vmatprep.subr.bf16.mxu0 0
  %3816 = vmatpush1.bf16.msra.mxu0 0
  %3817 = vmatprep.subr.bf16.mxu0 0
  %3818 = vmatpush1.bf16.msra.mxu0 0
  %3819 = vmatprep.subr.bf16.mxu0 0
  %3820 = vmatpush1.bf16.msra.mxu0 0
  %3821 = vmatprep.subr.bf16.mxu0 0
  %3822 = vmatpush1.bf16.msra.mxu0 0
  %3823 = vmatprep.subr.bf16.mxu0 0
  %3824 = vmatpush1.bf16.msra.mxu0 0
  %3825 = vmatprep.subr.bf16.mxu0 0
  %3826 = vmatpush1.bf16.msra.mxu0 0
  %3827 = vmatprep.subr.bf16.mxu0 0
  %3828 = vmatpush1.bf16.msra.mxu0 0
  %3829 = vmatprep.subr.bf16.mxu0 0
  %3830 = vmatpush1.bf16.msra.mxu0 0
  %3831 = vmatprep.subr.bf16.mxu0 0
  %3832 = vmatpush1.bf16.msra.mxu0 0
  %3833 = vmatprep.subr.bf16.mxu0 0
  %3834 = vmatpush1.bf16.msra.mxu0 0
  %3835 = vmatprep.mubr.bf16.mxu0 0
  %3836 = vmatmul.mubr.bf16.gmra.mrb[0].mxu0 %v3798
  %v3837 = vpop.f32.mrb[0].mxu0
  %v3838 = vadd.f32 0.0, %v3837
  %v3839 = vpop.f32.mrb[0].mxu0
  %v3840 = vpop.f32.mrb[0].mxu0
  %v3841 = vpop.f32.mrb[0].mxu0
  %3842 = vdwg.mxu0
  %3843 = vrot.lane.b32.xlu0 %v3458, 64
  %v3844 = vpop.permute.xlu0 %3843
  %v3846 = vsel %vm382, %v3698, 0
  %v3849 = vsel %vm864, %v3844, 0
  %3851 = vmatprep.subr.bf16.mxu0 0
  %3852 = vmatpush1.bf16.msra.mxu0 %v3849
  %3853 = vmatprep.subr.bf16.mxu0 0
  %3854 = vmatpush1.bf16.msra.mxu0 0
  %3855 = vmatprep.subr.bf16.mxu0 0
  %3856 = vmatpush1.bf16.msra.mxu0 0
  %3857 = vmatprep.subr.bf16.mxu0 0
  %3858 = vmatpush1.bf16.msra.mxu0 0
  %3859 = vmatprep.subr.bf16.mxu0 0
  %3860 = vmatpush1.bf16.msra.mxu0 0
  %3861 = vmatprep.subr.bf16.mxu0 0
  %3862 = vmatpush1.bf16.msra.mxu0 0
  %3863 = vmatprep.subr.bf16.mxu0 0
  %3864 = vmatpush1.bf16.msra.mxu0 0
  %3865 = vmatprep.subr.bf16.mxu0 0
  %3866 = vmatpush1.bf16.msra.mxu0 0
  %3867 = vmatprep.subr.bf16.mxu0 0
  %3868 = vmatpush1.bf16.msra.mxu0 0
  %3869 = vmatprep.subr.bf16.mxu0 0
  %3870 = vmatpush1.bf16.msra.mxu0 0
  %3871 = vmatprep.subr.bf16.mxu0 0
  %3872 = vmatpush1.bf16.msra.mxu0 0
  %3873 = vmatprep.subr.bf16.mxu0 0
  %3874 = vmatpush1.bf16.msra.mxu0 0
  %3875 = vmatprep.subr.bf16.mxu0 0
  %3876 = vmatpush1.bf16.msra.mxu0 0
  %3877 = vmatprep.subr.bf16.mxu0 0
  %3878 = vmatpush1.bf16.msra.mxu0 0
  %3879 = vmatprep.subr.bf16.mxu0 0
  %3880 = vmatpush1.bf16.msra.mxu0 0
  %3881 = vmatprep.subr.bf16.mxu0 0
  %3882 = vmatpush1.bf16.msra.mxu0 0
  %3883 = vmatprep.mubr.bf16.mxu0 0
  %3884 = vmatmul.mubr.bf16.gmra.mrb[0].mxu0 %v3846
  %v3885 = vpop.f32.mrb[0].mxu0
  %v3886 = vadd.f32 0.0, %v3885
  %v3887 = vpop.f32.mrb[0].mxu0
  %v3888 = vpop.f32.mrb[0].mxu0
  %v3889 = vpop.f32.mrb[0].mxu0
  %3890 = vdwg.mxu0
  %v3891 = vpack.c.bf16 %v3742, %v3742
  %v3892 = vpack.c.bf16 %v3790, %v3790
  %v3893 = vpack.c.bf16 %v3838, %v3838
  %v3894 = vpack.c.bf16 %v3886, %v3886
  %v3896 = vsel %vm382, %v3891, 0
  %v3899 = vsel %vm864, %v3447, 0
  %3901 = vmatprep.subr.bf16.mxu0 0
  %3902 = vmatpush1.bf16.msra.mxu0 %v3899
  %3903 = vmatprep.subr.bf16.mxu0 0
  %3904 = vmatpush1.bf16.msra.mxu0 0
  %3905 = vmatprep.subr.bf16.mxu0 0
  %3906 = vmatpush1.bf16.msra.mxu0 0
  %3907 = vmatprep.subr.bf16.mxu0 0
  %3908 = vmatpush1.bf16.msra.mxu0 0
  %3909 = vmatprep.subr.bf16.mxu0 0
  %3910 = vmatpush1.bf16.msra.mxu0 0
  %3911 = vmatprep.subr.bf16.mxu0 0
  %3912 = vmatpush1.bf16.msra.mxu0 0
  %3913 = vmatprep.subr.bf16.mxu0 0
  %3914 = vmatpush1.bf16.msra.mxu0 0
  %3915 = vmatprep.subr.bf16.mxu0 0
  %3916 = vmatpush1.bf16.msra.mxu0 0
  %3917 = vmatprep.subr.bf16.mxu0 0
  %3918 = vmatpush1.bf16.msra.mxu0 0
  %3919 = vmatprep.subr.bf16.mxu0 0
  %3920 = vmatpush1.bf16.msra.mxu0 0
  %3921 = vmatprep.subr.bf16.mxu0 0
  %3922 = vmatpush1.bf16.msra.mxu0 0
  %3923 = vmatprep.subr.bf16.mxu0 0
  %3924 = vmatpush1.bf16.msra.mxu0 0
  %3925 = vmatprep.subr.bf16.mxu0 0
  %3926 = vmatpush1.bf16.msra.mxu0 0
  %3927 = vmatprep.subr.bf16.mxu0 0
  %3928 = vmatpush1.bf16.msra.mxu0 0
  %3929 = vmatprep.subr.bf16.mxu0 0
  %3930 = vmatpush1.bf16.msra.mxu0 0
  %3931 = vmatprep.subr.bf16.mxu0 0
  %3932 = vmatpush1.bf16.msra.mxu0 0
  %3933 = vmatprep.mubr.bf16.mxu0 0
  %3934 = vmatmul.mubr.bf16.gmra.mrb[0].mxu0 %v3896
  %v3935 = vpop.f32.mrb[0].mxu0
  %v3936 = vadd.f32 0.0, %v3935
  %v3937 = vpop.f32.mrb[0].mxu0
  %v3938 = vpop.f32.mrb[0].mxu0
  %v3939 = vpop.f32.mrb[0].mxu0
  %3940 = vdwg.mxu0
  %v3942 = vsel %vm382, %v3892, 0
  %v3945 = vsel %vm864, %v3448, 0
  %3947 = vmatprep.subr.bf16.mxu0 0
  %3948 = vmatpush1.bf16.msra.mxu0 %v3945
  %3949 = vmatprep.subr.bf16.mxu0 0
  %3950 = vmatpush1.bf16.msra.mxu0 0
  %3951 = vmatprep.subr.bf16.mxu0 0
  %3952 = vmatpush1.bf16.msra.mxu0 0
  %3953 = vmatprep.subr.bf16.mxu0 0
  %3954 = vmatpush1.bf16.msra.mxu0 0
  %3955 = vmatprep.subr.bf16.mxu0 0
  %3956 = vmatpush1.bf16.msra.mxu0 0
  %3957 = vmatprep.subr.bf16.mxu0 0
  %3958 = vmatpush1.bf16.msra.mxu0 0
  %3959 = vmatprep.subr.bf16.mxu0 0
  %3960 = vmatpush1.bf16.msra.mxu0 0
  %3961 = vmatprep.subr.bf16.mxu0 0
  %3962 = vmatpush1.bf16.msra.mxu0 0
  %3963 = vmatprep.subr.bf16.mxu0 0
  %3964 = vmatpush1.bf16.msra.mxu0 0
  %3965 = vmatprep.subr.bf16.mxu0 0
  %3966 = vmatpush1.bf16.msra.mxu0 0
  %3967 = vmatprep.subr.bf16.mxu0 0
  %3968 = vmatpush1.bf16.msra.mxu0 0
  %3969 = vmatprep.subr.bf16.mxu0 0
  %3970 = vmatpush1.bf16.msra.mxu0 0
  %3971 = vmatprep.subr.bf16.mxu0 0
  %3972 = vmatpush1.bf16.msra.mxu0 0
  %3973 = vmatprep.subr.bf16.mxu0 0
  %3974 = vmatpush1.bf16.msra.mxu0 0
  %3975 = vmatprep.subr.bf16.mxu0 0
  %3976 = vmatpush1.bf16.msra.mxu0 0
  %3977 = vmatprep.subr.bf16.mxu0 0
  %3978 = vmatpush1.bf16.msra.mxu0 0
  %3979 = vmatprep.mubr.bf16.mxu0 0
  %3980 = vmatmul.mubr.bf16.gmra.mrb[0].mxu0 %v3942
  %v3981 = vpop.f32.mrb[0].mxu0
  %v3982 = vadd.f32 0.0, %v3981
  %v3983 = vpop.f32.mrb[0].mxu0
  %v3984 = vpop.f32.mrb[0].mxu0
  %v3985 = vpop.f32.mrb[0].mxu0
  %3986 = vdwg.mxu0
  %v3988 = vsel %vm382, %v3893, 0
  %v3991 = vsel %vm864, %v3449, 0
  %3993 = vmatprep.subr.bf16.mxu0 0
  %3994 = vmatpush1.bf16.msra.mxu0 %v3991
  %3995 = vmatprep.subr.bf16.mxu0 0
  %3996 = vmatpush1.bf16.msra.mxu0 0
  %3997 = vmatprep.subr.bf16.mxu0 0
  %3998 = vmatpush1.bf16.msra.mxu0 0
  %3999 = vmatprep.subr.bf16.mxu0 0
  %4000 = vmatpush1.bf16.msra.mxu0 0
  %4001 = vmatprep.subr.bf16.mxu0 0
  %4002 = vmatpush1.bf16.msra.mxu0 0
  %4003 = vmatprep.subr.bf16.mxu0 0
  %4004 = vmatpush1.bf16.msra.mxu0 0
  %4005 = vmatprep.subr.bf16.mxu0 0
  %4006 = vmatpush1.bf16.msra.mxu0 0
  %4007 = vmatprep.subr.bf16.mxu0 0
  %4008 = vmatpush1.bf16.msra.mxu0 0
  %4009 = vmatprep.subr.bf16.mxu0 0
  %4010 = vmatpush1.bf16.msra.mxu0 0
  %4011 = vmatprep.subr.bf16.mxu0 0
  %4012 = vmatpush1.bf16.msra.mxu0 0
  %4013 = vmatprep.subr.bf16.mxu0 0
  %4014 = vmatpush1.bf16.msra.mxu0 0
  %4015 = vmatprep.subr.bf16.mxu0 0
  %4016 = vmatpush1.bf16.msra.mxu0 0
  %4017 = vmatprep.subr.bf16.mxu0 0
  %4018 = vmatpush1.bf16.msra.mxu0 0
  %4019 = vmatprep.subr.bf16.mxu0 0
  %4020 = vmatpush1.bf16.msra.mxu0 0
  %4021 = vmatprep.subr.bf16.mxu0 0
  %4022 = vmatpush1.bf16.msra.mxu0 0
  %4023 = vmatprep.subr.bf16.mxu0 0
  %4024 = vmatpush1.bf16.msra.mxu0 0
  %4025 = vmatprep.mubr.bf16.mxu0 0
  %4026 = vmatmul.mubr.bf16.gmra.mrb[0].mxu0 %v3988
  %v4027 = vpop.f32.mrb[0].mxu0
  %v4028 = vadd.f32 0.0, %v4027
  %v4029 = vpop.f32.mrb[0].mxu0
  %v4030 = vpop.f32.mrb[0].mxu0
  %v4031 = vpop.f32.mrb[0].mxu0
  %4032 = vdwg.mxu0
  %v4034 = vsel %vm382, %v3894, 0
  %v4037 = vsel %vm864, %v3450, 0
  %4039 = vmatprep.subr.bf16.mxu0 0
  %4040 = vmatpush1.bf16.msra.mxu0 %v4037
  %4041 = vmatprep.subr.bf16.mxu0 0
  %4042 = vmatpush1.bf16.msra.mxu0 0
  %4043 = vmatprep.subr.bf16.mxu0 0
  %4044 = vmatpush1.bf16.msra.mxu0 0
  %4045 = vmatprep.subr.bf16.mxu0 0
  %4046 = vmatpush1.bf16.msra.mxu0 0
  %4047 = vmatprep.subr.bf16.mxu0 0
  %4048 = vmatpush1.bf16.msra.mxu0 0
  %4049 = vmatprep.subr.bf16.mxu0 0
  %4050 = vmatpush1.bf16.msra.mxu0 0
  %4051 = vmatprep.subr.bf16.mxu0 0
  %4052 = vmatpush1.bf16.msra.mxu0 0
  %4053 = vmatprep.subr.bf16.mxu0 0
  %4054 = vmatpush1.bf16.msra.mxu0 0
  %4055 = vmatprep.subr.bf16.mxu0 0
  %4056 = vmatpush1.bf16.msra.mxu0 0
  %4057 = vmatprep.subr.bf16.mxu0 0
  %4058 = vmatpush1.bf16.msra.mxu0 0
  %4059 = vmatprep.subr.bf16.mxu0 0
  %4060 = vmatpush1.bf16.msra.mxu0 0
  %4061 = vmatprep.subr.bf16.mxu0 0
  %4062 = vmatpush1.bf16.msra.mxu0 0
  %4063 = vmatprep.subr.bf16.mxu0 0
  %4064 = vmatpush1.bf16.msra.mxu0 0
  %4065 = vmatprep.subr.bf16.mxu0 0
  %4066 = vmatpush1.bf16.msra.mxu0 0
  %4067 = vmatprep.subr.bf16.mxu0 0
  %4068 = vmatpush1.bf16.msra.mxu0 0
  %4069 = vmatprep.subr.bf16.mxu0 0
  %4070 = vmatpush1.bf16.msra.mxu0 0
  %4071 = vmatprep.mubr.bf16.mxu0 0
  %4072 = vmatmul.mubr.bf16.gmra.mrb[0].mxu0 %v4034
  %v4073 = vpop.f32.mrb[0].mxu0
  %v4074 = vadd.f32 0.0, %v4073
  %v4075 = vpop.f32.mrb[0].mxu0
  %v4076 = vpop.f32.mrb[0].mxu0
  %v4077 = vpop.f32.mrb[0].mxu0
  %4078 = vdwg.mxu0
  %v4079 = vsel %vm323, %v3936, 0.0
  %v4080 = vsel %vm323, %v3982, 0.0
  %v4081 = vadd.f32 %v4079, %v4080
  %v4082 = vsel %vm323, %v4028, 0.0
  %v4083 = vadd.f32 %v4081, %v4082
  %v4084 = vsel %vm323, %v4074, 0.0
  %v4085 = vadd.f32 %v4083, %v4084
  %v4086 = vld [vmem:[%s41] sm:$0x1]
  %v4088 = vlaneseq
  %v4089 = vshrl.u32 %v4088, 7
  %v4090 = vsub.s32 0, %v4089
  %v4091 = vrot.slane %v4086, %v4090
  %v4093 = vadd.f32 %v4085, %v4091
  %v4094 = vld [vmem:[%s43] sm:$0x1]
  %v4095 = vld [vmem:[%s45] sm:$0x1]
  %v4096 = vadd.f32 %v3379, %v4093
  %v4097 = vsel %vm323, %v4096, 0.0
  %4098 = vadd.xlane.f32.xlu0 %v4097
  %v4099 = vpop.xlane.xlu0 %4098
  %v4100 = vmul.f32 %v4099, %v1083
  %v4101 = vsub.f32 %v4096, %v4100
  %v4102 = vmul.f32 %v4101, %v4101
  %v4103 = vsel %vm323, %v4102, 0.0
  %4104 = vadd.xlane.f32.xlu0 %v4103
  %v4105 = vpop.xlane.xlu0 %4104
  %v4106 = vmul.f32 %v4105, %v1083
  %v4107 = vadd.f32 %v4106, 1e-05
  %v4108 = vrsqrt.pop %v4107
  %v4109 = vmul.f32 %v4101, %v4108
  %v4111 = vlaneseq
  %v4112 = vshrl.u32 %v4111, 7
  %v4113 = vsub.s32 0, %v4112
  %v4114 = vrot.slane %v4094, %v4113
  %v4116 = vmul.f32 %v4109, %v4114
  %v4118 = vlaneseq
  %v4119 = vshrl.u32 %v4118, 7
  %v4120 = vsub.s32 0, %v4119
  %v4121 = vrot.slane %v4095, %v4120
  %v4123 = vadd.f32 %v4116, %v4121
  %v4124 = vld [vmem:[%s47] sm:$0xf]
  %v4125 = vld [vmem:[%s47 + $0x4] sm:$0xf]
  %v4126 = vld [vmem:[%s47 + $0x8] sm:$0xf]
  %v4127 = vld [vmem:[%s47 + $0xc] sm:$0xf]
  %v4128 = vpack.c.bf16 %v4123, %v4123
  %v4129 = vld [vmem:[%s49] sm:$0x1]
  %v4131 = vlaneseq
  %v4132 = vshrl.u32 %v4131, 7
  %v4133 = vsub.s32 0, %v4132
  %v4134 = vrot.slane %v4129, %v4133
  %v4140 = vunpack.c.l.b16 %v4124
  %v4141 = vunpack.c.l.b16 %v4125
  %v4142 = vunpack.c.l.b16 %v4126
  %v4143 = vunpack.c.l.b16 %v4127
  %v4144 = vpack.c.b16 %v4141, %v4140
  %v4145 = vpack.c.b16 %v4143, %v4142
  %v4149 = vsel %vm323, %v4128, 0
  %4151 = vmatprep.subr.bf16.mxu0 0
  %4152 = vmatpush1.bf16.msra.mxu0 %v4144
  %4153 = vmatprep.subr.bf16.mxu0 0
  %4154 = vmatpush1.bf16.msra.mxu0 %v4145
  %4155 = vmatprep.subr.bf16.mxu0 0
  %4156 = vmatpush1.bf16.msra.mxu0 0
  %4157 = vmatprep.subr.bf16.mxu0 0
  %4158 = vmatpush1.bf16.msra.mxu0 0
  %4159 = vmatprep.subr.bf16.mxu0 0
  %4160 = vmatpush1.bf16.msra.mxu0 0
  %4161 = vmatprep.subr.bf16.mxu0 0
  %4162 = vmatpush1.bf16.msra.mxu0 0
  %4163 = vmatprep.subr.bf16.mxu0 0
  %4164 = vmatpush1.bf16.msra.mxu0 0
  %4165 = vmatprep.subr.bf16.mxu0 0
  %4166 = vmatpush1.bf16.msra.mxu0 0
  %4167 = vmatprep.subr.bf16.mxu0 0
  %4168 = vmatpush1.bf16.msra.mxu0 0
  %4169 = vmatprep.subr.bf16.mxu0 0
  %4170 = vmatpush1.bf16.msra.mxu0 0
  %4171 = vmatprep.subr.bf16.mxu0 0
  %4172 = vmatpush1.bf16.msra.mxu0 0
  %4173 = vmatprep.subr.bf16.mxu0 0
  %4174 = vmatpush1.bf16.msra.mxu0 0
  %4175 = vmatprep.subr.bf16.mxu0 0
  %4176 = vmatpush1.bf16.msra.mxu0 0
  %4177 = vmatprep.subr.bf16.mxu0 0
  %4178 = vmatpush1.bf16.msra.mxu0 0
  %4179 = vmatprep.subr.bf16.mxu0 0
  %4180 = vmatpush1.bf16.msra.mxu0 0
  %4181 = vmatprep.subr.bf16.mxu0 0
  %4182 = vmatpush1.bf16.msra.mxu0 0
  %4183 = vmatprep.mubr.bf16.mxu0 0
  %4184 = vmatmul.mubr.bf16.gmra.mrb[0].mxu0 %v4149
  %v4185 = vpop.f32.mrb[0].mxu0
  %v4186 = vadd.f32 %v4134, %v4185
  %v4187 = vpop.f32.mrb[0].mxu0
  %v4188 = vpop.f32.mrb[0].mxu0
  %v4189 = vpop.f32.mrb[0].mxu0
  %4190 = vdwg.mxu0
  %v4191 = vld [vmem:[%s51] sm:$0xf]
  %v4192 = vld [vmem:[%s51 + $0x4] sm:$0xf]
  %v4193 = vld [vmem:[%s51 + $0x8] sm:$0xf]
  %v4194 = vld [vmem:[%s51 + $0xc] sm:$0xf]
  %v4195 = vpack.c.bf16 %v3378, %v3377
  %v4196 = vld [vmem:[%s53] sm:$0x1]
  %v4198 = vlaneseq
  %v4199 = vshrl.u32 %v4198, 7
  %v4200 = vsub.s32 0, %v4199
  %v4201 = vrot.slane %v4196, %v4200
  %v4207 = vunpack.c.l.b16 %v4191
  %v4208 = vunpack.c.l.b16 %v4192
  %v4209 = vunpack.c.l.b16 %v4193
  %v4210 = vunpack.c.l.b16 %v4194
  %v4211 = vpack.c.b16 %v4208, %v4207
  %v4212 = vpack.c.b16 %v4210, %v4209
  %v4216 = vsel %vm323, %v4195, 0
  %4218 = vmatprep.subr.bf16.mxu0 0
  %4219 = vmatpush1.bf16.msra.mxu0 %v4211
  %4220 = vmatprep.subr.bf16.mxu0 0
  %4221 = vmatpush1.bf16.msra.mxu0 %v4212
  %4222 = vmatprep.subr.bf16.mxu0 0
  %4223 = vmatpush1.bf16.msra.mxu0 0
  %4224 = vmatprep.subr.bf16.mxu0 0
  %4225 = vmatpush1.bf16.msra.mxu0 0
  %4226 = vmatprep.subr.bf16.mxu0 0
  %4227 = vmatpush1.bf16.msra.mxu0 0
  %4228 = vmatprep.subr.bf16.mxu0 0
  %4229 = vmatpush1.bf16.msra.mxu0 0
  %4230 = vmatprep.subr.bf16.mxu0 0
  %4231 = vmatpush1.bf16.msra.mxu0 0
  %4232 = vmatprep.subr.bf16.mxu0 0
  %4233 = vmatpush1.bf16.msra.mxu0 0
  %4234 = vmatprep.subr.bf16.mxu0 0
  %4235 = vmatpush1.bf16.msra.mxu0 0
  %4236 = vmatprep.subr.bf16.mxu0 0
  %4237 = vmatpush1.bf16.msra.mxu0 0
  %4238 = vmatprep.subr.bf16.mxu0 0
  %4239 = vmatpush1.bf16.msra.mxu0 0
  %4240 = vmatprep.subr.bf16.mxu0 0
  %4241 = vmatpush1.bf16.msra.mxu0 0
  %4242 = vmatprep.subr.bf16.mxu0 0
  %4243 = vmatpush1.bf16.msra.mxu0 0
  %4244 = vmatprep.subr.bf16.mxu0 0
  %4245 = vmatpush1.bf16.msra.mxu0 0
  %4246 = vmatprep.subr.bf16.mxu0 0
  %4247 = vmatpush1.bf16.msra.mxu0 0
  %4248 = vmatprep.subr.bf16.mxu0 0
  %4249 = vmatpush1.bf16.msra.mxu0 0
  %4250 = vmatprep.mubr.bf16.mxu0 0
  %4251 = vmatmul.mubr.bf16.gmra.mrb[0].mxu0 %v4216
  %v4252 = vpop.f32.mrb[0].mxu0
  %v4253 = vadd.f32 %v4201, %v4252
  %v4254 = vpop.f32.mrb[0].mxu0
  %v4255 = vpop.f32.mrb[0].mxu0
  %v4256 = vadd.f32 %v4201, %v4255
  %v4257 = vpop.f32.mrb[0].mxu0
  %4258 = vdwg.mxu0
  %v4259 = vld [vmem:[%s55] sm:$0xf]
  %v4260 = vld [vmem:[%s55 + $0x4] sm:$0xf]
  %v4261 = vld [vmem:[%s55 + $0x8] sm:$0xf]
  %v4262 = vld [vmem:[%s55 + $0xc] sm:$0xf]
  %v4263 = vpack.c.bf16 %v4186, %v4186
  %4265 = vrot.lane.b32.xlu0 %v4263, 120
  %v4266 = vpop.permute.xlu0 %4265
  %4267 = vrot.lane.b32.xlu0 %v4263, 112
  %v4268 = vpop.permute.xlu0 %4267
  %4269 = vrot.lane.b32.xlu0 %v4263, 104
  %v4270 = vpop.permute.xlu0 %4269
  %v4271 = vpack.c.bf16 %v4256, %v4253
  %4273 = vrot.lane.b32.xlu0 %v4271, 120
  %v4274 = vpop.permute.xlu0 %4273
  %4275 = vrot.lane.b32.xlu0 %v4271, 112
  %v4276 = vpop.permute.xlu0 %4275
  %4277 = vrot.lane.b32.xlu0 %v4271, 104
  %v4278 = vpop.permute.xlu0 %4277
  %v4280 = vsel %vm382, %v4263, 0
  %v4283 = vsel %vm382, %v4271, 0
  %4285 = vmatprep.subr.bf16.mxu0 0
  %4286 = vmatpush1.bf16.xpose.msra.mxu0 %v4283
  %4287 = vmatprep.subr.bf16.mxu0 0
  %4288 = vmatpush1.bf16.xpose.msra.mxu0 0
  %4289 = vmatprep.subr.bf16.mxu0 0
  %4290 = vmatpush1.bf16.xpose.msra.mxu0 0
  %4291 = vmatprep.subr.bf16.mxu0 0
  %4292 = vmatpush1.bf16.xpose.msra.mxu0 0
  %4293 = vmatprep.subr.bf16.mxu0 0
  %4294 = vmatpush1.bf16.xpose.msra.mxu0 0
  %4295 = vmatprep.subr.bf16.mxu0 0
  %4296 = vmatpush1.bf16.xpose.msra.mxu0 0
  %4297 = vmatprep.subr.bf16.mxu0 0
  %4298 = vmatpush1.bf16.xpose.msra.mxu0 0
  %4299 = vmatprep.subr.bf16.mxu0 0
  %4300 = vmatpush1.bf16.xpose.msra.mxu0 0
  %4301 = vmatprep.subr.bf16.mxu0 0
  %4302 = vmatpush1.bf16.xpose.msra.mxu0 0
  %4303 = vmatprep.subr.bf16.mxu0 0
  %4304 = vmatpush1.bf16.xpose.msra.mxu0 0
  %4305 = vmatprep.subr.bf16.mxu0 0
  %4306 = vmatpush1.bf16.xpose.msra.mxu0 0
  %4307 = vmatprep.subr.bf16.mxu0 0
  %4308 = vmatpush1.bf16.xpose.msra.mxu0 0
  %4309 = vmatprep.subr.bf16.mxu0 0
  %4310 = vmatpush1.bf16.xpose.msra.mxu0 0
  %4311 = vmatprep.subr.bf16.mxu0 0
  %4312 = vmatpush1.bf16.xpose.msra.mxu0 0
  %4313 = vmatprep.subr.bf16.mxu0 0
  %4314 = vmatpush1.bf16.xpose.msra.mxu0 0
  %4315 = vmatprep.subr.bf16.mxu0 0
  %4316 = vmatpush1.bf16.xpose.msra.mxu0 0
  %4317 = vmatprep.mubr.bf16.mxu0 0
  %4318 = vmatmul.mubr.bf16.gmra.mrb[0].mxu0 %v4280
  %v4319 = vpop.f32.mrb[0].mxu0
  %v4320 = vadd.f32 0.0, %v4319
  %v4321 = vpop.f32.mrb[0].mxu0
  %v4322 = vpop.f32.mrb[0].mxu0
  %v4323 = vpop.f32.mrb[0].mxu0
  %4324 = vdwg.mxu0
  %v4326 = vsel %vm382, %v4266, 0
  %v4329 = vsel %vm382, %v4274, 0
  %4331 = vmatprep.subr.bf16.mxu0 0
  %4332 = vmatpush1.bf16.xpose.msra.mxu0 %v4329
  %4333 = vmatprep.subr.bf16.mxu0 0
  %4334 = vmatpush1.bf16.xpose.msra.mxu0 0
  %4335 = vmatprep.subr.bf16.mxu0 0
  %4336 = vmatpush1.bf16.xpose.msra.mxu0 0
  %4337 = vmatprep.subr.bf16.mxu0 0
  %4338 = vmatpush1.bf16.xpose.msra.mxu0 0
  %4339 = vmatprep.subr.bf16.mxu0 0
  %4340 = vmatpush1.bf16.xpose.msra.mxu0 0
  %4341 = vmatprep.subr.bf16.mxu0 0
  %4342 = vmatpush1.bf16.xpose.msra.mxu0 0
  %4343 = vmatprep.subr.bf16.mxu0 0
  %4344 = vmatpush1.bf16.xpose.msra.mxu0 0
  %4345 = vmatprep.subr.bf16.mxu0 0
  %4346 = vmatpush1.bf16.xpose.msra.mxu0 0
  %4347 = vmatprep.subr.bf16.mxu0 0
  %4348 = vmatpush1.bf16.xpose.msra.mxu0 0
  %4349 = vmatprep.subr.bf16.mxu0 0
  %4350 = vmatpush1.bf16.xpose.msra.mxu0 0
  %4351 = vmatprep.subr.bf16.mxu0 0
  %4352 = vmatpush1.bf16.xpose.msra.mxu0 0
  %4353 = vmatprep.subr.bf16.mxu0 0
  %4354 = vmatpush1.bf16.xpose.msra.mxu0 0
  %4355 = vmatprep.subr.bf16.mxu0 0
  %4356 = vmatpush1.bf16.xpose.msra.mxu0 0
  %4357 = vmatprep.subr.bf16.mxu0 0
  %4358 = vmatpush1.bf16.xpose.msra.mxu0 0
  %4359 = vmatprep.subr.bf16.mxu0 0
  %4360 = vmatpush1.bf16.xpose.msra.mxu0 0
  %4361 = vmatprep.subr.bf16.mxu0 0
  %4362 = vmatpush1.bf16.xpose.msra.mxu0 0
  %4363 = vmatprep.mubr.bf16.mxu0 0
  %4364 = vmatmul.mubr.bf16.gmra.mrb[0].mxu0 %v4326
  %v4365 = vpop.f32.mrb[0].mxu0
  %v4366 = vadd.f32 0.0, %v4365
  %v4367 = vpop.f32.mrb[0].mxu0
  %v4368 = vpop.f32.mrb[0].mxu0
  %v4369 = vpop.f32.mrb[0].mxu0
  %4370 = vdwg.mxu0
  %v4372 = vsel %vm382, %v4268, 0
  %v4375 = vsel %vm382, %v4276, 0
  %4377 = vmatprep.subr.bf16.mxu0 0
  %4378 = vmatpush1.bf16.xpose.msra.mxu0 %v4375
  %4379 = vmatprep.subr.bf16.mxu0 0
  %4380 = vmatpush1.bf16.xpose.msra.mxu0 0
  %4381 = vmatprep.subr.bf16.mxu0 0
  %4382 = vmatpush1.bf16.xpose.msra.mxu0 0
  %4383 = vmatprep.subr.bf16.mxu0 0
  %4384 = vmatpush1.bf16.xpose.msra.mxu0 0
  %4385 = vmatprep.subr.bf16.mxu0 0
  %4386 = vmatpush1.bf16.xpose.msra.mxu0 0
  %4387 = vmatprep.subr.bf16.mxu0 0
  %4388 = vmatpush1.bf16.xpose.msra.mxu0 0
  %4389 = vmatprep.subr.bf16.mxu0 0
  %4390 = vmatpush1.bf16.xpose.msra.mxu0 0
  %4391 = vmatprep.subr.bf16.mxu0 0
  %4392 = vmatpush1.bf16.xpose.msra.mxu0 0
  %4393 = vmatprep.subr.bf16.mxu0 0
  %4394 = vmatpush1.bf16.xpose.msra.mxu0 0
  %4395 = vmatprep.subr.bf16.mxu0 0
  %4396 = vmatpush1.bf16.xpose.msra.mxu0 0
  %4397 = vmatprep.subr.bf16.mxu0 0
  %4398 = vmatpush1.bf16.xpose.msra.mxu0 0
  %4399 = vmatprep.subr.bf16.mxu0 0
  %4400 = vmatpush1.bf16.xpose.msra.mxu0 0
  %4401 = vmatprep.subr.bf16.mxu0 0
  %4402 = vmatpush1.bf16.xpose.msra.mxu0 0
  %4403 = vmatprep.subr.bf16.mxu0 0
  %4404 = vmatpush1.bf16.xpose.msra.mxu0 0
  %4405 = vmatprep.subr.bf16.mxu0 0
  %4406 = vmatpush1.bf16.xpose.msra.mxu0 0
  %4407 = vmatprep.subr.bf16.mxu0 0
  %4408 = vmatpush1.bf16.xpose.msra.mxu0 0
  %4409 = vmatprep.mubr.bf16.mxu0 0
  %4410 = vmatmul.mubr.bf16.gmra.mrb[0].mxu0 %v4372
  %v4411 = vpop.f32.mrb[0].mxu0
  %v4412 = vadd.f32 0.0, %v4411
  %v4413 = vpop.f32.mrb[0].mxu0
  %v4414 = vpop.f32.mrb[0].mxu0
  %v4415 = vpop.f32.mrb[0].mxu0
  %4416 = vdwg.mxu0
  %v4418 = vsel %vm382, %v4270, 0
  %v4421 = vsel %vm382, %v4278, 0
  %4423 = vmatprep.subr.bf16.mxu0 0
  %4424 = vmatpush1.bf16.xpose.msra.mxu0 %v4421
  %4425 = vmatprep.subr.bf16.mxu0 0
  %4426 = vmatpush1.bf16.xpose.msra.mxu0 0
  %4427 = vmatprep.subr.bf16.mxu0 0
  %4428 = vmatpush1.bf16.xpose.msra.mxu0 0
  %4429 = vmatprep.subr.bf16.mxu0 0
  %4430 = vmatpush1.bf16.xpose.msra.mxu0 0
  %4431 = vmatprep.subr.bf16.mxu0 0
  %4432 = vmatpush1.bf16.xpose.msra.mxu0 0
  %4433 = vmatprep.subr.bf16.mxu0 0
  %4434 = vmatpush1.bf16.xpose.msra.mxu0 0
  %4435 = vmatprep.subr.bf16.mxu0 0
  %4436 = vmatpush1.bf16.xpose.msra.mxu0 0
  %4437 = vmatprep.subr.bf16.mxu0 0
  %4438 = vmatpush1.bf16.xpose.msra.mxu0 0
  %4439 = vmatprep.subr.bf16.mxu0 0
  %4440 = vmatpush1.bf16.xpose.msra.mxu0 0
  %4441 = vmatprep.subr.bf16.mxu0 0
  %4442 = vmatpush1.bf16.xpose.msra.mxu0 0
  %4443 = vmatprep.subr.bf16.mxu0 0
  %4444 = vmatpush1.bf16.xpose.msra.mxu0 0
  %4445 = vmatprep.subr.bf16.mxu0 0
  %4446 = vmatpush1.bf16.xpose.msra.mxu0 0
  %4447 = vmatprep.subr.bf16.mxu0 0
  %4448 = vmatpush1.bf16.xpose.msra.mxu0 0
  %4449 = vmatprep.subr.bf16.mxu0 0
  %4450 = vmatpush1.bf16.xpose.msra.mxu0 0
  %4451 = vmatprep.subr.bf16.mxu0 0
  %4452 = vmatpush1.bf16.xpose.msra.mxu0 0
  %4453 = vmatprep.subr.bf16.mxu0 0
  %4454 = vmatpush1.bf16.xpose.msra.mxu0 0
  %4455 = vmatprep.mubr.bf16.mxu0 0
  %4456 = vmatmul.mubr.bf16.gmra.mrb[0].mxu0 %v4418
  %v4457 = vpop.f32.mrb[0].mxu0
  %v4458 = vadd.f32 0.0, %v4457
  %v4459 = vpop.f32.mrb[0].mxu0
  %v4460 = vpop.f32.mrb[0].mxu0
  %v4461 = vpop.f32.mrb[0].mxu0
  %4462 = vdwg.mxu0
  %v4463 = vsel %vm248, %v4320, -inf
  %4464 = vmax.xlane.f32.xlu0 %v4463
  %v4465 = vpop.xlane.xlu0 %4464
  %v4466 = vsel %vm248, %v4366, -inf
  %4467 = vmax.xlane.f32.xlu0 %v4466
  %v4468 = vpop.xlane.xlu0 %4467
  %v4469 = vsel %vm248, %v4412, -inf
  %4470 = vmax.xlane.f32.xlu0 %v4469
  %v4471 = vpop.xlane.xlu0 %4470
  %v4472 = vsel %vm248, %v4458, -inf
  %4473 = vmax.xlane.f32.xlu0 %v4472
  %v4474 = vpop.xlane.xlu0 %4473
  %v4475 = vsub.f32 %v4320, %v4465
  %v4476 = vsub.f32 %v4366, %v4468
  %v4477 = vsub.f32 %v4412, %v4471
  %v4478 = vsub.f32 %v4458, %v4474
  %v4479 = vmul.f32 %v4475, 1.442695
  %v4480 = vpow.pop %v4479
  %v4481 = vmul.f32 %v4476, 1.442695
  %v4482 = vpow.pop %v4481
  %v4483 = vmul.f32 %v4477, 1.442695
  %v4484 = vpow.pop %v4483
  %v4485 = vmul.f32 %v4478, 1.442695
  %v4486 = vpow.pop %v4485
  %v4487 = vsel %vm248, %v4480, 0.0
  %4488 = vadd.xlane.f32.xlu0 %v4487
  %v4489 = vpop.xlane.xlu0 %4488
  %v4490 = vsel %vm248, %v4482, 0.0
  %4491 = vadd.xlane.f32.xlu0 %v4490
  %v4492 = vpop.xlane.xlu0 %4491
  %v4493 = vsel %vm248, %v4484, 0.0
  %4494 = vadd.xlane.f32.xlu0 %v4493
  %v4495 = vpop.xlane.xlu0 %4494
  %v4496 = vsel %vm248, %v4486, 0.0
  %4497 = vadd.xlane.f32.xlu0 %v4496
  %v4498 = vpop.xlane.xlu0 %4497
  %v4499 = vrcp.pop %v4489
  %v4500 = vrcp.pop %v4492
  %v4501 = vrcp.pop %v4495
  %v4502 = vrcp.pop %v4498
  %v4503 = vmul.f32 %v4480, %v4499
  %v4504 = vmul.f32 %v4482, %v4500
  %v4505 = vmul.f32 %v4484, %v4501
  %v4506 = vmul.f32 %v4486, %v4502
  %v4507 = vpack.c.bf16 %v4503, %v4503
  %v4508 = vpack.c.bf16 %v4504, %v4504
  %v4509 = vpack.c.bf16 %v4505, %v4505
  %v4510 = vpack.c.bf16 %v4506, %v4506
  %4511 = vrot.lane.b32.xlu0 %v4271, 96
  %v4512 = vpop.permute.xlu0 %4511
  %v4515 = vsel %vm248, %v4507, 0
  %4517 = vmatprep.subr.bf16.mxu0 0
  %4518 = vmatpush1.bf16.msra.mxu0 %v4512
  %4519 = vmatprep.subr.bf16.mxu0 0
  %4520 = vmatpush1.bf16.msra.mxu0 0
  %4521 = vmatprep.subr.bf16.mxu0 0
  %4522 = vmatpush1.bf16.msra.mxu0 0
  %4523 = vmatprep.subr.bf16.mxu0 0
  %4524 = vmatpush1.bf16.msra.mxu0 0
  %4525 = vmatprep.subr.bf16.mxu0 0
  %4526 = vmatpush1.bf16.msra.mxu0 0
  %4527 = vmatprep.subr.bf16.mxu0 0
  %4528 = vmatpush1.bf16.msra.mxu0 0
  %4529 = vmatprep.subr.bf16.mxu0 0
  %4530 = vmatpush1.bf16.msra.mxu0 0
  %4531 = vmatprep.subr.bf16.mxu0 0
  %4532 = vmatpush1.bf16.msra.mxu0 0
  %4533 = vmatprep.subr.bf16.mxu0 0
  %4534 = vmatpush1.bf16.msra.mxu0 0
  %4535 = vmatprep.subr.bf16.mxu0 0
  %4536 = vmatpush1.bf16.msra.mxu0 0
  %4537 = vmatprep.subr.bf16.mxu0 0
  %4538 = vmatpush1.bf16.msra.mxu0 0
  %4539 = vmatprep.subr.bf16.mxu0 0
  %4540 = vmatpush1.bf16.msra.mxu0 0
  %4541 = vmatprep.subr.bf16.mxu0 0
  %4542 = vmatpush1.bf16.msra.mxu0 0
  %4543 = vmatprep.subr.bf16.mxu0 0
  %4544 = vmatpush1.bf16.msra.mxu0 0
  %4545 = vmatprep.subr.bf16.mxu0 0
  %4546 = vmatpush1.bf16.msra.mxu0 0
  %4547 = vmatprep.subr.bf16.mxu0 0
  %4548 = vmatpush1.bf16.msra.mxu0 0
  %4549 = vmatprep.mubr.bf16.mxu0 0
  %4550 = vmatmul.mubr.bf16.gmra.mrb[0].mxu0 %v4515
  %v4551 = vpop.f32.mrb[0].mxu0
  %v4552 = vadd.f32 0.0, %v4551
  %v4553 = vpop.f32.mrb[0].mxu0
  %v4554 = vpop.f32.mrb[0].mxu0
  %v4555 = vpop.f32.mrb[0].mxu0
  %4556 = vdwg.mxu0
  %4557 = vrot.lane.b32.xlu0 %v4274, 96
  %v4558 = vpop.permute.xlu0 %4557
  %v4561 = vsel %vm248, %v4508, 0
  %4563 = vmatprep.subr.bf16.mxu0 0
  %4564 = vmatpush1.bf16.msra.mxu0 %v4558
  %4565 = vmatprep.subr.bf16.mxu0 0
  %4566 = vmatpush1.bf16.msra.mxu0 0
  %4567 = vmatprep.subr.bf16.mxu0 0
  %4568 = vmatpush1.bf16.msra.mxu0 0
  %4569 = vmatprep.subr.bf16.mxu0 0
  %4570 = vmatpush1.bf16.msra.mxu0 0
  %4571 = vmatprep.subr.bf16.mxu0 0
  %4572 = vmatpush1.bf16.msra.mxu0 0
  %4573 = vmatprep.subr.bf16.mxu0 0
  %4574 = vmatpush1.bf16.msra.mxu0 0
  %4575 = vmatprep.subr.bf16.mxu0 0
  %4576 = vmatpush1.bf16.msra.mxu0 0
  %4577 = vmatprep.subr.bf16.mxu0 0
  %4578 = vmatpush1.bf16.msra.mxu0 0
  %4579 = vmatprep.subr.bf16.mxu0 0
  %4580 = vmatpush1.bf16.msra.mxu0 0
  %4581 = vmatprep.subr.bf16.mxu0 0
  %4582 = vmatpush1.bf16.msra.mxu0 0
  %4583 = vmatprep.subr.bf16.mxu0 0
  %4584 = vmatpush1.bf16.msra.mxu0 0
  %4585 = vmatprep.subr.bf16.mxu0 0
  %4586 = vmatpush1.bf16.msra.mxu0 0
  %4587 = vmatprep.subr.bf16.mxu0 0
  %4588 = vmatpush1.bf16.msra.mxu0 0
  %4589 = vmatprep.subr.bf16.mxu0 0
  %4590 = vmatpush1.bf16.msra.mxu0 0
  %4591 = vmatprep.subr.bf16.mxu0 0
  %4592 = vmatpush1.bf16.msra.mxu0 0
  %4593 = vmatprep.subr.bf16.mxu0 0
  %4594 = vmatpush1.bf16.msra.mxu0 0
  %4595 = vmatprep.mubr.bf16.mxu0 0
  %4596 = vmatmul.mubr.bf16.gmra.mrb[0].mxu0 %v4561
  %v4597 = vpop.f32.mrb[0].mxu0
  %v4598 = vadd.f32 0.0, %v4597
  %v4599 = vpop.f32.mrb[0].mxu0
  %v4600 = vpop.f32.mrb[0].mxu0
  %v4601 = vpop.f32.mrb[0].mxu0
  %4602 = vdwg.mxu0
  %4603 = vrot.lane.b32.xlu0 %v4276, 96
  %v4604 = vpop.permute.xlu0 %4603
  %v4607 = vsel %vm248, %v4509, 0
  %4609 = vmatprep.subr.bf16.mxu0 0
  %4610 = vmatpush1.bf16.msra.mxu0 %v4604
  %4611 = vmatprep.subr.bf16.mxu0 0
  %4612 = vmatpush1.bf16.msra.mxu0 0
  %4613 = vmatprep.subr.bf16.mxu0 0
  %4614 = vmatpush1.bf16.msra.mxu0 0
  %4615 = vmatprep.subr.bf16.mxu0 0
  %4616 = vmatpush1.bf16.msra.mxu0 0
  %4617 = vmatprep.subr.bf16.mxu0 0
  %4618 = vmatpush1.bf16.msra.mxu0 0
  %4619 = vmatprep.subr.bf16.mxu0 0
  %4620 = vmatpush1.bf16.msra.mxu0 0
  %4621 = vmatprep.subr.bf16.mxu0 0
  %4622 = vmatpush1.bf16.msra.mxu0 0
  %4623 = vmatprep.subr.bf16.mxu0 0
  %4624 = vmatpush1.bf16.msra.mxu0 0
  %4625 = vmatprep.subr.bf16.mxu0 0
  %4626 = vmatpush1.bf16.msra.mxu0 0
  %4627 = vmatprep.subr.bf16.mxu0 0
  %4628 = vmatpush1.bf16.msra.mxu0 0
  %4629 = vmatprep.subr.bf16.mxu0 0
  %4630 = vmatpush1.bf16.msra.mxu0 0
  %4631 = vmatprep.subr.bf16.mxu0 0
  %4632 = vmatpush1.bf16.msra.mxu0 0
  %4633 = vmatprep.subr.bf16.mxu0 0
  %4634 = vmatpush1.bf16.msra.mxu0 0
  %4635 = vmatprep.subr.bf16.mxu0 0
  %4636 = vmatpush1.bf16.msra.mxu0 0
  %4637 = vmatprep.subr.bf16.mxu0 0
  %4638 = vmatpush1.bf16.msra.mxu0 0
  %4639 = vmatprep.subr.bf16.mxu0 0
  %4640 = vmatpush1.bf16.msra.mxu0 0
  %4641 = vmatprep.mubr.bf16.mxu0 0
  %4642 = vmatmul.mubr.bf16.gmra.mrb[0].mxu0 %v4607
  %v4643 = vpop.f32.mrb[0].mxu0
  %v4644 = vadd.f32 0.0, %v4643
  %v4645 = vpop.f32.mrb[0].mxu0
  %v4646 = vpop.f32.mrb[0].mxu0
  %v4647 = vpop.f32.mrb[0].mxu0
  %4648 = vdwg.mxu0
  %4649 = vrot.lane.b32.xlu0 %v4278, 96
  %v4650 = vpop.permute.xlu0 %4649
  %v4653 = vsel %vm248, %v4510, 0
  %4655 = vmatprep.subr.bf16.mxu0 0
  %4656 = vmatpush1.bf16.msra.mxu0 %v4650
  %4657 = vmatprep.subr.bf16.mxu0 0
  %4658 = vmatpush1.bf16.msra.mxu0 0
  %4659 = vmatprep.subr.bf16.mxu0 0
  %4660 = vmatpush1.bf16.msra.mxu0 0
  %4661 = vmatprep.subr.bf16.mxu0 0
  %4662 = vmatpush1.bf16.msra.mxu0 0
  %4663 = vmatprep.subr.bf16.mxu0 0
  %4664 = vmatpush1.bf16.msra.mxu0 0
  %4665 = vmatprep.subr.bf16.mxu0 0
  %4666 = vmatpush1.bf16.msra.mxu0 0
  %4667 = vmatprep.subr.bf16.mxu0 0
  %4668 = vmatpush1.bf16.msra.mxu0 0
  %4669 = vmatprep.subr.bf16.mxu0 0
  %4670 = vmatpush1.bf16.msra.mxu0 0
  %4671 = vmatprep.subr.bf16.mxu0 0
  %4672 = vmatpush1.bf16.msra.mxu0 0
  %4673 = vmatprep.subr.bf16.mxu0 0
  %4674 = vmatpush1.bf16.msra.mxu0 0
  %4675 = vmatprep.subr.bf16.mxu0 0
  %4676 = vmatpush1.bf16.msra.mxu0 0
  %4677 = vmatprep.subr.bf16.mxu0 0
  %4678 = vmatpush1.bf16.msra.mxu0 0
  %4679 = vmatprep.subr.bf16.mxu0 0
  %4680 = vmatpush1.bf16.msra.mxu0 0
  %4681 = vmatprep.subr.bf16.mxu0 0
  %4682 = vmatpush1.bf16.msra.mxu0 0
  %4683 = vmatprep.subr.bf16.mxu0 0
  %4684 = vmatpush1.bf16.msra.mxu0 0
  %4685 = vmatprep.subr.bf16.mxu0 0
  %4686 = vmatpush1.bf16.msra.mxu0 0
  %4687 = vmatprep.mubr.bf16.mxu0 0
  %4688 = vmatmul.mubr.bf16.gmra.mrb[0].mxu0 %v4653
  %v4689 = vpop.f32.mrb[0].mxu0
  %v4690 = vadd.f32 0.0, %v4689
  %v4691 = vpop.f32.mrb[0].mxu0
  %v4692 = vpop.f32.mrb[0].mxu0
  %v4693 = vpop.f32.mrb[0].mxu0
  %4694 = vdwg.mxu0
  %v4695 = vpack.c.bf16 %v4552, %v4552
  %v4696 = vpack.c.bf16 %v4598, %v4598
  %v4697 = vpack.c.bf16 %v4644, %v4644
  %v4698 = vpack.c.bf16 %v4690, %v4690
  %v4700 = vsel %vm382, %v4695, 0
  %v4703 = vsel %vm864, %v4259, 0
  %4705 = vmatprep.subr.bf16.mxu0 0
  %4706 = vmatpush1.bf16.msra.mxu0 %v4703
  %4707 = vmatprep.subr.bf16.mxu0 0
  %4708 = vmatpush1.bf16.msra.mxu0 0
  %4709 = vmatprep.subr.bf16.mxu0 0
  %4710 = vmatpush1.bf16.msra.mxu0 0
  %4711 = vmatprep.subr.bf16.mxu0 0
  %4712 = vmatpush1.bf16.msra.mxu0 0
  %4713 = vmatprep.subr.bf16.mxu0 0
  %4714 = vmatpush1.bf16.msra.mxu0 0
  %4715 = vmatprep.subr.bf16.mxu0 0
  %4716 = vmatpush1.bf16.msra.mxu0 0
  %4717 = vmatprep.subr.bf16.mxu0 0
  %4718 = vmatpush1.bf16.msra.mxu0 0
  %4719 = vmatprep.subr.bf16.mxu0 0
  %4720 = vmatpush1.bf16.msra.mxu0 0
  %4721 = vmatprep.subr.bf16.mxu0 0
  %4722 = vmatpush1.bf16.msra.mxu0 0
  %4723 = vmatprep.subr.bf16.mxu0 0
  %4724 = vmatpush1.bf16.msra.mxu0 0
  %4725 = vmatprep.subr.bf16.mxu0 0
  %4726 = vmatpush1.bf16.msra.mxu0 0
  %4727 = vmatprep.subr.bf16.mxu0 0
  %4728 = vmatpush1.bf16.msra.mxu0 0
  %4729 = vmatprep.subr.bf16.mxu0 0
  %4730 = vmatpush1.bf16.msra.mxu0 0
  %4731 = vmatprep.subr.bf16.mxu0 0
  %4732 = vmatpush1.bf16.msra.mxu0 0
  %4733 = vmatprep.subr.bf16.mxu0 0
  %4734 = vmatpush1.bf16.msra.mxu0 0
  %4735 = vmatprep.subr.bf16.mxu0 0
  %4736 = vmatpush1.bf16.msra.mxu0 0
  %4737 = vmatprep.mubr.bf16.mxu0 0
  %4738 = vmatmul.mubr.bf16.gmra.mrb[0].mxu0 %v4700
  %v4739 = vpop.f32.mrb[0].mxu0
  %v4740 = vadd.f32 0.0, %v4739
  %v4741 = vpop.f32.mrb[0].mxu0
  %v4742 = vpop.f32.mrb[0].mxu0
  %v4743 = vpop.f32.mrb[0].mxu0
  %4744 = vdwg.mxu0
  %v4746 = vsel %vm382, %v4696, 0
  %v4749 = vsel %vm864, %v4260, 0
  %4751 = vmatprep.subr.bf16.mxu0 0
  %4752 = vmatpush1.bf16.msra.mxu0 %v4749
  %4753 = vmatprep.subr.bf16.mxu0 0
  %4754 = vmatpush1.bf16.msra.mxu0 0
  %4755 = vmatprep.subr.bf16.mxu0 0
  %4756 = vmatpush1.bf16.msra.mxu0 0
  %4757 = vmatprep.subr.bf16.mxu0 0
  %4758 = vmatpush1.bf16.msra.mxu0 0
  %4759 = vmatprep.subr.bf16.mxu0 0
  %4760 = vmatpush1.bf16.msra.mxu0 0
  %4761 = vmatprep.subr.bf16.mxu0 0
  %4762 = vmatpush1.bf16.msra.mxu0 0
  %4763 = vmatprep.subr.bf16.mxu0 0
  %4764 = vmatpush1.bf16.msra.mxu0 0
  %4765 = vmatprep.subr.bf16.mxu0 0
  %4766 = vmatpush1.bf16.msra.mxu0 0
  %4767 = vmatprep.subr.bf16.mxu0 0
  %4768 = vmatpush1.bf16.msra.mxu0 0
  %4769 = vmatprep.subr.bf16.mxu0 0
  %4770 = vmatpush1.bf16.msra.mxu0 0
  %4771 = vmatprep.subr.bf16.mxu0 0
  %4772 = vmatpush1.bf16.msra.mxu0 0
  %4773 = vmatprep.subr.bf16.mxu0 0
  %4774 = vmatpush1.bf16.msra.mxu0 0
  %4775 = vmatprep.subr.bf16.mxu0 0
  %4776 = vmatpush1.bf16.msra.mxu0 0
  %4777 = vmatprep.subr.bf16.mxu0 0
  %4778 = vmatpush1.bf16.msra.mxu0 0
  %4779 = vmatprep.subr.bf16.mxu0 0
  %4780 = vmatpush1.bf16.msra.mxu0 0
  %4781 = vmatprep.subr.bf16.mxu0 0
  %4782 = vmatpush1.bf16.msra.mxu0 0
  %4783 = vmatprep.mubr.bf16.mxu0 0
  %4784 = vmatmul.mubr.bf16.gmra.mrb[0].mxu0 %v4746
  %v4785 = vpop.f32.mrb[0].mxu0
  %v4786 = vadd.f32 0.0, %v4785
  %v4787 = vpop.f32.mrb[0].mxu0
  %v4788 = vpop.f32.mrb[0].mxu0
  %v4789 = vpop.f32.mrb[0].mxu0
  %4790 = vdwg.mxu0
  %v4792 = vsel %vm382, %v4697, 0
  %v4795 = vsel %vm864, %v4261, 0
  %4797 = vmatprep.subr.bf16.mxu0 0
  %4798 = vmatpush1.bf16.msra.mxu0 %v4795
  %4799 = vmatprep.subr.bf16.mxu0 0
  %4800 = vmatpush1.bf16.msra.mxu0 0
  %4801 = vmatprep.subr.bf16.mxu0 0
  %4802 = vmatpush1.bf16.msra.mxu0 0
  %4803 = vmatprep.subr.bf16.mxu0 0
  %4804 = vmatpush1.bf16.msra.mxu0 0
  %4805 = vmatprep.subr.bf16.mxu0 0
  %4806 = vmatpush1.bf16.msra.mxu0 0
  %4807 = vmatprep.subr.bf16.mxu0 0
  %4808 = vmatpush1.bf16.msra.mxu0 0
  %4809 = vmatprep.subr.bf16.mxu0 0
  %4810 = vmatpush1.bf16.msra.mxu0 0
  %4811 = vmatprep.subr.bf16.mxu0 0
  %4812 = vmatpush1.bf16.msra.mxu0 0
  %4813 = vmatprep.subr.bf16.mxu0 0
  %4814 = vmatpush1.bf16.msra.mxu0 0
  %4815 = vmatprep.subr.bf16.mxu0 0
  %4816 = vmatpush1.bf16.msra.mxu0 0
  %4817 = vmatprep.subr.bf16.mxu0 0
  %4818 = vmatpush1.bf16.msra.mxu0 0
  %4819 = vmatprep.subr.bf16.mxu0 0
  %4820 = vmatpush1.bf16.msra.mxu0 0
  %4821 = vmatprep.subr.bf16.mxu0 0
  %4822 = vmatpush1.bf16.msra.mxu0 0
  %4823 = vmatprep.subr.bf16.mxu0 0
  %4824 = vmatpush1.bf16.msra.mxu0 0
  %4825 = vmatprep.subr.bf16.mxu0 0
  %4826 = vmatpush1.bf16.msra.mxu0 0
  %4827 = vmatprep.subr.bf16.mxu0 0
  %4828 = vmatpush1.bf16.msra.mxu0 0
  %4829 = vmatprep.mubr.bf16.mxu0 0
  %4830 = vmatmul.mubr.bf16.gmra.mrb[0].mxu0 %v4792
  %v4831 = vpop.f32.mrb[0].mxu0
  %v4832 = vadd.f32 0.0, %v4831
  %v4833 = vpop.f32.mrb[0].mxu0
  %v4834 = vpop.f32.mrb[0].mxu0
  %v4835 = vpop.f32.mrb[0].mxu0
  %4836 = vdwg.mxu0
  %v4838 = vsel %vm382, %v4698, 0
  %v4841 = vsel %vm864, %v4262, 0
  %4843 = vmatprep.subr.bf16.mxu0 0
  %4844 = vmatpush1.bf16.msra.mxu0 %v4841
  %4845 = vmatprep.subr.bf16.mxu0 0
  %4846 = vmatpush1.bf16.msra.mxu0 0
  %4847 = vmatprep.subr.bf16.mxu0 0
  %4848 = vmatpush1.bf16.msra.mxu0 0
  %4849 = vmatprep.subr.bf16.mxu0 0
  %4850 = vmatpush1.bf16.msra.mxu0 0
  %4851 = vmatprep.subr.bf16.mxu0 0
  %4852 = vmatpush1.bf16.msra.mxu0 0
  %4853 = vmatprep.subr.bf16.mxu0 0
  %4854 = vmatpush1.bf16.msra.mxu0 0
  %4855 = vmatprep.subr.bf16.mxu0 0
  %4856 = vmatpush1.bf16.msra.mxu0 0
  %4857 = vmatprep.subr.bf16.mxu0 0
  %4858 = vmatpush1.bf16.msra.mxu0 0
  %4859 = vmatprep.subr.bf16.mxu0 0
  %4860 = vmatpush1.bf16.msra.mxu0 0
  %4861 = vmatprep.subr.bf16.mxu0 0
  %4862 = vmatpush1.bf16.msra.mxu0 0
  %4863 = vmatprep.subr.bf16.mxu0 0
  %4864 = vmatpush1.bf16.msra.mxu0 0
  %4865 = vmatprep.subr.bf16.mxu0 0
  %4866 = vmatpush1.bf16.msra.mxu0 0
  %4867 = vmatprep.subr.bf16.mxu0 0
  %4868 = vmatpush1.bf16.msra.mxu0 0
  %4869 = vmatprep.subr.bf16.mxu0 0
  %4870 = vmatpush1.bf16.msra.mxu0 0
  %4871 = vmatprep.subr.bf16.mxu0 0
  %4872 = vmatpush1.bf16.msra.mxu0 0
  %4873 = vmatprep.subr.bf16.mxu0 0
  %4874 = vmatpush1.bf16.msra.mxu0 0
  %4875 = vmatprep.mubr.bf16.mxu0 0
  %4876 = vmatmul.mubr.bf16.gmra.mrb[0].mxu0 %v4838
  %v4877 = vpop.f32.mrb[0].mxu0
  %v4878 = vadd.f32 0.0, %v4877
  %v4879 = vpop.f32.mrb[0].mxu0
  %v4880 = vpop.f32.mrb[0].mxu0
  %v4881 = vpop.f32.mrb[0].mxu0
  %4882 = vdwg.mxu0
  %v4883 = vsel %vm323, %v4740, 0.0
  %v4884 = vsel %vm323, %v4786, 0.0
  %v4885 = vadd.f32 %v4883, %v4884
  %v4886 = vsel %vm323, %v4832, 0.0
  %v4887 = vadd.f32 %v4885, %v4886
  %v4888 = vsel %vm323, %v4878, 0.0
  %v4889 = vadd.f32 %v4887, %v4888
  %v4890 = vld [vmem:[%s57] sm:$0x1]
  %v4892 = vlaneseq
  %v4893 = vshrl.u32 %v4892, 7
  %v4894 = vsub.s32 0, %v4893
  %v4895 = vrot.slane %v4890, %v4894
  %v4897 = vadd.f32 %v4889, %v4895
  %v4898 = vld [vmem:[%s59] sm:$0x1]
  %v4899 = vld [vmem:[%s61] sm:$0x1]
  %v4900 = vadd.f32 %v4123, %v4897
  %v4901 = vsel %vm323, %v4900, 0.0
  %4902 = vadd.xlane.f32.xlu0 %v4901
  %v4903 = vpop.xlane.xlu0 %4902
  %v4904 = vmul.f32 %v4903, %v1083
  %v4905 = vsub.f32 %v4900, %v4904
  %v4906 = vmul.f32 %v4905, %v4905
  %v4907 = vsel %vm323, %v4906, 0.0
  %4908 = vadd.xlane.f32.xlu0 %v4907
  %v4909 = vpop.xlane.xlu0 %4908
  %v4910 = vmul.f32 %v4909, %v1083
  %v4911 = vadd.f32 %v4910, 1e-05
  %v4912 = vrsqrt.pop %v4911
  %v4913 = vmul.f32 %v4905, %v4912
  %v4915 = vlaneseq
  %v4916 = vshrl.u32 %v4915, 7
  %v4917 = vsub.s32 0, %v4916
  %v4918 = vrot.slane %v4898, %v4917
  %v4920 = vmul.f32 %v4913, %v4918
  %v4922 = vlaneseq
  %v4923 = vshrl.u32 %v4922, 7
  %v4924 = vsub.s32 0, %v4923
  %v4925 = vrot.slane %v4899, %v4924
  %v4927 = vadd.f32 %v4920, %v4925
  %v4928 = vld [vmem:[%s63] sm:$0xf]
  %v4929 = vld [vmem:[%s63 + $0x4] sm:$0xf]
  %v4930 = vld [vmem:[%s63 + $0x8] sm:$0xf]
  %v4931 = vld [vmem:[%s63 + $0xc] sm:$0xf]
  %v4932 = vpack.c.bf16 %v4927, %v4927
  %v4933 = vld [vmem:[%s65] sm:$0x1]
  %v4935 = vlaneseq
  %v4936 = vshrl.u32 %v4935, 7
  %v4937 = vsub.s32 0, %v4936
  %v4938 = vrot.slane %v4933, %v4937
  %v4944 = vunpack.c.l.b16 %v4928
  %v4945 = vunpack.c.l.b16 %v4929
  %v4946 = vunpack.c.l.b16 %v4930
  %v4947 = vunpack.c.l.b16 %v4931
  %v4948 = vpack.c.b16 %v4945, %v4944
  %v4949 = vpack.c.b16 %v4947, %v4946
  %v4953 = vsel %vm323, %v4932, 0
  %4955 = vmatprep.subr.bf16.mxu0 0
  %4956 = vmatpush1.bf16.msra.mxu0 %v4948
  %4957 = vmatprep.subr.bf16.mxu0 0
  %4958 = vmatpush1.bf16.msra.mxu0 %v4949
  %4959 = vmatprep.subr.bf16.mxu0 0
  %4960 = vmatpush1.bf16.msra.mxu0 0
  %4961 = vmatprep.subr.bf16.mxu0 0
  %4962 = vmatpush1.bf16.msra.mxu0 0
  %4963 = vmatprep.subr.bf16.mxu0 0
  %4964 = vmatpush1.bf16.msra.mxu0 0
  %4965 = vmatprep.subr.bf16.mxu0 0
  %4966 = vmatpush1.bf16.msra.mxu0 0
  %4967 = vmatprep.subr.bf16.mxu0 0
  %4968 = vmatpush1.bf16.msra.mxu0 0
  %4969 = vmatprep.subr.bf16.mxu0 0
  %4970 = vmatpush1.bf16.msra.mxu0 0
  %4971 = vmatprep.subr.bf16.mxu0 0
  %4972 = vmatpush1.bf16.msra.mxu0 0
  %4973 = vmatprep.subr.bf16.mxu0 0
  %4974 = vmatpush1.bf16.msra.mxu0 0
  %4975 = vmatprep.subr.bf16.mxu0 0
  %4976 = vmatpush1.bf16.msra.mxu0 0
  %4977 = vmatprep.subr.bf16.mxu0 0
  %4978 = vmatpush1.bf16.msra.mxu0 0
  %4979 = vmatprep.subr.bf16.mxu0 0
  %4980 = vmatpush1.bf16.msra.mxu0 0
  %4981 = vmatprep.subr.bf16.mxu0 0
  %4982 = vmatpush1.bf16.msra.mxu0 0
  %4983 = vmatprep.subr.bf16.mxu0 0
  %4984 = vmatpush1.bf16.msra.mxu0 0
  %4985 = vmatprep.subr.bf16.mxu0 0
  %4986 = vmatpush1.bf16.msra.mxu0 0
  %4987 = vmatprep.mubr.bf16.mxu0 0
  %4988 = vmatmul.mubr.bf16.gmra.mrb[0].mxu0 %v4953
  %v4989 = vpop.f32.mrb[0].mxu0
  %v4990 = vadd.f32 %v4938, %v4989
  %v4991 = vpop.f32.mrb[0].mxu0
  %v4992 = vpop.f32.mrb[0].mxu0
  %v4993 = vpop.f32.mrb[0].mxu0
  %4994 = vdwg.mxu0
  %v4995 = vmax.f32 %v4990, 0.0
  %v4996 = vld [vmem:[%s67] sm:$0xf]
  %v4997 = vld [vmem:[%s67 + $0x4] sm:$0xf]
  %v4998 = vld [vmem:[%s67 + $0x8] sm:$0xf]
  %v4999 = vld [vmem:[%s67 + $0xc] sm:$0xf]
  %v5000 = vld [vmem:[%s67 + $0x10] sm:$0xf]
  %v5001 = vld [vmem:[%s67 + $0x14] sm:$0xf]
  %v5002 = vld [vmem:[%s67 + $0x18] sm:$0xf]
  %v5003 = vld [vmem:[%s67 + $0x1c] sm:$0xf]
  %v5004 = vpack.c.bf16 %v4995, %v4995
  %v5005 = vld [vmem:[%s69] sm:$0x1]
  %v5007 = vlaneseq
  %v5008 = vshrl.u32 %v5007, 7
  %v5009 = vsub.s32 0, %v5008
  %v5010 = vrot.slane %v5005, %v5009
  %v5020 = vunpack.c.l.b16 %v4996
  %v5021 = vunpack.c.l.b16 %v4997
  %v5022 = vunpack.c.l.b16 %v4998
  %v5023 = vunpack.c.l.b16 %v4999
  %v5024 = vunpack.c.l.b16 %v5000
  %v5025 = vunpack.c.l.b16 %v5001
  %v5026 = vunpack.c.l.b16 %v5002
  %v5027 = vunpack.c.l.b16 %v5003
  %v5028 = vpack.c.b16 %v5021, %v5020
  %v5029 = vpack.c.b16 %v5023, %v5022
  %v5030 = vpack.c.b16 %v5025, %v5024
  %v5031 = vpack.c.b16 %v5027, %v5026
  %v5037 = vsel %vm1230, %v5004, 0
  %5039 = vmatprep.subr.bf16.mxu0 0
  %5040 = vmatpush1.bf16.msra.mxu0 %v5028
  %5041 = vmatprep.subr.bf16.mxu0 0
  %5042 = vmatpush1.bf16.msra.mxu0 %v5029
  %5043 = vmatprep.subr.bf16.mxu0 0
  %5044 = vmatpush1.bf16.msra.mxu0 %v5030
  %5045 = vmatprep.subr.bf16.mxu0 0
  %5046 = vmatpush1.bf16.msra.mxu0 %v5031
  %5047 = vmatprep.subr.bf16.mxu0 0
  %5048 = vmatpush1.bf16.msra.mxu0 0
  %5049 = vmatprep.subr.bf16.mxu0 0
  %5050 = vmatpush1.bf16.msra.mxu0 0
  %5051 = vmatprep.subr.bf16.mxu0 0
  %5052 = vmatpush1.bf16.msra.mxu0 0
  %5053 = vmatprep.subr.bf16.mxu0 0
  %5054 = vmatpush1.bf16.msra.mxu0 0
  %5055 = vmatprep.subr.bf16.mxu0 0
  %5056 = vmatpush1.bf16.msra.mxu0 0
  %5057 = vmatprep.subr.bf16.mxu0 0
  %5058 = vmatpush1.bf16.msra.mxu0 0
  %5059 = vmatprep.subr.bf16.mxu0 0
  %5060 = vmatpush1.bf16.msra.mxu0 0
  %5061 = vmatprep.subr.bf16.mxu0 0
  %5062 = vmatpush1.bf16.msra.mxu0 0
  %5063 = vmatprep.subr.bf16.mxu0 0
  %5064 = vmatpush1.bf16.msra.mxu0 0
  %5065 = vmatprep.subr.bf16.mxu0 0
  %5066 = vmatpush1.bf16.msra.mxu0 0
  %5067 = vmatprep.subr.bf16.mxu0 0
  %5068 = vmatpush1.bf16.msra.mxu0 0
  %5069 = vmatprep.subr.bf16.mxu0 0
  %5070 = vmatpush1.bf16.msra.mxu0 0
  %5071 = vmatprep.mubr.bf16.mxu0 0
  %5072 = vmatmul.mubr.bf16.gmra.mrb[0].mxu0 %v5037
  %v5073 = vpop.f32.mrb[0].mxu0
  %v5074 = vadd.f32 %v5010, %v5073
  %v5075 = vpop.f32.mrb[0].mxu0
  %v5076 = vpop.f32.mrb[0].mxu0
  %v5077 = vpop.f32.mrb[0].mxu0
  %5078 = vdwg.mxu0
  %v5079 = vld [vmem:[%s71] sm:$0x1]
  %v5080 = vld [vmem:[%s73] sm:$0x1]
  %v5081 = vadd.f32 %v4927, %v5074
  %v5082 = vsel %vm323, %v5081, 0.0
  %5083 = vadd.xlane.f32.xlu0 %v5082
  %v5084 = vpop.xlane.xlu0 %5083
  %v5085 = vmul.f32 %v5084, %v1083
  %v5086 = vsub.f32 %v5081, %v5085
  %v5087 = vmul.f32 %v5086, %v5086
  %v5088 = vsel %vm323, %v5087, 0.0
  %5089 = vadd.xlane.f32.xlu0 %v5088
  %v5090 = vpop.xlane.xlu0 %5089
  %v5091 = vmul.f32 %v5090, %v1083
  %v5092 = vadd.f32 %v5091, 1e-05
  %v5093 = vrsqrt.pop %v5092
  %v5094 = vmul.f32 %v5086, %v5093
  %v5096 = vlaneseq
  %v5097 = vshrl.u32 %v5096, 7
  %v5098 = vsub.s32 0, %v5097
  %v5099 = vrot.slane %v5079, %v5098
  %v5101 = vmul.f32 %v5094, %v5099
  %v5103 = vlaneseq
  %v5104 = vshrl.u32 %v5103, 7
  %v5105 = vsub.s32 0, %v5104
  %v5106 = vrot.slane %v5080, %v5105
  %v5108 = vadd.f32 %v5101, %v5106
  %v5109 = vld [vmem:[%s75] sm:$0xf]
  %v5110 = vld [vmem:[%s75 + $0x4] sm:$0xf]
  %v5111 = vld [vmem:[%s75 + $0x8] sm:$0xf]
  %v5112 = vld [vmem:[%s75 + $0xc] sm:$0xf]
  %v5113 = vpack.c.bf16 %v5108, %v5108
  %v5114 = vld [vmem:[%s77] sm:$0x1]
  %v5116 = vlaneseq
  %v5117 = vshrl.u32 %v5116, 7
  %v5118 = vsub.s32 0, %v5117
  %v5119 = vrot.slane %v5114, %v5118
  %v5125 = vunpack.c.l.b16 %v5109
  %v5126 = vunpack.c.l.b16 %v5110
  %v5127 = vunpack.c.l.b16 %v5111
  %v5128 = vunpack.c.l.b16 %v5112
  %v5129 = vpack.c.b16 %v5126, %v5125
  %v5130 = vpack.c.b16 %v5128, %v5127
  %v5134 = vsel %vm323, %v5113, 0
  %5136 = vmatprep.subr.bf16.mxu0 0
  %5137 = vmatpush1.bf16.msra.mxu0 %v5129
  %5138 = vmatprep.subr.bf16.mxu0 0
  %5139 = vmatpush1.bf16.msra.mxu0 %v5130
  %5140 = vmatprep.subr.bf16.mxu0 0
  %5141 = vmatpush1.bf16.msra.mxu0 0
  %5142 = vmatprep.subr.bf16.mxu0 0
  %5143 = vmatpush1.bf16.msra.mxu0 0
  %5144 = vmatprep.subr.bf16.mxu0 0
  %5145 = vmatpush1.bf16.msra.mxu0 0
  %5146 = vmatprep.subr.bf16.mxu0 0
  %5147 = vmatpush1.bf16.msra.mxu0 0
  %5148 = vmatprep.subr.bf16.mxu0 0
  %5149 = vmatpush1.bf16.msra.mxu0 0
  %5150 = vmatprep.subr.bf16.mxu0 0
  %5151 = vmatpush1.bf16.msra.mxu0 0
  %5152 = vmatprep.subr.bf16.mxu0 0
  %5153 = vmatpush1.bf16.msra.mxu0 0
  %5154 = vmatprep.subr.bf16.mxu0 0
  %5155 = vmatpush1.bf16.msra.mxu0 0
  %5156 = vmatprep.subr.bf16.mxu0 0
  %5157 = vmatpush1.bf16.msra.mxu0 0
  %5158 = vmatprep.subr.bf16.mxu0 0
  %5159 = vmatpush1.bf16.msra.mxu0 0
  %5160 = vmatprep.subr.bf16.mxu0 0
  %5161 = vmatpush1.bf16.msra.mxu0 0
  %5162 = vmatprep.subr.bf16.mxu0 0
  %5163 = vmatpush1.bf16.msra.mxu0 0
  %5164 = vmatprep.subr.bf16.mxu0 0
  %5165 = vmatpush1.bf16.msra.mxu0 0
  %5166 = vmatprep.subr.bf16.mxu0 0
  %5167 = vmatpush1.bf16.msra.mxu0 0
  %5168 = vmatprep.mubr.bf16.mxu0 0
  %5169 = vmatmul.mubr.bf16.gmra.mrb[0].mxu0 %v5134
  %v5170 = vpop.f32.mrb[0].mxu0
  %v5171 = vadd.f32 %v5119, %v5170
  %v5172 = vpop.f32.mrb[0].mxu0
  %v5173 = vpop.f32.mrb[0].mxu0
  %v5174 = vpop.f32.mrb[0].mxu0
  %5175 = vdwg.mxu0
  %5176 = vst [vmem:[%s79] sm:$0xff] %v5171
  // Predicated region
  $region158: #{i2c_forward.3} parent=0 // pred_check
    _
  $region159: #{i2c_forward.3} parent=0 // pred_check_branch
    %5178 = sbr.rel (0) target = $region161
  $region160: #{i2c_forward.3} parent=0 // pred_region
    _
  $region161: #{i2c_forward.3} parent=0 // pred_fallthru
    _
  // Predicated region
  $region162: #{i2c_forward.3} parent=0 // pred_check
    _
  $region163: #{i2c_forward.3} parent=0 // pred_check_branch
    %5180 = sbr.rel (0) target = $region165
  $region164: #{i2c_forward.3} parent=0 // pred_region
    _
  $region165: #{i2c_forward.3} parent=0 // pred_fallthru
    _

</llo_original>
